<compile_context>
chip_gen: v6e
topology: v6e:2x2x1
jax: 0.10.0
libtpu: 0.0.40
codegen_flags: <defaults>
</compile_context>

<pallas_src>
import jax
import jax.numpy as jnp
from jax.experimental import pallas as pl
from jax.experimental.pallas import tpu as pltpu

_LANE = 128


# --------------------------------------------------------------------------
# Kernel helpers
# --------------------------------------------------------------------------
def _build_cat(cat_ref, xv, H, W):
    """Build the dx-im2col'd, row-haloed buffer in VMEM.

    cat_ref[n, y, x, kx*C + c] = x_padded[n, y, x + kx, c]  (1-px zero halo),
    so a 3x3 conv becomes 3 matmuls (one per dy) with K = 3*C.
    Every element of cat_ref is written each call (safe under "parallel").
    """
    nb, _, _, C = xv.shape
    dt = cat_ref.dtype
    zrow = jnp.zeros((nb, 1, W, 3 * C), dt)
    zcol = jnp.zeros((nb, H, 1, C), dt)
    # top / bottom halo rows
    cat_ref[:, 0:1, :, :] = zrow
    cat_ref[:, H + 1:H + 2, :, :] = zrow
    # kx = 0  (source column x-1)
    cat_ref[:, 1:H + 1, 0:1, 0:C] = zcol
    cat_ref[:, 1:H + 1, 1:W, 0:C] = xv[:, :, 0:W - 1, :]
    # kx = 1  (source column x)
    cat_ref[:, 1:H + 1, :, C:2 * C] = xv
    # kx = 2  (source column x+1)
    cat_ref[:, 1:H + 1, 0:W - 1, 2 * C:3 * C] = xv[:, :, 1:W, :]
    cat_ref[:, 1:H + 1, W - 1:W, 2 * C:3 * C] = zcol


def _block_body(x_ref, w1_ref, b1_ref, w2_ref, b2_ref, out_ref,
                xcat_ref, mcat_ref, shortcut_fn):
    # x_ref  : (Nb, H, W, Cpi)        bf16, lane-padded channels, no spatial pad
    # w1_ref : (3, 3*Cpi, Cpo)        bf16, BN1 scale folded in
    # w2_ref : (3, 3*Cpo, Cpo)        bf16, BN2 scale folded in
    # b*_ref : (1, Cpo)               f32 folded BN biases
    # out_ref: (Nb, H, W, Cpo)        f32
    nb, H, W, cout = out_ref.shape
    cpi = x_ref.shape[-1]
    M = nb * H * W

    # conv1: build haloed dx-im2col input, 3 matmuls of K = 3*Cpi.
    _build_cat(xcat_ref, x_ref[...], H, W)

    acc1 = None
    op_center = None   # dy == 1 operand, reused by the shortcut
    for dy in range(3):
        op = xcat_ref[:, dy:dy + H, :, :].reshape(M, 3 * cpi)
        if dy == 1:
            op_center = op
        d = jnp.dot(op, w1_ref[dy], preferred_element_type=jnp.float32)
        acc1 = d if acc1 is None else acc1 + d
    mid = jnp.maximum(acc1 + b1_ref[...], 0.0)

    # conv2: same scheme on the bf16 mid activation.
    _build_cat(mcat_ref, mid.astype(mcat_ref.dtype).reshape(nb, H, W, cout), H, W)

    acc2 = None
    for dy in range(3):
        op = mcat_ref[:, dy:dy + H, :, :].reshape(M, 3 * cout)
        d = jnp.dot(op, w2_ref[dy], preferred_element_type=jnp.float32)
        acc2 = d if acc2 is None else acc2 + d
    out2 = acc2 + b2_ref[...]

    sc = shortcut_fn(op_center, cpi, M)
    out_ref[...] = jnp.maximum(out2 + sc, 0.0).reshape(nb, H, W, cout).astype(out_ref.dtype)


def _kernel_identity(x_ref, w1_ref, b1_ref, w2_ref, b2_ref, out_ref,
                     xcat_ref, mcat_ref):
    def shortcut(op_center, cpi, M):
        # identity shortcut: the centre tap of the input is the kx=1 lane block
        # of the dy=1 operand -- a free lane slice, no matmul, no extra copy.
        return op_center[:, cpi:2 * cpi].astype(jnp.float32)

    _block_body(x_ref, w1_ref, b1_ref, w2_ref, b2_ref, out_ref,
                xcat_ref, mcat_ref, shortcut)


def _kernel_proj(x_ref, w1_ref, b1_ref, w2_ref, b2_ref, wsc_ref, bsc_ref,
                 out_ref, xcat_ref, mcat_ref):
    def shortcut(op_center, cpi, M):
        # 1x1 projection shortcut computed from the already-materialized dy=1
        # operand (weights are zero outside the kx=1 row block), BN folded in.
        return (jnp.dot(op_center, wsc_ref[...], preferred_element_type=jnp.float32)
                + bsc_ref[...])

    _block_body(x_ref, w1_ref, b1_ref, w2_ref, b2_ref, out_ref,
                xcat_ref, mcat_ref, shortcut)


# --------------------------------------------------------------------------
# Wrapper
# --------------------------------------------------------------------------
def _fold_bn(gamma, beta, mean, var, eps=1e-5):
    scale = gamma / jnp.sqrt(var + eps)
    bias = beta - mean * scale
    return scale, bias


def _round_up(x, m):
    return ((x + m - 1) // m) * m


def _vmem_capacity_bytes():
    try:
        return int(pltpu.get_tpu_info().vmem_capacity_bytes)
    except Exception:
        return 64 * 1024 * 1024   # conservative (v7x-sized) fallback


def _pick_batch_block(n, h, w, cpi, cpo, budget):
    """Largest divisor of n that fits the VMEM budget, preferring >=2 grid steps."""
    # double-buffered bf16 weights + f32 biases (constant index maps)
    wbytes = 2 * 2 * (3 * 3 * cpi * cpo + 3 * 3 * cpo * cpo + 3 * cpi * cpo) + 2 * 4 * 3 * cpo

    def step_bytes(nb):
        m = nb * h * w
        x_blk = 2 * nb * h * w * cpi * 2          # bf16 input block, double buffered
        o_blk = 2 * nb * h * w * cpo * 4          # f32 output block, double buffered
        xcat = nb * (h + 2) * w * 3 * cpi * 2     # bf16 halo scratch
        mcat = nb * (h + 2) * w * 3 * cpo * 2     # bf16 halo scratch
        live = m * (3 * cpi * 2 + 3 * cpo * 2 + 2 * cpo * 4)   # operands + f32 accumulators
        return x_blk + o_blk + xcat + mcat + live

    fits = [d for d in range(1, n + 1) if n % d == 0 and wbytes + step_bytes(d) <= budget]
    if not fits:
        return 1
    multi = [d for d in fits if n // d >= 2]      # keep >=2 steps for pipelining / 2 TCs
    return max(multi) if multi else max(fits)


def basic_block_pallas_nhwc(x_nhwc, p, stride=1):
    """BasicBlock forward.  x_nhwc: (N, H, W, Cin) -> (N, H, W, Cpo) f32 NHWC,
    output channels zero-padded to a lane multiple (slice [:Cout] if needed)."""
    assert stride == 1  # TODO(synk): stride > 1 (strided conv) path not implemented
    N, H, W, Cin = x_nhwc.shape
    Cout = p["conv1_w"].shape[0]
    Cpi = _round_up(Cin, _LANE)
    Cpo = _round_up(Cout, _LANE)
    use_proj = (stride != 1) or (Cin != Cout)

    # Lane-pad channels, bf16 MXU operands.  No spatial padding in HBM.
    xq = jnp.pad(x_nhwc, ((0, 0), (0, 0), (0, 0), (0, Cpi - Cin))).astype(jnp.bfloat16)

    # Fold BN scales into conv weights; build dx-stacked (K = 3*C) weights.
    s1, b1 = _fold_bn(p["bn1_gamma"], p["bn1_beta"], p["bn1_mean"], p["bn1_var"])
    s2, b2 = _fold_bn(p["bn2_gamma"], p["bn2_beta"], p["bn2_mean"], p["bn2_var"])

    w1 = jnp.transpose(p["conv1_w"], (2, 3, 1, 0)) * s1[None, None, None, :]   # (ky,kx,Ci,Co)
    w1 = jnp.pad(w1, ((0, 0), (0, 0), (0, Cpi - Cin), (0, Cpo - Cout)))
    w1 = w1.reshape(3, 3 * Cpi, Cpo).astype(jnp.bfloat16)

    w2 = jnp.transpose(p["conv2_w"], (2, 3, 1, 0)) * s2[None, None, None, :]
    w2 = jnp.pad(w2, ((0, 0), (0, 0), (0, Cpo - Cout), (0, Cpo - Cout)))
    w2 = w2.reshape(3, 3 * Cpo, Cpo).astype(jnp.bfloat16)

    b1p = jnp.pad(b1, (0, Cpo - Cout)).reshape(1, Cpo).astype(jnp.float32)
    b2p = jnp.pad(b2, (0, Cpo - Cout)).reshape(1, Cpo).astype(jnp.float32)

    vmem_cap = _vmem_capacity_bytes()
    Nb = _pick_batch_block(N, H, W, Cpi, Cpo, budget=int(vmem_cap * 0.5))

    def full(shape):
        return pl.BlockSpec(shape, lambda n, _l=len(shape): (0,) * _l)

    in_specs = [
        pl.BlockSpec((Nb, H, W, Cpi), lambda n: (n, 0, 0, 0)),
        full((3, 3 * Cpi, Cpo)), full((1, Cpo)),
        full((3, 3 * Cpo, Cpo)), full((1, Cpo)),
    ]
    args = [xq, w1, b1p, w2, b2p]

    if use_proj:
        ssc, bsc = _fold_bn(p["sc_gamma"], p["sc_beta"], p["sc_mean"], p["sc_var"])
        ws = jnp.transpose(p["sc_w"][:, :, 0, 0], (1, 0)) * ssc[None, :]        # (Cin, Cout)
        ws = jnp.pad(ws, ((0, Cpi - Cin), (0, Cpo - Cout)))
        # Embed the 1x1 weights in the kx=1 row block so the shortcut reuses the
        # dy=1 conv1 operand (zero rows for kx=0 / kx=2).
        wsc = jnp.zeros((3, Cpi, Cpo), ws.dtype).at[1].set(ws)
        wsc = wsc.reshape(3 * Cpi, Cpo).astype(jnp.bfloat16)
        bscp = jnp.pad(bsc, (0, Cpo - Cout)).reshape(1, Cpo).astype(jnp.float32)
        in_specs += [full((3 * Cpi, Cpo)), full((1, Cpo))]
        args += [wsc, bscp]
        kernel = _kernel_proj
    else:
        assert Cpi == Cpo
        kernel = _kernel_identity

    out = pl.pallas_call(
        kernel,
        out_shape=jax.ShapeDtypeStruct((N, H, W, Cpo), jnp.float32),
        grid_spec=pltpu.PrefetchScalarGridSpec(
            num_scalar_prefetch=0,
            grid=(N // Nb,),
            in_specs=in_specs,
            out_specs=pl.BlockSpec((Nb, H, W, Cpo), lambda n: (n, 0, 0, 0)),
            scratch_shapes=[
                pltpu.VMEM((Nb, H + 2, W, 3 * Cpi), jnp.bfloat16),
                pltpu.VMEM((Nb, H + 2, W, 3 * Cpo), jnp.bfloat16),
            ],
        ),
        compiler_params=pltpu.CompilerParams(
            dimension_semantics=("parallel",),
            vmem_limit_bytes=int(vmem_cap * 0.7),
        ),
    )(*args)
    return out


def basic_block_pallas(x_nchw, p, stride=1):
    """NCHW interface matching the PyTorch module.  Prefer the NHWC entry point
    (basic_block_pallas_nhwc) when chaining blocks across a ResNet."""
    Cout = p["conv1_w"].shape[0]
    x_nhwc = jnp.transpose(x_nchw, (0, 2, 3, 1))
    out = basic_block_pallas_nhwc(x_nhwc, p, stride)
    # TODO(synk): keep NHWC / lane-padded channels as the inter-layer layout;
    # this slice + transpose exists only to match the PyTorch NCHW contract.
    return jnp.transpose(out[:, :, :, :Cout], (0, 3, 1, 2))


# --------------------------------------------------------------------------
# Pure-JAX reference (same inference-mode BN semantics), NCHW
# --------------------------------------------------------------------------
def basic_block_ref(x_nchw, p, stride=1):
    eps = 1e-5

    def conv(x, w, s, pad):
        return jax.lax.conv_general_dilated(
            x, w, window_strides=(s, s), padding=pad,
            dimension_numbers=("NCHW", "OIHW", "NCHW"))

    def bn(y, g, b, m, v):
        return ((y - m[None, :, None, None]) / jnp.sqrt(v + eps)[None, :, None, None]
                * g[None, :, None, None] + b[None, :, None, None])

    out = jax.nn.relu(bn(conv(x_nchw, p["conv1_w"], stride, ((1, 1), (1, 1))),
                         p["bn1_gamma"], p["bn1_beta"], p["bn1_mean"], p["bn1_var"]))
    out = bn(conv(out, p["conv2_w"], 1, ((1, 1), (1, 1))),
             p["bn2_gamma"], p["bn2_beta"], p["bn2_mean"], p["bn2_var"])
    Cin, Cout = x_nchw.shape[1], p["conv1_w"].shape[0]
    if stride != 1 or Cin != Cout:
        sc = bn(conv(x_nchw, p["sc_w"], stride, "VALID"),
                p["sc_gamma"], p["sc_beta"], p["sc_mean"], p["sc_var"])
    else:
        sc = x_nchw
    return jax.nn.relu(out + sc)


def _make_params(key, cin, planes):
    keys = jax.random.split(key, 16)

    def unif(k, shape):
        return 0.5 + jax.random.uniform(k, shape, jnp.float32)

    def nrm(k, shape, s=0.1):
        return s * jax.random.normal(k, shape, jnp.float32)

    return {
        "conv1_w": 0.2 * jax.random.normal(keys[1], (planes, cin, 3, 3), jnp.float32),
        "bn1_gamma": unif(keys[2], (planes,)), "bn1_beta": nrm(keys[3], (planes,)),
        "bn1_mean": nrm(keys[4], (planes,)), "bn1_var": unif(keys[5], (planes,)),
        "conv2_w": 0.2 * jax.random.normal(keys[6], (planes, planes, 3, 3), jnp.float32),
        "bn2_gamma": unif(keys[7], (planes,)), "bn2_beta": nrm(keys[8], (planes,)),
        "bn2_mean": nrm(keys[9], (planes,)), "bn2_var": unif(keys[10], (planes,)),
        "sc_w": 0.2 * jax.random.normal(keys[11], (planes, cin, 1, 1), jnp.float32),
        "sc_gamma": unif(keys[12], (planes,)), "sc_beta": nrm(keys[13], (planes,)),
        "sc_mean": nrm(keys[14], (planes,)), "sc_var": unif(keys[15], (planes,)),
    }


def _check(y, r, name):
    # bf16 MXU operands -> looser tolerance than a pure-f32 kernel.
    err = float(jnp.max(jnp.abs(y - r)))
    rel = float(jnp.linalg.norm((y - r).ravel()) / (jnp.linalg.norm(r.ravel()) + 1e-9))
    assert err < 2e-1 and rel < 2e-2, f"{name}: max_abs={err}, rel_l2={rel}"


if __name__ == "__main__":
    key = jax.random.PRNGKey(0)
    k_x1, k_p1, k_x2, k_p2 = jax.random.split(key, 4)

    # Case 1: projection shortcut (Cin != planes) -> 1x1-conv kernel variant.
    N, Cin, H, W, planes = 2, 4, 16, 16, 8
    x1 = jax.random.normal(k_x1, (N, Cin, H, W), jnp.float32)
    p1 = _make_params(k_p1, Cin, planes)
    y1 = jax.block_until_ready(basic_block_pallas(x1, p1, 1))
    r1 = basic_block_ref(x1, p1, 1)
    assert y1.shape == (N, planes, H, W), y1.shape
    _check(y1, r1, "projection-shortcut")

    # Case 2: identity shortcut (Cin == planes) -> specialized kernel, no 1x1 matmul.
    Cin2 = planes2 = 8
    x2 = jax.random.normal(k_x2, (N, Cin2, H, W), jnp.float32)
    p2 = _make_params(k_p2, Cin2, planes2)
    y2 = jax.block_until_ready(basic_block_pallas(x2, p2, 1))
    r2 = basic_block_ref(x2, p2, 1)
    assert y2.shape == (N, planes2, H, W), y2.shape
    _check(y2, r2, "identity-shortcut")

    print("KERNEL_OK")
</pallas_src>

<mosaic_0001>
module attributes {stable_mosaic.version = 11 : i64} {
  func.func @_kernel_proj(%arg0: i32, %arg1: memref<1x16x16x128xbf16, #tpu.memory_space<vmem>>, %arg2: memref<3x384x128xbf16, #tpu.memory_space<vmem>>, %arg3: memref<1x128xf32, #tpu.memory_space<vmem>>, %arg4: memref<3x384x128xbf16, #tpu.memory_space<vmem>>, %arg5: memref<1x128xf32, #tpu.memory_space<vmem>>, %arg6: memref<384x128xbf16, #tpu.memory_space<vmem>>, %arg7: memref<1x128xf32, #tpu.memory_space<vmem>>, %arg8: memref<1x16x16x128xf32, #tpu.memory_space<vmem>>, %arg9: memref<1x18x16x384xbf16, #tpu.memory_space<vmem>>, %arg10: memref<1x18x16x384xbf16, #tpu.memory_space<vmem>>) attributes {dimension_semantics = [#tpu.dimension_semantics<parallel>], iteration_bounds = array<i64: 2>, scalar_prefetch = 0 : i64, scratch_operands = 2 : i64, tpu.core_type = #tpu.core_type<tc>, window_params = [{transform_indices = @transform_0, window_bounds = array<i64: 1, 16, 16, 128>}, {pipeline_mode = #tpu.pipeline_mode<synchronous>, transform_indices = @transform_1, window_bounds = array<i64: 3, 384, 128>}, {pipeline_mode = #tpu.pipeline_mode<synchronous>, transform_indices = @transform_2, window_bounds = array<i64: 1, 128>}, {pipeline_mode = #tpu.pipeline_mode<synchronous>, transform_indices = @transform_3, window_bounds = array<i64: 3, 384, 128>}, {pipeline_mode = #tpu.pipeline_mode<synchronous>, transform_indices = @transform_4, window_bounds = array<i64: 1, 128>}, {pipeline_mode = #tpu.pipeline_mode<synchronous>, transform_indices = @transform_5, window_bounds = array<i64: 384, 128>}, {pipeline_mode = #tpu.pipeline_mode<synchronous>, transform_indices = @transform_6, window_bounds = array<i64: 1, 128>}, {transform_indices = @transform_7, window_bounds = array<i64: 1, 16, 16, 128>}]} {
    %c0 = arith.constant 0 : index
    %c0_0 = arith.constant 0 : index
    %c0_1 = arith.constant 0 : index
    %c0_2 = arith.constant 0 : index
    %0 = vector.load %arg1[%c0, %c0_0, %c0_1, %c0_2] : memref<1x16x16x128xbf16, #tpu.memory_space<vmem>>, vector<1x16x16x128xbf16>
    %cst = arith.constant 0.000000e+00 : bf16
    %1 = vector.broadcast %cst : bf16 to vector<1x1x16x384xbf16>
    %cst_3 = arith.constant 0.000000e+00 : bf16
    %2 = vector.broadcast %cst_3 : bf16 to vector<1x16x1x128xbf16>
    %c0_4 = arith.constant 0 : index
    %c0_5 = arith.constant 0 : index
    %c0_6 = arith.constant 0 : index
    %c0_7 = arith.constant 0 : index
    %3 = vector.load %arg9[%c0_4, %c0_5, %c0_6, %c0_7] : memref<1x18x16x384xbf16, #tpu.memory_space<vmem>>, vector<1x1x16x384xbf16>
    tpu.vector_store %arg9[%c0_4, %c0_5, %c0_6, %c0_7], %1 {strides = array<i32>} : memref<1x18x16x384xbf16, #tpu.memory_space<vmem>>, vector<1x1x16x384xbf16>,
    %c0_8 = arith.constant 0 : index
    %c17 = arith.constant 17 : index
    %c0_9 = arith.constant 0 : index
    %c0_10 = arith.constant 0 : index
    %4 = vector.load %arg9[%c0_8, %c17, %c0_9, %c0_10] : memref<1x18x16x384xbf16, #tpu.memory_space<vmem>>, vector<1x1x16x384xbf16>
    tpu.vector_store %arg9[%c0_8, %c17, %c0_9, %c0_10], %1 {strides = array<i32>} : memref<1x18x16x384xbf16, #tpu.memory_space<vmem>>, vector<1x1x16x384xbf16>,
    %c0_11 = arith.constant 0 : index
    %c1 = arith.constant 1 : index
    %c0_12 = arith.constant 0 : index
    %c0_13 = arith.constant 0 : index
    %5 = vector.load %arg9[%c0_11, %c1, %c0_12, %c0_13] : memref<1x18x16x384xbf16, #tpu.memory_space<vmem>>, vector<1x16x1x128xbf16>
    tpu.vector_store %arg9[%c0_11, %c1, %c0_12, %c0_13], %2 {strides = array<i32>} : memref<1x18x16x384xbf16, #tpu.memory_space<vmem>>, vector<1x16x1x128xbf16>,
    %6 = vector.extract_strided_slice %0 {offsets = [0, 0, 0, 0], sizes = [1, 16, 15, 128], strides = [1, 1, 1, 1]} : vector<1x16x16x128xbf16> to vector<1x16x15x128xbf16>
    %c0_14 = arith.constant 0 : index
    %c1_15 = arith.constant 1 : index
    %c1_16 = arith.constant 1 : index
    %c0_17 = arith.constant 0 : index
    %7 = vector.load %arg9[%c0_14, %c1_15, %c1_16, %c0_17] : memref<1x18x16x384xbf16, #tpu.memory_space<vmem>>, vector<1x16x15x128xbf16>
    tpu.vector_store %arg9[%c0_14, %c1_15, %c1_16, %c0_17], %6 {strides = array<i32>} : memref<1x18x16x384xbf16, #tpu.memory_space<vmem>>, vector<1x16x15x128xbf16>,
    %c0_18 = arith.constant 0 : index
    %c1_19 = arith.constant 1 : index
    %c0_20 = arith.constant 0 : index
    %c128 = arith.constant 128 : index
    %8 = vector.load %arg9[%c0_18, %c1_19, %c0_20, %c128] : memref<1x18x16x384xbf16, #tpu.memory_space<vmem>>, vector<1x16x16x128xbf16>
    tpu.vector_store %arg9[%c0_18, %c1_19, %c0_20, %c128], %0 {strides = array<i32>} : memref<1x18x16x384xbf16, #tpu.memory_space<vmem>>, vector<1x16x16x128xbf16>,
    %9 = vector.extract_strided_slice %0 {offsets = [0, 0, 1, 0], sizes = [1, 16, 15, 128], strides = [1, 1, 1, 1]} : vector<1x16x16x128xbf16> to vector<1x16x15x128xbf16>
    %c0_21 = arith.constant 0 : index
    %c1_22 = arith.constant 1 : index
    %c0_23 = arith.constant 0 : index
    %c256 = arith.constant 256 : index
    %10 = vector.load %arg9[%c0_21, %c1_22, %c0_23, %c256] : memref<1x18x16x384xbf16, #tpu.memory_space<vmem>>, vector<1x16x15x128xbf16>
    tpu.vector_store %arg9[%c0_21, %c1_22, %c0_23, %c256], %9 {strides = array<i32>} : memref<1x18x16x384xbf16, #tpu.memory_space<vmem>>, vector<1x16x15x128xbf16>,
    %c0_24 = arith.constant 0 : index
    %c1_25 = arith.constant 1 : index
    %c15 = arith.constant 15 : index
    %c256_26 = arith.constant 256 : index
    %11 = vector.load %arg9[%c0_24, %c1_25, %c15, %c256_26] : memref<1x18x16x384xbf16, #tpu.memory_space<vmem>>, vector<1x16x1x128xbf16>
    tpu.vector_store %arg9[%c0_24, %c1_25, %c15, %c256_26], %2 {strides = array<i32>} : memref<1x18x16x384xbf16, #tpu.memory_space<vmem>>, vector<1x16x1x128xbf16>,
    %c0_27 = arith.constant 0 : index
    %c0_28 = arith.constant 0 : index
    %c0_29 = arith.constant 0 : index
    %c0_30 = arith.constant 0 : index
    %12 = vector.load %arg9[%c0_27, %c0_28, %c0_29, %c0_30] : memref<1x18x16x384xbf16, #tpu.memory_space<vmem>>, vector<1x16x16x384xbf16>
    %13 = vector.shape_cast %12 : vector<1x16x16x384xbf16> to vector<256x384xbf16>
    %c0_31 = arith.constant 0 : index
    %c0_32 = arith.constant 0 : index
    %c0_33 = arith.constant 0 : index
    %14 = vector.load %arg2[%c0_31, %c0_32, %c0_33] : memref<3x384x128xbf16, #tpu.memory_space<vmem>>, vector<1x384x128xbf16>
    %15 = vector.shape_cast %14 : vector<1x384x128xbf16> to vector<384x128xbf16>
    %cst_34 = arith.constant dense<0.000000e+00> : vector<256x128xf32>
    %16 = tpu.matmul %13, %15, %cst_34 {dimension_numbers = #tpu.dot_dimension_numbers<[1], [0], [0], [1], [0, 0, 1, 1], [], []>} : vector<256x384xbf16>, vector<384x128xbf16>, vector<256x128xf32> -> vector<256x128xf32>
    %c0_35 = arith.constant 0 : index
    %c1_36 = arith.constant 1 : index
    %c0_37 = arith.constant 0 : index
    %c0_38 = arith.constant 0 : index
    %17 = vector.load %arg9[%c0_35, %c1_36, %c0_37, %c0_38] : memref<1x18x16x384xbf16, #tpu.memory_space<vmem>>, vector<1x16x16x384xbf16>
    %18 = vector.shape_cast %17 : vector<1x16x16x384xbf16> to vector<256x384xbf16>
    %c1_39 = arith.constant 1 : index
    %c0_40 = arith.constant 0 : index
    %c0_41 = arith.constant 0 : index
    %19 = vector.load %arg2[%c1_39, %c0_40, %c0_41] : memref<3x384x128xbf16, #tpu.memory_space<vmem>>, vector<1x384x128xbf16>
    %20 = vector.shape_cast %19 : vector<1x384x128xbf16> to vector<384x128xbf16>
    %cst_42 = arith.constant dense<0.000000e+00> : vector<256x128xf32>
    %21 = tpu.matmul %18, %20, %cst_42 {dimension_numbers = #tpu.dot_dimension_numbers<[1], [0], [0], [1], [0, 0, 1, 1], [], []>} : vector<256x384xbf16>, vector<384x128xbf16>, vector<256x128xf32> -> vector<256x128xf32>
    %22 = arith.addf %16, %21 : vector<256x128xf32>
    %c0_43 = arith.constant 0 : index
    %c2 = arith.constant 2 : index
    %c0_44 = arith.constant 0 : index
    %c0_45 = arith.constant 0 : index
    %23 = vector.load %arg9[%c0_43, %c2, %c0_44, %c0_45] : memref<1x18x16x384xbf16, #tpu.memory_space<vmem>>, vector<1x16x16x384xbf16>
    %24 = vector.shape_cast %23 : vector<1x16x16x384xbf16> to vector<256x384xbf16>
    %c2_46 = arith.constant 2 : index
    %c0_47 = arith.constant 0 : index
    %c0_48 = arith.constant 0 : index
    %25 = vector.load %arg2[%c2_46, %c0_47, %c0_48] : memref<3x384x128xbf16, #tpu.memory_space<vmem>>, vector<1x384x128xbf16>
    %26 = vector.shape_cast %25 : vector<1x384x128xbf16> to vector<384x128xbf16>
    %cst_49 = arith.constant dense<0.000000e+00> : vector<256x128xf32>
    %27 = tpu.matmul %24, %26, %cst_49 {dimension_numbers = #tpu.dot_dimension_numbers<[1], [0], [0], [1], [0, 0, 1, 1], [], []>} : vector<256x384xbf16>, vector<384x128xbf16>, vector<256x128xf32> -> vector<256x128xf32>
    %28 = arith.addf %22, %27 : vector<256x128xf32>
    %c0_50 = arith.constant 0 : index
    %c0_51 = arith.constant 0 : index
    %29 = vector.load %arg3[%c0_50, %c0_51] : memref<1x128xf32, #tpu.memory_space<vmem>>, vector<1x128xf32>
    %30 = vector.broadcast %29 : vector<1x128xf32> to vector<256x128xf32>
    %31 = arith.addf %28, %30 : vector<256x128xf32>
    %cst_52 = arith.constant 0.000000e+00 : f32
    %32 = vector.broadcast %cst_52 : f32 to vector<256x128xf32>
    %33 = arith.maximumf %31, %32 : vector<256x128xf32>
    %34 = arith.truncf %33 : vector<256x128xf32> to vector<256x128xbf16>
    %35 = vector.shape_cast %34 : vector<256x128xbf16> to vector<1x16x16x128xbf16>
    %cst_53 = arith.constant 0.000000e+00 : bf16
    %36 = vector.broadcast %cst_53 : bf16 to vector<1x1x16x384xbf16>
    %cst_54 = arith.constant 0.000000e+00 : bf16
    %37 = vector.broadcast %cst_54 : bf16 to vector<1x16x1x128xbf16>
    %c0_55 = arith.constant 0 : index
    %c0_56 = arith.constant 0 : index
    %c0_57 = arith.constant 0 : index
    %c0_58 = arith.constant 0 : index
    %38 = vector.load %arg10[%c0_55, %c0_56, %c0_57, %c0_58] : memref<1x18x16x384xbf16, #tpu.memory_space<vmem>>, vector<1x1x16x384xbf16>
    tpu.vector_store %arg10[%c0_55, %c0_56, %c0_57, %c0_58], %36 {strides = array<i32>} : memref<1x18x16x384xbf16, #tpu.memory_space<vmem>>, vector<1x1x16x384xbf16>,
    %c0_59 = arith.constant 0 : index
    %c17_60 = arith.constant 17 : index
    %c0_61 = arith.constant 0 : index
    %c0_62 = arith.constant 0 : index
    %39 = vector.load %arg10[%c0_59, %c17_60, %c0_61, %c0_62] : memref<1x18x16x384xbf16, #tpu.memory_space<vmem>>, vector<1x1x16x384xbf16>
    tpu.vector_store %arg10[%c0_59, %c17_60, %c0_61, %c0_62], %36 {strides = array<i32>} : memref<1x18x16x384xbf16, #tpu.memory_space<vmem>>, vector<1x1x16x384xbf16>,
    %c0_63 = arith.constant 0 : index
    %c1_64 = arith.constant 1 : index
    %c0_65 = arith.constant 0 : index
    %c0_66 = arith.constant 0 : index
    %40 = vector.load %arg10[%c0_63, %c1_64, %c0_65, %c0_66] : memref<1x18x16x384xbf16, #tpu.memory_space<vmem>>, vector<1x16x1x128xbf16>
    tpu.vector_store %arg10[%c0_63, %c1_64, %c0_65, %c0_66], %37 {strides = array<i32>} : memref<1x18x16x384xbf16, #tpu.memory_space<vmem>>, vector<1x16x1x128xbf16>,
    %41 = vector.extract_strided_slice %35 {offsets = [0, 0, 0, 0], sizes = [1, 16, 15, 128], strides = [1, 1, 1, 1]} : vector<1x16x16x128xbf16> to vector<1x16x15x128xbf16>
    %c0_67 = arith.constant 0 : index
    %c1_68 = arith.constant 1 : index
    %c1_69 = arith.constant 1 : index
    %c0_70 = arith.constant 0 : index
    %42 = vector.load %arg10[%c0_67, %c1_68, %c1_69, %c0_70] : memref<1x18x16x384xbf16, #tpu.memory_space<vmem>>, vector<1x16x15x128xbf16>
    tpu.vector_store %arg10[%c0_67, %c1_68, %c1_69, %c0_70], %41 {strides = array<i32>} : memref<1x18x16x384xbf16, #tpu.memory_space<vmem>>, vector<1x16x15x128xbf16>,
    %c0_71 = arith.constant 0 : index
    %c1_72 = arith.constant 1 : index
    %c0_73 = arith.constant 0 : index
    %c128_74 = arith.constant 128 : index
    %43 = vector.load %arg10[%c0_71, %c1_72, %c0_73, %c128_74] : memref<1x18x16x384xbf16, #tpu.memory_space<vmem>>, vector<1x16x16x128xbf16>
    tpu.vector_store %arg10[%c0_71, %c1_72, %c0_73, %c128_74], %35 {strides = array<i32>} : memref<1x18x16x384xbf16, #tpu.memory_space<vmem>>, vector<1x16x16x128xbf16>,
    %44 = vector.extract_strided_slice %35 {offsets = [0, 0, 1, 0], sizes = [1, 16, 15, 128], strides = [1, 1, 1, 1]} : vector<1x16x16x128xbf16> to vector<1x16x15x128xbf16>
    %c0_75 = arith.constant 0 : index
    %c1_76 = arith.constant 1 : index
    %c0_77 = arith.constant 0 : index
    %c256_78 = arith.constant 256 : index
    %45 = vector.load %arg10[%c0_75, %c1_76, %c0_77, %c256_78] : memref<1x18x16x384xbf16, #tpu.memory_space<vmem>>, vector<1x16x15x128xbf16>
    tpu.vector_store %arg10[%c0_75, %c1_76, %c0_77, %c256_78], %44 {strides = array<i32>} : memref<1x18x16x384xbf16, #tpu.memory_space<vmem>>, vector<1x16x15x128xbf16>,
    %c0_79 = arith.constant 0 : index
    %c1_80 = arith.constant 1 : index
    %c15_81 = arith.constant 15 : index
    %c256_82 = arith.constant 256 : index
    %46 = vector.load %arg10[%c0_79, %c1_80, %c15_81, %c256_82] : memref<1x18x16x384xbf16, #tpu.memory_space<vmem>>, vector<1x16x1x128xbf16>
    tpu.vector_store %arg10[%c0_79, %c1_80, %c15_81, %c256_82], %37 {strides = array<i32>} : memref<1x18x16x384xbf16, #tpu.memory_space<vmem>>, vector<1x16x1x128xbf16>,
    %c0_83 = arith.constant 0 : index
    %c0_84 = arith.constant 0 : index
    %c0_85 = arith.constant 0 : index
    %c0_86 = arith.constant 0 : index
    %47 = vector.load %arg10[%c0_83, %c0_84, %c0_85, %c0_86] : memref<1x18x16x384xbf16, #tpu.memory_space<vmem>>, vector<1x16x16x384xbf16>
    %48 = vector.shape_cast %47 : vector<1x16x16x384xbf16> to vector<256x384xbf16>
    %c0_87 = arith.constant 0 : index
    %c0_88 = arith.constant 0 : index
    %c0_89 = arith.constant 0 : index
    %49 = vector.load %arg4[%c0_87, %c0_88, %c0_89] : memref<3x384x128xbf16, #tpu.memory_space<vmem>>, vector<1x384x128xbf16>
    %50 = vector.shape_cast %49 : vector<1x384x128xbf16> to vector<384x128xbf16>
    %cst_90 = arith.constant dense<0.000000e+00> : vector<256x128xf32>
    %51 = tpu.matmul %48, %50, %cst_90 {dimension_numbers = #tpu.dot_dimension_numbers<[1], [0], [0], [1], [0, 0, 1, 1], [], []>} : vector<256x384xbf16>, vector<384x128xbf16>, vector<256x128xf32> -> vector<256x128xf32>
    %c0_91 = arith.constant 0 : index
    %c1_92 = arith.constant 1 : index
    %c0_93 = arith.constant 0 : index
    %c0_94 = arith.constant 0 : index
    %52 = vector.load %arg10[%c0_91, %c1_92, %c0_93, %c0_94] : memref<1x18x16x384xbf16, #tpu.memory_space<vmem>>, vector<1x16x16x384xbf16>
    %53 = vector.shape_cast %52 : vector<1x16x16x384xbf16> to vector<256x384xbf16>
    %c1_95 = arith.constant 1 : index
    %c0_96 = arith.constant 0 : index
    %c0_97 = arith.constant 0 : index
    %54 = vector.load %arg4[%c1_95, %c0_96, %c0_97] : memref<3x384x128xbf16, #tpu.memory_space<vmem>>, vector<1x384x128xbf16>
    %55 = vector.shape_cast %54 : vector<1x384x128xbf16> to vector<384x128xbf16>
    %cst_98 = arith.constant dense<0.000000e+00> : vector<256x128xf32>
    %56 = tpu.matmul %53, %55, %cst_98 {dimension_numbers = #tpu.dot_dimension_numbers<[1], [0], [0], [1], [0, 0, 1, 1], [], []>} : vector<256x384xbf16>, vector<384x128xbf16>, vector<256x128xf32> -> vector<256x128xf32>
    %57 = arith.addf %51, %56 : vector<256x128xf32>
    %c0_99 = arith.constant 0 : index
    %c2_100 = arith.constant 2 : index
    %c0_101 = arith.constant 0 : index
    %c0_102 = arith.constant 0 : index
    %58 = vector.load %arg10[%c0_99, %c2_100, %c0_101, %c0_102] : memref<1x18x16x384xbf16, #tpu.memory_space<vmem>>, vector<1x16x16x384xbf16>
    %59 = vector.shape_cast %58 : vector<1x16x16x384xbf16> to vector<256x384xbf16>
    %c2_103 = arith.constant 2 : index
    %c0_104 = arith.constant 0 : index
    %c0_105 = arith.constant 0 : index
    %60 = vector.load %arg4[%c2_103, %c0_104, %c0_105] : memref<3x384x128xbf16, #tpu.memory_space<vmem>>, vector<1x384x128xbf16>
    %61 = vector.shape_cast %60 : vector<1x384x128xbf16> to vector<384x128xbf16>
    %cst_106 = arith.constant dense<0.000000e+00> : vector<256x128xf32>
    %62 = tpu.matmul %59, %61, %cst_106 {dimension_numbers = #tpu.dot_dimension_numbers<[1], [0], [0], [1], [0, 0, 1, 1], [], []>} : vector<256x384xbf16>, vector<384x128xbf16>, vector<256x128xf32> -> vector<256x128xf32>
    %63 = arith.addf %57, %62 : vector<256x128xf32>
    %c0_107 = arith.constant 0 : index
    %c0_108 = arith.constant 0 : index
    %64 = vector.load %arg5[%c0_107, %c0_108] : memref<1x128xf32, #tpu.memory_space<vmem>>, vector<1x128xf32>
    %65 = vector.broadcast %64 : vector<1x128xf32> to vector<256x128xf32>
    %66 = arith.addf %63, %65 : vector<256x128xf32>
    %c0_109 = arith.constant 0 : index
    %c0_110 = arith.constant 0 : index
    %67 = vector.load %arg6[%c0_109, %c0_110] : memref<384x128xbf16, #tpu.memory_space<vmem>>, vector<384x128xbf16>
    %cst_111 = arith.constant dense<0.000000e+00> : vector<256x128xf32>
    %68 = tpu.matmul %18, %67, %cst_111 {dimension_numbers = #tpu.dot_dimension_numbers<[1], [0], [0], [1], [0, 0, 1, 1], [], []>} : vector<256x384xbf16>, vector<384x128xbf16>, vector<256x128xf32> -> vector<256x128xf32>
    %c0_112 = arith.constant 0 : index
    %c0_113 = arith.constant 0 : index
    %69 = vector.load %arg7[%c0_112, %c0_113] : memref<1x128xf32, #tpu.memory_space<vmem>>, vector<1x128xf32>
    %70 = vector.broadcast %69 : vector<1x128xf32> to vector<256x128xf32>
    %71 = arith.addf %68, %70 : vector<256x128xf32>
    %72 = arith.addf %66, %71 : vector<256x128xf32>
    %cst_114 = arith.constant 0.000000e+00 : f32
    %73 = vector.broadcast %cst_114 : f32 to vector<256x128xf32>
    %74 = arith.maximumf %72, %73 : vector<256x128xf32>
    %75 = vector.shape_cast %74 : vector<256x128xf32> to vector<1x16x16x128xf32>
    %c0_115 = arith.constant 0 : index
    %c0_116 = arith.constant 0 : index
    %c0_117 = arith.constant 0 : index
    %c0_118 = arith.constant 0 : index
    %76 = vector.load %arg8[%c0_115, %c0_116, %c0_117, %c0_118] : memref<1x16x16x128xf32, #tpu.memory_space<vmem>>, vector<1x16x16x128xf32>
    tpu.vector_store %arg8[%c0_115, %c0_116, %c0_117, %c0_118], %75 {strides = array<i32>} : memref<1x16x16x128xf32, #tpu.memory_space<vmem>>, vector<1x16x16x128xf32>,
    return
  }
  func.func @transform_0(%arg0: i32) -> (i32, i32, i32, i32) {
    %c0_i32 = arith.constant 0 : i32
    %c0_i32_0 = arith.constant 0 : i32
    %c0_i32_1 = arith.constant 0 : i32
    %c0_i32_2 = arith.constant 0 : i32
    return %arg0, %c0_i32, %c0_i32_0, %c0_i32_1 : i32, i32, i32, i32
  }
  func.func @transform_1(%arg0: i32) -> (i32, i32, i32) {
    %c0_i32 = arith.constant 0 : i32
    %c0_i32_0 = arith.constant 0 : i32
    %c0_i32_1 = arith.constant 0 : i32
    %c0_i32_2 = arith.constant 0 : i32
    return %c0_i32, %c0_i32_0, %c0_i32_1 : i32, i32, i32
  }
  func.func @transform_2(%arg0: i32) -> (i32, i32) {
    %c0_i32 = arith.constant 0 : i32
    %c0_i32_0 = arith.constant 0 : i32
    %c0_i32_1 = arith.constant 0 : i32
    return %c0_i32, %c0_i32_0 : i32, i32
  }
  func.func @transform_3(%arg0: i32) -> (i32, i32, i32) {
    %c0_i32 = arith.constant 0 : i32
    %c0_i32_0 = arith.constant 0 : i32
    %c0_i32_1 = arith.constant 0 : i32
    %c0_i32_2 = arith.constant 0 : i32
    return %c0_i32, %c0_i32_0, %c0_i32_1 : i32, i32, i32
  }
  func.func @transform_4(%arg0: i32) -> (i32, i32) {
    %c0_i32 = arith.constant 0 : i32
    %c0_i32_0 = arith.constant 0 : i32
    %c0_i32_1 = arith.constant 0 : i32
    return %c0_i32, %c0_i32_0 : i32, i32
  }
  func.func @transform_5(%arg0: i32) -> (i32, i32) {
    %c0_i32 = arith.constant 0 : i32
    %c0_i32_0 = arith.constant 0 : i32
    %c0_i32_1 = arith.constant 0 : i32
    return %c0_i32, %c0_i32_0 : i32, i32
  }
  func.func @transform_6(%arg0: i32) -> (i32, i32) {
    %c0_i32 = arith.constant 0 : i32
    %c0_i32_0 = arith.constant 0 : i32
    %c0_i32_1 = arith.constant 0 : i32
    return %c0_i32, %c0_i32_0 : i32, i32
  }
  func.func @transform_7(%arg0: i32) -> (i32, i32, i32, i32) {
    %c0_i32 = arith.constant 0 : i32
    %c0_i32_0 = arith.constant 0 : i32
    %c0_i32_1 = arith.constant 0 : i32
    %c0_i32_2 = arith.constant 0 : i32
    return %arg0, %c0_i32, %c0_i32_0, %c0_i32_1 : i32, i32, i32, i32
  }
}

</mosaic_0001>

<llo_original>
// kernel: tpu_custom_call.1
$region0: #{tpu_custom_call.1}
  #allocation0 [shape = 'u32[]', space=smem, size = 0x4, offset = 0x4, fixed_abs, tag = 'smem constant byte address 0x4 - core index']
  #allocation1 [shape = 'u32[144,128]{1,0:T(1,128)}', space=vmem, size = 0x12000, scoped, tag = 'internal scratch']
  #allocation2 [shape = 'bf16[1,18,16,384]{3,2,1,0:T(8,128)(2,1)}', space=vmem, size = 0x36000, scoped, tag = 'scratch operand']
  #allocation3 [shape = 'bf16[1,18,16,384]{3,2,1,0:T(8,128)(2,1)}', space=vmem, size = 0x36000, scoped, tag = 'scratch operand']
  %s0 = inlined_call_operand.hbm [shape: bf16[2,16,16,128], index: 0, kind: input, shape index: {}]
  %s1 = inlined_call_operand.hbm [shape: bf16[3,384,128], index: 1, kind: input, shape index: {}]
  %s2 = inlined_call_operand.vmem [shape: f32[1,128], index: 2, kind: input, shape index: {}]
  %s3 = inlined_call_operand.hbm [shape: bf16[3,384,128], index: 3, kind: input, shape index: {}]
  %s4 = inlined_call_operand.vmem [shape: f32[1,128], index: 4, kind: input, shape index: {}]
  %s5 = inlined_call_operand.hbm [shape: bf16[384,128], index: 5, kind: input, shape index: {}]
  %s6 = inlined_call_operand.vmem [shape: f32[1,128], index: 6, kind: input, shape index: {}]
  %s7 = inlined_call_operand.hbm [shape: f32[2,16,16,128], index: 7, kind: output, shape index: {}]
  %s8 = sld [smem:[#allocation0]]
  $region77: #{tpu_custom_call.1} parent=0
    _
  %s10 = ssub.s32 1, %s8
  %s11 = scalar_select 0, %s10, %s8
  $region1: #{tpu_custom_call.1} parent=0
    #allocation4 [shape = 'u8[131072]{0}', space=vmem, size = 0x20000, scoped, tag = 'input window, operand 0']
    #allocation5 [shape = 's32[2]{0}', space=sflag, size = 0x8, scoped, tag = 'scoped memory for tpu_custom_call.1']
    #allocation6 [shape = 's32[2]{0}', space=sflag, size = 0x8, scoped, tag = 'scoped memory for tpu_custom_call.1']
    #allocation7 [shape = 'u8[294912]{0}', space=vmem, size = 0x48000, scoped, tag = 'input window, operand 1, single buffered']
    #allocation8 [shape = 's32[1]{0}', space=sflag, size = 0x4, scoped, tag = 'scoped memory for tpu_custom_call.1']
    #allocation9 [shape = 'u8[294912]{0}', space=vmem, size = 0x48000, scoped, tag = 'input window, operand 3, single buffered']
    #allocation10 [shape = 'u8[98304]{0}', space=vmem, size = 0x18000, scoped, tag = 'input window, operand 5, single buffered']
    #allocation11 [shape = 's32[1]{0}', space=sflag, size = 0x4, scoped, tag = 'scoped memory for tpu_custom_call.1']
    #allocation12 [shape = 'u8[262144]{0}', space=vmem, size = 0x40000, scoped, tag = 'output window, operand 0']
    %12 = vsyncpa [#allocation5], 0
    %s13 = scalar_lea.sflag [#allocation5], 1
    %14 = vsyncpa %s13, 0
    %15 = vsyncpa [#allocation8], 0
    %16 = vsyncpa [#allocation11], 0
    %17 = vsyncpa [#allocation6], 0
    %s18 = scalar_lea.sflag [#allocation6], 1
    %19 = vsyncpa %s18, 0
    loop: start=0, step=1, limit=4
    $region2: #{tpu_custom_call.1} parent=1 // loop_pre_header
      _
    $region3: #{tpu_custom_call.1} parent=1 // loop_header
      %s21 = sphi 0, %s25
      %p22 = scmp.ge.s32.totalorder %s21, 4
      %s31 = sphi 0, %s33
      %s34 = sphi 0, %s31
      %s35 = sphi 0, %s34
      %s51 = sphi 0, %s35
      %s55 = sphi 0, %s55
      %s57 = sphi 0, %s55
      %s58 = sphi 0, %s57
      %s72 = sphi 0, %s58
      %s76 = sphi 0, %s76
      %s78 = sphi 0, %s76
      %s79 = sphi 0, %s78
      %s93 = sphi 0, %s79
      %s97 = sphi 0, %s97
      %s99 = sphi 0, %s97
      %s100 = sphi 0, %s99
      %s114 = sphi 0, %s100
      %s118 = sphi 0, %s118
      %s120 = sphi 0, %s118
      %s121 = sphi 0, %s120
      %s135 = sphi 0, %s121
      %s139 = sphi 0, %s139
      %s141 = sphi 0, %s139
      %s142 = sphi 0, %s141
      %s156 = sphi 0, %s142
      %s160 = sphi 0, %s160
      %s162 = sphi 0, %s160
      %s163 = sphi 0, %s162
      %s177 = sphi 0, %s163
      %s183 = sphi 0, %s185
      %s186 = sphi 0, %s183
      %s187 = sphi 0, %s186
      %s203 = sphi 0, %s187
    $region4: #{tpu_custom_call.1} parent=1 // loop_header_branch
      %24 = sbr.rel (%p22) target = $region8
    $region5: #{tpu_custom_call.1} parent=1 // loop_body
      %s26 = ssub.s32 %s21, 1
      %s27 = ssub.s32 %s21, 2
      %s28 = sadd.s32 %s21, 1
      %s29 = ssub.s32 %s21, %s28
      %p30 = scmp.eq.s32.totalorder %s29, 0
      %s32 = sadd.s32 %s31, 1
      %s33 = scalar_select %p30, %s31, %s32
      %p36 = pneg %p30
      %p37 = scmp.eq.s32.totalorder %s21, 1
      %p38 = por %p36, %p37
      %p39 = scmp.ne.s32.totalorder %s31, %s34
      %p40 = scmp.eq.s32.totalorder %s21, 0
      %p41 = por %p39, %p40
      %p42 = scmp.ne.s32.totalorder %s31, %s34
      %p43 = scmp.eq.s32.totalorder %s26, 1
      %p44 = por %p42, %p43
      %p45 = scmp.ne.s32.totalorder %s34, %s35
      %p46 = scmp.eq.s32.totalorder %s26, 0
      %p47 = por %p45, %p46
      %p48 = scmp.ne.s32.totalorder %s34, %s35
      %p49 = scmp.eq.s32.totalorder %s27, 1
      %p50 = por %p48, %p49
      %p52 = scmp.ne.s32.totalorder %s35, %s51
      %p53 = scmp.eq.s32.totalorder %s27, 0
      %p54 = por %p52, %p53
      %s56 = sadd.s32 %s55, 1
      %p59 = scmp.eq.s32.totalorder %s21, 1
      %p60 = scmp.ne.s32.totalorder %s55, %s57
      %p61 = scmp.eq.s32.totalorder %s21, 0
      %p62 = por %p60, %p61
      %p63 = scmp.ne.s32.totalorder %s55, %s57
      %p64 = scmp.eq.s32.totalorder %s26, 1
      %p65 = por %p63, %p64
      %p66 = scmp.ne.s32.totalorder %s57, %s58
      %p67 = scmp.eq.s32.totalorder %s26, 0
      %p68 = por %p66, %p67
      %p69 = scmp.ne.s32.totalorder %s57, %s58
      %p70 = scmp.eq.s32.totalorder %s27, 1
      %p71 = por %p69, %p70
      %p73 = scmp.ne.s32.totalorder %s58, %s72
      %p74 = scmp.eq.s32.totalorder %s27, 0
      %p75 = por %p73, %p74
      %s77 = sadd.s32 %s76, 1
      %p80 = scmp.eq.s32.totalorder %s21, 1
      %p81 = scmp.ne.s32.totalorder %s76, %s78
      %p82 = scmp.eq.s32.totalorder %s21, 0
      %p83 = por %p81, %p82
      %p84 = scmp.ne.s32.totalorder %s76, %s78
      %p85 = scmp.eq.s32.totalorder %s26, 1
      %p86 = por %p84, %p85
      %p87 = scmp.ne.s32.totalorder %s78, %s79
      %p88 = scmp.eq.s32.totalorder %s26, 0
      %p89 = por %p87, %p88
      %p90 = scmp.ne.s32.totalorder %s78, %s79
      %p91 = scmp.eq.s32.totalorder %s27, 1
      %p92 = por %p90, %p91
      %p94 = scmp.ne.s32.totalorder %s79, %s93
      %p95 = scmp.eq.s32.totalorder %s27, 0
      %p96 = por %p94, %p95
      %s98 = sadd.s32 %s97, 1
      %p101 = scmp.eq.s32.totalorder %s21, 1
      %p102 = scmp.ne.s32.totalorder %s97, %s99
      %p103 = scmp.eq.s32.totalorder %s21, 0
      %p104 = por %p102, %p103
      %p105 = scmp.ne.s32.totalorder %s97, %s99
      %p106 = scmp.eq.s32.totalorder %s26, 1
      %p107 = por %p105, %p106
      %p108 = scmp.ne.s32.totalorder %s99, %s100
      %p109 = scmp.eq.s32.totalorder %s26, 0
      %p110 = por %p108, %p109
      %p111 = scmp.ne.s32.totalorder %s99, %s100
      %p112 = scmp.eq.s32.totalorder %s27, 1
      %p113 = por %p111, %p112
      %p115 = scmp.ne.s32.totalorder %s100, %s114
      %p116 = scmp.eq.s32.totalorder %s27, 0
      %p117 = por %p115, %p116
      %s119 = sadd.s32 %s118, 1
      %p122 = scmp.eq.s32.totalorder %s21, 1
      %p123 = scmp.ne.s32.totalorder %s118, %s120
      %p124 = scmp.eq.s32.totalorder %s21, 0
      %p125 = por %p123, %p124
      %p126 = scmp.ne.s32.totalorder %s118, %s120
      %p127 = scmp.eq.s32.totalorder %s26, 1
      %p128 = por %p126, %p127
      %p129 = scmp.ne.s32.totalorder %s120, %s121
      %p130 = scmp.eq.s32.totalorder %s26, 0
      %p131 = por %p129, %p130
      %p132 = scmp.ne.s32.totalorder %s120, %s121
      %p133 = scmp.eq.s32.totalorder %s27, 1
      %p134 = por %p132, %p133
      %p136 = scmp.ne.s32.totalorder %s121, %s135
      %p137 = scmp.eq.s32.totalorder %s27, 0
      %p138 = por %p136, %p137
      %s140 = sadd.s32 %s139, 1
      %p143 = scmp.eq.s32.totalorder %s21, 1
      %p144 = scmp.ne.s32.totalorder %s139, %s141
      %p145 = scmp.eq.s32.totalorder %s21, 0
      %p146 = por %p144, %p145
      %p147 = scmp.ne.s32.totalorder %s139, %s141
      %p148 = scmp.eq.s32.totalorder %s26, 1
      %p149 = por %p147, %p148
      %p150 = scmp.ne.s32.totalorder %s141, %s142
      %p151 = scmp.eq.s32.totalorder %s26, 0
      %p152 = por %p150, %p151
      %p153 = scmp.ne.s32.totalorder %s141, %s142
      %p154 = scmp.eq.s32.totalorder %s27, 1
      %p155 = por %p153, %p154
      %p157 = scmp.ne.s32.totalorder %s142, %s156
      %p158 = scmp.eq.s32.totalorder %s27, 0
      %p159 = por %p157, %p158
      %s161 = sadd.s32 %s160, 1
      %p164 = scmp.eq.s32.totalorder %s21, 1
      %p165 = scmp.ne.s32.totalorder %s160, %s162
      %p166 = scmp.eq.s32.totalorder %s21, 0
      %p167 = por %p165, %p166
      %p168 = scmp.ne.s32.totalorder %s160, %s162
      %p169 = scmp.eq.s32.totalorder %s26, 1
      %p170 = por %p168, %p169
      %p171 = scmp.ne.s32.totalorder %s162, %s163
      %p172 = scmp.eq.s32.totalorder %s26, 0
      %p173 = por %p171, %p172
      %p174 = scmp.ne.s32.totalorder %s162, %s163
      %p175 = scmp.eq.s32.totalorder %s27, 1
      %p176 = por %p174, %p175
      %p178 = scmp.ne.s32.totalorder %s163, %s177
      %p179 = scmp.eq.s32.totalorder %s27, 0
      %p180 = por %p178, %p179
      %s181 = ssub.s32 %s21, %s28
      %p182 = scmp.eq.s32.totalorder %s181, 0
      %s184 = sadd.s32 %s183, 1
      %s185 = scalar_select %p182, %s183, %s184
      %p188 = pneg %p182
      %p189 = scmp.eq.s32.totalorder %s21, 1
      %p190 = por %p188, %p189
      %p191 = scmp.ne.s32.totalorder %s183, %s186
      %p192 = scmp.eq.s32.totalorder %s21, 0
      %p193 = por %p191, %p192
      %p194 = scmp.ne.s32.totalorder %s183, %s186
      %p195 = scmp.eq.s32.totalorder %s26, 1
      %p196 = por %p194, %p195
      %p197 = scmp.ne.s32.totalorder %s186, %s187
      %p198 = scmp.eq.s32.totalorder %s26, 0
      %p199 = por %p197, %p198
      %p200 = scmp.ne.s32.totalorder %s186, %s187
      %p201 = scmp.eq.s32.totalorder %s27, 1
      %p202 = por %p200, %p201
      %p204 = scmp.ne.s32.totalorder %s187, %s203
      %p205 = scmp.eq.s32.totalorder %s27, 0
      %p206 = por %p204, %p205
      %p207 = scmp.le.s32.totalorder 1, %s21
      %p208 = scmp.lt.s32.totalorder %s21, 3
      %p209 = pnand %p207, %p208
      %p210 = pneg %p209
      // Predicated region
      $region9: #{tpu_custom_call.1} parent=5 // pred_check
        _
      $region10: #{tpu_custom_call.1} parent=5 // pred_check_branch
        %212 = sbr.rel (%p209) target = $region12
      $region11: #{tpu_custom_call.1} parent=5 // pred_region
        %s213 = ssub.s32 %s21, 1
        // Predicated region
        $region13: #{tpu_custom_call.1} parent=11 // pred_check
          %p214 = pneg %p68
        $region14: #{tpu_custom_call.1} parent=11 // pred_check_branch
          %216 = sbr.rel (%p214) target = $region16
        $region15: #{tpu_custom_call.1} parent=11 // pred_region
          %s218 = ssub.s32 9216, 9216
          %219 = vsyncadd [#allocation8], %s218
          %s220 = sshll.u32 [#allocation7], 4
          %s221 = int_to_ptr.vmem [resolvable:$true] %s220
          %226 = dma.hbm_to_vmem [thread:$0]  %s1, 9216, %s221, [#allocation8], 64, 64, 4
        $region16: #{tpu_custom_call.1} parent=11 // pred_fallthru
          _
        // Predicated region
        $region17: #{tpu_custom_call.1} parent=11 // pred_check
          %p227 = pneg %p89
        $region18: #{tpu_custom_call.1} parent=11 // pred_check_branch
          %229 = sbr.rel (%p227) target = $region20
        $region19: #{tpu_custom_call.1} parent=11 // pred_region
          _
        $region20: #{tpu_custom_call.1} parent=11 // pred_fallthru
          _
        // Predicated region
        $region21: #{tpu_custom_call.1} parent=11 // pred_check
          %p230 = pneg %p110
        $region22: #{tpu_custom_call.1} parent=11 // pred_check_branch
          %232 = sbr.rel (%p230) target = $region24
        $region23: #{tpu_custom_call.1} parent=11 // pred_region
          %s234 = ssub.s32 9216, 9216
          %235 = vsyncadd [#allocation8], %s234
          %s236 = sshll.u32 [#allocation9], 4
          %s237 = int_to_ptr.vmem [resolvable:$true] %s236
          %242 = dma.hbm_to_vmem [thread:$0]  %s3, 9216, %s237, [#allocation8], 64, 64, 4
        $region24: #{tpu_custom_call.1} parent=11 // pred_fallthru
          _
        // Predicated region
        $region25: #{tpu_custom_call.1} parent=11 // pred_check
          %p243 = pneg %p131
        $region26: #{tpu_custom_call.1} parent=11 // pred_check_branch
          %245 = sbr.rel (%p243) target = $region28
        $region27: #{tpu_custom_call.1} parent=11 // pred_region
          _
        $region28: #{tpu_custom_call.1} parent=11 // pred_fallthru
          _
        // Predicated region
        $region29: #{tpu_custom_call.1} parent=11 // pred_check
          %p246 = pneg %p152
        $region30: #{tpu_custom_call.1} parent=11 // pred_check_branch
          %248 = sbr.rel (%p246) target = $region32
        $region31: #{tpu_custom_call.1} parent=11 // pred_region
          %s250 = ssub.s32 3072, 3072
          %251 = vsyncadd [#allocation11], %s250
          %s252 = sshll.u32 [#allocation10], 4
          %s253 = int_to_ptr.vmem [resolvable:$true] %s252
          %258 = dma.hbm_to_vmem [thread:$0]  %s5, 3072, %s253, [#allocation11], 64, 64, 4
        $region32: #{tpu_custom_call.1} parent=11 // pred_fallthru
          _
        // Predicated region
        $region33: #{tpu_custom_call.1} parent=11 // pred_check
          %p259 = pneg %p173
        $region34: #{tpu_custom_call.1} parent=11 // pred_check_branch
          %261 = sbr.rel (%p259) target = $region36
        $region35: #{tpu_custom_call.1} parent=11 // pred_region
          _
        $region36: #{tpu_custom_call.1} parent=11 // pred_fallthru
          _
      $region12: #{tpu_custom_call.1} parent=5 // pred_fallthru
        _
      %p262 = scmp.lt.s32.totalorder %s21, 2
      // Predicated region
      $region37: #{tpu_custom_call.1} parent=5 // pred_check
        %p263 = pneg %p262
      $region38: #{tpu_custom_call.1} parent=5 // pred_check_branch
        %265 = sbr.rel (%p263) target = $region40
      $region39: #{tpu_custom_call.1} parent=5 // pred_region
        // Predicated region
        $region41: #{tpu_custom_call.1} parent=39 // pred_check
          %p266 = pneg %p41
        $region42: #{tpu_custom_call.1} parent=39 // pred_check_branch
          %268 = sbr.rel (%p266) target = $region44
        $region43: #{tpu_custom_call.1} parent=39 // pred_region
          %s269 = sand.u32 %s31, 1
          %s270 = scalar_lea.sflag [#allocation5], %s269
          %s271 = sand.u32 %s31, 1
          %s272 = smul.addr %s271, 128
          %s273 = scalar_lea.vmem [#allocation4], %s272
          %s275 = ssub.s32 2048, 2048
          %276 = vsyncadd %s270, %s275
          %s277 = smul.addr %s21, 32
          %s278 = smul.addr %s277, 64
          %s279 = scalar_lea.hbm %s0, %s278
          %s280 = sshll.u32 %s273, 4
          %s281 = int_to_ptr.vmem [resolvable:$true] %s280
          %286 = dma.hbm_to_vmem [thread:$0]  %s279, 2048, %s281, %s270, 64, 64, 4
        $region44: #{tpu_custom_call.1} parent=39 // pred_fallthru
          _
      $region40: #{tpu_custom_call.1} parent=5 // pred_fallthru
        _
      %p287 = scmp.le.s32.totalorder 1, %s21
      %p288 = scmp.lt.s32.totalorder %s21, 3
      %p289 = pnand %p287, %p288
      %p290 = pneg %p289
      // Predicated region
      $region45: #{tpu_custom_call.1} parent=5 // pred_check
        _
      $region46: #{tpu_custom_call.1} parent=5 // pred_check_branch
        %292 = sbr.rel (%p289) target = $region48
      $region47: #{tpu_custom_call.1} parent=5 // pred_region
        %s293 = ssub.s32 %s21, 1
        %s294 = sand.u32 %s34, 1
        %s295 = scalar_lea.sflag [#allocation5], %s294
        %s296 = sand.u32 %s34, 1
        %s297 = smul.addr %s296, 128
        %s298 = scalar_lea.vmem [#allocation4], %s297
        // Predicated region
        $region49: #{tpu_custom_call.1} parent=47 // pred_check
          %p299 = pneg %p47
        $region50: #{tpu_custom_call.1} parent=47 // pred_check_branch
          %301 = sbr.rel (%p299) target = $region52
        $region51: #{tpu_custom_call.1} parent=47 // pred_region
          %302 = dma.done %s295, 2048
        $region52: #{tpu_custom_call.1} parent=47 // pred_fallthru
          _
        // Predicated region
        $region53: #{tpu_custom_call.1} parent=47 // pred_check
          %p303 = pneg %p68
        $region54: #{tpu_custom_call.1} parent=47 // pred_check_branch
          %305 = sbr.rel (%p303) target = $region56
        $region55: #{tpu_custom_call.1} parent=47 // pred_region
          %306 = dma.done [#allocation8], 9216
        $region56: #{tpu_custom_call.1} parent=47 // pred_fallthru
          _
        // Predicated region
        $region57: #{tpu_custom_call.1} parent=47 // pred_check
          %p307 = pneg %p110
        $region58: #{tpu_custom_call.1} parent=47 // pred_check_branch
          %309 = sbr.rel (%p307) target = $region60
        $region59: #{tpu_custom_call.1} parent=47 // pred_region
          %310 = dma.done [#allocation8], 9216
        $region60: #{tpu_custom_call.1} parent=47 // pred_fallthru
          _
        // Predicated region
        $region61: #{tpu_custom_call.1} parent=47 // pred_check
          %p311 = pneg %p152
        $region62: #{tpu_custom_call.1} parent=47 // pred_check_branch
          %313 = sbr.rel (%p311) target = $region64
        $region63: #{tpu_custom_call.1} parent=47 // pred_region
          %314 = dma.done [#allocation11], 3072
        $region64: #{tpu_custom_call.1} parent=47 // pred_fallthru
          _
        %s315 = sand.u32 %s34, 1
        %s316 = scalar_lea.sflag [#allocation5], %s315
        %s317 = sand.u32 %s34, 1
        %s318 = smul.addr %s317, 128
        %s319 = scalar_lea.vmem [#allocation4], %s318
        %p320 = pneg %p47
        %p321 = pneg %p44
        %p322 = pneg %p68
        %p323 = pneg %p65
        %p324 = pneg %p89
        %p325 = pneg %p86
        %p326 = pneg %p110
        %p327 = pneg %p107
        %p328 = pneg %p131
        %p329 = pneg %p128
        %p330 = pneg %p152
        %p331 = pneg %p149
        %p332 = pneg %p173
        %p333 = pneg %p170
        %p334 = pneg %p199
        %p335 = pneg %p196
        %s336 = sand.u32 %s186, 1
        %s337 = scalar_lea.sflag [#allocation6], %s336
        %s338 = sand.u32 %s186, 1
        %s339 = smul.addr %s338, 256
        %s340 = scalar_lea.vmem [#allocation12], %s339
        %v342 = vld [vmem:[%s298] sm:$0xf]
        %v343 = vld [vmem:[%s298 + $0x4] sm:$0xf]
        %v344 = vld [vmem:[%s298 + $0x8] sm:$0xf]
        %v345 = vld [vmem:[%s298 + $0xc] sm:$0xf]
        %v346 = vld [vmem:[%s298 + $0x10] sm:$0xf]
        %v347 = vld [vmem:[%s298 + $0x14] sm:$0xf]
        %v348 = vld [vmem:[%s298 + $0x18] sm:$0xf]
        %v349 = vld [vmem:[%s298 + $0x1c] sm:$0xf]
        %v350 = vld [vmem:[%s298 + $0x20] sm:$0xf]
        %v351 = vld [vmem:[%s298 + $0x24] sm:$0xf]
        %v352 = vld [vmem:[%s298 + $0x28] sm:$0xf]
        %v353 = vld [vmem:[%s298 + $0x2c] sm:$0xf]
        %v354 = vld [vmem:[%s298 + $0x30] sm:$0xf]
        %v355 = vld [vmem:[%s298 + $0x34] sm:$0xf]
        %v356 = vld [vmem:[%s298 + $0x38] sm:$0xf]
        %v357 = vld [vmem:[%s298 + $0x3c] sm:$0xf]
        %v358 = vld [vmem:[%s298 + $0x40] sm:$0xf]
        %v359 = vld [vmem:[%s298 + $0x44] sm:$0xf]
        %v360 = vld [vmem:[%s298 + $0x48] sm:$0xf]
        %v361 = vld [vmem:[%s298 + $0x4c] sm:$0xf]
        %v362 = vld [vmem:[%s298 + $0x50] sm:$0xf]
        %v363 = vld [vmem:[%s298 + $0x54] sm:$0xf]
        %v364 = vld [vmem:[%s298 + $0x58] sm:$0xf]
        %v365 = vld [vmem:[%s298 + $0x5c] sm:$0xf]
        %v366 = vld [vmem:[%s298 + $0x60] sm:$0xf]
        %v367 = vld [vmem:[%s298 + $0x64] sm:$0xf]
        %v368 = vld [vmem:[%s298 + $0x68] sm:$0xf]
        %v369 = vld [vmem:[%s298 + $0x6c] sm:$0xf]
        %v370 = vld [vmem:[%s298 + $0x70] sm:$0xf]
        %v371 = vld [vmem:[%s298 + $0x74] sm:$0xf]
        %v372 = vld [vmem:[%s298 + $0x78] sm:$0xf]
        %v373 = vld [vmem:[%s298 + $0x7c] sm:$0xf]
        %374 = vst [vmem:[#allocation2] sm:$0xff] 0
        %375 = vst [vmem:[#allocation2 + $0x8] sm:$0xf] 0
        %376 = vst [vmem:[#allocation2 + $0xc] sm:$0xff] 0
        %377 = vst [vmem:[#allocation2 + $0x14] sm:$0xf] 0
        %s378 = scalar_lea.vmem [#allocation2], 408
        %379 = vst [vmem:[%s378] sm:$0xff] 0
        %380 = vst [vmem:[%s378 + $0x8] sm:$0xf] 0
        %381 = vst [vmem:[%s378 + $0xc] sm:$0xff] 0
        %382 = vst [vmem:[%s378 + $0x14] sm:$0xf] 0
        %s383 = scalar_lea.vmem [#allocation2], 24
        %vm384 = vcmask 1040384
        %vm385 = vsmask.f32 256
        %vm386 = vmand %vm384, %vm385
        %v387 = vld [vmem:[%s383] sm:$0x1]
        %v388 = vsel %vm386, 0, %v387
        %389 = vst [vmem:[%s383] sm:$0x1] %v388
        %v390 = vld [vmem:[%s383 + $0x18] sm:$0x1]
        %v391 = vsel %vm386, 0, %v390
        %392 = vst [vmem:[%s383 + $0x18] sm:$0x1] %v391
        %v393 = vld [vmem:[%s383 + $0x30] sm:$0x1]
        %v394 = vsel %vm386, 0, %v393
        %395 = vst [vmem:[%s383 + $0x30] sm:$0x1] %v394
        %v396 = vld [vmem:[%s383 + $0x48] sm:$0x1]
        %v397 = vsel %vm386, 0, %v396
        %398 = vst [vmem:[%s383 + $0x48] sm:$0x1] %v397
        %v399 = vld [vmem:[%s383 + $0x60] sm:$0x1]
        %v400 = vsel %vm386, 0, %v399
        %401 = vst [vmem:[%s383 + $0x60] sm:$0x1] %v400
        %v402 = vld [vmem:[%s383 + $0x78] sm:$0x1]
        %v403 = vsel %vm386, 0, %v402
        %404 = vst [vmem:[%s383 + $0x78] sm:$0x1] %v403
        %v405 = vld [vmem:[%s383 + $0x90] sm:$0x1]
        %v406 = vsel %vm386, 0, %v405
        %407 = vst [vmem:[%s383 + $0x90] sm:$0x1] %v406
        %v408 = vld [vmem:[%s383 + $0xa8] sm:$0x1]
        %v409 = vsel %vm386, 0, %v408
        %410 = vst [vmem:[%s383 + $0xa8] sm:$0x1] %v409
        %v411 = vld [vmem:[%s383 + $0xc0] sm:$0x1]
        %v412 = vsel %vm386, 0, %v411
        %413 = vst [vmem:[%s383 + $0xc0] sm:$0x1] %v412
        %v414 = vld [vmem:[%s383 + $0xd8] sm:$0x1]
        %v415 = vsel %vm386, 0, %v414
        %416 = vst [vmem:[%s383 + $0xd8] sm:$0x1] %v415
        %v417 = vld [vmem:[%s383 + $0xf0] sm:$0x1]
        %v418 = vsel %vm386, 0, %v417
        %419 = vst [vmem:[%s383 + $0xf0] sm:$0x1] %v418
        %v420 = vld [vmem:[%s383 + $0x108] sm:$0x1]
        %v421 = vsel %vm386, 0, %v420
        %422 = vst [vmem:[%s383 + $0x108] sm:$0x1] %v421
        %v423 = vld [vmem:[%s383 + $0x120] sm:$0x1]
        %v424 = vsel %vm386, 0, %v423
        %425 = vst [vmem:[%s383 + $0x120] sm:$0x1] %v424
        %v426 = vld [vmem:[%s383 + $0x138] sm:$0x1]
        %v427 = vsel %vm386, 0, %v426
        %428 = vst [vmem:[%s383 + $0x138] sm:$0x1] %v427
        %v429 = vld [vmem:[%s383 + $0x150] sm:$0x1]
        %v430 = vsel %vm386, 0, %v429
        %431 = vst [vmem:[%s383 + $0x150] sm:$0x1] %v430
        %v432 = vld [vmem:[%s383 + $0x168] sm:$0x1]
        %v433 = vsel %vm386, 0, %v432
        %434 = vst [vmem:[%s383 + $0x168] sm:$0x1] %v433
        %vm435 = vsmask.f32 4368
        %vm436 = vmor %vm385, %vm435
        %v438 = vshrl.u32 %v342, 16
        %v440 = vrot.slane %v438, 7
        %v441 = vshll.u32 %v342, 16
        %v443 = vor.u32 %v440, %v441
        %v444 = vrot.slane %v440, 4
        %v446 = vshrl.u32 %v343, 16
        %v448 = vrot.slane %v446, 7
        %v449 = vshll.u32 %v343, 16
        %v451 = vor.u32 %v448, %v449
        %v452 = vsel %vm436, %v444, %v451
        %v454 = vshrl.u32 %v344, 16
        %v456 = vrot.slane %v454, 7
        %v457 = vshll.u32 %v344, 16
        %v459 = vor.u32 %v456, %v457
        %v460 = vrot.slane %v456, 4
        %v462 = vshrl.u32 %v345, 16
        %v464 = vrot.slane %v462, 7
        %v465 = vshll.u32 %v345, 16
        %v467 = vor.u32 %v464, %v465
        %v468 = vsel %vm436, %v460, %v467
        %v470 = vshrl.u32 %v346, 16
        %v472 = vrot.slane %v470, 7
        %v473 = vshll.u32 %v346, 16
        %v475 = vor.u32 %v472, %v473
        %v476 = vrot.slane %v472, 4
        %v478 = vshrl.u32 %v347, 16
        %v480 = vrot.slane %v478, 7
        %v481 = vshll.u32 %v347, 16
        %v483 = vor.u32 %v480, %v481
        %v484 = vsel %vm436, %v476, %v483
        %v486 = vshrl.u32 %v348, 16
        %v488 = vrot.slane %v486, 7
        %v489 = vshll.u32 %v348, 16
        %v491 = vor.u32 %v488, %v489
        %v492 = vrot.slane %v488, 4
        %v494 = vshrl.u32 %v349, 16
        %v496 = vrot.slane %v494, 7
        %v497 = vshll.u32 %v349, 16
        %v499 = vor.u32 %v496, %v497
        %v500 = vsel %vm436, %v492, %v499
        %v502 = vshrl.u32 %v350, 16
        %v504 = vrot.slane %v502, 7
        %v505 = vshll.u32 %v350, 16
        %v507 = vor.u32 %v504, %v505
        %v508 = vrot.slane %v504, 4
        %v510 = vshrl.u32 %v351, 16
        %v512 = vrot.slane %v510, 7
        %v513 = vshll.u32 %v351, 16
        %v515 = vor.u32 %v512, %v513
        %v516 = vsel %vm436, %v508, %v515
        %v518 = vshrl.u32 %v352, 16
        %v520 = vrot.slane %v518, 7
        %v521 = vshll.u32 %v352, 16
        %v523 = vor.u32 %v520, %v521
        %v524 = vrot.slane %v520, 4
        %v526 = vshrl.u32 %v353, 16
        %v528 = vrot.slane %v526, 7
        %v529 = vshll.u32 %v353, 16
        %v531 = vor.u32 %v528, %v529
        %v532 = vsel %vm436, %v524, %v531
        %v534 = vshrl.u32 %v354, 16
        %v536 = vrot.slane %v534, 7
        %v537 = vshll.u32 %v354, 16
        %v539 = vor.u32 %v536, %v537
        %v540 = vrot.slane %v536, 4
        %v542 = vshrl.u32 %v355, 16
        %v544 = vrot.slane %v542, 7
        %v545 = vshll.u32 %v355, 16
        %v547 = vor.u32 %v544, %v545
        %v548 = vsel %vm436, %v540, %v547
        %v550 = vshrl.u32 %v356, 16
        %v552 = vrot.slane %v550, 7
        %v553 = vshll.u32 %v356, 16
        %v555 = vor.u32 %v552, %v553
        %v556 = vrot.slane %v552, 4
        %v558 = vshrl.u32 %v357, 16
        %v560 = vrot.slane %v558, 7
        %v561 = vshll.u32 %v357, 16
        %v563 = vor.u32 %v560, %v561
        %v564 = vsel %vm436, %v556, %v563
        %v566 = vshrl.u32 %v358, 16
        %v568 = vrot.slane %v566, 7
        %v569 = vshll.u32 %v358, 16
        %v571 = vor.u32 %v568, %v569
        %v572 = vrot.slane %v568, 4
        %v574 = vshrl.u32 %v359, 16
        %v576 = vrot.slane %v574, 7
        %v577 = vshll.u32 %v359, 16
        %v579 = vor.u32 %v576, %v577
        %v580 = vsel %vm436, %v572, %v579
        %v582 = vshrl.u32 %v360, 16
        %v584 = vrot.slane %v582, 7
        %v585 = vshll.u32 %v360, 16
        %v587 = vor.u32 %v584, %v585
        %v588 = vrot.slane %v584, 4
        %v590 = vshrl.u32 %v361, 16
        %v592 = vrot.slane %v590, 7
        %v593 = vshll.u32 %v361, 16
        %v595 = vor.u32 %v592, %v593
        %v596 = vsel %vm436, %v588, %v595
        %v598 = vshrl.u32 %v362, 16
        %v600 = vrot.slane %v598, 7
        %v601 = vshll.u32 %v362, 16
        %v603 = vor.u32 %v600, %v601
        %v604 = vrot.slane %v600, 4
        %v606 = vshrl.u32 %v363, 16
        %v608 = vrot.slane %v606, 7
        %v609 = vshll.u32 %v363, 16
        %v611 = vor.u32 %v608, %v609
        %v612 = vsel %vm436, %v604, %v611
        %v614 = vshrl.u32 %v364, 16
        %v616 = vrot.slane %v614, 7
        %v617 = vshll.u32 %v364, 16
        %v619 = vor.u32 %v616, %v617
        %v620 = vrot.slane %v616, 4
        %v622 = vshrl.u32 %v365, 16
        %v624 = vrot.slane %v622, 7
        %v625 = vshll.u32 %v365, 16
        %v627 = vor.u32 %v624, %v625
        %v628 = vsel %vm436, %v620, %v627
        %v630 = vshrl.u32 %v366, 16
        %v632 = vrot.slane %v630, 7
        %v633 = vshll.u32 %v366, 16
        %v635 = vor.u32 %v632, %v633
        %v636 = vrot.slane %v632, 4
        %v638 = vshrl.u32 %v367, 16
        %v640 = vrot.slane %v638, 7
        %v641 = vshll.u32 %v367, 16
        %v643 = vor.u32 %v640, %v641
        %v644 = vsel %vm436, %v636, %v643
        %v646 = vshrl.u32 %v368, 16
        %v648 = vrot.slane %v646, 7
        %v649 = vshll.u32 %v368, 16
        %v651 = vor.u32 %v648, %v649
        %v652 = vrot.slane %v648, 4
        %v654 = vshrl.u32 %v369, 16
        %v656 = vrot.slane %v654, 7
        %v657 = vshll.u32 %v369, 16
        %v659 = vor.u32 %v656, %v657
        %v660 = vsel %vm436, %v652, %v659
        %v662 = vshrl.u32 %v370, 16
        %v664 = vrot.slane %v662, 7
        %v665 = vshll.u32 %v370, 16
        %v667 = vor.u32 %v664, %v665
        %v668 = vrot.slane %v664, 4
        %v670 = vshrl.u32 %v371, 16
        %v672 = vrot.slane %v670, 7
        %v673 = vshll.u32 %v371, 16
        %v675 = vor.u32 %v672, %v673
        %v676 = vsel %vm436, %v668, %v675
        %v678 = vshrl.u32 %v372, 16
        %v680 = vrot.slane %v678, 7
        %v681 = vshll.u32 %v372, 16
        %v683 = vor.u32 %v680, %v681
        %v684 = vrot.slane %v680, 4
        %v686 = vshrl.u32 %v373, 16
        %v688 = vrot.slane %v686, 7
        %v689 = vshll.u32 %v373, 16
        %v691 = vor.u32 %v688, %v689
        %v692 = vsel %vm436, %v684, %v691
        %vm725 = vcmask 1043456
        %vm726 = vsmask.f32 7938
        %vm727 = vmand %vm725, %vm726
        %v728 = vld [vmem:[%s383] sm:$0xf]
        %v729 = vsel %vm727, %v443, %v728
        %730 = vst [vmem:[%s383] sm:$0xf] %v729
        %731 = vst [vmem:[%s383 + $0xc] sm:$0xf] %v452
        %v732 = vld [vmem:[%s383 + $0x18] sm:$0xf]
        %v733 = vsel %vm727, %v459, %v732
        %734 = vst [vmem:[%s383 + $0x18] sm:$0xf] %v733
        %735 = vst [vmem:[%s383 + $0x24] sm:$0xf] %v468
        %v736 = vld [vmem:[%s383 + $0x30] sm:$0xf]
        %v737 = vsel %vm727, %v475, %v736
        %738 = vst [vmem:[%s383 + $0x30] sm:$0xf] %v737
        %739 = vst [vmem:[%s383 + $0x3c] sm:$0xf] %v484
        %v740 = vld [vmem:[%s383 + $0x48] sm:$0xf]
        %v741 = vsel %vm727, %v491, %v740
        %742 = vst [vmem:[%s383 + $0x48] sm:$0xf] %v741
        %743 = vst [vmem:[%s383 + $0x54] sm:$0xf] %v500
        %v744 = vld [vmem:[%s383 + $0x60] sm:$0xf]
        %v745 = vsel %vm727, %v507, %v744
        %746 = vst [vmem:[%s383 + $0x60] sm:$0xf] %v745
        %747 = vst [vmem:[%s383 + $0x6c] sm:$0xf] %v516
        %v748 = vld [vmem:[%s383 + $0x78] sm:$0xf]
        %v749 = vsel %vm727, %v523, %v748
        %750 = vst [vmem:[%s383 + $0x78] sm:$0xf] %v749
        %751 = vst [vmem:[%s383 + $0x84] sm:$0xf] %v532
        %v752 = vld [vmem:[%s383 + $0x90] sm:$0xf]
        %v753 = vsel %vm727, %v539, %v752
        %754 = vst [vmem:[%s383 + $0x90] sm:$0xf] %v753
        %755 = vst [vmem:[%s383 + $0x9c] sm:$0xf] %v548
        %v756 = vld [vmem:[%s383 + $0xa8] sm:$0xf]
        %v757 = vsel %vm727, %v555, %v756
        %758 = vst [vmem:[%s383 + $0xa8] sm:$0xf] %v757
        %759 = vst [vmem:[%s383 + $0xb4] sm:$0xf] %v564
        %v760 = vld [vmem:[%s383 + $0xc0] sm:$0xf]
        %v761 = vsel %vm727, %v571, %v760
        %762 = vst [vmem:[%s383 + $0xc0] sm:$0xf] %v761
        %763 = vst [vmem:[%s383 + $0xcc] sm:$0xf] %v580
        %v764 = vld [vmem:[%s383 + $0xd8] sm:$0xf]
        %v765 = vsel %vm727, %v587, %v764
        %766 = vst [vmem:[%s383 + $0xd8] sm:$0xf] %v765
        %767 = vst [vmem:[%s383 + $0xe4] sm:$0xf] %v596
        %v768 = vld [vmem:[%s383 + $0xf0] sm:$0xf]
        %v769 = vsel %vm727, %v603, %v768
        %770 = vst [vmem:[%s383 + $0xf0] sm:$0xf] %v769
        %771 = vst [vmem:[%s383 + $0xfc] sm:$0xf] %v612
        %v772 = vld [vmem:[%s383 + $0x108] sm:$0xf]
        %v773 = vsel %vm727, %v619, %v772
        %774 = vst [vmem:[%s383 + $0x108] sm:$0xf] %v773
        %775 = vst [vmem:[%s383 + $0x114] sm:$0xf] %v628
        %v776 = vld [vmem:[%s383 + $0x120] sm:$0xf]
        %v777 = vsel %vm727, %v635, %v776
        %778 = vst [vmem:[%s383 + $0x120] sm:$0xf] %v777
        %779 = vst [vmem:[%s383 + $0x12c] sm:$0xf] %v644
        %v780 = vld [vmem:[%s383 + $0x138] sm:$0xf]
        %v781 = vsel %vm727, %v651, %v780
        %782 = vst [vmem:[%s383 + $0x138] sm:$0xf] %v781
        %783 = vst [vmem:[%s383 + $0x144] sm:$0xf] %v660
        %v784 = vld [vmem:[%s383 + $0x150] sm:$0xf]
        %v785 = vsel %vm727, %v667, %v784
        %786 = vst [vmem:[%s383 + $0x150] sm:$0xf] %v785
        %787 = vst [vmem:[%s383 + $0x15c] sm:$0xf] %v676
        %v788 = vld [vmem:[%s383 + $0x168] sm:$0xf]
        %v789 = vsel %vm727, %v683, %v788
        %790 = vst [vmem:[%s383 + $0x168] sm:$0xf] %v789
        %791 = vst [vmem:[%s383 + $0x174] sm:$0xf] %v692
        %792 = vst [vmem:[%s383 + $0x4] sm:$0xf] %v342
        %793 = vst [vmem:[%s383 + $0x10] sm:$0xf] %v343
        %794 = vst [vmem:[%s383 + $0x1c] sm:$0xf] %v344
        %795 = vst [vmem:[%s383 + $0x28] sm:$0xf] %v345
        %796 = vst [vmem:[%s383 + $0x34] sm:$0xf] %v346
        %797 = vst [vmem:[%s383 + $0x40] sm:$0xf] %v347
        %798 = vst [vmem:[%s383 + $0x4c] sm:$0xf] %v348
        %799 = vst [vmem:[%s383 + $0x58] sm:$0xf] %v349
        %800 = vst [vmem:[%s383 + $0x64] sm:$0xf] %v350
        %801 = vst [vmem:[%s383 + $0x70] sm:$0xf] %v351
        %802 = vst [vmem:[%s383 + $0x7c] sm:$0xf] %v352
        %803 = vst [vmem:[%s383 + $0x88] sm:$0xf] %v353
        %804 = vst [vmem:[%s383 + $0x94] sm:$0xf] %v354
        %805 = vst [vmem:[%s383 + $0xa0] sm:$0xf] %v355
        %806 = vst [vmem:[%s383 + $0xac] sm:$0xf] %v356
        %807 = vst [vmem:[%s383 + $0xb8] sm:$0xf] %v357
        %808 = vst [vmem:[%s383 + $0xc4] sm:$0xf] %v358
        %809 = vst [vmem:[%s383 + $0xd0] sm:$0xf] %v359
        %810 = vst [vmem:[%s383 + $0xdc] sm:$0xf] %v360
        %811 = vst [vmem:[%s383 + $0xe8] sm:$0xf] %v361
        %812 = vst [vmem:[%s383 + $0xf4] sm:$0xf] %v362
        %813 = vst [vmem:[%s383 + $0x100] sm:$0xf] %v363
        %814 = vst [vmem:[%s383 + $0x10c] sm:$0xf] %v364
        %815 = vst [vmem:[%s383 + $0x118] sm:$0xf] %v365
        %816 = vst [vmem:[%s383 + $0x124] sm:$0xf] %v366
        %817 = vst [vmem:[%s383 + $0x130] sm:$0xf] %v367
        %818 = vst [vmem:[%s383 + $0x13c] sm:$0xf] %v368
        %819 = vst [vmem:[%s383 + $0x148] sm:$0xf] %v369
        %820 = vst [vmem:[%s383 + $0x154] sm:$0xf] %v370
        %821 = vst [vmem:[%s383 + $0x160] sm:$0xf] %v371
        %822 = vst [vmem:[%s383 + $0x16c] sm:$0xf] %v372
        %823 = vst [vmem:[%s383 + $0x178] sm:$0xf] %v373
        %vm824 = vsmask.f32 3328
        %vm825 = vsmask.f32 7440
        %vm826 = vmor %vm824, %vm825
        %v827 = vrot.slane %v438, 4
        %v828 = vrot.slane %v441, 5
        %v829 = vor.u32 %v827, %v828
        %v830 = vrot.slane %v829, 4
        %v831 = vrot.slane %v449, 5
        %v832 = vsel %vm826, %v830, %v831
        %v833 = vrot.slane %v446, 4
        %v834 = vor.u32 %v833, %v831
        %v835 = vrot.slane %v834, 4
        %v836 = vrot.slane %v454, 4
        %v837 = vrot.slane %v457, 5
        %v838 = vor.u32 %v836, %v837
        %v839 = vrot.slane %v838, 4
        %v840 = vrot.slane %v465, 5
        %v841 = vsel %vm826, %v839, %v840
        %v842 = vrot.slane %v462, 4
        %v843 = vor.u32 %v842, %v840
        %v844 = vrot.slane %v843, 4
        %v845 = vrot.slane %v470, 4
        %v846 = vrot.slane %v473, 5
        %v847 = vor.u32 %v845, %v846
        %v848 = vrot.slane %v847, 4
        %v849 = vrot.slane %v481, 5
        %v850 = vsel %vm826, %v848, %v849
        %v851 = vrot.slane %v478, 4
        %v852 = vor.u32 %v851, %v849
        %v853 = vrot.slane %v852, 4
        %v854 = vrot.slane %v486, 4
        %v855 = vrot.slane %v489, 5
        %v856 = vor.u32 %v854, %v855
        %v857 = vrot.slane %v856, 4
        %v858 = vrot.slane %v497, 5
        %v859 = vsel %vm826, %v857, %v858
        %v860 = vrot.slane %v494, 4
        %v861 = vor.u32 %v860, %v858
        %v862 = vrot.slane %v861, 4
        %v863 = vrot.slane %v502, 4
        %v864 = vrot.slane %v505, 5
        %v865 = vor.u32 %v863, %v864
        %v866 = vrot.slane %v865, 4
        %v867 = vrot.slane %v513, 5
        %v868 = vsel %vm826, %v866, %v867
        %v869 = vrot.slane %v510, 4
        %v870 = vor.u32 %v869, %v867
        %v871 = vrot.slane %v870, 4
        %v872 = vrot.slane %v518, 4
        %v873 = vrot.slane %v521, 5
        %v874 = vor.u32 %v872, %v873
        %v875 = vrot.slane %v874, 4
        %v876 = vrot.slane %v529, 5
        %v877 = vsel %vm826, %v875, %v876
        %v878 = vrot.slane %v526, 4
        %v879 = vor.u32 %v878, %v876
        %v880 = vrot.slane %v879, 4
        %v881 = vrot.slane %v534, 4
        %v882 = vrot.slane %v537, 5
        %v883 = vor.u32 %v881, %v882
        %v884 = vrot.slane %v883, 4
        %v885 = vrot.slane %v545, 5
        %v886 = vsel %vm826, %v884, %v885
        %v887 = vrot.slane %v542, 4
        %v888 = vor.u32 %v887, %v885
        %v889 = vrot.slane %v888, 4
        %v890 = vrot.slane %v550, 4
        %v891 = vrot.slane %v553, 5
        %v892 = vor.u32 %v890, %v891
        %v893 = vrot.slane %v892, 4
        %v894 = vrot.slane %v561, 5
        %v895 = vsel %vm826, %v893, %v894
        %v896 = vrot.slane %v558, 4
        %v897 = vor.u32 %v896, %v894
        %v898 = vrot.slane %v897, 4
        %v899 = vrot.slane %v566, 4
        %v900 = vrot.slane %v569, 5
        %v901 = vor.u32 %v899, %v900
        %v902 = vrot.slane %v901, 4
        %v903 = vrot.slane %v577, 5
        %v904 = vsel %vm826, %v902, %v903
        %v905 = vrot.slane %v574, 4
        %v906 = vor.u32 %v905, %v903
        %v907 = vrot.slane %v906, 4
        %v908 = vrot.slane %v582, 4
        %v909 = vrot.slane %v585, 5
        %v910 = vor.u32 %v908, %v909
        %v911 = vrot.slane %v910, 4
        %v912 = vrot.slane %v593, 5
        %v913 = vsel %vm826, %v911, %v912
        %v914 = vrot.slane %v590, 4
        %v915 = vor.u32 %v914, %v912
        %v916 = vrot.slane %v915, 4
        %v917 = vrot.slane %v598, 4
        %v918 = vrot.slane %v601, 5
        %v919 = vor.u32 %v917, %v918
        %v920 = vrot.slane %v919, 4
        %v921 = vrot.slane %v609, 5
        %v922 = vsel %vm826, %v920, %v921
        %v923 = vrot.slane %v606, 4
        %v924 = vor.u32 %v923, %v921
        %v925 = vrot.slane %v924, 4
        %v926 = vrot.slane %v614, 4
        %v927 = vrot.slane %v617, 5
        %v928 = vor.u32 %v926, %v927
        %v929 = vrot.slane %v928, 4
        %v930 = vrot.slane %v625, 5
        %v931 = vsel %vm826, %v929, %v930
        %v932 = vrot.slane %v622, 4
        %v933 = vor.u32 %v932, %v930
        %v934 = vrot.slane %v933, 4
        %v935 = vrot.slane %v630, 4
        %v936 = vrot.slane %v633, 5
        %v937 = vor.u32 %v935, %v936
        %v938 = vrot.slane %v937, 4
        %v939 = vrot.slane %v641, 5
        %v940 = vsel %vm826, %v938, %v939
        %v941 = vrot.slane %v638, 4
        %v942 = vor.u32 %v941, %v939
        %v943 = vrot.slane %v942, 4
        %v944 = vrot.slane %v646, 4
        %v945 = vrot.slane %v649, 5
        %v946 = vor.u32 %v944, %v945
        %v947 = vrot.slane %v946, 4
        %v948 = vrot.slane %v657, 5
        %v949 = vsel %vm826, %v947, %v948
        %v950 = vrot.slane %v654, 4
        %v951 = vor.u32 %v950, %v948
        %v952 = vrot.slane %v951, 4
        %v953 = vrot.slane %v662, 4
        %v954 = vrot.slane %v665, 5
        %v955 = vor.u32 %v953, %v954
        %v956 = vrot.slane %v955, 4
        %v957 = vrot.slane %v673, 5
        %v958 = vsel %vm826, %v956, %v957
        %v959 = vrot.slane %v670, 4
        %v960 = vor.u32 %v959, %v957
        %v961 = vrot.slane %v960, 4
        %v962 = vrot.slane %v678, 4
        %v963 = vrot.slane %v681, 5
        %v964 = vor.u32 %v962, %v963
        %v965 = vrot.slane %v964, 4
        %v966 = vrot.slane %v689, 5
        %v967 = vsel %vm826, %v965, %v966
        %v968 = vrot.slane %v686, 4
        %v969 = vor.u32 %v968, %v966
        %v970 = vrot.slane %v969, 4
        %1003 = vst [vmem:[%s383 + $0x8] sm:$0xf] %v832
        %vm1004 = vmand %vm725, %vm824
        %v1005 = vld [vmem:[%s383 + $0x14] sm:$0xf]
        %v1006 = vsel %vm1004, %v835, %v1005
        %1007 = vst [vmem:[%s383 + $0x14] sm:$0xf] %v1006
        %1008 = vst [vmem:[%s383 + $0x20] sm:$0xf] %v841
        %v1009 = vld [vmem:[%s383 + $0x2c] sm:$0xf]
        %v1010 = vsel %vm1004, %v844, %v1009
        %1011 = vst [vmem:[%s383 + $0x2c] sm:$0xf] %v1010
        %1012 = vst [vmem:[%s383 + $0x38] sm:$0xf] %v850
        %v1013 = vld [vmem:[%s383 + $0x44] sm:$0xf]
        %v1014 = vsel %vm1004, %v853, %v1013
        %1015 = vst [vmem:[%s383 + $0x44] sm:$0xf] %v1014
        %1016 = vst [vmem:[%s383 + $0x50] sm:$0xf] %v859
        %v1017 = vld [vmem:[%s383 + $0x5c] sm:$0xf]
        %v1018 = vsel %vm1004, %v862, %v1017
        %1019 = vst [vmem:[%s383 + $0x5c] sm:$0xf] %v1018
        %1020 = vst [vmem:[%s383 + $0x68] sm:$0xf] %v868
        %v1021 = vld [vmem:[%s383 + $0x74] sm:$0xf]
        %v1022 = vsel %vm1004, %v871, %v1021
        %1023 = vst [vmem:[%s383 + $0x74] sm:$0xf] %v1022
        %1024 = vst [vmem:[%s383 + $0x80] sm:$0xf] %v877
        %v1025 = vld [vmem:[%s383 + $0x8c] sm:$0xf]
        %v1026 = vsel %vm1004, %v880, %v1025
        %1027 = vst [vmem:[%s383 + $0x8c] sm:$0xf] %v1026
        %1028 = vst [vmem:[%s383 + $0x98] sm:$0xf] %v886
        %v1029 = vld [vmem:[%s383 + $0xa4] sm:$0xf]
        %v1030 = vsel %vm1004, %v889, %v1029
        %1031 = vst [vmem:[%s383 + $0xa4] sm:$0xf] %v1030
        %1032 = vst [vmem:[%s383 + $0xb0] sm:$0xf] %v895
        %v1033 = vld [vmem:[%s383 + $0xbc] sm:$0xf]
        %v1034 = vsel %vm1004, %v898, %v1033
        %1035 = vst [vmem:[%s383 + $0xbc] sm:$0xf] %v1034
        %1036 = vst [vmem:[%s383 + $0xc8] sm:$0xf] %v904
        %v1037 = vld [vmem:[%s383 + $0xd4] sm:$0xf]
        %v1038 = vsel %vm1004, %v907, %v1037
        %1039 = vst [vmem:[%s383 + $0xd4] sm:$0xf] %v1038
        %1040 = vst [vmem:[%s383 + $0xe0] sm:$0xf] %v913
        %v1041 = vld [vmem:[%s383 + $0xec] sm:$0xf]
        %v1042 = vsel %vm1004, %v916, %v1041
        %1043 = vst [vmem:[%s383 + $0xec] sm:$0xf] %v1042
        %1044 = vst [vmem:[%s383 + $0xf8] sm:$0xf] %v922
        %v1045 = vld [vmem:[%s383 + $0x104] sm:$0xf]
        %v1046 = vsel %vm1004, %v925, %v1045
        %1047 = vst [vmem:[%s383 + $0x104] sm:$0xf] %v1046
        %1048 = vst [vmem:[%s383 + $0x110] sm:$0xf] %v931
        %v1049 = vld [vmem:[%s383 + $0x11c] sm:$0xf]
        %v1050 = vsel %vm1004, %v934, %v1049
        %1051 = vst [vmem:[%s383 + $0x11c] sm:$0xf] %v1050
        %1052 = vst [vmem:[%s383 + $0x128] sm:$0xf] %v940
        %v1053 = vld [vmem:[%s383 + $0x134] sm:$0xf]
        %v1054 = vsel %vm1004, %v943, %v1053
        %1055 = vst [vmem:[%s383 + $0x134] sm:$0xf] %v1054
        %1056 = vst [vmem:[%s383 + $0x140] sm:$0xf] %v949
        %v1057 = vld [vmem:[%s383 + $0x14c] sm:$0xf]
        %v1058 = vsel %vm1004, %v952, %v1057
        %1059 = vst [vmem:[%s383 + $0x14c] sm:$0xf] %v1058
        %1060 = vst [vmem:[%s383 + $0x158] sm:$0xf] %v958
        %v1061 = vld [vmem:[%s383 + $0x164] sm:$0xf]
        %v1062 = vsel %vm1004, %v961, %v1061
        %1063 = vst [vmem:[%s383 + $0x164] sm:$0xf] %v1062
        %1064 = vst [vmem:[%s383 + $0x170] sm:$0xf] %v967
        %v1065 = vld [vmem:[%s383 + $0x17c] sm:$0xf]
        %v1066 = vsel %vm1004, %v970, %v1065
        %1067 = vst [vmem:[%s383 + $0x17c] sm:$0xf] %v1066
        %vm1068 = vcmask 1043459
        %vm1069 = vsmask.f32 7950
        %vm1070 = vmand %vm1068, %vm1069
        %v1071 = vld [vmem:[%s383 + $0x14] sm:$0x8]
        %v1072 = vsel %vm1070, 0, %v1071
        %1073 = vst [vmem:[%s383 + $0x14] sm:$0x8] %v1072
        %v1074 = vld [vmem:[%s383 + $0x2c] sm:$0x8]
        %v1075 = vsel %vm1070, 0, %v1074
        %1076 = vst [vmem:[%s383 + $0x2c] sm:$0x8] %v1075
        %v1077 = vld [vmem:[%s383 + $0x44] sm:$0x8]
        %v1078 = vsel %vm1070, 0, %v1077
        %1079 = vst [vmem:[%s383 + $0x44] sm:$0x8] %v1078
        %v1080 = vld [vmem:[%s383 + $0x5c] sm:$0x8]
        %v1081 = vsel %vm1070, 0, %v1080
        %1082 = vst [vmem:[%s383 + $0x5c] sm:$0x8] %v1081
        %v1083 = vld [vmem:[%s383 + $0x74] sm:$0x8]
        %v1084 = vsel %vm1070, 0, %v1083
        %1085 = vst [vmem:[%s383 + $0x74] sm:$0x8] %v1084
        %v1086 = vld [vmem:[%s383 + $0x8c] sm:$0x8]
        %v1087 = vsel %vm1070, 0, %v1086
        %1088 = vst [vmem:[%s383 + $0x8c] sm:$0x8] %v1087
        %v1089 = vld [vmem:[%s383 + $0xa4] sm:$0x8]
        %v1090 = vsel %vm1070, 0, %v1089
        %1091 = vst [vmem:[%s383 + $0xa4] sm:$0x8] %v1090
        %v1092 = vld [vmem:[%s383 + $0xbc] sm:$0x8]
        %v1093 = vsel %vm1070, 0, %v1092
        %1094 = vst [vmem:[%s383 + $0xbc] sm:$0x8] %v1093
        %v1095 = vld [vmem:[%s383 + $0xd4] sm:$0x8]
        %v1096 = vsel %vm1070, 0, %v1095
        %1097 = vst [vmem:[%s383 + $0xd4] sm:$0x8] %v1096
        %v1098 = vld [vmem:[%s383 + $0xec] sm:$0x8]
        %v1099 = vsel %vm1070, 0, %v1098
        %1100 = vst [vmem:[%s383 + $0xec] sm:$0x8] %v1099
        %v1101 = vld [vmem:[%s383 + $0x104] sm:$0x8]
        %v1102 = vsel %vm1070, 0, %v1101
        %1103 = vst [vmem:[%s383 + $0x104] sm:$0x8] %v1102
        %v1104 = vld [vmem:[%s383 + $0x11c] sm:$0x8]
        %v1105 = vsel %vm1070, 0, %v1104
        %1106 = vst [vmem:[%s383 + $0x11c] sm:$0x8] %v1105
        %v1107 = vld [vmem:[%s383 + $0x134] sm:$0x8]
        %v1108 = vsel %vm1070, 0, %v1107
        %1109 = vst [vmem:[%s383 + $0x134] sm:$0x8] %v1108
        %v1110 = vld [vmem:[%s383 + $0x14c] sm:$0x8]
        %v1111 = vsel %vm1070, 0, %v1110
        %1112 = vst [vmem:[%s383 + $0x14c] sm:$0x8] %v1111
        %v1113 = vld [vmem:[%s383 + $0x164] sm:$0x8]
        %v1114 = vsel %vm1070, 0, %v1113
        %1115 = vst [vmem:[%s383 + $0x164] sm:$0x8] %v1114
        %v1116 = vld [vmem:[%s383 + $0x17c] sm:$0x8]
        %v1117 = vsel %vm1070, 0, %v1116
        %1118 = vst [vmem:[%s383 + $0x17c] sm:$0x8] %v1117
        %v1119 = vld [vmem:[#allocation2] sm:$0xff]
        %v1120 = vld [vmem:[#allocation2 + $0x8] sm:$0xf]
        %v1121 = vld [vmem:[#allocation2 + $0xc] sm:$0xff]
        %v1122 = vld [vmem:[#allocation2 + $0x14] sm:$0xf]
        %v1123 = vld [vmem:[#allocation2 + $0x18] sm:$0xff]
        %v1124 = vld [vmem:[#allocation2 + $0x20] sm:$0xf]
        %v1125 = vld [vmem:[#allocation2 + $0x24] sm:$0xff]
        %v1126 = vld [vmem:[#allocation2 + $0x2c] sm:$0xf]
        %v1127 = vld [vmem:[#allocation2 + $0x30] sm:$0xff]
        %v1128 = vld [vmem:[#allocation2 + $0x38] sm:$0xf]
        %v1129 = vld [vmem:[#allocation2 + $0x3c] sm:$0xff]
        %v1130 = vld [vmem:[#allocation2 + $0x44] sm:$0xf]
        %v1131 = vld [vmem:[#allocation2 + $0x48] sm:$0xff]
        %v1132 = vld [vmem:[#allocation2 + $0x50] sm:$0xf]
        %v1133 = vld [vmem:[#allocation2 + $0x54] sm:$0xff]
        %v1134 = vld [vmem:[#allocation2 + $0x5c] sm:$0xf]
        %v1135 = vld [vmem:[#allocation2 + $0x60] sm:$0xff]
        %v1136 = vld [vmem:[#allocation2 + $0x68] sm:$0xf]
        %v1137 = vld [vmem:[#allocation2 + $0x6c] sm:$0xff]
        %v1138 = vld [vmem:[#allocation2 + $0x74] sm:$0xf]
        %v1139 = vld [vmem:[#allocation2 + $0x78] sm:$0xff]
        %v1140 = vld [vmem:[#allocation2 + $0x80] sm:$0xf]
        %v1141 = vld [vmem:[#allocation2 + $0x84] sm:$0xff]
        %v1142 = vld [vmem:[#allocation2 + $0x8c] sm:$0xf]
        %v1143 = vld [vmem:[#allocation2 + $0x90] sm:$0xff]
        %v1144 = vld [vmem:[#allocation2 + $0x98] sm:$0xf]
        %v1145 = vld [vmem:[#allocation2 + $0x9c] sm:$0xff]
        %v1146 = vld [vmem:[#allocation2 + $0xa4] sm:$0xf]
        %v1147 = vld [vmem:[#allocation2 + $0xa8] sm:$0xff]
        %v1148 = vld [vmem:[#allocation2 + $0xb0] sm:$0xf]
        %v1149 = vld [vmem:[#allocation2 + $0xb4] sm:$0xff]
        %v1150 = vld [vmem:[#allocation2 + $0xbc] sm:$0xf]
        %v1151 = vld [vmem:[#allocation2 + $0xc0] sm:$0xff]
        %v1152 = vld [vmem:[#allocation2 + $0xc8] sm:$0xf]
        %v1153 = vld [vmem:[#allocation2 + $0xcc] sm:$0xff]
        %v1154 = vld [vmem:[#allocation2 + $0xd4] sm:$0xf]
        %v1155 = vld [vmem:[#allocation2 + $0xd8] sm:$0xff]
        %v1156 = vld [vmem:[#allocation2 + $0xe0] sm:$0xf]
        %v1157 = vld [vmem:[#allocation2 + $0xe4] sm:$0xff]
        %v1158 = vld [vmem:[#allocation2 + $0xec] sm:$0xf]
        %v1159 = vld [vmem:[#allocation2 + $0xf0] sm:$0xff]
        %v1160 = vld [vmem:[#allocation2 + $0xf8] sm:$0xf]
        %v1161 = vld [vmem:[#allocation2 + $0xfc] sm:$0xff]
        %v1162 = vld [vmem:[#allocation2 + $0x104] sm:$0xf]
        %v1163 = vld [vmem:[#allocation2 + $0x108] sm:$0xff]
        %v1164 = vld [vmem:[#allocation2 + $0x110] sm:$0xf]
        %v1165 = vld [vmem:[#allocation2 + $0x114] sm:$0xff]
        %v1166 = vld [vmem:[#allocation2 + $0x11c] sm:$0xf]
        %v1167 = vld [vmem:[#allocation2 + $0x120] sm:$0xff]
        %v1168 = vld [vmem:[#allocation2 + $0x128] sm:$0xf]
        %v1169 = vld [vmem:[#allocation2 + $0x12c] sm:$0xff]
        %v1170 = vld [vmem:[#allocation2 + $0x134] sm:$0xf]
        %v1171 = vld [vmem:[#allocation2 + $0x138] sm:$0xff]
        %v1172 = vld [vmem:[#allocation2 + $0x140] sm:$0xf]
        %v1173 = vld [vmem:[#allocation2 + $0x144] sm:$0xff]
        %v1174 = vld [vmem:[#allocation2 + $0x14c] sm:$0xf]
        %v1175 = vld [vmem:[#allocation2 + $0x150] sm:$0xff]
        %v1176 = vld [vmem:[#allocation2 + $0x158] sm:$0xf]
        %v1177 = vld [vmem:[#allocation2 + $0x15c] sm:$0xff]
        %v1178 = vld [vmem:[#allocation2 + $0x164] sm:$0xf]
        %v1179 = vld [vmem:[#allocation2 + $0x168] sm:$0xff]
        %v1180 = vld [vmem:[#allocation2 + $0x170] sm:$0xf]
        %v1181 = vld [vmem:[#allocation2 + $0x174] sm:$0xff]
        %v1182 = vld [vmem:[#allocation2 + $0x17c] sm:$0xf]
        %v1183 = vld [vmem:[#allocation7] sm:$0xf]
        %v1184 = vld [vmem:[#allocation7 + $0x4] sm:$0xf]
        %v1185 = vld [vmem:[#allocation7 + $0x8] sm:$0xf]
        %v1186 = vld [vmem:[#allocation7 + $0xc] sm:$0xf]
        %v1187 = vld [vmem:[#allocation7 + $0x10] sm:$0xf]
        %v1188 = vld [vmem:[#allocation7 + $0x14] sm:$0xf]
        %v1189 = vld [vmem:[#allocation7 + $0x18] sm:$0xf]
        %v1190 = vld [vmem:[#allocation7 + $0x1c] sm:$0xf]
        %v1191 = vld [vmem:[#allocation7 + $0x20] sm:$0xf]
        %v1192 = vld [vmem:[#allocation7 + $0x24] sm:$0xf]
        %v1193 = vld [vmem:[#allocation7 + $0x28] sm:$0xf]
        %v1194 = vld [vmem:[#allocation7 + $0x2c] sm:$0xf]
        %v1195 = vld [vmem:[#allocation7 + $0x30] sm:$0xf]
        %v1196 = vld [vmem:[#allocation7 + $0x34] sm:$0xf]
        %v1197 = vld [vmem:[#allocation7 + $0x38] sm:$0xf]
        %v1198 = vld [vmem:[#allocation7 + $0x3c] sm:$0xf]
        %v1199 = vld [vmem:[#allocation7 + $0x40] sm:$0xf]
        %v1200 = vld [vmem:[#allocation7 + $0x44] sm:$0xf]
        %v1201 = vld [vmem:[#allocation7 + $0x48] sm:$0xf]
        %v1202 = vld [vmem:[#allocation7 + $0x4c] sm:$0xf]
        %v1203 = vld [vmem:[#allocation7 + $0x50] sm:$0xf]
        %v1204 = vld [vmem:[#allocation7 + $0x54] sm:$0xf]
        %v1205 = vld [vmem:[#allocation7 + $0x58] sm:$0xf]
        %v1206 = vld [vmem:[#allocation7 + $0x5c] sm:$0xf]
        %v1207 = vld [vmem:[#allocation7 + $0x60] sm:$0xf]
        %v1208 = vld [vmem:[#allocation7 + $0x64] sm:$0xf]
        %v1209 = vld [vmem:[#allocation7 + $0x68] sm:$0xf]
        %v1210 = vld [vmem:[#allocation7 + $0x6c] sm:$0xf]
        %v1211 = vld [vmem:[#allocation7 + $0x70] sm:$0xf]
        %v1212 = vld [vmem:[#allocation7 + $0x74] sm:$0xf]
        %v1213 = vld [vmem:[#allocation7 + $0x78] sm:$0xf]
        %v1214 = vld [vmem:[#allocation7 + $0x7c] sm:$0xf]
        %v1215 = vld [vmem:[#allocation7 + $0x80] sm:$0xf]
        %v1216 = vld [vmem:[#allocation7 + $0x84] sm:$0xf]
        %v1217 = vld [vmem:[#allocation7 + $0x88] sm:$0xf]
        %v1218 = vld [vmem:[#allocation7 + $0x8c] sm:$0xf]
        %v1219 = vld [vmem:[#allocation7 + $0x90] sm:$0xf]
        %v1220 = vld [vmem:[#allocation7 + $0x94] sm:$0xf]
        %v1221 = vld [vmem:[#allocation7 + $0x98] sm:$0xf]
        %v1222 = vld [vmem:[#allocation7 + $0x9c] sm:$0xf]
        %v1223 = vld [vmem:[#allocation7 + $0xa0] sm:$0xf]
        %v1224 = vld [vmem:[#allocation7 + $0xa4] sm:$0xf]
        %v1225 = vld [vmem:[#allocation7 + $0xa8] sm:$0xf]
        %v1226 = vld [vmem:[#allocation7 + $0xac] sm:$0xf]
        %v1227 = vld [vmem:[#allocation7 + $0xb0] sm:$0xf]
        %v1228 = vld [vmem:[#allocation7 + $0xb4] sm:$0xf]
        %v1229 = vld [vmem:[#allocation7 + $0xb8] sm:$0xf]
        %v1230 = vld [vmem:[#allocation7 + $0xbc] sm:$0xf]
        %v1231 = vld [vmem:[%s383] sm:$0xff]
        %v1232 = vld [vmem:[%s383 + $0x8] sm:$0xf]
        %v1233 = vld [vmem:[%s383 + $0xc] sm:$0xff]
        %v1234 = vld [vmem:[%s383 + $0x14] sm:$0xf]
        %v1235 = vld [vmem:[%s383 + $0x18] sm:$0xff]
        %v1236 = vld [vmem:[%s383 + $0x20] sm:$0xf]
        %v1237 = vld [vmem:[%s383 + $0x24] sm:$0xff]
        %v1238 = vld [vmem:[%s383 + $0x2c] sm:$0xf]
        %v1239 = vld [vmem:[%s383 + $0x30] sm:$0xff]
        %v1240 = vld [vmem:[%s383 + $0x38] sm:$0xf]
        %v1241 = vld [vmem:[%s383 + $0x3c] sm:$0xff]
        %v1242 = vld [vmem:[%s383 + $0x44] sm:$0xf]
        %v1243 = vld [vmem:[%s383 + $0x48] sm:$0xff]
        %v1244 = vld [vmem:[%s383 + $0x50] sm:$0xf]
        %v1245 = vld [vmem:[%s383 + $0x54] sm:$0xff]
        %v1246 = vld [vmem:[%s383 + $0x5c] sm:$0xf]
        %v1247 = vld [vmem:[%s383 + $0x60] sm:$0xff]
        %v1248 = vld [vmem:[%s383 + $0x68] sm:$0xf]
        %v1249 = vld [vmem:[%s383 + $0x6c] sm:$0xff]
        %v1250 = vld [vmem:[%s383 + $0x74] sm:$0xf]
        %v1251 = vld [vmem:[%s383 + $0x78] sm:$0xff]
        %v1252 = vld [vmem:[%s383 + $0x80] sm:$0xf]
        %v1253 = vld [vmem:[%s383 + $0x84] sm:$0xff]
        %v1254 = vld [vmem:[%s383 + $0x8c] sm:$0xf]
        %v1255 = vld [vmem:[%s383 + $0x90] sm:$0xff]
        %v1256 = vld [vmem:[%s383 + $0x98] sm:$0xf]
        %v1257 = vld [vmem:[%s383 + $0x9c] sm:$0xff]
        %v1258 = vld [vmem:[%s383 + $0xa4] sm:$0xf]
        %v1259 = vld [vmem:[%s383 + $0xa8] sm:$0xff]
        %v1260 = vld [vmem:[%s383 + $0xb0] sm:$0xf]
        %v1261 = vld [vmem:[%s383 + $0xb4] sm:$0xff]
        %v1262 = vld [vmem:[%s383 + $0xbc] sm:$0xf]
        %v1263 = vld [vmem:[%s383 + $0xc0] sm:$0xff]
        %v1264 = vld [vmem:[%s383 + $0xc8] sm:$0xf]
        %v1265 = vld [vmem:[%s383 + $0xcc] sm:$0xff]
        %v1266 = vld [vmem:[%s383 + $0xd4] sm:$0xf]
        %v1267 = vld [vmem:[%s383 + $0xd8] sm:$0xff]
        %v1268 = vld [vmem:[%s383 + $0xe0] sm:$0xf]
        %v1269 = vld [vmem:[%s383 + $0xe4] sm:$0xff]
        %v1270 = vld [vmem:[%s383 + $0xec] sm:$0xf]
        %v1271 = vld [vmem:[%s383 + $0xf0] sm:$0xff]
        %v1272 = vld [vmem:[%s383 + $0xf8] sm:$0xf]
        %v1273 = vld [vmem:[%s383 + $0xfc] sm:$0xff]
        %v1274 = vld [vmem:[%s383 + $0x104] sm:$0xf]
        %v1275 = vld [vmem:[%s383 + $0x108] sm:$0xff]
        %v1276 = vld [vmem:[%s383 + $0x110] sm:$0xf]
        %v1277 = vld [vmem:[%s383 + $0x114] sm:$0xff]
        %v1278 = vld [vmem:[%s383 + $0x11c] sm:$0xf]
        %v1279 = vld [vmem:[%s383 + $0x120] sm:$0xff]
        %v1280 = vld [vmem:[%s383 + $0x128] sm:$0xf]
        %v1281 = vld [vmem:[%s383 + $0x12c] sm:$0xff]
        %v1282 = vld [vmem:[%s383 + $0x134] sm:$0xf]
        %v1283 = vld [vmem:[%s383 + $0x138] sm:$0xff]
        %v1284 = vld [vmem:[%s383 + $0x140] sm:$0xf]
        %v1285 = vld [vmem:[%s383 + $0x144] sm:$0xff]
        %v1286 = vld [vmem:[%s383 + $0x14c] sm:$0xf]
        %v1287 = vld [vmem:[%s383 + $0x150] sm:$0xff]
        %v1288 = vld [vmem:[%s383 + $0x158] sm:$0xf]
        %v1289 = vld [vmem:[%s383 + $0x15c] sm:$0xff]
        %v1290 = vld [vmem:[%s383 + $0x164] sm:$0xf]
        %v1291 = vld [vmem:[%s383 + $0x168] sm:$0xff]
        %v1292 = vld [vmem:[%s383 + $0x170] sm:$0xf]
        %v1293 = vld [vmem:[%s383 + $0x174] sm:$0xff]
        %v1294 = vld [vmem:[%s383 + $0x17c] sm:$0xf]
        %s1295 = scalar_lea.vmem [#allocation7], 192
        %v1296 = vld [vmem:[%s1295] sm:$0xf]
        %v1297 = vld [vmem:[%s1295 + $0x4] sm:$0xf]
        %v1298 = vld [vmem:[%s1295 + $0x8] sm:$0xf]
        %v1299 = vld [vmem:[%s1295 + $0xc] sm:$0xf]
        %v1300 = vld [vmem:[%s1295 + $0x10] sm:$0xf]
        %v1301 = vld [vmem:[%s1295 + $0x14] sm:$0xf]
        %v1302 = vld [vmem:[%s1295 + $0x18] sm:$0xf]
        %v1303 = vld [vmem:[%s1295 + $0x1c] sm:$0xf]
        %v1304 = vld [vmem:[%s1295 + $0x20] sm:$0xf]
        %v1305 = vld [vmem:[%s1295 + $0x24] sm:$0xf]
        %v1306 = vld [vmem:[%s1295 + $0x28] sm:$0xf]
        %v1307 = vld [vmem:[%s1295 + $0x2c] sm:$0xf]
        %v1308 = vld [vmem:[%s1295 + $0x30] sm:$0xf]
        %v1309 = vld [vmem:[%s1295 + $0x34] sm:$0xf]
        %v1310 = vld [vmem:[%s1295 + $0x38] sm:$0xf]
        %v1311 = vld [vmem:[%s1295 + $0x3c] sm:$0xf]
        %v1312 = vld [vmem:[%s1295 + $0x40] sm:$0xf]
        %v1313 = vld [vmem:[%s1295 + $0x44] sm:$0xf]
        %v1314 = vld [vmem:[%s1295 + $0x48] sm:$0xf]
        %v1315 = vld [vmem:[%s1295 + $0x4c] sm:$0xf]
        %v1316 = vld [vmem:[%s1295 + $0x50] sm:$0xf]
        %v1317 = vld [vmem:[%s1295 + $0x54] sm:$0xf]
        %v1318 = vld [vmem:[%s1295 + $0x58] sm:$0xf]
        %v1319 = vld [vmem:[%s1295 + $0x5c] sm:$0xf]
        %v1320 = vld [vmem:[%s1295 + $0x60] sm:$0xf]
        %v1321 = vld [vmem:[%s1295 + $0x64] sm:$0xf]
        %v1322 = vld [vmem:[%s1295 + $0x68] sm:$0xf]
        %v1323 = vld [vmem:[%s1295 + $0x6c] sm:$0xf]
        %v1324 = vld [vmem:[%s1295 + $0x70] sm:$0xf]
        %v1325 = vld [vmem:[%s1295 + $0x74] sm:$0xf]
        %v1326 = vld [vmem:[%s1295 + $0x78] sm:$0xf]
        %v1327 = vld [vmem:[%s1295 + $0x7c] sm:$0xf]
        %v1328 = vld [vmem:[%s1295 + $0x80] sm:$0xf]
        %v1329 = vld [vmem:[%s1295 + $0x84] sm:$0xf]
        %v1330 = vld [vmem:[%s1295 + $0x88] sm:$0xf]
        %v1331 = vld [vmem:[%s1295 + $0x8c] sm:$0xf]
        %v1332 = vld [vmem:[%s1295 + $0x90] sm:$0xf]
        %v1333 = vld [vmem:[%s1295 + $0x94] sm:$0xf]
        %v1334 = vld [vmem:[%s1295 + $0x98] sm:$0xf]
        %v1335 = vld [vmem:[%s1295 + $0x9c] sm:$0xf]
        %v1336 = vld [vmem:[%s1295 + $0xa0] sm:$0xf]
        %v1337 = vld [vmem:[%s1295 + $0xa4] sm:$0xf]
        %v1338 = vld [vmem:[%s1295 + $0xa8] sm:$0xf]
        %v1339 = vld [vmem:[%s1295 + $0xac] sm:$0xf]
        %v1340 = vld [vmem:[%s1295 + $0xb0] sm:$0xf]
        %v1341 = vld [vmem:[%s1295 + $0xb4] sm:$0xf]
        %v1342 = vld [vmem:[%s1295 + $0xb8] sm:$0xf]
        %v1343 = vld [vmem:[%s1295 + $0xbc] sm:$0xf]
        %v1408 = vunpack.c.l.b16 %v1231
        %v1409 = vunpack.c.h.b16 %v1231
        %v1410 = vunpack.c.l.b16 %v1232
        %v1411 = vunpack.c.l.b16 %v1233
        %v1412 = vunpack.c.h.b16 %v1233
        %v1413 = vunpack.c.l.b16 %v1234
        %v1414 = vunpack.c.l.b16 %v1235
        %v1415 = vunpack.c.h.b16 %v1235
        %v1416 = vunpack.c.l.b16 %v1236
        %v1417 = vunpack.c.l.b16 %v1237
        %v1418 = vunpack.c.h.b16 %v1237
        %v1419 = vunpack.c.l.b16 %v1238
        %v1420 = vunpack.c.l.b16 %v1239
        %v1421 = vunpack.c.h.b16 %v1239
        %v1422 = vunpack.c.l.b16 %v1240
        %v1423 = vunpack.c.l.b16 %v1241
        %v1424 = vunpack.c.h.b16 %v1241
        %v1425 = vunpack.c.l.b16 %v1242
        %v1426 = vunpack.c.l.b16 %v1243
        %v1427 = vunpack.c.h.b16 %v1243
        %v1428 = vunpack.c.l.b16 %v1244
        %v1429 = vunpack.c.l.b16 %v1245
        %v1430 = vunpack.c.h.b16 %v1245
        %v1431 = vunpack.c.l.b16 %v1246
        %v1432 = vunpack.c.l.b16 %v1247
        %v1433 = vunpack.c.h.b16 %v1247
        %v1434 = vunpack.c.l.b16 %v1248
        %v1435 = vunpack.c.l.b16 %v1249
        %v1436 = vunpack.c.h.b16 %v1249
        %v1437 = vunpack.c.l.b16 %v1250
        %v1438 = vunpack.c.l.b16 %v1251
        %v1439 = vunpack.c.h.b16 %v1251
        %v1440 = vunpack.c.l.b16 %v1252
        %v1441 = vunpack.c.l.b16 %v1253
        %v1442 = vunpack.c.h.b16 %v1253
        %v1443 = vunpack.c.l.b16 %v1254
        %v1444 = vunpack.c.l.b16 %v1255
        %v1445 = vunpack.c.h.b16 %v1255
        %v1446 = vunpack.c.l.b16 %v1256
        %v1447 = vunpack.c.l.b16 %v1257
        %v1448 = vunpack.c.h.b16 %v1257
        %v1449 = vunpack.c.l.b16 %v1258
        %v1450 = vunpack.c.l.b16 %v1259
        %v1451 = vunpack.c.h.b16 %v1259
        %v1452 = vunpack.c.l.b16 %v1260
        %v1453 = vunpack.c.l.b16 %v1261
        %v1454 = vunpack.c.h.b16 %v1261
        %v1455 = vunpack.c.l.b16 %v1262
        %v1456 = vunpack.c.l.b16 %v1263
        %v1457 = vunpack.c.h.b16 %v1263
        %v1458 = vunpack.c.l.b16 %v1264
        %v1459 = vunpack.c.l.b16 %v1265
        %v1460 = vunpack.c.h.b16 %v1265
        %v1461 = vunpack.c.l.b16 %v1266
        %v1462 = vunpack.c.l.b16 %v1267
        %v1463 = vunpack.c.h.b16 %v1267
        %v1464 = vunpack.c.l.b16 %v1268
        %v1465 = vunpack.c.l.b16 %v1269
        %v1466 = vunpack.c.h.b16 %v1269
        %v1467 = vunpack.c.l.b16 %v1270
        %v1468 = vunpack.c.l.b16 %v1271
        %v1469 = vunpack.c.h.b16 %v1271
        %v1470 = vunpack.c.l.b16 %v1272
        %v1471 = vunpack.c.l.b16 %v1273
        %v1472 = vunpack.c.h.b16 %v1273
        %v1473 = vunpack.c.l.b16 %v1274
        %v1474 = vunpack.c.l.b16 %v1275
        %v1475 = vunpack.c.h.b16 %v1275
        %v1476 = vunpack.c.l.b16 %v1276
        %v1477 = vunpack.c.l.b16 %v1277
        %v1478 = vunpack.c.h.b16 %v1277
        %v1479 = vunpack.c.l.b16 %v1278
        %v1480 = vunpack.c.l.b16 %v1279
        %v1481 = vunpack.c.h.b16 %v1279
        %v1482 = vunpack.c.l.b16 %v1280
        %v1483 = vunpack.c.l.b16 %v1281
        %v1484 = vunpack.c.h.b16 %v1281
        %v1485 = vunpack.c.l.b16 %v1282
        %v1486 = vunpack.c.l.b16 %v1283
        %v1487 = vunpack.c.h.b16 %v1283
        %v1488 = vunpack.c.l.b16 %v1284
        %v1489 = vunpack.c.l.b16 %v1285
        %v1490 = vunpack.c.h.b16 %v1285
        %v1491 = vunpack.c.l.b16 %v1286
        %v1492 = vunpack.c.l.b16 %v1287
        %v1493 = vunpack.c.h.b16 %v1287
        %v1494 = vunpack.c.l.b16 %v1288
        %v1495 = vunpack.c.l.b16 %v1289
        %v1496 = vunpack.c.h.b16 %v1289
        %v1497 = vunpack.c.l.b16 %v1290
        %v1498 = vunpack.c.l.b16 %v1291
        %v1499 = vunpack.c.h.b16 %v1291
        %v1500 = vunpack.c.l.b16 %v1292
        %v1501 = vunpack.c.l.b16 %v1293
        %v1502 = vunpack.c.h.b16 %v1293
        %v1503 = vunpack.c.l.b16 %v1294
        %v1504 = vpack.c.b16 %v1411, %v1408
        %v1505 = vpack.c.b16 %v1412, %v1409
        %v1506 = vpack.c.b16 %v1413, %v1410
        %v1507 = vpack.c.b16 %v1417, %v1414
        %v1508 = vpack.c.b16 %v1418, %v1415
        %v1509 = vpack.c.b16 %v1419, %v1416
        %v1510 = vpack.c.b16 %v1423, %v1420
        %v1511 = vpack.c.b16 %v1424, %v1421
        %v1512 = vpack.c.b16 %v1425, %v1422
        %v1513 = vpack.c.b16 %v1429, %v1426
        %v1514 = vpack.c.b16 %v1430, %v1427
        %v1515 = vpack.c.b16 %v1431, %v1428
        %v1516 = vpack.c.b16 %v1435, %v1432
        %v1517 = vpack.c.b16 %v1436, %v1433
        %v1518 = vpack.c.b16 %v1437, %v1434
        %v1519 = vpack.c.b16 %v1441, %v1438
        %v1520 = vpack.c.b16 %v1442, %v1439
        %v1521 = vpack.c.b16 %v1443, %v1440
        %v1522 = vpack.c.b16 %v1447, %v1444
        %v1523 = vpack.c.b16 %v1448, %v1445
        %v1524 = vpack.c.b16 %v1449, %v1446
        %v1525 = vpack.c.b16 %v1453, %v1450
        %v1526 = vpack.c.b16 %v1454, %v1451
        %v1527 = vpack.c.b16 %v1455, %v1452
        %v1528 = vpack.c.b16 %v1459, %v1456
        %v1529 = vpack.c.b16 %v1460, %v1457
        %v1530 = vpack.c.b16 %v1461, %v1458
        %v1531 = vpack.c.b16 %v1465, %v1462
        %v1532 = vpack.c.b16 %v1466, %v1463
        %v1533 = vpack.c.b16 %v1467, %v1464
        %v1534 = vpack.c.b16 %v1471, %v1468
        %v1535 = vpack.c.b16 %v1472, %v1469
        %v1536 = vpack.c.b16 %v1473, %v1470
        %v1537 = vpack.c.b16 %v1477, %v1474
        %v1538 = vpack.c.b16 %v1478, %v1475
        %v1539 = vpack.c.b16 %v1479, %v1476
        %v1540 = vpack.c.b16 %v1483, %v1480
        %v1541 = vpack.c.b16 %v1484, %v1481
        %v1542 = vpack.c.b16 %v1485, %v1482
        %v1543 = vpack.c.b16 %v1489, %v1486
        %v1544 = vpack.c.b16 %v1490, %v1487
        %v1545 = vpack.c.b16 %v1491, %v1488
        %v1546 = vpack.c.b16 %v1495, %v1492
        %v1547 = vpack.c.b16 %v1496, %v1493
        %v1548 = vpack.c.b16 %v1497, %v1494
        %v1549 = vpack.c.b16 %v1501, %v1498
        %v1550 = vpack.c.b16 %v1502, %v1499
        %v1551 = vpack.c.b16 %v1503, %v1500
        %v1648 = vunpack.c.l.b16 %v1296
        %v1649 = vunpack.c.l.b16 %v1297
        %v1650 = vunpack.c.l.b16 %v1298
        %v1651 = vunpack.c.l.b16 %v1299
        %v1652 = vunpack.c.l.b16 %v1300
        %v1653 = vunpack.c.l.b16 %v1301
        %v1654 = vunpack.c.l.b16 %v1302
        %v1655 = vunpack.c.l.b16 %v1303
        %v1656 = vunpack.c.l.b16 %v1304
        %v1657 = vunpack.c.l.b16 %v1305
        %v1658 = vunpack.c.l.b16 %v1306
        %v1659 = vunpack.c.l.b16 %v1307
        %v1660 = vunpack.c.l.b16 %v1308
        %v1661 = vunpack.c.l.b16 %v1309
        %v1662 = vunpack.c.l.b16 %v1310
        %v1663 = vunpack.c.l.b16 %v1311
        %v1664 = vunpack.c.l.b16 %v1312
        %v1665 = vunpack.c.l.b16 %v1313
        %v1666 = vunpack.c.l.b16 %v1314
        %v1667 = vunpack.c.l.b16 %v1315
        %v1668 = vunpack.c.l.b16 %v1316
        %v1669 = vunpack.c.l.b16 %v1317
        %v1670 = vunpack.c.l.b16 %v1318
        %v1671 = vunpack.c.l.b16 %v1319
        %v1672 = vunpack.c.l.b16 %v1320
        %v1673 = vunpack.c.l.b16 %v1321
        %v1674 = vunpack.c.l.b16 %v1322
        %v1675 = vunpack.c.l.b16 %v1323
        %v1676 = vunpack.c.l.b16 %v1324
        %v1677 = vunpack.c.l.b16 %v1325
        %v1678 = vunpack.c.l.b16 %v1326
        %v1679 = vunpack.c.l.b16 %v1327
        %v1680 = vunpack.c.l.b16 %v1328
        %v1681 = vunpack.c.l.b16 %v1329
        %v1682 = vunpack.c.l.b16 %v1330
        %v1683 = vunpack.c.l.b16 %v1331
        %v1684 = vunpack.c.l.b16 %v1332
        %v1685 = vunpack.c.l.b16 %v1333
        %v1686 = vunpack.c.l.b16 %v1334
        %v1687 = vunpack.c.l.b16 %v1335
        %v1688 = vunpack.c.l.b16 %v1336
        %v1689 = vunpack.c.l.b16 %v1337
        %v1690 = vunpack.c.l.b16 %v1338
        %v1691 = vunpack.c.l.b16 %v1339
        %v1692 = vunpack.c.l.b16 %v1340
        %v1693 = vunpack.c.l.b16 %v1341
        %v1694 = vunpack.c.l.b16 %v1342
        %v1695 = vunpack.c.l.b16 %v1343
        %v1696 = vpack.c.b16 %v1649, %v1648
        %v1697 = vpack.c.b16 %v1651, %v1650
        %v1698 = vpack.c.b16 %v1653, %v1652
        %v1699 = vpack.c.b16 %v1655, %v1654
        %v1700 = vpack.c.b16 %v1657, %v1656
        %v1701 = vpack.c.b16 %v1659, %v1658
        %v1702 = vpack.c.b16 %v1661, %v1660
        %v1703 = vpack.c.b16 %v1663, %v1662
        %v1704 = vpack.c.b16 %v1665, %v1664
        %v1705 = vpack.c.b16 %v1667, %v1666
        %v1706 = vpack.c.b16 %v1669, %v1668
        %v1707 = vpack.c.b16 %v1671, %v1670
        %v1708 = vpack.c.b16 %v1673, %v1672
        %v1709 = vpack.c.b16 %v1675, %v1674
        %v1710 = vpack.c.b16 %v1677, %v1676
        %v1711 = vpack.c.b16 %v1679, %v1678
        %v1712 = vpack.c.b16 %v1681, %v1680
        %v1713 = vpack.c.b16 %v1683, %v1682
        %v1714 = vpack.c.b16 %v1685, %v1684
        %v1715 = vpack.c.b16 %v1687, %v1686
        %v1716 = vpack.c.b16 %v1689, %v1688
        %v1717 = vpack.c.b16 %v1691, %v1690
        %v1718 = vpack.c.b16 %v1693, %v1692
        %v1719 = vpack.c.b16 %v1695, %v1694
        %1744 = vmatprep.subr.bf16.mxu0 0
        %1745 = vmatpush1.bf16.msra.mxu0 %v1703
        %1746 = vmatprep.subr.bf16.mxu0 0
        %1747 = vmatpush1.bf16.msra.mxu0 %v1702
        %1748 = vmatprep.subr.bf16.mxu0 0
        %1749 = vmatpush1.bf16.msra.mxu0 %v1701
        %1750 = vmatprep.subr.bf16.mxu0 0
        %1751 = vmatpush1.bf16.msra.mxu0 %v1700
        %1752 = vmatprep.subr.bf16.mxu0 0
        %1753 = vmatpush1.bf16.msra.mxu0 %v1699
        %1754 = vmatprep.subr.bf16.mxu0 0
        %1755 = vmatpush1.bf16.msra.mxu0 %v1698
        %1756 = vmatprep.subr.bf16.mxu0 0
        %1757 = vmatpush1.bf16.msra.mxu0 %v1697
        %1758 = vmatprep.subr.bf16.mxu0 0
        %1759 = vmatpush1.bf16.msra.mxu0 %v1696
        %1760 = vmatprep.subr.bf16.mxu0 0
        %1761 = vmatpush2.bf16.msra.mxu0 %v1711
        %1762 = vmatprep.subr.bf16.mxu0 0
        %1763 = vmatpush2.bf16.msra.mxu0 %v1710
        %1764 = vmatprep.subr.bf16.mxu0 0
        %1765 = vmatpush2.bf16.msra.mxu0 %v1709
        %1766 = vmatprep.subr.bf16.mxu0 0
        %1767 = vmatpush2.bf16.msra.mxu0 %v1708
        %1768 = vmatprep.subr.bf16.mxu0 0
        %1769 = vmatpush2.bf16.msra.mxu0 %v1707
        %1770 = vmatprep.subr.bf16.mxu0 0
        %1771 = vmatpush2.bf16.msra.mxu0 %v1706
        %1772 = vmatprep.subr.bf16.mxu0 0
        %1773 = vmatpush2.bf16.msra.mxu0 %v1705
        %1774 = vmatprep.subr.bf16.mxu0 0
        %1775 = vmatpush2.bf16.msra.mxu0 %v1704
        %1776 = vmatprep.mubr.bf16.mxu0 %v1505
        %1777 = vmatmul.mubr.bf16.gmra.mxu0 %v1504
        %v1778 = vpop.f32.mrf.mxu0
        %v1779 = vadd.f32 0.0, %v1778
        %v1780 = vpop.f32.mrf.mxu0
        %v1781 = vpop.f32.mrf.mxu0
        %v1782 = vadd.f32 0.0, %v1781
        %v1783 = vpop.f32.mrf.mxu0
        %1784 = vmatprep.mubr.bf16.mxu0 %v1508
        %1785 = vmatmul.mubr.bf16.gmra.mxu0 %v1507
        %v1786 = vpop.f32.mrf.mxu0
        %v1787 = vadd.f32 0.0, %v1786
        %v1788 = vpop.f32.mrf.mxu0
        %v1789 = vpop.f32.mrf.mxu0
        %v1790 = vadd.f32 0.0, %v1789
        %v1791 = vpop.f32.mrf.mxu0
        %1792 = vmatprep.mubr.bf16.mxu0 %v1511
        %1793 = vmatmul.mubr.bf16.gmra.mxu0 %v1510
        %v1794 = vpop.f32.mrf.mxu0
        %v1795 = vadd.f32 0.0, %v1794
        %v1796 = vpop.f32.mrf.mxu0
        %v1797 = vpop.f32.mrf.mxu0
        %v1798 = vadd.f32 0.0, %v1797
        %v1799 = vpop.f32.mrf.mxu0
        %1800 = vmatprep.mubr.bf16.mxu0 %v1514
        %1801 = vmatmul.mubr.bf16.gmra.mxu0 %v1513
        %v1802 = vpop.f32.mrf.mxu0
        %v1803 = vadd.f32 0.0, %v1802
        %v1804 = vpop.f32.mrf.mxu0
        %v1805 = vpop.f32.mrf.mxu0
        %v1806 = vadd.f32 0.0, %v1805
        %v1807 = vpop.f32.mrf.mxu0
        %1808 = vmatprep.mubr.bf16.mxu0 %v1517
        %1809 = vmatmul.mubr.bf16.gmra.mxu0 %v1516
        %v1810 = vpop.f32.mrf.mxu0
        %v1811 = vadd.f32 0.0, %v1810
        %v1812 = vpop.f32.mrf.mxu0
        %v1813 = vpop.f32.mrf.mxu0
        %v1814 = vadd.f32 0.0, %v1813
        %v1815 = vpop.f32.mrf.mxu0
        %1816 = vmatprep.mubr.bf16.mxu0 %v1520
        %1817 = vmatmul.mubr.bf16.gmra.mxu0 %v1519
        %v1818 = vpop.f32.mrf.mxu0
        %v1819 = vadd.f32 0.0, %v1818
        %v1820 = vpop.f32.mrf.mxu0
        %v1821 = vpop.f32.mrf.mxu0
        %v1822 = vadd.f32 0.0, %v1821
        %v1823 = vpop.f32.mrf.mxu0
        %1824 = vmatprep.mubr.bf16.mxu0 %v1523
        %1825 = vmatmul.mubr.bf16.gmra.mxu0 %v1522
        %v1826 = vpop.f32.mrf.mxu0
        %v1827 = vadd.f32 0.0, %v1826
        %v1828 = vpop.f32.mrf.mxu0
        %v1829 = vpop.f32.mrf.mxu0
        %v1830 = vadd.f32 0.0, %v1829
        %v1831 = vpop.f32.mrf.mxu0
        %1832 = vmatprep.mubr.bf16.mxu0 %v1526
        %1833 = vmatmul.mubr.bf16.gmra.mxu0 %v1525
        %v1834 = vpop.f32.mrf.mxu0
        %v1835 = vadd.f32 0.0, %v1834
        %v1836 = vpop.f32.mrf.mxu0
        %v1837 = vpop.f32.mrf.mxu0
        %v1838 = vadd.f32 0.0, %v1837
        %v1839 = vpop.f32.mrf.mxu0
        %1840 = vmatprep.mubr.bf16.mxu0 %v1529
        %1841 = vmatmul.mubr.bf16.gmra.mxu0 %v1528
        %v1842 = vpop.f32.mrf.mxu0
        %v1843 = vadd.f32 0.0, %v1842
        %v1844 = vpop.f32.mrf.mxu0
        %v1845 = vpop.f32.mrf.mxu0
        %v1846 = vadd.f32 0.0, %v1845
        %v1847 = vpop.f32.mrf.mxu0
        %1848 = vmatprep.mubr.bf16.mxu0 %v1532
        %1849 = vmatmul.mubr.bf16.gmra.mxu0 %v1531
        %v1850 = vpop.f32.mrf.mxu0
        %v1851 = vadd.f32 0.0, %v1850
        %v1852 = vpop.f32.mrf.mxu0
        %v1853 = vpop.f32.mrf.mxu0
        %v1854 = vadd.f32 0.0, %v1853
        %v1855 = vpop.f32.mrf.mxu0
        %1856 = vmatprep.mubr.bf16.mxu0 %v1535
        %1857 = vmatmul.mubr.bf16.gmra.mxu0 %v1534
        %v1858 = vpop.f32.mrf.mxu0
        %v1859 = vadd.f32 0.0, %v1858
        %v1860 = vpop.f32.mrf.mxu0
        %v1861 = vpop.f32.mrf.mxu0
        %v1862 = vadd.f32 0.0, %v1861
        %v1863 = vpop.f32.mrf.mxu0
        %1864 = vmatprep.mubr.bf16.mxu0 %v1538
        %1865 = vmatmul.mubr.bf16.gmra.mxu0 %v1537
        %v1866 = vpop.f32.mrf.mxu0
        %v1867 = vadd.f32 0.0, %v1866
        %v1868 = vpop.f32.mrf.mxu0
        %v1869 = vpop.f32.mrf.mxu0
        %v1870 = vadd.f32 0.0, %v1869
        %v1871 = vpop.f32.mrf.mxu0
        %1872 = vmatprep.mubr.bf16.mxu0 %v1541
        %1873 = vmatmul.mubr.bf16.gmra.mxu0 %v1540
        %v1874 = vpop.f32.mrf.mxu0
        %v1875 = vadd.f32 0.0, %v1874
        %v1876 = vpop.f32.mrf.mxu0
        %v1877 = vpop.f32.mrf.mxu0
        %v1878 = vadd.f32 0.0, %v1877
        %v1879 = vpop.f32.mrf.mxu0
        %1880 = vmatprep.mubr.bf16.mxu0 %v1544
        %1881 = vmatmul.mubr.bf16.gmra.mxu0 %v1543
        %v1882 = vpop.f32.mrf.mxu0
        %v1883 = vadd.f32 0.0, %v1882
        %v1884 = vpop.f32.mrf.mxu0
        %v1885 = vpop.f32.mrf.mxu0
        %v1886 = vadd.f32 0.0, %v1885
        %v1887 = vpop.f32.mrf.mxu0
        %1888 = vmatprep.mubr.bf16.mxu0 %v1547
        %1889 = vmatmul.mubr.bf16.gmra.mxu0 %v1546
        %v1890 = vpop.f32.mrf.mxu0
        %v1891 = vadd.f32 0.0, %v1890
        %v1892 = vpop.f32.mrf.mxu0
        %v1893 = vpop.f32.mrf.mxu0
        %v1894 = vadd.f32 0.0, %v1893
        %v1895 = vpop.f32.mrf.mxu0
        %1896 = vmatprep.mubr.bf16.mxu0 %v1550
        %1897 = vmatmul.mubr.bf16.gmra.mxu0 %v1549
        %v1898 = vpop.f32.mrf.mxu0
        %v1899 = vadd.f32 0.0, %v1898
        %v1900 = vpop.f32.mrf.mxu0
        %v1901 = vpop.f32.mrf.mxu0
        %v1902 = vadd.f32 0.0, %v1901
        %v1903 = vpop.f32.mrf.mxu0
        %1904 = vdwg.mxu0
        %1905 = vmatprep.subr.bf16.mxu0 0
        %1906 = vmatpush1.bf16.msra.mxu0 %v1719
        %1907 = vmatprep.subr.bf16.mxu0 0
        %1908 = vmatpush1.bf16.msra.mxu0 %v1718
        %1909 = vmatprep.subr.bf16.mxu0 0
        %1910 = vmatpush1.bf16.msra.mxu0 %v1717
        %1911 = vmatprep.subr.bf16.mxu0 0
        %1912 = vmatpush1.bf16.msra.mxu0 %v1716
        %1913 = vmatprep.subr.bf16.mxu0 0
        %1914 = vmatpush1.bf16.msra.mxu0 %v1715
        %1915 = vmatprep.subr.bf16.mxu0 0
        %1916 = vmatpush1.bf16.msra.mxu0 %v1714
        %1917 = vmatprep.subr.bf16.mxu0 0
        %1918 = vmatpush1.bf16.msra.mxu0 %v1713
        %1919 = vmatprep.subr.bf16.mxu0 0
        %1920 = vmatpush1.bf16.msra.mxu0 %v1712
        %1921 = vmatprep.subr.bf16.mxu0 0
        %1922 = vmatpush2.bf16.msra.mxu0 0
        %1923 = vmatprep.subr.bf16.mxu0 0
        %1924 = vmatpush2.bf16.msra.mxu0 0
        %1925 = vmatprep.subr.bf16.mxu0 0
        %1926 = vmatpush2.bf16.msra.mxu0 0
        %1927 = vmatprep.subr.bf16.mxu0 0
        %1928 = vmatpush2.bf16.msra.mxu0 0
        %1929 = vmatprep.subr.bf16.mxu0 0
        %1930 = vmatpush2.bf16.msra.mxu0 0
        %1931 = vmatprep.subr.bf16.mxu0 0
        %1932 = vmatpush2.bf16.msra.mxu0 0
        %1933 = vmatprep.subr.bf16.mxu0 0
        %1934 = vmatpush2.bf16.msra.mxu0 0
        %1935 = vmatprep.subr.bf16.mxu0 0
        %1936 = vmatpush2.bf16.msra.mxu0 0
        %1937 = vmatprep.mubr.bf16.mxu0 0
        %1938 = vmatmul.mubr.bf16.gmra.mxu0 %v1506
        %v1939 = vpop.f32.mrf.mxu0
        %v1940 = vadd.f32 %v1779, %v1939
        %v1941 = vpop.f32.mrf.mxu0
        %v1942 = vpop.f32.mrf.mxu0
        %v1943 = vadd.f32 %v1782, %v1942
        %v1944 = vpop.f32.mrf.mxu0
        %1945 = vmatprep.mubr.bf16.mxu0 0
        %1946 = vmatmul.mubr.bf16.gmra.mxu0 %v1509
        %v1947 = vpop.f32.mrf.mxu0
        %v1948 = vadd.f32 %v1787, %v1947
        %v1949 = vpop.f32.mrf.mxu0
        %v1950 = vpop.f32.mrf.mxu0
        %v1951 = vadd.f32 %v1790, %v1950
        %v1952 = vpop.f32.mrf.mxu0
        %1953 = vmatprep.mubr.bf16.mxu0 0
        %1954 = vmatmul.mubr.bf16.gmra.mxu0 %v1512
        %v1955 = vpop.f32.mrf.mxu0
        %v1956 = vadd.f32 %v1795, %v1955
        %v1957 = vpop.f32.mrf.mxu0
        %v1958 = vpop.f32.mrf.mxu0
        %v1959 = vadd.f32 %v1798, %v1958
        %v1960 = vpop.f32.mrf.mxu0
        %1961 = vmatprep.mubr.bf16.mxu0 0
        %1962 = vmatmul.mubr.bf16.gmra.mxu0 %v1515
        %v1963 = vpop.f32.mrf.mxu0
        %v1964 = vadd.f32 %v1803, %v1963
        %v1965 = vpop.f32.mrf.mxu0
        %v1966 = vpop.f32.mrf.mxu0
        %v1967 = vadd.f32 %v1806, %v1966
        %v1968 = vpop.f32.mrf.mxu0
        %1969 = vmatprep.mubr.bf16.mxu0 0
        %1970 = vmatmul.mubr.bf16.gmra.mxu0 %v1518
        %v1971 = vpop.f32.mrf.mxu0
        %v1972 = vadd.f32 %v1811, %v1971
        %v1973 = vpop.f32.mrf.mxu0
        %v1974 = vpop.f32.mrf.mxu0
        %v1975 = vadd.f32 %v1814, %v1974
        %v1976 = vpop.f32.mrf.mxu0
        %1977 = vmatprep.mubr.bf16.mxu0 0
        %1978 = vmatmul.mubr.bf16.gmra.mxu0 %v1521
        %v1979 = vpop.f32.mrf.mxu0
        %v1980 = vadd.f32 %v1819, %v1979
        %v1981 = vpop.f32.mrf.mxu0
        %v1982 = vpop.f32.mrf.mxu0
        %v1983 = vadd.f32 %v1822, %v1982
        %v1984 = vpop.f32.mrf.mxu0
        %1985 = vmatprep.mubr.bf16.mxu0 0
        %1986 = vmatmul.mubr.bf16.gmra.mxu0 %v1524
        %v1987 = vpop.f32.mrf.mxu0
        %v1988 = vadd.f32 %v1827, %v1987
        %v1989 = vpop.f32.mrf.mxu0
        %v1990 = vpop.f32.mrf.mxu0
        %v1991 = vadd.f32 %v1830, %v1990
        %v1992 = vpop.f32.mrf.mxu0
        %1993 = vmatprep.mubr.bf16.mxu0 0
        %1994 = vmatmul.mubr.bf16.gmra.mxu0 %v1527
        %v1995 = vpop.f32.mrf.mxu0
        %v1996 = vadd.f32 %v1835, %v1995
        %v1997 = vpop.f32.mrf.mxu0
        %v1998 = vpop.f32.mrf.mxu0
        %v1999 = vadd.f32 %v1838, %v1998
        %v2000 = vpop.f32.mrf.mxu0
        %2001 = vmatprep.mubr.bf16.mxu0 0
        %2002 = vmatmul.mubr.bf16.gmra.mxu0 %v1530
        %v2003 = vpop.f32.mrf.mxu0
        %v2004 = vadd.f32 %v1843, %v2003
        %v2005 = vpop.f32.mrf.mxu0
        %v2006 = vpop.f32.mrf.mxu0
        %v2007 = vadd.f32 %v1846, %v2006
        %v2008 = vpop.f32.mrf.mxu0
        %2009 = vmatprep.mubr.bf16.mxu0 0
        %2010 = vmatmul.mubr.bf16.gmra.mxu0 %v1533
        %v2011 = vpop.f32.mrf.mxu0
        %v2012 = vadd.f32 %v1851, %v2011
        %v2013 = vpop.f32.mrf.mxu0
        %v2014 = vpop.f32.mrf.mxu0
        %v2015 = vadd.f32 %v1854, %v2014
        %v2016 = vpop.f32.mrf.mxu0
        %2017 = vmatprep.mubr.bf16.mxu0 0
        %2018 = vmatmul.mubr.bf16.gmra.mxu0 %v1536
        %v2019 = vpop.f32.mrf.mxu0
        %v2020 = vadd.f32 %v1859, %v2019
        %v2021 = vpop.f32.mrf.mxu0
        %v2022 = vpop.f32.mrf.mxu0
        %v2023 = vadd.f32 %v1862, %v2022
        %v2024 = vpop.f32.mrf.mxu0
        %2025 = vmatprep.mubr.bf16.mxu0 0
        %2026 = vmatmul.mubr.bf16.gmra.mxu0 %v1539
        %v2027 = vpop.f32.mrf.mxu0
        %v2028 = vadd.f32 %v1867, %v2027
        %v2029 = vpop.f32.mrf.mxu0
        %v2030 = vpop.f32.mrf.mxu0
        %v2031 = vadd.f32 %v1870, %v2030
        %v2032 = vpop.f32.mrf.mxu0
        %2033 = vmatprep.mubr.bf16.mxu0 0
        %2034 = vmatmul.mubr.bf16.gmra.mxu0 %v1542
        %v2035 = vpop.f32.mrf.mxu0
        %v2036 = vadd.f32 %v1875, %v2035
        %v2037 = vpop.f32.mrf.mxu0
        %v2038 = vpop.f32.mrf.mxu0
        %v2039 = vadd.f32 %v1878, %v2038
        %v2040 = vpop.f32.mrf.mxu0
        %2041 = vmatprep.mubr.bf16.mxu0 0
        %2042 = vmatmul.mubr.bf16.gmra.mxu0 %v1545
        %v2043 = vpop.f32.mrf.mxu0
        %v2044 = vadd.f32 %v1883, %v2043
        %v2045 = vpop.f32.mrf.mxu0
        %v2046 = vpop.f32.mrf.mxu0
        %v2047 = vadd.f32 %v1886, %v2046
        %v2048 = vpop.f32.mrf.mxu0
        %2049 = vmatprep.mubr.bf16.mxu0 0
        %2050 = vmatmul.mubr.bf16.gmra.mxu0 %v1548
        %v2051 = vpop.f32.mrf.mxu0
        %v2052 = vadd.f32 %v1891, %v2051
        %v2053 = vpop.f32.mrf.mxu0
        %v2054 = vpop.f32.mrf.mxu0
        %v2055 = vadd.f32 %v1894, %v2054
        %v2056 = vpop.f32.mrf.mxu0
        %2057 = vmatprep.mubr.bf16.mxu0 0
        %2058 = vmatmul.mubr.bf16.gmra.mxu0 %v1551
        %v2059 = vpop.f32.mrf.mxu0
        %v2060 = vadd.f32 %v1899, %v2059
        %v2061 = vpop.f32.mrf.mxu0
        %v2062 = vpop.f32.mrf.mxu0
        %v2063 = vadd.f32 %v1902, %v2062
        %v2064 = vpop.f32.mrf.mxu0
        %2065 = vdwg.mxu0
        %v2130 = vunpack.c.l.b16 %v1119
        %v2131 = vunpack.c.h.b16 %v1119
        %v2132 = vunpack.c.l.b16 %v1120
        %v2133 = vunpack.c.l.b16 %v1121
        %v2134 = vunpack.c.h.b16 %v1121
        %v2135 = vunpack.c.l.b16 %v1122
        %v2136 = vunpack.c.l.b16 %v1123
        %v2137 = vunpack.c.h.b16 %v1123
        %v2138 = vunpack.c.l.b16 %v1124
        %v2139 = vunpack.c.l.b16 %v1125
        %v2140 = vunpack.c.h.b16 %v1125
        %v2141 = vunpack.c.l.b16 %v1126
        %v2142 = vunpack.c.l.b16 %v1127
        %v2143 = vunpack.c.h.b16 %v1127
        %v2144 = vunpack.c.l.b16 %v1128
        %v2145 = vunpack.c.l.b16 %v1129
        %v2146 = vunpack.c.h.b16 %v1129
        %v2147 = vunpack.c.l.b16 %v1130
        %v2148 = vunpack.c.l.b16 %v1131
        %v2149 = vunpack.c.h.b16 %v1131
        %v2150 = vunpack.c.l.b16 %v1132
        %v2151 = vunpack.c.l.b16 %v1133
        %v2152 = vunpack.c.h.b16 %v1133
        %v2153 = vunpack.c.l.b16 %v1134
        %v2154 = vunpack.c.l.b16 %v1135
        %v2155 = vunpack.c.h.b16 %v1135
        %v2156 = vunpack.c.l.b16 %v1136
        %v2157 = vunpack.c.l.b16 %v1137
        %v2158 = vunpack.c.h.b16 %v1137
        %v2159 = vunpack.c.l.b16 %v1138
        %v2160 = vunpack.c.l.b16 %v1139
        %v2161 = vunpack.c.h.b16 %v1139
        %v2162 = vunpack.c.l.b16 %v1140
        %v2163 = vunpack.c.l.b16 %v1141
        %v2164 = vunpack.c.h.b16 %v1141
        %v2165 = vunpack.c.l.b16 %v1142
        %v2166 = vunpack.c.l.b16 %v1143
        %v2167 = vunpack.c.h.b16 %v1143
        %v2168 = vunpack.c.l.b16 %v1144
        %v2169 = vunpack.c.l.b16 %v1145
        %v2170 = vunpack.c.h.b16 %v1145
        %v2171 = vunpack.c.l.b16 %v1146
        %v2172 = vunpack.c.l.b16 %v1147
        %v2173 = vunpack.c.h.b16 %v1147
        %v2174 = vunpack.c.l.b16 %v1148
        %v2175 = vunpack.c.l.b16 %v1149
        %v2176 = vunpack.c.h.b16 %v1149
        %v2177 = vunpack.c.l.b16 %v1150
        %v2178 = vunpack.c.l.b16 %v1151
        %v2179 = vunpack.c.h.b16 %v1151
        %v2180 = vunpack.c.l.b16 %v1152
        %v2181 = vunpack.c.l.b16 %v1153
        %v2182 = vunpack.c.h.b16 %v1153
        %v2183 = vunpack.c.l.b16 %v1154
        %v2184 = vunpack.c.l.b16 %v1155
        %v2185 = vunpack.c.h.b16 %v1155
        %v2186 = vunpack.c.l.b16 %v1156
        %v2187 = vunpack.c.l.b16 %v1157
        %v2188 = vunpack.c.h.b16 %v1157
        %v2189 = vunpack.c.l.b16 %v1158
        %v2190 = vunpack.c.l.b16 %v1159
        %v2191 = vunpack.c.h.b16 %v1159
        %v2192 = vunpack.c.l.b16 %v1160
        %v2193 = vunpack.c.l.b16 %v1161
        %v2194 = vunpack.c.h.b16 %v1161
        %v2195 = vunpack.c.l.b16 %v1162
        %v2196 = vunpack.c.l.b16 %v1163
        %v2197 = vunpack.c.h.b16 %v1163
        %v2198 = vunpack.c.l.b16 %v1164
        %v2199 = vunpack.c.l.b16 %v1165
        %v2200 = vunpack.c.h.b16 %v1165
        %v2201 = vunpack.c.l.b16 %v1166
        %v2202 = vunpack.c.l.b16 %v1167
        %v2203 = vunpack.c.h.b16 %v1167
        %v2204 = vunpack.c.l.b16 %v1168
        %v2205 = vunpack.c.l.b16 %v1169
        %v2206 = vunpack.c.h.b16 %v1169
        %v2207 = vunpack.c.l.b16 %v1170
        %v2208 = vunpack.c.l.b16 %v1171
        %v2209 = vunpack.c.h.b16 %v1171
        %v2210 = vunpack.c.l.b16 %v1172
        %v2211 = vunpack.c.l.b16 %v1173
        %v2212 = vunpack.c.h.b16 %v1173
        %v2213 = vunpack.c.l.b16 %v1174
        %v2214 = vunpack.c.l.b16 %v1175
        %v2215 = vunpack.c.h.b16 %v1175
        %v2216 = vunpack.c.l.b16 %v1176
        %v2217 = vunpack.c.l.b16 %v1177
        %v2218 = vunpack.c.h.b16 %v1177
        %v2219 = vunpack.c.l.b16 %v1178
        %v2220 = vunpack.c.l.b16 %v1179
        %v2221 = vunpack.c.h.b16 %v1179
        %v2222 = vunpack.c.l.b16 %v1180
        %v2223 = vunpack.c.l.b16 %v1181
        %v2224 = vunpack.c.h.b16 %v1181
        %v2225 = vunpack.c.l.b16 %v1182
        %v2226 = vpack.c.b16 %v2133, %v2130
        %v2227 = vpack.c.b16 %v2134, %v2131
        %v2228 = vpack.c.b16 %v2135, %v2132
        %v2229 = vpack.c.b16 %v2139, %v2136
        %v2230 = vpack.c.b16 %v2140, %v2137
        %v2231 = vpack.c.b16 %v2141, %v2138
        %v2232 = vpack.c.b16 %v2145, %v2142
        %v2233 = vpack.c.b16 %v2146, %v2143
        %v2234 = vpack.c.b16 %v2147, %v2144
        %v2235 = vpack.c.b16 %v2151, %v2148
        %v2236 = vpack.c.b16 %v2152, %v2149
        %v2237 = vpack.c.b16 %v2153, %v2150
        %v2238 = vpack.c.b16 %v2157, %v2154
        %v2239 = vpack.c.b16 %v2158, %v2155
        %v2240 = vpack.c.b16 %v2159, %v2156
        %v2241 = vpack.c.b16 %v2163, %v2160
        %v2242 = vpack.c.b16 %v2164, %v2161
        %v2243 = vpack.c.b16 %v2165, %v2162
        %v2244 = vpack.c.b16 %v2169, %v2166
        %v2245 = vpack.c.b16 %v2170, %v2167
        %v2246 = vpack.c.b16 %v2171, %v2168
        %v2247 = vpack.c.b16 %v2175, %v2172
        %v2248 = vpack.c.b16 %v2176, %v2173
        %v2249 = vpack.c.b16 %v2177, %v2174
        %v2250 = vpack.c.b16 %v2181, %v2178
        %v2251 = vpack.c.b16 %v2182, %v2179
        %v2252 = vpack.c.b16 %v2183, %v2180
        %v2253 = vpack.c.b16 %v2187, %v2184
        %v2254 = vpack.c.b16 %v2188, %v2185
        %v2255 = vpack.c.b16 %v2189, %v2186
        %v2256 = vpack.c.b16 %v2193, %v2190
        %v2257 = vpack.c.b16 %v2194, %v2191
        %v2258 = vpack.c.b16 %v2195, %v2192
        %v2259 = vpack.c.b16 %v2199, %v2196
        %v2260 = vpack.c.b16 %v2200, %v2197
        %v2261 = vpack.c.b16 %v2201, %v2198
        %v2262 = vpack.c.b16 %v2205, %v2202
        %v2263 = vpack.c.b16 %v2206, %v2203
        %v2264 = vpack.c.b16 %v2207, %v2204
        %v2265 = vpack.c.b16 %v2211, %v2208
        %v2266 = vpack.c.b16 %v2212, %v2209
        %v2267 = vpack.c.b16 %v2213, %v2210
        %v2268 = vpack.c.b16 %v2217, %v2214
        %v2269 = vpack.c.b16 %v2218, %v2215
        %v2270 = vpack.c.b16 %v2219, %v2216
        %v2271 = vpack.c.b16 %v2223, %v2220
        %v2272 = vpack.c.b16 %v2224, %v2221
        %v2273 = vpack.c.b16 %v2225, %v2222
        %v2370 = vunpack.c.l.b16 %v1183
        %v2371 = vunpack.c.l.b16 %v1184
        %v2372 = vunpack.c.l.b16 %v1185
        %v2373 = vunpack.c.l.b16 %v1186
        %v2374 = vunpack.c.l.b16 %v1187
        %v2375 = vunpack.c.l.b16 %v1188
        %v2376 = vunpack.c.l.b16 %v1189
        %v2377 = vunpack.c.l.b16 %v1190
        %v2378 = vunpack.c.l.b16 %v1191
        %v2379 = vunpack.c.l.b16 %v1192
        %v2380 = vunpack.c.l.b16 %v1193
        %v2381 = vunpack.c.l.b16 %v1194
        %v2382 = vunpack.c.l.b16 %v1195
        %v2383 = vunpack.c.l.b16 %v1196
        %v2384 = vunpack.c.l.b16 %v1197
        %v2385 = vunpack.c.l.b16 %v1198
        %v2386 = vunpack.c.l.b16 %v1199
        %v2387 = vunpack.c.l.b16 %v1200
        %v2388 = vunpack.c.l.b16 %v1201
        %v2389 = vunpack.c.l.b16 %v1202
        %v2390 = vunpack.c.l.b16 %v1203
        %v2391 = vunpack.c.l.b16 %v1204
        %v2392 = vunpack.c.l.b16 %v1205
        %v2393 = vunpack.c.l.b16 %v1206
        %v2394 = vunpack.c.l.b16 %v1207
        %v2395 = vunpack.c.l.b16 %v1208
        %v2396 = vunpack.c.l.b16 %v1209
        %v2397 = vunpack.c.l.b16 %v1210
        %v2398 = vunpack.c.l.b16 %v1211
        %v2399 = vunpack.c.l.b16 %v1212
        %v2400 = vunpack.c.l.b16 %v1213
        %v2401 = vunpack.c.l.b16 %v1214
        %v2402 = vunpack.c.l.b16 %v1215
        %v2403 = vunpack.c.l.b16 %v1216
        %v2404 = vunpack.c.l.b16 %v1217
        %v2405 = vunpack.c.l.b16 %v1218
        %v2406 = vunpack.c.l.b16 %v1219
        %v2407 = vunpack.c.l.b16 %v1220
        %v2408 = vunpack.c.l.b16 %v1221
        %v2409 = vunpack.c.l.b16 %v1222
        %v2410 = vunpack.c.l.b16 %v1223
        %v2411 = vunpack.c.l.b16 %v1224
        %v2412 = vunpack.c.l.b16 %v1225
        %v2413 = vunpack.c.l.b16 %v1226
        %v2414 = vunpack.c.l.b16 %v1227
        %v2415 = vunpack.c.l.b16 %v1228
        %v2416 = vunpack.c.l.b16 %v1229
        %v2417 = vunpack.c.l.b16 %v1230
        %v2418 = vpack.c.b16 %v2371, %v2370
        %v2419 = vpack.c.b16 %v2373, %v2372
        %v2420 = vpack.c.b16 %v2375, %v2374
        %v2421 = vpack.c.b16 %v2377, %v2376
        %v2422 = vpack.c.b16 %v2379, %v2378
        %v2423 = vpack.c.b16 %v2381, %v2380
        %v2424 = vpack.c.b16 %v2383, %v2382
        %v2425 = vpack.c.b16 %v2385, %v2384
        %v2426 = vpack.c.b16 %v2387, %v2386
        %v2427 = vpack.c.b16 %v2389, %v2388
        %v2428 = vpack.c.b16 %v2391, %v2390
        %v2429 = vpack.c.b16 %v2393, %v2392
        %v2430 = vpack.c.b16 %v2395, %v2394
        %v2431 = vpack.c.b16 %v2397, %v2396
        %v2432 = vpack.c.b16 %v2399, %v2398
        %v2433 = vpack.c.b16 %v2401, %v2400
        %v2434 = vpack.c.b16 %v2403, %v2402
        %v2435 = vpack.c.b16 %v2405, %v2404
        %v2436 = vpack.c.b16 %v2407, %v2406
        %v2437 = vpack.c.b16 %v2409, %v2408
        %v2438 = vpack.c.b16 %v2411, %v2410
        %v2439 = vpack.c.b16 %v2413, %v2412
        %v2440 = vpack.c.b16 %v2415, %v2414
        %v2441 = vpack.c.b16 %v2417, %v2416
        %2466 = vmatprep.subr.bf16.mxu0 0
        %2467 = vmatpush1.bf16.msra.mxu0 %v2425
        %2468 = vmatprep.subr.bf16.mxu0 0
        %2469 = vmatpush1.bf16.msra.mxu0 %v2424
        %2470 = vmatprep.subr.bf16.mxu0 0
        %2471 = vmatpush1.bf16.msra.mxu0 %v2423
        %2472 = vmatprep.subr.bf16.mxu0 0
        %2473 = vmatpush1.bf16.msra.mxu0 %v2422
        %2474 = vmatprep.subr.bf16.mxu0 0
        %2475 = vmatpush1.bf16.msra.mxu0 %v2421
        %2476 = vmatprep.subr.bf16.mxu0 0
        %2477 = vmatpush1.bf16.msra.mxu0 %v2420
        %2478 = vmatprep.subr.bf16.mxu0 0
        %2479 = vmatpush1.bf16.msra.mxu0 %v2419
        %2480 = vmatprep.subr.bf16.mxu0 0
        %2481 = vmatpush1.bf16.msra.mxu0 %v2418
        %2482 = vmatprep.subr.bf16.mxu0 0
        %2483 = vmatpush2.bf16.msra.mxu0 %v2433
        %2484 = vmatprep.subr.bf16.mxu0 0
        %2485 = vmatpush2.bf16.msra.mxu0 %v2432
        %2486 = vmatprep.subr.bf16.mxu0 0
        %2487 = vmatpush2.bf16.msra.mxu0 %v2431
        %2488 = vmatprep.subr.bf16.mxu0 0
        %2489 = vmatpush2.bf16.msra.mxu0 %v2430
        %2490 = vmatprep.subr.bf16.mxu0 0
        %2491 = vmatpush2.bf16.msra.mxu0 %v2429
        %2492 = vmatprep.subr.bf16.mxu0 0
        %2493 = vmatpush2.bf16.msra.mxu0 %v2428
        %2494 = vmatprep.subr.bf16.mxu0 0
        %2495 = vmatpush2.bf16.msra.mxu0 %v2427
        %2496 = vmatprep.subr.bf16.mxu0 0
        %2497 = vmatpush2.bf16.msra.mxu0 %v2426
        %2498 = vmatprep.mubr.bf16.mxu0 %v2227
        %2499 = vmatmul.mubr.bf16.gmra.mxu0 %v2226
        %v2500 = vpop.f32.mrf.mxu0
        %v2501 = vadd.f32 %v1940, %v2500
        %v2502 = vpop.f32.mrf.mxu0
        %v2503 = vpop.f32.mrf.mxu0
        %v2504 = vadd.f32 %v1943, %v2503
        %v2505 = vpop.f32.mrf.mxu0
        %2506 = vmatprep.mubr.bf16.mxu0 %v2230
        %2507 = vmatmul.mubr.bf16.gmra.mxu0 %v2229
        %v2508 = vpop.f32.mrf.mxu0
        %v2509 = vadd.f32 %v1948, %v2508
        %v2510 = vpop.f32.mrf.mxu0
        %v2511 = vpop.f32.mrf.mxu0
        %v2512 = vadd.f32 %v1951, %v2511
        %v2513 = vpop.f32.mrf.mxu0
        %2514 = vmatprep.mubr.bf16.mxu0 %v2233
        %2515 = vmatmul.mubr.bf16.gmra.mxu0 %v2232
        %v2516 = vpop.f32.mrf.mxu0
        %v2517 = vadd.f32 %v1956, %v2516
        %v2518 = vpop.f32.mrf.mxu0
        %v2519 = vpop.f32.mrf.mxu0
        %v2520 = vadd.f32 %v1959, %v2519
        %v2521 = vpop.f32.mrf.mxu0
        %2522 = vmatprep.mubr.bf16.mxu0 %v2236
        %2523 = vmatmul.mubr.bf16.gmra.mxu0 %v2235
        %v2524 = vpop.f32.mrf.mxu0
        %v2525 = vadd.f32 %v1964, %v2524
        %v2526 = vpop.f32.mrf.mxu0
        %v2527 = vpop.f32.mrf.mxu0
        %v2528 = vadd.f32 %v1967, %v2527
        %v2529 = vpop.f32.mrf.mxu0
        %2530 = vmatprep.mubr.bf16.mxu0 %v2239
        %2531 = vmatmul.mubr.bf16.gmra.mxu0 %v2238
        %v2532 = vpop.f32.mrf.mxu0
        %v2533 = vadd.f32 %v1972, %v2532
        %v2534 = vpop.f32.mrf.mxu0
        %v2535 = vpop.f32.mrf.mxu0
        %v2536 = vadd.f32 %v1975, %v2535
        %v2537 = vpop.f32.mrf.mxu0
        %2538 = vmatprep.mubr.bf16.mxu0 %v2242
        %2539 = vmatmul.mubr.bf16.gmra.mxu0 %v2241
        %v2540 = vpop.f32.mrf.mxu0
        %v2541 = vadd.f32 %v1980, %v2540
        %v2542 = vpop.f32.mrf.mxu0
        %v2543 = vpop.f32.mrf.mxu0
        %v2544 = vadd.f32 %v1983, %v2543
        %v2545 = vpop.f32.mrf.mxu0
        %2546 = vmatprep.mubr.bf16.mxu0 %v2245
        %2547 = vmatmul.mubr.bf16.gmra.mxu0 %v2244
        %v2548 = vpop.f32.mrf.mxu0
        %v2549 = vadd.f32 %v1988, %v2548
        %v2550 = vpop.f32.mrf.mxu0
        %v2551 = vpop.f32.mrf.mxu0
        %v2552 = vadd.f32 %v1991, %v2551
        %v2553 = vpop.f32.mrf.mxu0
        %2554 = vmatprep.mubr.bf16.mxu0 %v2248
        %2555 = vmatmul.mubr.bf16.gmra.mxu0 %v2247
        %v2556 = vpop.f32.mrf.mxu0
        %v2557 = vadd.f32 %v1996, %v2556
        %v2558 = vpop.f32.mrf.mxu0
        %v2559 = vpop.f32.mrf.mxu0
        %v2560 = vadd.f32 %v1999, %v2559
        %v2561 = vpop.f32.mrf.mxu0
        %2562 = vmatprep.mubr.bf16.mxu0 %v2251
        %2563 = vmatmul.mubr.bf16.gmra.mxu0 %v2250
        %v2564 = vpop.f32.mrf.mxu0
        %v2565 = vadd.f32 %v2004, %v2564
        %v2566 = vpop.f32.mrf.mxu0
        %v2567 = vpop.f32.mrf.mxu0
        %v2568 = vadd.f32 %v2007, %v2567
        %v2569 = vpop.f32.mrf.mxu0
        %2570 = vmatprep.mubr.bf16.mxu0 %v2254
        %2571 = vmatmul.mubr.bf16.gmra.mxu0 %v2253
        %v2572 = vpop.f32.mrf.mxu0
        %v2573 = vadd.f32 %v2012, %v2572
        %v2574 = vpop.f32.mrf.mxu0
        %v2575 = vpop.f32.mrf.mxu0
        %v2576 = vadd.f32 %v2015, %v2575
        %v2577 = vpop.f32.mrf.mxu0
        %2578 = vmatprep.mubr.bf16.mxu0 %v2257
        %2579 = vmatmul.mubr.bf16.gmra.mxu0 %v2256
        %v2580 = vpop.f32.mrf.mxu0
        %v2581 = vadd.f32 %v2020, %v2580
        %v2582 = vpop.f32.mrf.mxu0
        %v2583 = vpop.f32.mrf.mxu0
        %v2584 = vadd.f32 %v2023, %v2583
        %v2585 = vpop.f32.mrf.mxu0
        %2586 = vmatprep.mubr.bf16.mxu0 %v2260
        %2587 = vmatmul.mubr.bf16.gmra.mxu0 %v2259
        %v2588 = vpop.f32.mrf.mxu0
        %v2589 = vadd.f32 %v2028, %v2588
        %v2590 = vpop.f32.mrf.mxu0
        %v2591 = vpop.f32.mrf.mxu0
        %v2592 = vadd.f32 %v2031, %v2591
        %v2593 = vpop.f32.mrf.mxu0
        %2594 = vmatprep.mubr.bf16.mxu0 %v2263
        %2595 = vmatmul.mubr.bf16.gmra.mxu0 %v2262
        %v2596 = vpop.f32.mrf.mxu0
        %v2597 = vadd.f32 %v2036, %v2596
        %v2598 = vpop.f32.mrf.mxu0
        %v2599 = vpop.f32.mrf.mxu0
        %v2600 = vadd.f32 %v2039, %v2599
        %v2601 = vpop.f32.mrf.mxu0
        %2602 = vmatprep.mubr.bf16.mxu0 %v2266
        %2603 = vmatmul.mubr.bf16.gmra.mxu0 %v2265
        %v2604 = vpop.f32.mrf.mxu0
        %v2605 = vadd.f32 %v2044, %v2604
        %v2606 = vpop.f32.mrf.mxu0
        %v2607 = vpop.f32.mrf.mxu0
        %v2608 = vadd.f32 %v2047, %v2607
        %v2609 = vpop.f32.mrf.mxu0
        %2610 = vmatprep.mubr.bf16.mxu0 %v2269
        %2611 = vmatmul.mubr.bf16.gmra.mxu0 %v2268
        %v2612 = vpop.f32.mrf.mxu0
        %v2613 = vadd.f32 %v2052, %v2612
        %v2614 = vpop.f32.mrf.mxu0
        %v2615 = vpop.f32.mrf.mxu0
        %v2616 = vadd.f32 %v2055, %v2615
        %v2617 = vpop.f32.mrf.mxu0
        %2618 = vmatprep.mubr.bf16.mxu0 %v2272
        %2619 = vmatmul.mubr.bf16.gmra.mxu0 %v2271
        %v2620 = vpop.f32.mrf.mxu0
        %v2621 = vadd.f32 %v2060, %v2620
        %v2622 = vpop.f32.mrf.mxu0
        %v2623 = vpop.f32.mrf.mxu0
        %v2624 = vadd.f32 %v2063, %v2623
        %v2625 = vpop.f32.mrf.mxu0
        %2626 = vdwg.mxu0
        %2627 = vmatprep.subr.bf16.mxu0 0
        %2628 = vmatpush1.bf16.msra.mxu0 %v2441
        %2629 = vmatprep.subr.bf16.mxu0 0
        %2630 = vmatpush1.bf16.msra.mxu0 %v2440
        %2631 = vmatprep.subr.bf16.mxu0 0
        %2632 = vmatpush1.bf16.msra.mxu0 %v2439
        %2633 = vmatprep.subr.bf16.mxu0 0
        %2634 = vmatpush1.bf16.msra.mxu0 %v2438
        %2635 = vmatprep.subr.bf16.mxu0 0
        %2636 = vmatpush1.bf16.msra.mxu0 %v2437
        %2637 = vmatprep.subr.bf16.mxu0 0
        %2638 = vmatpush1.bf16.msra.mxu0 %v2436
        %2639 = vmatprep.subr.bf16.mxu0 0
        %2640 = vmatpush1.bf16.msra.mxu0 %v2435
        %2641 = vmatprep.subr.bf16.mxu0 0
        %2642 = vmatpush1.bf16.msra.mxu0 %v2434
        %2643 = vmatprep.subr.bf16.mxu0 0
        %2644 = vmatpush2.bf16.msra.mxu0 0
        %2645 = vmatprep.subr.bf16.mxu0 0
        %2646 = vmatpush2.bf16.msra.mxu0 0
        %2647 = vmatprep.subr.bf16.mxu0 0
        %2648 = vmatpush2.bf16.msra.mxu0 0
        %2649 = vmatprep.subr.bf16.mxu0 0
        %2650 = vmatpush2.bf16.msra.mxu0 0
        %2651 = vmatprep.subr.bf16.mxu0 0
        %2652 = vmatpush2.bf16.msra.mxu0 0
        %2653 = vmatprep.subr.bf16.mxu0 0
        %2654 = vmatpush2.bf16.msra.mxu0 0
        %2655 = vmatprep.subr.bf16.mxu0 0
        %2656 = vmatpush2.bf16.msra.mxu0 0
        %2657 = vmatprep.subr.bf16.mxu0 0
        %2658 = vmatpush2.bf16.msra.mxu0 0
        %2659 = vmatprep.mubr.bf16.mxu0 0
        %2660 = vmatmul.mubr.bf16.gmra.mxu0 %v2228
        %v2661 = vpop.f32.mrf.mxu0
        %v2662 = vadd.f32 %v2501, %v2661
        %v2663 = vpop.f32.mrf.mxu0
        %v2664 = vpop.f32.mrf.mxu0
        %v2665 = vadd.f32 %v2504, %v2664
        %v2666 = vpop.f32.mrf.mxu0
        %2667 = vmatprep.mubr.bf16.mxu0 0
        %2668 = vmatmul.mubr.bf16.gmra.mxu0 %v2231
        %v2669 = vpop.f32.mrf.mxu0
        %v2670 = vadd.f32 %v2509, %v2669
        %v2671 = vpop.f32.mrf.mxu0
        %v2672 = vpop.f32.mrf.mxu0
        %v2673 = vadd.f32 %v2512, %v2672
        %v2674 = vpop.f32.mrf.mxu0
        %2675 = vmatprep.mubr.bf16.mxu0 0
        %2676 = vmatmul.mubr.bf16.gmra.mxu0 %v2234
        %v2677 = vpop.f32.mrf.mxu0
        %v2678 = vadd.f32 %v2517, %v2677
        %v2679 = vpop.f32.mrf.mxu0
        %v2680 = vpop.f32.mrf.mxu0
        %v2681 = vadd.f32 %v2520, %v2680
        %v2682 = vpop.f32.mrf.mxu0
        %2683 = vmatprep.mubr.bf16.mxu0 0
        %2684 = vmatmul.mubr.bf16.gmra.mxu0 %v2237
        %v2685 = vpop.f32.mrf.mxu0
        %v2686 = vadd.f32 %v2525, %v2685
        %v2687 = vpop.f32.mrf.mxu0
        %v2688 = vpop.f32.mrf.mxu0
        %v2689 = vadd.f32 %v2528, %v2688
        %v2690 = vpop.f32.mrf.mxu0
        %2691 = vmatprep.mubr.bf16.mxu0 0
        %2692 = vmatmul.mubr.bf16.gmra.mxu0 %v2240
        %v2693 = vpop.f32.mrf.mxu0
        %v2694 = vadd.f32 %v2533, %v2693
        %v2695 = vpop.f32.mrf.mxu0
        %v2696 = vpop.f32.mrf.mxu0
        %v2697 = vadd.f32 %v2536, %v2696
        %v2698 = vpop.f32.mrf.mxu0
        %2699 = vmatprep.mubr.bf16.mxu0 0
        %2700 = vmatmul.mubr.bf16.gmra.mxu0 %v2243
        %v2701 = vpop.f32.mrf.mxu0
        %v2702 = vadd.f32 %v2541, %v2701
        %v2703 = vpop.f32.mrf.mxu0
        %v2704 = vpop.f32.mrf.mxu0
        %v2705 = vadd.f32 %v2544, %v2704
        %v2706 = vpop.f32.mrf.mxu0
        %2707 = vmatprep.mubr.bf16.mxu0 0
        %2708 = vmatmul.mubr.bf16.gmra.mxu0 %v2246
        %v2709 = vpop.f32.mrf.mxu0
        %v2710 = vadd.f32 %v2549, %v2709
        %v2711 = vpop.f32.mrf.mxu0
        %v2712 = vpop.f32.mrf.mxu0
        %v2713 = vadd.f32 %v2552, %v2712
        %v2714 = vpop.f32.mrf.mxu0
        %2715 = vmatprep.mubr.bf16.mxu0 0
        %2716 = vmatmul.mubr.bf16.gmra.mxu0 %v2249
        %v2717 = vpop.f32.mrf.mxu0
        %v2718 = vadd.f32 %v2557, %v2717
        %v2719 = vpop.f32.mrf.mxu0
        %v2720 = vpop.f32.mrf.mxu0
        %v2721 = vadd.f32 %v2560, %v2720
        %v2722 = vpop.f32.mrf.mxu0
        %2723 = vmatprep.mubr.bf16.mxu0 0
        %2724 = vmatmul.mubr.bf16.gmra.mxu0 %v2252
        %v2725 = vpop.f32.mrf.mxu0
        %v2726 = vadd.f32 %v2565, %v2725
        %v2727 = vpop.f32.mrf.mxu0
        %v2728 = vpop.f32.mrf.mxu0
        %v2729 = vadd.f32 %v2568, %v2728
        %v2730 = vpop.f32.mrf.mxu0
        %2731 = vmatprep.mubr.bf16.mxu0 0
        %2732 = vmatmul.mubr.bf16.gmra.mxu0 %v2255
        %v2733 = vpop.f32.mrf.mxu0
        %v2734 = vadd.f32 %v2573, %v2733
        %v2735 = vpop.f32.mrf.mxu0
        %v2736 = vpop.f32.mrf.mxu0
        %v2737 = vadd.f32 %v2576, %v2736
        %v2738 = vpop.f32.mrf.mxu0
        %2739 = vmatprep.mubr.bf16.mxu0 0
        %2740 = vmatmul.mubr.bf16.gmra.mxu0 %v2258
        %v2741 = vpop.f32.mrf.mxu0
        %v2742 = vadd.f32 %v2581, %v2741
        %v2743 = vpop.f32.mrf.mxu0
        %v2744 = vpop.f32.mrf.mxu0
        %v2745 = vadd.f32 %v2584, %v2744
        %v2746 = vpop.f32.mrf.mxu0
        %2747 = vmatprep.mubr.bf16.mxu0 0
        %2748 = vmatmul.mubr.bf16.gmra.mxu0 %v2261
        %v2749 = vpop.f32.mrf.mxu0
        %v2750 = vadd.f32 %v2589, %v2749
        %v2751 = vpop.f32.mrf.mxu0
        %v2752 = vpop.f32.mrf.mxu0
        %v2753 = vadd.f32 %v2592, %v2752
        %v2754 = vpop.f32.mrf.mxu0
        %2755 = vmatprep.mubr.bf16.mxu0 0
        %2756 = vmatmul.mubr.bf16.gmra.mxu0 %v2264
        %v2757 = vpop.f32.mrf.mxu0
        %v2758 = vadd.f32 %v2597, %v2757
        %v2759 = vpop.f32.mrf.mxu0
        %v2760 = vpop.f32.mrf.mxu0
        %v2761 = vadd.f32 %v2600, %v2760
        %v2762 = vpop.f32.mrf.mxu0
        %2763 = vmatprep.mubr.bf16.mxu0 0
        %2764 = vmatmul.mubr.bf16.gmra.mxu0 %v2267
        %v2765 = vpop.f32.mrf.mxu0
        %v2766 = vadd.f32 %v2605, %v2765
        %v2767 = vpop.f32.mrf.mxu0
        %v2768 = vpop.f32.mrf.mxu0
        %v2769 = vadd.f32 %v2608, %v2768
        %v2770 = vpop.f32.mrf.mxu0
        %2771 = vmatprep.mubr.bf16.mxu0 0
        %2772 = vmatmul.mubr.bf16.gmra.mxu0 %v2270
        %v2773 = vpop.f32.mrf.mxu0
        %v2774 = vadd.f32 %v2613, %v2773
        %v2775 = vpop.f32.mrf.mxu0
        %v2776 = vpop.f32.mrf.mxu0
        %v2777 = vadd.f32 %v2616, %v2776
        %v2778 = vpop.f32.mrf.mxu0
        %2779 = vmatprep.mubr.bf16.mxu0 0
        %2780 = vmatmul.mubr.bf16.gmra.mxu0 %v2273
        %v2781 = vpop.f32.mrf.mxu0
        %v2782 = vadd.f32 %v2621, %v2781
        %v2783 = vpop.f32.mrf.mxu0
        %v2784 = vpop.f32.mrf.mxu0
        %v2785 = vadd.f32 %v2624, %v2784
        %v2786 = vpop.f32.mrf.mxu0
        %2787 = vdwg.mxu0
        %s2788 = scalar_lea.vmem [#allocation2], 48
        %v2789 = vld [vmem:[%s2788] sm:$0xff]
        %v2790 = vld [vmem:[%s2788 + $0x8] sm:$0xf]
        %v2791 = vld [vmem:[%s2788 + $0xc] sm:$0xff]
        %v2792 = vld [vmem:[%s2788 + $0x14] sm:$0xf]
        %v2793 = vld [vmem:[%s2788 + $0x18] sm:$0xff]
        %v2794 = vld [vmem:[%s2788 + $0x20] sm:$0xf]
        %v2795 = vld [vmem:[%s2788 + $0x24] sm:$0xff]
        %v2796 = vld [vmem:[%s2788 + $0x2c] sm:$0xf]
        %v2797 = vld [vmem:[%s2788 + $0x30] sm:$0xff]
        %v2798 = vld [vmem:[%s2788 + $0x38] sm:$0xf]
        %v2799 = vld [vmem:[%s2788 + $0x3c] sm:$0xff]
        %v2800 = vld [vmem:[%s2788 + $0x44] sm:$0xf]
        %v2801 = vld [vmem:[%s2788 + $0x48] sm:$0xff]
        %v2802 = vld [vmem:[%s2788 + $0x50] sm:$0xf]
        %v2803 = vld [vmem:[%s2788 + $0x54] sm:$0xff]
        %v2804 = vld [vmem:[%s2788 + $0x5c] sm:$0xf]
        %v2805 = vld [vmem:[%s2788 + $0x60] sm:$0xff]
        %v2806 = vld [vmem:[%s2788 + $0x68] sm:$0xf]
        %v2807 = vld [vmem:[%s2788 + $0x6c] sm:$0xff]
        %v2808 = vld [vmem:[%s2788 + $0x74] sm:$0xf]
        %v2809 = vld [vmem:[%s2788 + $0x78] sm:$0xff]
        %v2810 = vld [vmem:[%s2788 + $0x80] sm:$0xf]
        %v2811 = vld [vmem:[%s2788 + $0x84] sm:$0xff]
        %v2812 = vld [vmem:[%s2788 + $0x8c] sm:$0xf]
        %v2813 = vld [vmem:[%s2788 + $0x90] sm:$0xff]
        %v2814 = vld [vmem:[%s2788 + $0x98] sm:$0xf]
        %v2815 = vld [vmem:[%s2788 + $0x9c] sm:$0xff]
        %v2816 = vld [vmem:[%s2788 + $0xa4] sm:$0xf]
        %v2817 = vld [vmem:[%s2788 + $0xa8] sm:$0xff]
        %v2818 = vld [vmem:[%s2788 + $0xb0] sm:$0xf]
        %v2819 = vld [vmem:[%s2788 + $0xb4] sm:$0xff]
        %v2820 = vld [vmem:[%s2788 + $0xbc] sm:$0xf]
        %v2821 = vld [vmem:[%s2788 + $0xc0] sm:$0xff]
        %v2822 = vld [vmem:[%s2788 + $0xc8] sm:$0xf]
        %v2823 = vld [vmem:[%s2788 + $0xcc] sm:$0xff]
        %v2824 = vld [vmem:[%s2788 + $0xd4] sm:$0xf]
        %v2825 = vld [vmem:[%s2788 + $0xd8] sm:$0xff]
        %v2826 = vld [vmem:[%s2788 + $0xe0] sm:$0xf]
        %v2827 = vld [vmem:[%s2788 + $0xe4] sm:$0xff]
        %v2828 = vld [vmem:[%s2788 + $0xec] sm:$0xf]
        %v2829 = vld [vmem:[%s2788 + $0xf0] sm:$0xff]
        %v2830 = vld [vmem:[%s2788 + $0xf8] sm:$0xf]
        %v2831 = vld [vmem:[%s2788 + $0xfc] sm:$0xff]
        %v2832 = vld [vmem:[%s2788 + $0x104] sm:$0xf]
        %v2833 = vld [vmem:[%s2788 + $0x108] sm:$0xff]
        %v2834 = vld [vmem:[%s2788 + $0x110] sm:$0xf]
        %v2835 = vld [vmem:[%s2788 + $0x114] sm:$0xff]
        %v2836 = vld [vmem:[%s2788 + $0x11c] sm:$0xf]
        %v2837 = vld [vmem:[%s2788 + $0x120] sm:$0xff]
        %v2838 = vld [vmem:[%s2788 + $0x128] sm:$0xf]
        %v2839 = vld [vmem:[%s2788 + $0x12c] sm:$0xff]
        %v2840 = vld [vmem:[%s2788 + $0x134] sm:$0xf]
        %v2841 = vld [vmem:[%s2788 + $0x138] sm:$0xff]
        %v2842 = vld [vmem:[%s2788 + $0x140] sm:$0xf]
        %v2843 = vld [vmem:[%s2788 + $0x144] sm:$0xff]
        %v2844 = vld [vmem:[%s2788 + $0x14c] sm:$0xf]
        %v2845 = vld [vmem:[%s2788 + $0x150] sm:$0xff]
        %v2846 = vld [vmem:[%s2788 + $0x158] sm:$0xf]
        %v2847 = vld [vmem:[%s2788 + $0x15c] sm:$0xff]
        %v2848 = vld [vmem:[%s2788 + $0x164] sm:$0xf]
        %v2849 = vld [vmem:[%s2788 + $0x168] sm:$0xff]
        %v2850 = vld [vmem:[%s2788 + $0x170] sm:$0xf]
        %v2851 = vld [vmem:[%s2788 + $0x174] sm:$0xff]
        %v2852 = vld [vmem:[%s2788 + $0x17c] sm:$0xf]
        %s2853 = scalar_lea.vmem [#allocation7], 384
        %v2854 = vld [vmem:[%s2853] sm:$0xf]
        %v2855 = vld [vmem:[%s2853 + $0x4] sm:$0xf]
        %v2856 = vld [vmem:[%s2853 + $0x8] sm:$0xf]
        %v2857 = vld [vmem:[%s2853 + $0xc] sm:$0xf]
        %v2858 = vld [vmem:[%s2853 + $0x10] sm:$0xf]
        %v2859 = vld [vmem:[%s2853 + $0x14] sm:$0xf]
        %v2860 = vld [vmem:[%s2853 + $0x18] sm:$0xf]
        %v2861 = vld [vmem:[%s2853 + $0x1c] sm:$0xf]
        %v2862 = vld [vmem:[%s2853 + $0x20] sm:$0xf]
        %v2863 = vld [vmem:[%s2853 + $0x24] sm:$0xf]
        %v2864 = vld [vmem:[%s2853 + $0x28] sm:$0xf]
        %v2865 = vld [vmem:[%s2853 + $0x2c] sm:$0xf]
        %v2866 = vld [vmem:[%s2853 + $0x30] sm:$0xf]
        %v2867 = vld [vmem:[%s2853 + $0x34] sm:$0xf]
        %v2868 = vld [vmem:[%s2853 + $0x38] sm:$0xf]
        %v2869 = vld [vmem:[%s2853 + $0x3c] sm:$0xf]
        %v2870 = vld [vmem:[%s2853 + $0x40] sm:$0xf]
        %v2871 = vld [vmem:[%s2853 + $0x44] sm:$0xf]
        %v2872 = vld [vmem:[%s2853 + $0x48] sm:$0xf]
        %v2873 = vld [vmem:[%s2853 + $0x4c] sm:$0xf]
        %v2874 = vld [vmem:[%s2853 + $0x50] sm:$0xf]
        %v2875 = vld [vmem:[%s2853 + $0x54] sm:$0xf]
        %v2876 = vld [vmem:[%s2853 + $0x58] sm:$0xf]
        %v2877 = vld [vmem:[%s2853 + $0x5c] sm:$0xf]
        %v2878 = vld [vmem:[%s2853 + $0x60] sm:$0xf]
        %v2879 = vld [vmem:[%s2853 + $0x64] sm:$0xf]
        %v2880 = vld [vmem:[%s2853 + $0x68] sm:$0xf]
        %v2881 = vld [vmem:[%s2853 + $0x6c] sm:$0xf]
        %v2882 = vld [vmem:[%s2853 + $0x70] sm:$0xf]
        %v2883 = vld [vmem:[%s2853 + $0x74] sm:$0xf]
        %v2884 = vld [vmem:[%s2853 + $0x78] sm:$0xf]
        %v2885 = vld [vmem:[%s2853 + $0x7c] sm:$0xf]
        %v2886 = vld [vmem:[%s2853 + $0x80] sm:$0xf]
        %v2887 = vld [vmem:[%s2853 + $0x84] sm:$0xf]
        %v2888 = vld [vmem:[%s2853 + $0x88] sm:$0xf]
        %v2889 = vld [vmem:[%s2853 + $0x8c] sm:$0xf]
        %v2890 = vld [vmem:[%s2853 + $0x90] sm:$0xf]
        %v2891 = vld [vmem:[%s2853 + $0x94] sm:$0xf]
        %v2892 = vld [vmem:[%s2853 + $0x98] sm:$0xf]
        %v2893 = vld [vmem:[%s2853 + $0x9c] sm:$0xf]
        %v2894 = vld [vmem:[%s2853 + $0xa0] sm:$0xf]
        %v2895 = vld [vmem:[%s2853 + $0xa4] sm:$0xf]
        %v2896 = vld [vmem:[%s2853 + $0xa8] sm:$0xf]
        %v2897 = vld [vmem:[%s2853 + $0xac] sm:$0xf]
        %v2898 = vld [vmem:[%s2853 + $0xb0] sm:$0xf]
        %v2899 = vld [vmem:[%s2853 + $0xb4] sm:$0xf]
        %v2900 = vld [vmem:[%s2853 + $0xb8] sm:$0xf]
        %v2901 = vld [vmem:[%s2853 + $0xbc] sm:$0xf]
        %v2966 = vunpack.c.l.b16 %v2789
        %v2967 = vunpack.c.h.b16 %v2789
        %v2968 = vunpack.c.l.b16 %v2790
        %v2969 = vunpack.c.l.b16 %v2791
        %v2970 = vunpack.c.h.b16 %v2791
        %v2971 = vunpack.c.l.b16 %v2792
        %v2972 = vunpack.c.l.b16 %v2793
        %v2973 = vunpack.c.h.b16 %v2793
        %v2974 = vunpack.c.l.b16 %v2794
        %v2975 = vunpack.c.l.b16 %v2795
        %v2976 = vunpack.c.h.b16 %v2795
        %v2977 = vunpack.c.l.b16 %v2796
        %v2978 = vunpack.c.l.b16 %v2797
        %v2979 = vunpack.c.h.b16 %v2797
        %v2980 = vunpack.c.l.b16 %v2798
        %v2981 = vunpack.c.l.b16 %v2799
        %v2982 = vunpack.c.h.b16 %v2799
        %v2983 = vunpack.c.l.b16 %v2800
        %v2984 = vunpack.c.l.b16 %v2801
        %v2985 = vunpack.c.h.b16 %v2801
        %v2986 = vunpack.c.l.b16 %v2802
        %v2987 = vunpack.c.l.b16 %v2803
        %v2988 = vunpack.c.h.b16 %v2803
        %v2989 = vunpack.c.l.b16 %v2804
        %v2990 = vunpack.c.l.b16 %v2805
        %v2991 = vunpack.c.h.b16 %v2805
        %v2992 = vunpack.c.l.b16 %v2806
        %v2993 = vunpack.c.l.b16 %v2807
        %v2994 = vunpack.c.h.b16 %v2807
        %v2995 = vunpack.c.l.b16 %v2808
        %v2996 = vunpack.c.l.b16 %v2809
        %v2997 = vunpack.c.h.b16 %v2809
        %v2998 = vunpack.c.l.b16 %v2810
        %v2999 = vunpack.c.l.b16 %v2811
        %v3000 = vunpack.c.h.b16 %v2811
        %v3001 = vunpack.c.l.b16 %v2812
        %v3002 = vunpack.c.l.b16 %v2813
        %v3003 = vunpack.c.h.b16 %v2813
        %v3004 = vunpack.c.l.b16 %v2814
        %v3005 = vunpack.c.l.b16 %v2815
        %v3006 = vunpack.c.h.b16 %v2815
        %v3007 = vunpack.c.l.b16 %v2816
        %v3008 = vunpack.c.l.b16 %v2817
        %v3009 = vunpack.c.h.b16 %v2817
        %v3010 = vunpack.c.l.b16 %v2818
        %v3011 = vunpack.c.l.b16 %v2819
        %v3012 = vunpack.c.h.b16 %v2819
        %v3013 = vunpack.c.l.b16 %v2820
        %v3014 = vunpack.c.l.b16 %v2821
        %v3015 = vunpack.c.h.b16 %v2821
        %v3016 = vunpack.c.l.b16 %v2822
        %v3017 = vunpack.c.l.b16 %v2823
        %v3018 = vunpack.c.h.b16 %v2823
        %v3019 = vunpack.c.l.b16 %v2824
        %v3020 = vunpack.c.l.b16 %v2825
        %v3021 = vunpack.c.h.b16 %v2825
        %v3022 = vunpack.c.l.b16 %v2826
        %v3023 = vunpack.c.l.b16 %v2827
        %v3024 = vunpack.c.h.b16 %v2827
        %v3025 = vunpack.c.l.b16 %v2828
        %v3026 = vunpack.c.l.b16 %v2829
        %v3027 = vunpack.c.h.b16 %v2829
        %v3028 = vunpack.c.l.b16 %v2830
        %v3029 = vunpack.c.l.b16 %v2831
        %v3030 = vunpack.c.h.b16 %v2831
        %v3031 = vunpack.c.l.b16 %v2832
        %v3032 = vunpack.c.l.b16 %v2833
        %v3033 = vunpack.c.h.b16 %v2833
        %v3034 = vunpack.c.l.b16 %v2834
        %v3035 = vunpack.c.l.b16 %v2835
        %v3036 = vunpack.c.h.b16 %v2835
        %v3037 = vunpack.c.l.b16 %v2836
        %v3038 = vunpack.c.l.b16 %v2837
        %v3039 = vunpack.c.h.b16 %v2837
        %v3040 = vunpack.c.l.b16 %v2838
        %v3041 = vunpack.c.l.b16 %v2839
        %v3042 = vunpack.c.h.b16 %v2839
        %v3043 = vunpack.c.l.b16 %v2840
        %v3044 = vunpack.c.l.b16 %v2841
        %v3045 = vunpack.c.h.b16 %v2841
        %v3046 = vunpack.c.l.b16 %v2842
        %v3047 = vunpack.c.l.b16 %v2843
        %v3048 = vunpack.c.h.b16 %v2843
        %v3049 = vunpack.c.l.b16 %v2844
        %v3050 = vunpack.c.l.b16 %v2845
        %v3051 = vunpack.c.h.b16 %v2845
        %v3052 = vunpack.c.l.b16 %v2846
        %v3053 = vunpack.c.l.b16 %v2847
        %v3054 = vunpack.c.h.b16 %v2847
        %v3055 = vunpack.c.l.b16 %v2848
        %v3056 = vunpack.c.l.b16 %v2849
        %v3057 = vunpack.c.h.b16 %v2849
        %v3058 = vunpack.c.l.b16 %v2850
        %v3059 = vunpack.c.l.b16 %v2851
        %v3060 = vunpack.c.h.b16 %v2851
        %v3061 = vunpack.c.l.b16 %v2852
        %v3062 = vpack.c.b16 %v2969, %v2966
        %v3063 = vpack.c.b16 %v2970, %v2967
        %v3064 = vpack.c.b16 %v2971, %v2968
        %v3065 = vpack.c.b16 %v2975, %v2972
        %v3066 = vpack.c.b16 %v2976, %v2973
        %v3067 = vpack.c.b16 %v2977, %v2974
        %v3068 = vpack.c.b16 %v2981, %v2978
        %v3069 = vpack.c.b16 %v2982, %v2979
        %v3070 = vpack.c.b16 %v2983, %v2980
        %v3071 = vpack.c.b16 %v2987, %v2984
        %v3072 = vpack.c.b16 %v2988, %v2985
        %v3073 = vpack.c.b16 %v2989, %v2986
        %v3074 = vpack.c.b16 %v2993, %v2990
        %v3075 = vpack.c.b16 %v2994, %v2991
        %v3076 = vpack.c.b16 %v2995, %v2992
        %v3077 = vpack.c.b16 %v2999, %v2996
        %v3078 = vpack.c.b16 %v3000, %v2997
        %v3079 = vpack.c.b16 %v3001, %v2998
        %v3080 = vpack.c.b16 %v3005, %v3002
        %v3081 = vpack.c.b16 %v3006, %v3003
        %v3082 = vpack.c.b16 %v3007, %v3004
        %v3083 = vpack.c.b16 %v3011, %v3008
        %v3084 = vpack.c.b16 %v3012, %v3009
        %v3085 = vpack.c.b16 %v3013, %v3010
        %v3086 = vpack.c.b16 %v3017, %v3014
        %v3087 = vpack.c.b16 %v3018, %v3015
        %v3088 = vpack.c.b16 %v3019, %v3016
        %v3089 = vpack.c.b16 %v3023, %v3020
        %v3090 = vpack.c.b16 %v3024, %v3021
        %v3091 = vpack.c.b16 %v3025, %v3022
        %v3092 = vpack.c.b16 %v3029, %v3026
        %v3093 = vpack.c.b16 %v3030, %v3027
        %v3094 = vpack.c.b16 %v3031, %v3028
        %v3095 = vpack.c.b16 %v3035, %v3032
        %v3096 = vpack.c.b16 %v3036, %v3033
        %v3097 = vpack.c.b16 %v3037, %v3034
        %v3098 = vpack.c.b16 %v3041, %v3038
        %v3099 = vpack.c.b16 %v3042, %v3039
        %v3100 = vpack.c.b16 %v3043, %v3040
        %v3101 = vpack.c.b16 %v3047, %v3044
        %v3102 = vpack.c.b16 %v3048, %v3045
        %v3103 = vpack.c.b16 %v3049, %v3046
        %v3104 = vpack.c.b16 %v3053, %v3050
        %v3105 = vpack.c.b16 %v3054, %v3051
        %v3106 = vpack.c.b16 %v3055, %v3052
        %v3107 = vpack.c.b16 %v3059, %v3056
        %v3108 = vpack.c.b16 %v3060, %v3057
        %v3109 = vpack.c.b16 %v3061, %v3058
        %v3206 = vunpack.c.l.b16 %v2854
        %v3207 = vunpack.c.l.b16 %v2855
        %v3208 = vunpack.c.l.b16 %v2856
        %v3209 = vunpack.c.l.b16 %v2857
        %v3210 = vunpack.c.l.b16 %v2858
        %v3211 = vunpack.c.l.b16 %v2859
        %v3212 = vunpack.c.l.b16 %v2860
        %v3213 = vunpack.c.l.b16 %v2861
        %v3214 = vunpack.c.l.b16 %v2862
        %v3215 = vunpack.c.l.b16 %v2863
        %v3216 = vunpack.c.l.b16 %v2864
        %v3217 = vunpack.c.l.b16 %v2865
        %v3218 = vunpack.c.l.b16 %v2866
        %v3219 = vunpack.c.l.b16 %v2867
        %v3220 = vunpack.c.l.b16 %v2868
        %v3221 = vunpack.c.l.b16 %v2869
        %v3222 = vunpack.c.l.b16 %v2870
        %v3223 = vunpack.c.l.b16 %v2871
        %v3224 = vunpack.c.l.b16 %v2872
        %v3225 = vunpack.c.l.b16 %v2873
        %v3226 = vunpack.c.l.b16 %v2874
        %v3227 = vunpack.c.l.b16 %v2875
        %v3228 = vunpack.c.l.b16 %v2876
        %v3229 = vunpack.c.l.b16 %v2877
        %v3230 = vunpack.c.l.b16 %v2878
        %v3231 = vunpack.c.l.b16 %v2879
        %v3232 = vunpack.c.l.b16 %v2880
        %v3233 = vunpack.c.l.b16 %v2881
        %v3234 = vunpack.c.l.b16 %v2882
        %v3235 = vunpack.c.l.b16 %v2883
        %v3236 = vunpack.c.l.b16 %v2884
        %v3237 = vunpack.c.l.b16 %v2885
        %v3238 = vunpack.c.l.b16 %v2886
        %v3239 = vunpack.c.l.b16 %v2887
        %v3240 = vunpack.c.l.b16 %v2888
        %v3241 = vunpack.c.l.b16 %v2889
        %v3242 = vunpack.c.l.b16 %v2890
        %v3243 = vunpack.c.l.b16 %v2891
        %v3244 = vunpack.c.l.b16 %v2892
        %v3245 = vunpack.c.l.b16 %v2893
        %v3246 = vunpack.c.l.b16 %v2894
        %v3247 = vunpack.c.l.b16 %v2895
        %v3248 = vunpack.c.l.b16 %v2896
        %v3249 = vunpack.c.l.b16 %v2897
        %v3250 = vunpack.c.l.b16 %v2898
        %v3251 = vunpack.c.l.b16 %v2899
        %v3252 = vunpack.c.l.b16 %v2900
        %v3253 = vunpack.c.l.b16 %v2901
        %v3254 = vpack.c.b16 %v3207, %v3206
        %v3255 = vpack.c.b16 %v3209, %v3208
        %v3256 = vpack.c.b16 %v3211, %v3210
        %v3257 = vpack.c.b16 %v3213, %v3212
        %v3258 = vpack.c.b16 %v3215, %v3214
        %v3259 = vpack.c.b16 %v3217, %v3216
        %v3260 = vpack.c.b16 %v3219, %v3218
        %v3261 = vpack.c.b16 %v3221, %v3220
        %v3262 = vpack.c.b16 %v3223, %v3222
        %v3263 = vpack.c.b16 %v3225, %v3224
        %v3264 = vpack.c.b16 %v3227, %v3226
        %v3265 = vpack.c.b16 %v3229, %v3228
        %v3266 = vpack.c.b16 %v3231, %v3230
        %v3267 = vpack.c.b16 %v3233, %v3232
        %v3268 = vpack.c.b16 %v3235, %v3234
        %v3269 = vpack.c.b16 %v3237, %v3236
        %v3270 = vpack.c.b16 %v3239, %v3238
        %v3271 = vpack.c.b16 %v3241, %v3240
        %v3272 = vpack.c.b16 %v3243, %v3242
        %v3273 = vpack.c.b16 %v3245, %v3244
        %v3274 = vpack.c.b16 %v3247, %v3246
        %v3275 = vpack.c.b16 %v3249, %v3248
        %v3276 = vpack.c.b16 %v3251, %v3250
        %v3277 = vpack.c.b16 %v3253, %v3252
        %3302 = vmatprep.subr.bf16.mxu0 0
        %3303 = vmatpush1.bf16.msra.mxu0 %v3261
        %3304 = vmatprep.subr.bf16.mxu0 0
        %3305 = vmatpush1.bf16.msra.mxu0 %v3260
        %3306 = vmatprep.subr.bf16.mxu0 0
        %3307 = vmatpush1.bf16.msra.mxu0 %v3259
        %3308 = vmatprep.subr.bf16.mxu0 0
        %3309 = vmatpush1.bf16.msra.mxu0 %v3258
        %3310 = vmatprep.subr.bf16.mxu0 0
        %3311 = vmatpush1.bf16.msra.mxu0 %v3257
        %3312 = vmatprep.subr.bf16.mxu0 0
        %3313 = vmatpush1.bf16.msra.mxu0 %v3256
        %3314 = vmatprep.subr.bf16.mxu0 0
        %3315 = vmatpush1.bf16.msra.mxu0 %v3255
        %3316 = vmatprep.subr.bf16.mxu0 0
        %3317 = vmatpush1.bf16.msra.mxu0 %v3254
        %3318 = vmatprep.subr.bf16.mxu0 0
        %3319 = vmatpush2.bf16.msra.mxu0 %v3269
        %3320 = vmatprep.subr.bf16.mxu0 0
        %3321 = vmatpush2.bf16.msra.mxu0 %v3268
        %3322 = vmatprep.subr.bf16.mxu0 0
        %3323 = vmatpush2.bf16.msra.mxu0 %v3267
        %3324 = vmatprep.subr.bf16.mxu0 0
        %3325 = vmatpush2.bf16.msra.mxu0 %v3266
        %3326 = vmatprep.subr.bf16.mxu0 0
        %3327 = vmatpush2.bf16.msra.mxu0 %v3265
        %3328 = vmatprep.subr.bf16.mxu0 0
        %3329 = vmatpush2.bf16.msra.mxu0 %v3264
        %3330 = vmatprep.subr.bf16.mxu0 0
        %3331 = vmatpush2.bf16.msra.mxu0 %v3263
        %3332 = vmatprep.subr.bf16.mxu0 0
        %3333 = vmatpush2.bf16.msra.mxu0 %v3262
        %3334 = vmatprep.mubr.bf16.mxu0 %v3063
        %3335 = vmatmul.mubr.bf16.gmra.mxu0 %v3062
        %v3336 = vpop.f32.mrf.mxu0
        %v3337 = vadd.f32 0.0, %v3336
        %v3338 = vpop.f32.mrf.mxu0
        %v3339 = vpop.f32.mrf.mxu0
        %v3340 = vadd.f32 0.0, %v3339
        %v3341 = vpop.f32.mrf.mxu0
        %3342 = vmatprep.mubr.bf16.mxu0 %v3066
        %3343 = vmatmul.mubr.bf16.gmra.mxu0 %v3065
        %v3344 = vpop.f32.mrf.mxu0
        %v3345 = vadd.f32 0.0, %v3344
        %v3346 = vpop.f32.mrf.mxu0
        %v3347 = vpop.f32.mrf.mxu0
        %v3348 = vadd.f32 0.0, %v3347
        %v3349 = vpop.f32.mrf.mxu0
        %3350 = vmatprep.mubr.bf16.mxu0 %v3069
        %3351 = vmatmul.mubr.bf16.gmra.mxu0 %v3068
        %v3352 = vpop.f32.mrf.mxu0
        %v3353 = vadd.f32 0.0, %v3352
        %v3354 = vpop.f32.mrf.mxu0
        %v3355 = vpop.f32.mrf.mxu0
        %v3356 = vadd.f32 0.0, %v3355
        %v3357 = vpop.f32.mrf.mxu0
        %3358 = vmatprep.mubr.bf16.mxu0 %v3072
        %3359 = vmatmul.mubr.bf16.gmra.mxu0 %v3071
        %v3360 = vpop.f32.mrf.mxu0
        %v3361 = vadd.f32 0.0, %v3360
        %v3362 = vpop.f32.mrf.mxu0
        %v3363 = vpop.f32.mrf.mxu0
        %v3364 = vadd.f32 0.0, %v3363
        %v3365 = vpop.f32.mrf.mxu0
        %3366 = vmatprep.mubr.bf16.mxu0 %v3075
        %3367 = vmatmul.mubr.bf16.gmra.mxu0 %v3074
        %v3368 = vpop.f32.mrf.mxu0
        %v3369 = vadd.f32 0.0, %v3368
        %v3370 = vpop.f32.mrf.mxu0
        %v3371 = vpop.f32.mrf.mxu0
        %v3372 = vadd.f32 0.0, %v3371
        %v3373 = vpop.f32.mrf.mxu0
        %3374 = vmatprep.mubr.bf16.mxu0 %v3078
        %3375 = vmatmul.mubr.bf16.gmra.mxu0 %v3077
        %v3376 = vpop.f32.mrf.mxu0
        %v3377 = vadd.f32 0.0, %v3376
        %v3378 = vpop.f32.mrf.mxu0
        %v3379 = vpop.f32.mrf.mxu0
        %v3380 = vadd.f32 0.0, %v3379
        %v3381 = vpop.f32.mrf.mxu0
        %3382 = vmatprep.mubr.bf16.mxu0 %v3081
        %3383 = vmatmul.mubr.bf16.gmra.mxu0 %v3080
        %v3384 = vpop.f32.mrf.mxu0
        %v3385 = vadd.f32 0.0, %v3384
        %v3386 = vpop.f32.mrf.mxu0
        %v3387 = vpop.f32.mrf.mxu0
        %v3388 = vadd.f32 0.0, %v3387
        %v3389 = vpop.f32.mrf.mxu0
        %3390 = vmatprep.mubr.bf16.mxu0 %v3084
        %3391 = vmatmul.mubr.bf16.gmra.mxu0 %v3083
        %v3392 = vpop.f32.mrf.mxu0
        %v3393 = vadd.f32 0.0, %v3392
        %v3394 = vpop.f32.mrf.mxu0
        %v3395 = vpop.f32.mrf.mxu0
        %v3396 = vadd.f32 0.0, %v3395
        %v3397 = vpop.f32.mrf.mxu0
        %3398 = vmatprep.mubr.bf16.mxu0 %v3087
        %3399 = vmatmul.mubr.bf16.gmra.mxu0 %v3086
        %v3400 = vpop.f32.mrf.mxu0
        %v3401 = vadd.f32 0.0, %v3400
        %v3402 = vpop.f32.mrf.mxu0
        %v3403 = vpop.f32.mrf.mxu0
        %v3404 = vadd.f32 0.0, %v3403
        %v3405 = vpop.f32.mrf.mxu0
        %3406 = vmatprep.mubr.bf16.mxu0 %v3090
        %3407 = vmatmul.mubr.bf16.gmra.mxu0 %v3089
        %v3408 = vpop.f32.mrf.mxu0
        %v3409 = vadd.f32 0.0, %v3408
        %v3410 = vpop.f32.mrf.mxu0
        %v3411 = vpop.f32.mrf.mxu0
        %v3412 = vadd.f32 0.0, %v3411
        %v3413 = vpop.f32.mrf.mxu0
        %3414 = vmatprep.mubr.bf16.mxu0 %v3093
        %3415 = vmatmul.mubr.bf16.gmra.mxu0 %v3092
        %v3416 = vpop.f32.mrf.mxu0
        %v3417 = vadd.f32 0.0, %v3416
        %v3418 = vpop.f32.mrf.mxu0
        %v3419 = vpop.f32.mrf.mxu0
        %v3420 = vadd.f32 0.0, %v3419
        %v3421 = vpop.f32.mrf.mxu0
        %3422 = vmatprep.mubr.bf16.mxu0 %v3096
        %3423 = vmatmul.mubr.bf16.gmra.mxu0 %v3095
        %v3424 = vpop.f32.mrf.mxu0
        %v3425 = vadd.f32 0.0, %v3424
        %v3426 = vpop.f32.mrf.mxu0
        %v3427 = vpop.f32.mrf.mxu0
        %v3428 = vadd.f32 0.0, %v3427
        %v3429 = vpop.f32.mrf.mxu0
        %3430 = vmatprep.mubr.bf16.mxu0 %v3099
        %3431 = vmatmul.mubr.bf16.gmra.mxu0 %v3098
        %v3432 = vpop.f32.mrf.mxu0
        %v3433 = vadd.f32 0.0, %v3432
        %v3434 = vpop.f32.mrf.mxu0
        %v3435 = vpop.f32.mrf.mxu0
        %v3436 = vadd.f32 0.0, %v3435
        %v3437 = vpop.f32.mrf.mxu0
        %3438 = vmatprep.mubr.bf16.mxu0 %v3102
        %3439 = vmatmul.mubr.bf16.gmra.mxu0 %v3101
        %v3440 = vpop.f32.mrf.mxu0
        %v3441 = vadd.f32 0.0, %v3440
        %v3442 = vpop.f32.mrf.mxu0
        %v3443 = vpop.f32.mrf.mxu0
        %v3444 = vadd.f32 0.0, %v3443
        %v3445 = vpop.f32.mrf.mxu0
        %3446 = vmatprep.mubr.bf16.mxu0 %v3105
        %3447 = vmatmul.mubr.bf16.gmra.mxu0 %v3104
        %v3448 = vpop.f32.mrf.mxu0
        %v3449 = vadd.f32 0.0, %v3448
        %v3450 = vpop.f32.mrf.mxu0
        %v3451 = vpop.f32.mrf.mxu0
        %v3452 = vadd.f32 0.0, %v3451
        %v3453 = vpop.f32.mrf.mxu0
        %3454 = vmatprep.mubr.bf16.mxu0 %v3108
        %3455 = vmatmul.mubr.bf16.gmra.mxu0 %v3107
        %v3456 = vpop.f32.mrf.mxu0
        %v3457 = vadd.f32 0.0, %v3456
        %v3458 = vpop.f32.mrf.mxu0
        %v3459 = vpop.f32.mrf.mxu0
        %v3460 = vadd.f32 0.0, %v3459
        %v3461 = vpop.f32.mrf.mxu0
        %3462 = vdwg.mxu0
        %3463 = vmatprep.subr.bf16.mxu0 0
        %3464 = vmatpush1.bf16.msra.mxu0 %v3277
        %3465 = vmatprep.subr.bf16.mxu0 0
        %3466 = vmatpush1.bf16.msra.mxu0 %v3276
        %3467 = vmatprep.subr.bf16.mxu0 0
        %3468 = vmatpush1.bf16.msra.mxu0 %v3275
        %3469 = vmatprep.subr.bf16.mxu0 0
        %3470 = vmatpush1.bf16.msra.mxu0 %v3274
        %3471 = vmatprep.subr.bf16.mxu0 0
        %3472 = vmatpush1.bf16.msra.mxu0 %v3273
        %3473 = vmatprep.subr.bf16.mxu0 0
        %3474 = vmatpush1.bf16.msra.mxu0 %v3272
        %3475 = vmatprep.subr.bf16.mxu0 0
        %3476 = vmatpush1.bf16.msra.mxu0 %v3271
        %3477 = vmatprep.subr.bf16.mxu0 0
        %3478 = vmatpush1.bf16.msra.mxu0 %v3270
        %3479 = vmatprep.subr.bf16.mxu0 0
        %3480 = vmatpush2.bf16.msra.mxu0 0
        %3481 = vmatprep.subr.bf16.mxu0 0
        %3482 = vmatpush2.bf16.msra.mxu0 0
        %3483 = vmatprep.subr.bf16.mxu0 0
        %3484 = vmatpush2.bf16.msra.mxu0 0
        %3485 = vmatprep.subr.bf16.mxu0 0
        %3486 = vmatpush2.bf16.msra.mxu0 0
        %3487 = vmatprep.subr.bf16.mxu0 0
        %3488 = vmatpush2.bf16.msra.mxu0 0
        %3489 = vmatprep.subr.bf16.mxu0 0
        %3490 = vmatpush2.bf16.msra.mxu0 0
        %3491 = vmatprep.subr.bf16.mxu0 0
        %3492 = vmatpush2.bf16.msra.mxu0 0
        %3493 = vmatprep.subr.bf16.mxu0 0
        %3494 = vmatpush2.bf16.msra.mxu0 0
        %3495 = vmatprep.mubr.bf16.mxu0 0
        %3496 = vmatmul.mubr.bf16.gmra.mxu0 %v3064
        %v3497 = vpop.f32.mrf.mxu0
        %v3498 = vadd.f32 %v3337, %v3497
        %v3499 = vpop.f32.mrf.mxu0
        %v3500 = vpop.f32.mrf.mxu0
        %v3501 = vadd.f32 %v3340, %v3500
        %v3502 = vpop.f32.mrf.mxu0
        %3503 = vmatprep.mubr.bf16.mxu0 0
        %3504 = vmatmul.mubr.bf16.gmra.mxu0 %v3067
        %v3505 = vpop.f32.mrf.mxu0
        %v3506 = vadd.f32 %v3345, %v3505
        %v3507 = vpop.f32.mrf.mxu0
        %v3508 = vpop.f32.mrf.mxu0
        %v3509 = vadd.f32 %v3348, %v3508
        %v3510 = vpop.f32.mrf.mxu0
        %3511 = vmatprep.mubr.bf16.mxu0 0
        %3512 = vmatmul.mubr.bf16.gmra.mxu0 %v3070
        %v3513 = vpop.f32.mrf.mxu0
        %v3514 = vadd.f32 %v3353, %v3513
        %v3515 = vpop.f32.mrf.mxu0
        %v3516 = vpop.f32.mrf.mxu0
        %v3517 = vadd.f32 %v3356, %v3516
        %v3518 = vpop.f32.mrf.mxu0
        %3519 = vmatprep.mubr.bf16.mxu0 0
        %3520 = vmatmul.mubr.bf16.gmra.mxu0 %v3073
        %v3521 = vpop.f32.mrf.mxu0
        %v3522 = vadd.f32 %v3361, %v3521
        %v3523 = vpop.f32.mrf.mxu0
        %v3524 = vpop.f32.mrf.mxu0
        %v3525 = vadd.f32 %v3364, %v3524
        %v3526 = vpop.f32.mrf.mxu0
        %3527 = vmatprep.mubr.bf16.mxu0 0
        %3528 = vmatmul.mubr.bf16.gmra.mxu0 %v3076
        %v3529 = vpop.f32.mrf.mxu0
        %v3530 = vadd.f32 %v3369, %v3529
        %v3531 = vpop.f32.mrf.mxu0
        %v3532 = vpop.f32.mrf.mxu0
        %v3533 = vadd.f32 %v3372, %v3532
        %v3534 = vpop.f32.mrf.mxu0
        %3535 = vmatprep.mubr.bf16.mxu0 0
        %3536 = vmatmul.mubr.bf16.gmra.mxu0 %v3079
        %v3537 = vpop.f32.mrf.mxu0
        %v3538 = vadd.f32 %v3377, %v3537
        %v3539 = vpop.f32.mrf.mxu0
        %v3540 = vpop.f32.mrf.mxu0
        %v3541 = vadd.f32 %v3380, %v3540
        %v3542 = vpop.f32.mrf.mxu0
        %3543 = vmatprep.mubr.bf16.mxu0 0
        %3544 = vmatmul.mubr.bf16.gmra.mxu0 %v3082
        %v3545 = vpop.f32.mrf.mxu0
        %v3546 = vadd.f32 %v3385, %v3545
        %v3547 = vpop.f32.mrf.mxu0
        %v3548 = vpop.f32.mrf.mxu0
        %v3549 = vadd.f32 %v3388, %v3548
        %v3550 = vpop.f32.mrf.mxu0
        %3551 = vmatprep.mubr.bf16.mxu0 0
        %3552 = vmatmul.mubr.bf16.gmra.mxu0 %v3085
        %v3553 = vpop.f32.mrf.mxu0
        %v3554 = vadd.f32 %v3393, %v3553
        %v3555 = vpop.f32.mrf.mxu0
        %v3556 = vpop.f32.mrf.mxu0
        %v3557 = vadd.f32 %v3396, %v3556
        %v3558 = vpop.f32.mrf.mxu0
        %3559 = vmatprep.mubr.bf16.mxu0 0
        %3560 = vmatmul.mubr.bf16.gmra.mxu0 %v3088
        %v3561 = vpop.f32.mrf.mxu0
        %v3562 = vadd.f32 %v3401, %v3561
        %v3563 = vpop.f32.mrf.mxu0
        %v3564 = vpop.f32.mrf.mxu0
        %v3565 = vadd.f32 %v3404, %v3564
        %v3566 = vpop.f32.mrf.mxu0
        %3567 = vmatprep.mubr.bf16.mxu0 0
        %3568 = vmatmul.mubr.bf16.gmra.mxu0 %v3091
        %v3569 = vpop.f32.mrf.mxu0
        %v3570 = vadd.f32 %v3409, %v3569
        %v3571 = vpop.f32.mrf.mxu0
        %v3572 = vpop.f32.mrf.mxu0
        %v3573 = vadd.f32 %v3412, %v3572
        %v3574 = vpop.f32.mrf.mxu0
        %3575 = vmatprep.mubr.bf16.mxu0 0
        %3576 = vmatmul.mubr.bf16.gmra.mxu0 %v3094
        %v3577 = vpop.f32.mrf.mxu0
        %v3578 = vadd.f32 %v3417, %v3577
        %v3579 = vpop.f32.mrf.mxu0
        %v3580 = vpop.f32.mrf.mxu0
        %v3581 = vadd.f32 %v3420, %v3580
        %v3582 = vpop.f32.mrf.mxu0
        %3583 = vmatprep.mubr.bf16.mxu0 0
        %3584 = vmatmul.mubr.bf16.gmra.mxu0 %v3097
        %v3585 = vpop.f32.mrf.mxu0
        %v3586 = vadd.f32 %v3425, %v3585
        %v3587 = vpop.f32.mrf.mxu0
        %v3588 = vpop.f32.mrf.mxu0
        %v3589 = vadd.f32 %v3428, %v3588
        %v3590 = vpop.f32.mrf.mxu0
        %3591 = vmatprep.mubr.bf16.mxu0 0
        %3592 = vmatmul.mubr.bf16.gmra.mxu0 %v3100
        %v3593 = vpop.f32.mrf.mxu0
        %v3594 = vadd.f32 %v3433, %v3593
        %v3595 = vpop.f32.mrf.mxu0
        %v3596 = vpop.f32.mrf.mxu0
        %v3597 = vadd.f32 %v3436, %v3596
        %v3598 = vpop.f32.mrf.mxu0
        %3599 = vmatprep.mubr.bf16.mxu0 0
        %3600 = vmatmul.mubr.bf16.gmra.mxu0 %v3103
        %v3601 = vpop.f32.mrf.mxu0
        %v3602 = vadd.f32 %v3441, %v3601
        %v3603 = vpop.f32.mrf.mxu0
        %v3604 = vpop.f32.mrf.mxu0
        %v3605 = vadd.f32 %v3444, %v3604
        %v3606 = vpop.f32.mrf.mxu0
        %3607 = vmatprep.mubr.bf16.mxu0 0
        %3608 = vmatmul.mubr.bf16.gmra.mxu0 %v3106
        %v3609 = vpop.f32.mrf.mxu0
        %v3610 = vadd.f32 %v3449, %v3609
        %v3611 = vpop.f32.mrf.mxu0
        %v3612 = vpop.f32.mrf.mxu0
        %v3613 = vadd.f32 %v3452, %v3612
        %v3614 = vpop.f32.mrf.mxu0
        %3615 = vmatprep.mubr.bf16.mxu0 0
        %3616 = vmatmul.mubr.bf16.gmra.mxu0 %v3109
        %v3617 = vpop.f32.mrf.mxu0
        %v3618 = vadd.f32 %v3457, %v3617
        %v3619 = vpop.f32.mrf.mxu0
        %v3620 = vpop.f32.mrf.mxu0
        %v3621 = vadd.f32 %v3460, %v3620
        %v3622 = vpop.f32.mrf.mxu0
        %3623 = vdwg.mxu0
        %v3624 = vadd.f32 %v2662, %v3498
        %v3625 = vadd.f32 %v2665, %v3501
        %v3626 = vadd.f32 %v2670, %v3506
        %v3627 = vadd.f32 %v2673, %v3509
        %v3628 = vadd.f32 %v2678, %v3514
        %v3629 = vadd.f32 %v2681, %v3517
        %v3630 = vadd.f32 %v2686, %v3522
        %v3631 = vadd.f32 %v2689, %v3525
        %v3632 = vadd.f32 %v2694, %v3530
        %v3633 = vadd.f32 %v2697, %v3533
        %v3634 = vadd.f32 %v2702, %v3538
        %v3635 = vadd.f32 %v2705, %v3541
        %v3636 = vadd.f32 %v2710, %v3546
        %v3637 = vadd.f32 %v2713, %v3549
        %v3638 = vadd.f32 %v2718, %v3554
        %v3639 = vadd.f32 %v2721, %v3557
        %v3640 = vadd.f32 %v2726, %v3562
        %v3641 = vadd.f32 %v2729, %v3565
        %v3642 = vadd.f32 %v2734, %v3570
        %v3643 = vadd.f32 %v2737, %v3573
        %v3644 = vadd.f32 %v2742, %v3578
        %v3645 = vadd.f32 %v2745, %v3581
        %v3646 = vadd.f32 %v2750, %v3586
        %v3647 = vadd.f32 %v2753, %v3589
        %v3648 = vadd.f32 %v2758, %v3594
        %v3649 = vadd.f32 %v2761, %v3597
        %v3650 = vadd.f32 %v2766, %v3602
        %v3651 = vadd.f32 %v2769, %v3605
        %v3652 = vadd.f32 %v2774, %v3610
        %v3653 = vadd.f32 %v2777, %v3613
        %v3654 = vadd.f32 %v2782, %v3618
        %v3655 = vadd.f32 %v2785, %v3621
        %v3656 = vld [vmem:[%s2] sm:$0x1]
        %v3658 = vlaneseq
        %v3659 = vshrl.u32 %v3658, 7
        %v3660 = vsub.s32 0, %v3659
        %v3661 = vrot.slane %v3656, %v3660
        %v3663 = vadd.f32 %v3624, %v3661
        %v3664 = vadd.f32 %v3625, %v3661
        %v3665 = vadd.f32 %v3626, %v3661
        %v3666 = vadd.f32 %v3627, %v3661
        %v3667 = vadd.f32 %v3628, %v3661
        %v3668 = vadd.f32 %v3629, %v3661
        %v3669 = vadd.f32 %v3630, %v3661
        %v3670 = vadd.f32 %v3631, %v3661
        %v3671 = vadd.f32 %v3632, %v3661
        %v3672 = vadd.f32 %v3633, %v3661
        %v3673 = vadd.f32 %v3634, %v3661
        %v3674 = vadd.f32 %v3635, %v3661
        %v3675 = vadd.f32 %v3636, %v3661
        %v3676 = vadd.f32 %v3637, %v3661
        %v3677 = vadd.f32 %v3638, %v3661
        %v3678 = vadd.f32 %v3639, %v3661
        %v3679 = vadd.f32 %v3640, %v3661
        %v3680 = vadd.f32 %v3641, %v3661
        %v3681 = vadd.f32 %v3642, %v3661
        %v3682 = vadd.f32 %v3643, %v3661
        %v3683 = vadd.f32 %v3644, %v3661
        %v3684 = vadd.f32 %v3645, %v3661
        %v3685 = vadd.f32 %v3646, %v3661
        %v3686 = vadd.f32 %v3647, %v3661
        %v3687 = vadd.f32 %v3648, %v3661
        %v3688 = vadd.f32 %v3649, %v3661
        %v3689 = vadd.f32 %v3650, %v3661
        %v3690 = vadd.f32 %v3651, %v3661
        %v3691 = vadd.f32 %v3652, %v3661
        %v3692 = vadd.f32 %v3653, %v3661
        %v3693 = vadd.f32 %v3654, %v3661
        %v3694 = vadd.f32 %v3655, %v3661
        %v3695 = vmax.f32 %v3663, 0.0
        %v3696 = vmax.f32 %v3664, 0.0
        %v3697 = vmax.f32 %v3665, 0.0
        %v3698 = vmax.f32 %v3666, 0.0
        %v3699 = vmax.f32 %v3667, 0.0
        %v3700 = vmax.f32 %v3668, 0.0
        %v3701 = vmax.f32 %v3669, 0.0
        %v3702 = vmax.f32 %v3670, 0.0
        %v3703 = vmax.f32 %v3671, 0.0
        %v3704 = vmax.f32 %v3672, 0.0
        %v3705 = vmax.f32 %v3673, 0.0
        %v3706 = vmax.f32 %v3674, 0.0
        %v3707 = vmax.f32 %v3675, 0.0
        %v3708 = vmax.f32 %v3676, 0.0
        %v3709 = vmax.f32 %v3677, 0.0
        %v3710 = vmax.f32 %v3678, 0.0
        %v3711 = vmax.f32 %v3679, 0.0
        %v3712 = vmax.f32 %v3680, 0.0
        %v3713 = vmax.f32 %v3681, 0.0
        %v3714 = vmax.f32 %v3682, 0.0
        %v3715 = vmax.f32 %v3683, 0.0
        %v3716 = vmax.f32 %v3684, 0.0
        %v3717 = vmax.f32 %v3685, 0.0
        %v3718 = vmax.f32 %v3686, 0.0
        %v3719 = vmax.f32 %v3687, 0.0
        %v3720 = vmax.f32 %v3688, 0.0
        %v3721 = vmax.f32 %v3689, 0.0
        %v3722 = vmax.f32 %v3690, 0.0
        %v3723 = vmax.f32 %v3691, 0.0
        %v3724 = vmax.f32 %v3692, 0.0
        %v3725 = vmax.f32 %v3693, 0.0
        %v3726 = vmax.f32 %v3694, 0.0
        %v3727 = vpack.c.bf16 %v3696, %v3695
        %v3728 = vpack.c.bf16 %v3698, %v3697
        %v3729 = vpack.c.bf16 %v3700, %v3699
        %v3730 = vpack.c.bf16 %v3702, %v3701
        %v3731 = vpack.c.bf16 %v3704, %v3703
        %v3732 = vpack.c.bf16 %v3706, %v3705
        %v3733 = vpack.c.bf16 %v3708, %v3707
        %v3734 = vpack.c.bf16 %v3710, %v3709
        %v3735 = vpack.c.bf16 %v3712, %v3711
        %v3736 = vpack.c.bf16 %v3714, %v3713
        %v3737 = vpack.c.bf16 %v3716, %v3715
        %v3738 = vpack.c.bf16 %v3718, %v3717
        %v3739 = vpack.c.bf16 %v3720, %v3719
        %v3740 = vpack.c.bf16 %v3722, %v3721
        %v3741 = vpack.c.bf16 %v3724, %v3723
        %v3742 = vpack.c.bf16 %v3726, %v3725
        %3743 = vst [vmem:[#allocation3] sm:$0xff] 0
        %3744 = vst [vmem:[#allocation3 + $0x8] sm:$0xf] 0
        %3745 = vst [vmem:[#allocation3 + $0xc] sm:$0xff] 0
        %3746 = vst [vmem:[#allocation3 + $0x14] sm:$0xf] 0
        %s3747 = scalar_lea.vmem [#allocation3], 408
        %3748 = vst [vmem:[%s3747] sm:$0xff] 0
        %3749 = vst [vmem:[%s3747 + $0x8] sm:$0xf] 0
        %3750 = vst [vmem:[%s3747 + $0xc] sm:$0xff] 0
        %3751 = vst [vmem:[%s3747 + $0x14] sm:$0xf] 0
        %s3752 = scalar_lea.vmem [#allocation3], 24
        %v3753 = vld [vmem:[%s3752] sm:$0x1]
        %v3754 = vsel %vm386, 0, %v3753
        %3755 = vst [vmem:[%s3752] sm:$0x1] %v3754
        %v3756 = vld [vmem:[%s3752 + $0x18] sm:$0x1]
        %v3757 = vsel %vm386, 0, %v3756
        %3758 = vst [vmem:[%s3752 + $0x18] sm:$0x1] %v3757
        %v3759 = vld [vmem:[%s3752 + $0x30] sm:$0x1]
        %v3760 = vsel %vm386, 0, %v3759
        %3761 = vst [vmem:[%s3752 + $0x30] sm:$0x1] %v3760
        %v3762 = vld [vmem:[%s3752 + $0x48] sm:$0x1]
        %v3763 = vsel %vm386, 0, %v3762
        %3764 = vst [vmem:[%s3752 + $0x48] sm:$0x1] %v3763
        %v3765 = vld [vmem:[%s3752 + $0x60] sm:$0x1]
        %v3766 = vsel %vm386, 0, %v3765
        %3767 = vst [vmem:[%s3752 + $0x60] sm:$0x1] %v3766
        %v3768 = vld [vmem:[%s3752 + $0x78] sm:$0x1]
        %v3769 = vsel %vm386, 0, %v3768
        %3770 = vst [vmem:[%s3752 + $0x78] sm:$0x1] %v3769
        %v3771 = vld [vmem:[%s3752 + $0x90] sm:$0x1]
        %v3772 = vsel %vm386, 0, %v3771
        %3773 = vst [vmem:[%s3752 + $0x90] sm:$0x1] %v3772
        %v3774 = vld [vmem:[%s3752 + $0xa8] sm:$0x1]
        %v3775 = vsel %vm386, 0, %v3774
        %3776 = vst [vmem:[%s3752 + $0xa8] sm:$0x1] %v3775
        %v3777 = vld [vmem:[%s3752 + $0xc0] sm:$0x1]
        %v3778 = vsel %vm386, 0, %v3777
        %3779 = vst [vmem:[%s3752 + $0xc0] sm:$0x1] %v3778
        %v3780 = vld [vmem:[%s3752 + $0xd8] sm:$0x1]
        %v3781 = vsel %vm386, 0, %v3780
        %3782 = vst [vmem:[%s3752 + $0xd8] sm:$0x1] %v3781
        %v3783 = vld [vmem:[%s3752 + $0xf0] sm:$0x1]
        %v3784 = vsel %vm386, 0, %v3783
        %3785 = vst [vmem:[%s3752 + $0xf0] sm:$0x1] %v3784
        %v3786 = vld [vmem:[%s3752 + $0x108] sm:$0x1]
        %v3787 = vsel %vm386, 0, %v3786
        %3788 = vst [vmem:[%s3752 + $0x108] sm:$0x1] %v3787
        %v3789 = vld [vmem:[%s3752 + $0x120] sm:$0x1]
        %v3790 = vsel %vm386, 0, %v3789
        %3791 = vst [vmem:[%s3752 + $0x120] sm:$0x1] %v3790
        %v3792 = vld [vmem:[%s3752 + $0x138] sm:$0x1]
        %v3793 = vsel %vm386, 0, %v3792
        %3794 = vst [vmem:[%s3752 + $0x138] sm:$0x1] %v3793
        %v3795 = vld [vmem:[%s3752 + $0x150] sm:$0x1]
        %v3796 = vsel %vm386, 0, %v3795
        %3797 = vst [vmem:[%s3752 + $0x150] sm:$0x1] %v3796
        %v3798 = vld [vmem:[%s3752 + $0x168] sm:$0x1]
        %v3799 = vsel %vm386, 0, %v3798
        %3800 = vst [vmem:[%s3752 + $0x168] sm:$0x1] %v3799
        %v3817 = vunpack.c.l.b16 %v3727
        %v3818 = vunpack.c.h.b16 %v3727
        %v3819 = vunpack.c.l.b16 %v3728
        %v3820 = vunpack.c.h.b16 %v3728
        %v3821 = vunpack.c.l.b16 %v3729
        %v3822 = vunpack.c.h.b16 %v3729
        %v3823 = vunpack.c.l.b16 %v3730
        %v3824 = vunpack.c.h.b16 %v3730
        %v3825 = vunpack.c.l.b16 %v3731
        %v3826 = vunpack.c.h.b16 %v3731
        %v3827 = vunpack.c.l.b16 %v3732
        %v3828 = vunpack.c.h.b16 %v3732
        %v3829 = vunpack.c.l.b16 %v3733
        %v3830 = vunpack.c.h.b16 %v3733
        %v3831 = vunpack.c.l.b16 %v3734
        %v3832 = vunpack.c.h.b16 %v3734
        %v3833 = vunpack.c.l.b16 %v3735
        %v3834 = vunpack.c.h.b16 %v3735
        %v3835 = vunpack.c.l.b16 %v3736
        %v3836 = vunpack.c.h.b16 %v3736
        %v3837 = vunpack.c.l.b16 %v3737
        %v3838 = vunpack.c.h.b16 %v3737
        %v3839 = vunpack.c.l.b16 %v3738
        %v3840 = vunpack.c.h.b16 %v3738
        %v3841 = vunpack.c.l.b16 %v3739
        %v3842 = vunpack.c.h.b16 %v3739
        %v3843 = vunpack.c.l.b16 %v3740
        %v3844 = vunpack.c.h.b16 %v3740
        %v3845 = vunpack.c.l.b16 %v3741
        %v3846 = vunpack.c.h.b16 %v3741
        %v3847 = vunpack.c.l.b16 %v3742
        %v3848 = vunpack.c.h.b16 %v3742
        %v3849 = vpack.c.b16 %v3817, %v3817
        %v3850 = vpack.c.b16 %v3818, %v3818
        %v3851 = vpack.c.b16 %v3819, %v3819
        %v3852 = vpack.c.b16 %v3820, %v3820
        %v3853 = vpack.c.b16 %v3821, %v3821
        %v3854 = vpack.c.b16 %v3822, %v3822
        %v3855 = vpack.c.b16 %v3823, %v3823
        %v3856 = vpack.c.b16 %v3824, %v3824
        %v3857 = vpack.c.b16 %v3825, %v3825
        %v3858 = vpack.c.b16 %v3826, %v3826
        %v3859 = vpack.c.b16 %v3827, %v3827
        %v3860 = vpack.c.b16 %v3828, %v3828
        %v3861 = vpack.c.b16 %v3829, %v3829
        %v3862 = vpack.c.b16 %v3830, %v3830
        %v3863 = vpack.c.b16 %v3831, %v3831
        %v3864 = vpack.c.b16 %v3832, %v3832
        %v3865 = vpack.c.b16 %v3833, %v3833
        %v3866 = vpack.c.b16 %v3834, %v3834
        %v3867 = vpack.c.b16 %v3835, %v3835
        %v3868 = vpack.c.b16 %v3836, %v3836
        %v3869 = vpack.c.b16 %v3837, %v3837
        %v3870 = vpack.c.b16 %v3838, %v3838
        %v3871 = vpack.c.b16 %v3839, %v3839
        %v3872 = vpack.c.b16 %v3840, %v3840
        %v3873 = vpack.c.b16 %v3841, %v3841
        %v3874 = vpack.c.b16 %v3842, %v3842
        %v3875 = vpack.c.b16 %v3843, %v3843
        %v3876 = vpack.c.b16 %v3844, %v3844
        %v3877 = vpack.c.b16 %v3845, %v3845
        %v3878 = vpack.c.b16 %v3846, %v3846
        %v3879 = vpack.c.b16 %v3847, %v3847
        %v3880 = vpack.c.b16 %v3848, %v3848
        %v3882 = vshrl.u32 %v3849, 16
        %v3884 = vrot.slane %v3882, 7
        %v3885 = vshll.u32 %v3849, 16
        %v3887 = vor.u32 %v3884, %v3885
        %v3888 = vrot.slane %v3884, 4
        %v3890 = vshrl.u32 %v3850, 16
        %v3892 = vrot.slane %v3890, 7
        %v3893 = vshll.u32 %v3850, 16
        %v3895 = vor.u32 %v3892, %v3893
        %v3896 = vsel %vm436, %v3888, %v3895
        %v3898 = vshrl.u32 %v3851, 16
        %v3900 = vrot.slane %v3898, 7
        %v3901 = vshll.u32 %v3851, 16
        %v3903 = vor.u32 %v3900, %v3901
        %v3904 = vrot.slane %v3900, 4
        %v3906 = vshrl.u32 %v3852, 16
        %v3908 = vrot.slane %v3906, 7
        %v3909 = vshll.u32 %v3852, 16
        %v3911 = vor.u32 %v3908, %v3909
        %v3912 = vsel %vm436, %v3904, %v3911
        %v3914 = vshrl.u32 %v3853, 16
        %v3916 = vrot.slane %v3914, 7
        %v3917 = vshll.u32 %v3853, 16
        %v3919 = vor.u32 %v3916, %v3917
        %v3920 = vrot.slane %v3916, 4
        %v3922 = vshrl.u32 %v3854, 16
        %v3924 = vrot.slane %v3922, 7
        %v3925 = vshll.u32 %v3854, 16
        %v3927 = vor.u32 %v3924, %v3925
        %v3928 = vsel %vm436, %v3920, %v3927
        %v3930 = vshrl.u32 %v3855, 16
        %v3932 = vrot.slane %v3930, 7
        %v3933 = vshll.u32 %v3855, 16
        %v3935 = vor.u32 %v3932, %v3933
        %v3936 = vrot.slane %v3932, 4
        %v3938 = vshrl.u32 %v3856, 16
        %v3940 = vrot.slane %v3938, 7
        %v3941 = vshll.u32 %v3856, 16
        %v3943 = vor.u32 %v3940, %v3941
        %v3944 = vsel %vm436, %v3936, %v3943
        %v3946 = vshrl.u32 %v3857, 16
        %v3948 = vrot.slane %v3946, 7
        %v3949 = vshll.u32 %v3857, 16
        %v3951 = vor.u32 %v3948, %v3949
        %v3952 = vrot.slane %v3948, 4
        %v3954 = vshrl.u32 %v3858, 16
        %v3956 = vrot.slane %v3954, 7
        %v3957 = vshll.u32 %v3858, 16
        %v3959 = vor.u32 %v3956, %v3957
        %v3960 = vsel %vm436, %v3952, %v3959
        %v3962 = vshrl.u32 %v3859, 16
        %v3964 = vrot.slane %v3962, 7
        %v3965 = vshll.u32 %v3859, 16
        %v3967 = vor.u32 %v3964, %v3965
        %v3968 = vrot.slane %v3964, 4
        %v3970 = vshrl.u32 %v3860, 16
        %v3972 = vrot.slane %v3970, 7
        %v3973 = vshll.u32 %v3860, 16
        %v3975 = vor.u32 %v3972, %v3973
        %v3976 = vsel %vm436, %v3968, %v3975
        %v3978 = vshrl.u32 %v3861, 16
        %v3980 = vrot.slane %v3978, 7
        %v3981 = vshll.u32 %v3861, 16
        %v3983 = vor.u32 %v3980, %v3981
        %v3984 = vrot.slane %v3980, 4
        %v3986 = vshrl.u32 %v3862, 16
        %v3988 = vrot.slane %v3986, 7
        %v3989 = vshll.u32 %v3862, 16
        %v3991 = vor.u32 %v3988, %v3989
        %v3992 = vsel %vm436, %v3984, %v3991
        %v3994 = vshrl.u32 %v3863, 16
        %v3996 = vrot.slane %v3994, 7
        %v3997 = vshll.u32 %v3863, 16
        %v3999 = vor.u32 %v3996, %v3997
        %v4000 = vrot.slane %v3996, 4
        %v4002 = vshrl.u32 %v3864, 16
        %v4004 = vrot.slane %v4002, 7
        %v4005 = vshll.u32 %v3864, 16
        %v4007 = vor.u32 %v4004, %v4005
        %v4008 = vsel %vm436, %v4000, %v4007
        %v4010 = vshrl.u32 %v3865, 16
        %v4012 = vrot.slane %v4010, 7
        %v4013 = vshll.u32 %v3865, 16
        %v4015 = vor.u32 %v4012, %v4013
        %v4016 = vrot.slane %v4012, 4
        %v4018 = vshrl.u32 %v3866, 16
        %v4020 = vrot.slane %v4018, 7
        %v4021 = vshll.u32 %v3866, 16
        %v4023 = vor.u32 %v4020, %v4021
        %v4024 = vsel %vm436, %v4016, %v4023
        %v4026 = vshrl.u32 %v3867, 16
        %v4028 = vrot.slane %v4026, 7
        %v4029 = vshll.u32 %v3867, 16
        %v4031 = vor.u32 %v4028, %v4029
        %v4032 = vrot.slane %v4028, 4
        %v4034 = vshrl.u32 %v3868, 16
        %v4036 = vrot.slane %v4034, 7
        %v4037 = vshll.u32 %v3868, 16
        %v4039 = vor.u32 %v4036, %v4037
        %v4040 = vsel %vm436, %v4032, %v4039
        %v4042 = vshrl.u32 %v3869, 16
        %v4044 = vrot.slane %v4042, 7
        %v4045 = vshll.u32 %v3869, 16
        %v4047 = vor.u32 %v4044, %v4045
        %v4048 = vrot.slane %v4044, 4
        %v4050 = vshrl.u32 %v3870, 16
        %v4052 = vrot.slane %v4050, 7
        %v4053 = vshll.u32 %v3870, 16
        %v4055 = vor.u32 %v4052, %v4053
        %v4056 = vsel %vm436, %v4048, %v4055
        %v4058 = vshrl.u32 %v3871, 16
        %v4060 = vrot.slane %v4058, 7
        %v4061 = vshll.u32 %v3871, 16
        %v4063 = vor.u32 %v4060, %v4061
        %v4064 = vrot.slane %v4060, 4
        %v4066 = vshrl.u32 %v3872, 16
        %v4068 = vrot.slane %v4066, 7
        %v4069 = vshll.u32 %v3872, 16
        %v4071 = vor.u32 %v4068, %v4069
        %v4072 = vsel %vm436, %v4064, %v4071
        %v4074 = vshrl.u32 %v3873, 16
        %v4076 = vrot.slane %v4074, 7
        %v4077 = vshll.u32 %v3873, 16
        %v4079 = vor.u32 %v4076, %v4077
        %v4080 = vrot.slane %v4076, 4
        %v4082 = vshrl.u32 %v3874, 16
        %v4084 = vrot.slane %v4082, 7
        %v4085 = vshll.u32 %v3874, 16
        %v4087 = vor.u32 %v4084, %v4085
        %v4088 = vsel %vm436, %v4080, %v4087
        %v4090 = vshrl.u32 %v3875, 16
        %v4092 = vrot.slane %v4090, 7
        %v4093 = vshll.u32 %v3875, 16
        %v4095 = vor.u32 %v4092, %v4093
        %v4096 = vrot.slane %v4092, 4
        %v4098 = vshrl.u32 %v3876, 16
        %v4100 = vrot.slane %v4098, 7
        %v4101 = vshll.u32 %v3876, 16
        %v4103 = vor.u32 %v4100, %v4101
        %v4104 = vsel %vm436, %v4096, %v4103
        %v4106 = vshrl.u32 %v3877, 16
        %v4108 = vrot.slane %v4106, 7
        %v4109 = vshll.u32 %v3877, 16
        %v4111 = vor.u32 %v4108, %v4109
        %v4112 = vrot.slane %v4108, 4
        %v4114 = vshrl.u32 %v3878, 16
        %v4116 = vrot.slane %v4114, 7
        %v4117 = vshll.u32 %v3878, 16
        %v4119 = vor.u32 %v4116, %v4117
        %v4120 = vsel %vm436, %v4112, %v4119
        %v4122 = vshrl.u32 %v3879, 16
        %v4124 = vrot.slane %v4122, 7
        %v4125 = vshll.u32 %v3879, 16
        %v4127 = vor.u32 %v4124, %v4125
        %v4128 = vrot.slane %v4124, 4
        %v4130 = vshrl.u32 %v3880, 16
        %v4132 = vrot.slane %v4130, 7
        %v4133 = vshll.u32 %v3880, 16
        %v4135 = vor.u32 %v4132, %v4133
        %v4136 = vsel %vm436, %v4128, %v4135
        %v4169 = vld [vmem:[%s3752] sm:$0xf]
        %v4170 = vsel %vm727, %v3887, %v4169
        %4171 = vst [vmem:[%s3752] sm:$0xf] %v4170
        %4172 = vst [vmem:[%s3752 + $0xc] sm:$0xf] %v3896
        %v4173 = vld [vmem:[%s3752 + $0x18] sm:$0xf]
        %v4174 = vsel %vm727, %v3903, %v4173
        %4175 = vst [vmem:[%s3752 + $0x18] sm:$0xf] %v4174
        %4176 = vst [vmem:[%s3752 + $0x24] sm:$0xf] %v3912
        %v4177 = vld [vmem:[%s3752 + $0x30] sm:$0xf]
        %v4178 = vsel %vm727, %v3919, %v4177
        %4179 = vst [vmem:[%s3752 + $0x30] sm:$0xf] %v4178
        %4180 = vst [vmem:[%s3752 + $0x3c] sm:$0xf] %v3928
        %v4181 = vld [vmem:[%s3752 + $0x48] sm:$0xf]
        %v4182 = vsel %vm727, %v3935, %v4181
        %4183 = vst [vmem:[%s3752 + $0x48] sm:$0xf] %v4182
        %4184 = vst [vmem:[%s3752 + $0x54] sm:$0xf] %v3944
        %v4185 = vld [vmem:[%s3752 + $0x60] sm:$0xf]
        %v4186 = vsel %vm727, %v3951, %v4185
        %4187 = vst [vmem:[%s3752 + $0x60] sm:$0xf] %v4186
        %4188 = vst [vmem:[%s3752 + $0x6c] sm:$0xf] %v3960
        %v4189 = vld [vmem:[%s3752 + $0x78] sm:$0xf]
        %v4190 = vsel %vm727, %v3967, %v4189
        %4191 = vst [vmem:[%s3752 + $0x78] sm:$0xf] %v4190
        %4192 = vst [vmem:[%s3752 + $0x84] sm:$0xf] %v3976
        %v4193 = vld [vmem:[%s3752 + $0x90] sm:$0xf]
        %v4194 = vsel %vm727, %v3983, %v4193
        %4195 = vst [vmem:[%s3752 + $0x90] sm:$0xf] %v4194
        %4196 = vst [vmem:[%s3752 + $0x9c] sm:$0xf] %v3992
        %v4197 = vld [vmem:[%s3752 + $0xa8] sm:$0xf]
        %v4198 = vsel %vm727, %v3999, %v4197
        %4199 = vst [vmem:[%s3752 + $0xa8] sm:$0xf] %v4198
        %4200 = vst [vmem:[%s3752 + $0xb4] sm:$0xf] %v4008
        %v4201 = vld [vmem:[%s3752 + $0xc0] sm:$0xf]
        %v4202 = vsel %vm727, %v4015, %v4201
        %4203 = vst [vmem:[%s3752 + $0xc0] sm:$0xf] %v4202
        %4204 = vst [vmem:[%s3752 + $0xcc] sm:$0xf] %v4024
        %v4205 = vld [vmem:[%s3752 + $0xd8] sm:$0xf]
        %v4206 = vsel %vm727, %v4031, %v4205
        %4207 = vst [vmem:[%s3752 + $0xd8] sm:$0xf] %v4206
        %4208 = vst [vmem:[%s3752 + $0xe4] sm:$0xf] %v4040
        %v4209 = vld [vmem:[%s3752 + $0xf0] sm:$0xf]
        %v4210 = vsel %vm727, %v4047, %v4209
        %4211 = vst [vmem:[%s3752 + $0xf0] sm:$0xf] %v4210
        %4212 = vst [vmem:[%s3752 + $0xfc] sm:$0xf] %v4056
        %v4213 = vld [vmem:[%s3752 + $0x108] sm:$0xf]
        %v4214 = vsel %vm727, %v4063, %v4213
        %4215 = vst [vmem:[%s3752 + $0x108] sm:$0xf] %v4214
        %4216 = vst [vmem:[%s3752 + $0x114] sm:$0xf] %v4072
        %v4217 = vld [vmem:[%s3752 + $0x120] sm:$0xf]
        %v4218 = vsel %vm727, %v4079, %v4217
        %4219 = vst [vmem:[%s3752 + $0x120] sm:$0xf] %v4218
        %4220 = vst [vmem:[%s3752 + $0x12c] sm:$0xf] %v4088
        %v4221 = vld [vmem:[%s3752 + $0x138] sm:$0xf]
        %v4222 = vsel %vm727, %v4095, %v4221
        %4223 = vst [vmem:[%s3752 + $0x138] sm:$0xf] %v4222
        %4224 = vst [vmem:[%s3752 + $0x144] sm:$0xf] %v4104
        %v4225 = vld [vmem:[%s3752 + $0x150] sm:$0xf]
        %v4226 = vsel %vm727, %v4111, %v4225
        %4227 = vst [vmem:[%s3752 + $0x150] sm:$0xf] %v4226
        %4228 = vst [vmem:[%s3752 + $0x15c] sm:$0xf] %v4120
        %v4229 = vld [vmem:[%s3752 + $0x168] sm:$0xf]
        %v4230 = vsel %vm727, %v4127, %v4229
        %4231 = vst [vmem:[%s3752 + $0x168] sm:$0xf] %v4230
        %4232 = vst [vmem:[%s3752 + $0x174] sm:$0xf] %v4136
        %4265 = vst [vmem:[%s3752 + $0x4] sm:$0xf] %v3849
        %4266 = vst [vmem:[%s3752 + $0x10] sm:$0xf] %v3850
        %4267 = vst [vmem:[%s3752 + $0x1c] sm:$0xf] %v3851
        %4268 = vst [vmem:[%s3752 + $0x28] sm:$0xf] %v3852
        %4269 = vst [vmem:[%s3752 + $0x34] sm:$0xf] %v3853
        %4270 = vst [vmem:[%s3752 + $0x40] sm:$0xf] %v3854
        %4271 = vst [vmem:[%s3752 + $0x4c] sm:$0xf] %v3855
        %4272 = vst [vmem:[%s3752 + $0x58] sm:$0xf] %v3856
        %4273 = vst [vmem:[%s3752 + $0x64] sm:$0xf] %v3857
        %4274 = vst [vmem:[%s3752 + $0x70] sm:$0xf] %v3858
        %4275 = vst [vmem:[%s3752 + $0x7c] sm:$0xf] %v3859
        %4276 = vst [vmem:[%s3752 + $0x88] sm:$0xf] %v3860
        %4277 = vst [vmem:[%s3752 + $0x94] sm:$0xf] %v3861
        %4278 = vst [vmem:[%s3752 + $0xa0] sm:$0xf] %v3862
        %4279 = vst [vmem:[%s3752 + $0xac] sm:$0xf] %v3863
        %4280 = vst [vmem:[%s3752 + $0xb8] sm:$0xf] %v3864
        %4281 = vst [vmem:[%s3752 + $0xc4] sm:$0xf] %v3865
        %4282 = vst [vmem:[%s3752 + $0xd0] sm:$0xf] %v3866
        %4283 = vst [vmem:[%s3752 + $0xdc] sm:$0xf] %v3867
        %4284 = vst [vmem:[%s3752 + $0xe8] sm:$0xf] %v3868
        %4285 = vst [vmem:[%s3752 + $0xf4] sm:$0xf] %v3869
        %4286 = vst [vmem:[%s3752 + $0x100] sm:$0xf] %v3870
        %4287 = vst [vmem:[%s3752 + $0x10c] sm:$0xf] %v3871
        %4288 = vst [vmem:[%s3752 + $0x118] sm:$0xf] %v3872
        %4289 = vst [vmem:[%s3752 + $0x124] sm:$0xf] %v3873
        %4290 = vst [vmem:[%s3752 + $0x130] sm:$0xf] %v3874
        %4291 = vst [vmem:[%s3752 + $0x13c] sm:$0xf] %v3875
        %4292 = vst [vmem:[%s3752 + $0x148] sm:$0xf] %v3876
        %4293 = vst [vmem:[%s3752 + $0x154] sm:$0xf] %v3877
        %4294 = vst [vmem:[%s3752 + $0x160] sm:$0xf] %v3878
        %4295 = vst [vmem:[%s3752 + $0x16c] sm:$0xf] %v3879
        %4296 = vst [vmem:[%s3752 + $0x178] sm:$0xf] %v3880
        %v4297 = vrot.slane %v3882, 4
        %v4298 = vrot.slane %v3885, 5
        %v4299 = vor.u32 %v4297, %v4298
        %v4300 = vrot.slane %v4299, 4
        %v4301 = vrot.slane %v3893, 5
        %v4302 = vsel %vm826, %v4300, %v4301
        %v4303 = vrot.slane %v3890, 4
        %v4304 = vor.u32 %v4303, %v4301
        %v4305 = vrot.slane %v4304, 4
        %v4306 = vrot.slane %v3898, 4
        %v4307 = vrot.slane %v3901, 5
        %v4308 = vor.u32 %v4306, %v4307
        %v4309 = vrot.slane %v4308, 4
        %v4310 = vrot.slane %v3909, 5
        %v4311 = vsel %vm826, %v4309, %v4310
        %v4312 = vrot.slane %v3906, 4
        %v4313 = vor.u32 %v4312, %v4310
        %v4314 = vrot.slane %v4313, 4
        %v4315 = vrot.slane %v3914, 4
        %v4316 = vrot.slane %v3917, 5
        %v4317 = vor.u32 %v4315, %v4316
        %v4318 = vrot.slane %v4317, 4
        %v4319 = vrot.slane %v3925, 5
        %v4320 = vsel %vm826, %v4318, %v4319
        %v4321 = vrot.slane %v3922, 4
        %v4322 = vor.u32 %v4321, %v4319
        %v4323 = vrot.slane %v4322, 4
        %v4324 = vrot.slane %v3930, 4
        %v4325 = vrot.slane %v3933, 5
        %v4326 = vor.u32 %v4324, %v4325
        %v4327 = vrot.slane %v4326, 4
        %v4328 = vrot.slane %v3941, 5
        %v4329 = vsel %vm826, %v4327, %v4328
        %v4330 = vrot.slane %v3938, 4
        %v4331 = vor.u32 %v4330, %v4328
        %v4332 = vrot.slane %v4331, 4
        %v4333 = vrot.slane %v3946, 4
        %v4334 = vrot.slane %v3949, 5
        %v4335 = vor.u32 %v4333, %v4334
        %v4336 = vrot.slane %v4335, 4
        %v4337 = vrot.slane %v3957, 5
        %v4338 = vsel %vm826, %v4336, %v4337
        %v4339 = vrot.slane %v3954, 4
        %v4340 = vor.u32 %v4339, %v4337
        %v4341 = vrot.slane %v4340, 4
        %v4342 = vrot.slane %v3962, 4
        %v4343 = vrot.slane %v3965, 5
        %v4344 = vor.u32 %v4342, %v4343
        %v4345 = vrot.slane %v4344, 4
        %v4346 = vrot.slane %v3973, 5
        %v4347 = vsel %vm826, %v4345, %v4346
        %v4348 = vrot.slane %v3970, 4
        %v4349 = vor.u32 %v4348, %v4346
        %v4350 = vrot.slane %v4349, 4
        %v4351 = vrot.slane %v3978, 4
        %v4352 = vrot.slane %v3981, 5
        %v4353 = vor.u32 %v4351, %v4352
        %v4354 = vrot.slane %v4353, 4
        %v4355 = vrot.slane %v3989, 5
        %v4356 = vsel %vm826, %v4354, %v4355
        %v4357 = vrot.slane %v3986, 4
        %v4358 = vor.u32 %v4357, %v4355
        %v4359 = vrot.slane %v4358, 4
        %v4360 = vrot.slane %v3994, 4
        %v4361 = vrot.slane %v3997, 5
        %v4362 = vor.u32 %v4360, %v4361
        %v4363 = vrot.slane %v4362, 4
        %v4364 = vrot.slane %v4005, 5
        %v4365 = vsel %vm826, %v4363, %v4364
        %v4366 = vrot.slane %v4002, 4
        %v4367 = vor.u32 %v4366, %v4364
        %v4368 = vrot.slane %v4367, 4
        %v4369 = vrot.slane %v4010, 4
        %v4370 = vrot.slane %v4013, 5
        %v4371 = vor.u32 %v4369, %v4370
        %v4372 = vrot.slane %v4371, 4
        %v4373 = vrot.slane %v4021, 5
        %v4374 = vsel %vm826, %v4372, %v4373
        %v4375 = vrot.slane %v4018, 4
        %v4376 = vor.u32 %v4375, %v4373
        %v4377 = vrot.slane %v4376, 4
        %v4378 = vrot.slane %v4026, 4
        %v4379 = vrot.slane %v4029, 5
        %v4380 = vor.u32 %v4378, %v4379
        %v4381 = vrot.slane %v4380, 4
        %v4382 = vrot.slane %v4037, 5
        %v4383 = vsel %vm826, %v4381, %v4382
        %v4384 = vrot.slane %v4034, 4
        %v4385 = vor.u32 %v4384, %v4382
        %v4386 = vrot.slane %v4385, 4
        %v4387 = vrot.slane %v4042, 4
        %v4388 = vrot.slane %v4045, 5
        %v4389 = vor.u32 %v4387, %v4388
        %v4390 = vrot.slane %v4389, 4
        %v4391 = vrot.slane %v4053, 5
        %v4392 = vsel %vm826, %v4390, %v4391
        %v4393 = vrot.slane %v4050, 4
        %v4394 = vor.u32 %v4393, %v4391
        %v4395 = vrot.slane %v4394, 4
        %v4396 = vrot.slane %v4058, 4
        %v4397 = vrot.slane %v4061, 5
        %v4398 = vor.u32 %v4396, %v4397
        %v4399 = vrot.slane %v4398, 4
        %v4400 = vrot.slane %v4069, 5
        %v4401 = vsel %vm826, %v4399, %v4400
        %v4402 = vrot.slane %v4066, 4
        %v4403 = vor.u32 %v4402, %v4400
        %v4404 = vrot.slane %v4403, 4
        %v4405 = vrot.slane %v4074, 4
        %v4406 = vrot.slane %v4077, 5
        %v4407 = vor.u32 %v4405, %v4406
        %v4408 = vrot.slane %v4407, 4
        %v4409 = vrot.slane %v4085, 5
        %v4410 = vsel %vm826, %v4408, %v4409
        %v4411 = vrot.slane %v4082, 4
        %v4412 = vor.u32 %v4411, %v4409
        %v4413 = vrot.slane %v4412, 4
        %v4414 = vrot.slane %v4090, 4
        %v4415 = vrot.slane %v4093, 5
        %v4416 = vor.u32 %v4414, %v4415
        %v4417 = vrot.slane %v4416, 4
        %v4418 = vrot.slane %v4101, 5
        %v4419 = vsel %vm826, %v4417, %v4418
        %v4420 = vrot.slane %v4098, 4
        %v4421 = vor.u32 %v4420, %v4418
        %v4422 = vrot.slane %v4421, 4
        %v4423 = vrot.slane %v4106, 4
        %v4424 = vrot.slane %v4109, 5
        %v4425 = vor.u32 %v4423, %v4424
        %v4426 = vrot.slane %v4425, 4
        %v4427 = vrot.slane %v4117, 5
        %v4428 = vsel %vm826, %v4426, %v4427
        %v4429 = vrot.slane %v4114, 4
        %v4430 = vor.u32 %v4429, %v4427
        %v4431 = vrot.slane %v4430, 4
        %v4432 = vrot.slane %v4122, 4
        %v4433 = vrot.slane %v4125, 5
        %v4434 = vor.u32 %v4432, %v4433
        %v4435 = vrot.slane %v4434, 4
        %v4436 = vrot.slane %v4133, 5
        %v4437 = vsel %vm826, %v4435, %v4436
        %v4438 = vrot.slane %v4130, 4
        %v4439 = vor.u32 %v4438, %v4436
        %v4440 = vrot.slane %v4439, 4
        %4473 = vst [vmem:[%s3752 + $0x8] sm:$0xf] %v4302
        %v4474 = vld [vmem:[%s3752 + $0x14] sm:$0xf]
        %v4475 = vsel %vm1004, %v4305, %v4474
        %4476 = vst [vmem:[%s3752 + $0x14] sm:$0xf] %v4475
        %4477 = vst [vmem:[%s3752 + $0x20] sm:$0xf] %v4311
        %v4478 = vld [vmem:[%s3752 + $0x2c] sm:$0xf]
        %v4479 = vsel %vm1004, %v4314, %v4478
        %4480 = vst [vmem:[%s3752 + $0x2c] sm:$0xf] %v4479
        %4481 = vst [vmem:[%s3752 + $0x38] sm:$0xf] %v4320
        %v4482 = vld [vmem:[%s3752 + $0x44] sm:$0xf]
        %v4483 = vsel %vm1004, %v4323, %v4482
        %4484 = vst [vmem:[%s3752 + $0x44] sm:$0xf] %v4483
        %4485 = vst [vmem:[%s3752 + $0x50] sm:$0xf] %v4329
        %v4486 = vld [vmem:[%s3752 + $0x5c] sm:$0xf]
        %v4487 = vsel %vm1004, %v4332, %v4486
        %4488 = vst [vmem:[%s3752 + $0x5c] sm:$0xf] %v4487
        %4489 = vst [vmem:[%s3752 + $0x68] sm:$0xf] %v4338
        %v4490 = vld [vmem:[%s3752 + $0x74] sm:$0xf]
        %v4491 = vsel %vm1004, %v4341, %v4490
        %4492 = vst [vmem:[%s3752 + $0x74] sm:$0xf] %v4491
        %4493 = vst [vmem:[%s3752 + $0x80] sm:$0xf] %v4347
        %v4494 = vld [vmem:[%s3752 + $0x8c] sm:$0xf]
        %v4495 = vsel %vm1004, %v4350, %v4494
        %4496 = vst [vmem:[%s3752 + $0x8c] sm:$0xf] %v4495
        %4497 = vst [vmem:[%s3752 + $0x98] sm:$0xf] %v4356
        %v4498 = vld [vmem:[%s3752 + $0xa4] sm:$0xf]
        %v4499 = vsel %vm1004, %v4359, %v4498
        %4500 = vst [vmem:[%s3752 + $0xa4] sm:$0xf] %v4499
        %4501 = vst [vmem:[%s3752 + $0xb0] sm:$0xf] %v4365
        %v4502 = vld [vmem:[%s3752 + $0xbc] sm:$0xf]
        %v4503 = vsel %vm1004, %v4368, %v4502
        %4504 = vst [vmem:[%s3752 + $0xbc] sm:$0xf] %v4503
        %4505 = vst [vmem:[%s3752 + $0xc8] sm:$0xf] %v4374
        %v4506 = vld [vmem:[%s3752 + $0xd4] sm:$0xf]
        %v4507 = vsel %vm1004, %v4377, %v4506
        %4508 = vst [vmem:[%s3752 + $0xd4] sm:$0xf] %v4507
        %4509 = vst [vmem:[%s3752 + $0xe0] sm:$0xf] %v4383
        %v4510 = vld [vmem:[%s3752 + $0xec] sm:$0xf]
        %v4511 = vsel %vm1004, %v4386, %v4510
        %4512 = vst [vmem:[%s3752 + $0xec] sm:$0xf] %v4511
        %4513 = vst [vmem:[%s3752 + $0xf8] sm:$0xf] %v4392
        %v4514 = vld [vmem:[%s3752 + $0x104] sm:$0xf]
        %v4515 = vsel %vm1004, %v4395, %v4514
        %4516 = vst [vmem:[%s3752 + $0x104] sm:$0xf] %v4515
        %4517 = vst [vmem:[%s3752 + $0x110] sm:$0xf] %v4401
        %v4518 = vld [vmem:[%s3752 + $0x11c] sm:$0xf]
        %v4519 = vsel %vm1004, %v4404, %v4518
        %4520 = vst [vmem:[%s3752 + $0x11c] sm:$0xf] %v4519
        %4521 = vst [vmem:[%s3752 + $0x128] sm:$0xf] %v4410
        %v4522 = vld [vmem:[%s3752 + $0x134] sm:$0xf]
        %v4523 = vsel %vm1004, %v4413, %v4522
        %4524 = vst [vmem:[%s3752 + $0x134] sm:$0xf] %v4523
        %4525 = vst [vmem:[%s3752 + $0x140] sm:$0xf] %v4419
        %v4526 = vld [vmem:[%s3752 + $0x14c] sm:$0xf]
        %v4527 = vsel %vm1004, %v4422, %v4526
        %4528 = vst [vmem:[%s3752 + $0x14c] sm:$0xf] %v4527
        %4529 = vst [vmem:[%s3752 + $0x158] sm:$0xf] %v4428
        %v4530 = vld [vmem:[%s3752 + $0x164] sm:$0xf]
        %v4531 = vsel %vm1004, %v4431, %v4530
        %4532 = vst [vmem:[%s3752 + $0x164] sm:$0xf] %v4531
        %4533 = vst [vmem:[%s3752 + $0x170] sm:$0xf] %v4437
        %v4534 = vld [vmem:[%s3752 + $0x17c] sm:$0xf]
        %v4535 = vsel %vm1004, %v4440, %v4534
        %4536 = vst [vmem:[%s3752 + $0x17c] sm:$0xf] %v4535
        %v4537 = vld [vmem:[%s3752 + $0x14] sm:$0x8]
        %v4538 = vsel %vm1070, 0, %v4537
        %4539 = vst [vmem:[%s3752 + $0x14] sm:$0x8] %v4538
        %v4540 = vld [vmem:[%s3752 + $0x2c] sm:$0x8]
        %v4541 = vsel %vm1070, 0, %v4540
        %4542 = vst [vmem:[%s3752 + $0x2c] sm:$0x8] %v4541
        %v4543 = vld [vmem:[%s3752 + $0x44] sm:$0x8]
        %v4544 = vsel %vm1070, 0, %v4543
        %4545 = vst [vmem:[%s3752 + $0x44] sm:$0x8] %v4544
        %v4546 = vld [vmem:[%s3752 + $0x5c] sm:$0x8]
        %v4547 = vsel %vm1070, 0, %v4546
        %4548 = vst [vmem:[%s3752 + $0x5c] sm:$0x8] %v4547
        %v4549 = vld [vmem:[%s3752 + $0x74] sm:$0x8]
        %v4550 = vsel %vm1070, 0, %v4549
        %4551 = vst [vmem:[%s3752 + $0x74] sm:$0x8] %v4550
        %v4552 = vld [vmem:[%s3752 + $0x8c] sm:$0x8]
        %v4553 = vsel %vm1070, 0, %v4552
        %4554 = vst [vmem:[%s3752 + $0x8c] sm:$0x8] %v4553
        %v4555 = vld [vmem:[%s3752 + $0xa4] sm:$0x8]
        %v4556 = vsel %vm1070, 0, %v4555
        %4557 = vst [vmem:[%s3752 + $0xa4] sm:$0x8] %v4556
        %v4558 = vld [vmem:[%s3752 + $0xbc] sm:$0x8]
        %v4559 = vsel %vm1070, 0, %v4558
        %4560 = vst [vmem:[%s3752 + $0xbc] sm:$0x8] %v4559
        %v4561 = vld [vmem:[%s3752 + $0xd4] sm:$0x8]
        %v4562 = vsel %vm1070, 0, %v4561
        %4563 = vst [vmem:[%s3752 + $0xd4] sm:$0x8] %v4562
        %v4564 = vld [vmem:[%s3752 + $0xec] sm:$0x8]
        %v4565 = vsel %vm1070, 0, %v4564
        %4566 = vst [vmem:[%s3752 + $0xec] sm:$0x8] %v4565
        %v4567 = vld [vmem:[%s3752 + $0x104] sm:$0x8]
        %v4568 = vsel %vm1070, 0, %v4567
        %4569 = vst [vmem:[%s3752 + $0x104] sm:$0x8] %v4568
        %v4570 = vld [vmem:[%s3752 + $0x11c] sm:$0x8]
        %v4571 = vsel %vm1070, 0, %v4570
        %4572 = vst [vmem:[%s3752 + $0x11c] sm:$0x8] %v4571
        %v4573 = vld [vmem:[%s3752 + $0x134] sm:$0x8]
        %v4574 = vsel %vm1070, 0, %v4573
        %4575 = vst [vmem:[%s3752 + $0x134] sm:$0x8] %v4574
        %v4576 = vld [vmem:[%s3752 + $0x14c] sm:$0x8]
        %v4577 = vsel %vm1070, 0, %v4576
        %4578 = vst [vmem:[%s3752 + $0x14c] sm:$0x8] %v4577
        %v4579 = vld [vmem:[%s3752 + $0x164] sm:$0x8]
        %v4580 = vsel %vm1070, 0, %v4579
        %4581 = vst [vmem:[%s3752 + $0x164] sm:$0x8] %v4580
        %v4582 = vld [vmem:[%s3752 + $0x17c] sm:$0x8]
        %v4583 = vsel %vm1070, 0, %v4582
        %4584 = vst [vmem:[%s3752 + $0x17c] sm:$0x8] %v4583
        %v4585 = vld [vmem:[#allocation3] sm:$0xff]
        %v4586 = vld [vmem:[#allocation3 + $0x8] sm:$0xf]
        %v4587 = vld [vmem:[#allocation3 + $0xc] sm:$0xff]
        %v4588 = vld [vmem:[#allocation3 + $0x14] sm:$0xf]
        %v4589 = vld [vmem:[#allocation3 + $0x18] sm:$0xff]
        %v4590 = vld [vmem:[#allocation3 + $0x20] sm:$0xf]
        %v4591 = vld [vmem:[#allocation3 + $0x24] sm:$0xff]
        %v4592 = vld [vmem:[#allocation3 + $0x2c] sm:$0xf]
        %v4593 = vld [vmem:[#allocation3 + $0x30] sm:$0xff]
        %v4594 = vld [vmem:[#allocation3 + $0x38] sm:$0xf]
        %v4595 = vld [vmem:[#allocation3 + $0x3c] sm:$0xff]
        %v4596 = vld [vmem:[#allocation3 + $0x44] sm:$0xf]
        %v4597 = vld [vmem:[#allocation3 + $0x48] sm:$0xff]
        %v4598 = vld [vmem:[#allocation3 + $0x50] sm:$0xf]
        %v4599 = vld [vmem:[#allocation3 + $0x54] sm:$0xff]
        %v4600 = vld [vmem:[#allocation3 + $0x5c] sm:$0xf]
        %v4601 = vld [vmem:[#allocation3 + $0x60] sm:$0xff]
        %v4602 = vld [vmem:[#allocation3 + $0x68] sm:$0xf]
        %v4603 = vld [vmem:[#allocation3 + $0x6c] sm:$0xff]
        %v4604 = vld [vmem:[#allocation3 + $0x74] sm:$0xf]
        %v4605 = vld [vmem:[#allocation3 + $0x78] sm:$0xff]
        %v4606 = vld [vmem:[#allocation3 + $0x80] sm:$0xf]
        %v4607 = vld [vmem:[#allocation3 + $0x84] sm:$0xff]
        %v4608 = vld [vmem:[#allocation3 + $0x8c] sm:$0xf]
        %v4609 = vld [vmem:[#allocation3 + $0x90] sm:$0xff]
        %v4610 = vld [vmem:[#allocation3 + $0x98] sm:$0xf]
        %v4611 = vld [vmem:[#allocation3 + $0x9c] sm:$0xff]
        %v4612 = vld [vmem:[#allocation3 + $0xa4] sm:$0xf]
        %v4613 = vld [vmem:[#allocation3 + $0xa8] sm:$0xff]
        %v4614 = vld [vmem:[#allocation3 + $0xb0] sm:$0xf]
        %v4615 = vld [vmem:[#allocation3 + $0xb4] sm:$0xff]
        %v4616 = vld [vmem:[#allocation3 + $0xbc] sm:$0xf]
        %v4617 = vld [vmem:[#allocation3 + $0xc0] sm:$0xff]
        %v4618 = vld [vmem:[#allocation3 + $0xc8] sm:$0xf]
        %v4619 = vld [vmem:[#allocation3 + $0xcc] sm:$0xff]
        %v4620 = vld [vmem:[#allocation3 + $0xd4] sm:$0xf]
        %v4621 = vld [vmem:[#allocation3 + $0xd8] sm:$0xff]
        %v4622 = vld [vmem:[#allocation3 + $0xe0] sm:$0xf]
        %v4623 = vld [vmem:[#allocation3 + $0xe4] sm:$0xff]
        %v4624 = vld [vmem:[#allocation3 + $0xec] sm:$0xf]
        %v4625 = vld [vmem:[#allocation3 + $0xf0] sm:$0xff]
        %v4626 = vld [vmem:[#allocation3 + $0xf8] sm:$0xf]
        %v4627 = vld [vmem:[#allocation3 + $0xfc] sm:$0xff]
        %v4628 = vld [vmem:[#allocation3 + $0x104] sm:$0xf]
        %v4629 = vld [vmem:[#allocation3 + $0x108] sm:$0xff]
        %v4630 = vld [vmem:[#allocation3 + $0x110] sm:$0xf]
        %v4631 = vld [vmem:[#allocation3 + $0x114] sm:$0xff]
        %v4632 = vld [vmem:[#allocation3 + $0x11c] sm:$0xf]
        %v4633 = vld [vmem:[#allocation3 + $0x120] sm:$0xff]
        %v4634 = vld [vmem:[#allocation3 + $0x128] sm:$0xf]
        %v4635 = vld [vmem:[#allocation3 + $0x12c] sm:$0xff]
        %v4636 = vld [vmem:[#allocation3 + $0x134] sm:$0xf]
        %v4637 = vld [vmem:[#allocation3 + $0x138] sm:$0xff]
        %v4638 = vld [vmem:[#allocation3 + $0x140] sm:$0xf]
        %v4639 = vld [vmem:[#allocation3 + $0x144] sm:$0xff]
        %v4640 = vld [vmem:[#allocation3 + $0x14c] sm:$0xf]
        %v4641 = vld [vmem:[#allocation3 + $0x150] sm:$0xff]
        %v4642 = vld [vmem:[#allocation3 + $0x158] sm:$0xf]
        %v4643 = vld [vmem:[#allocation3 + $0x15c] sm:$0xff]
        %v4644 = vld [vmem:[#allocation3 + $0x164] sm:$0xf]
        %v4645 = vld [vmem:[#allocation3 + $0x168] sm:$0xff]
        %v4646 = vld [vmem:[#allocation3 + $0x170] sm:$0xf]
        %v4647 = vld [vmem:[#allocation3 + $0x174] sm:$0xff]
        %v4648 = vld [vmem:[#allocation3 + $0x17c] sm:$0xf]
        %v4649 = vld [vmem:[#allocation9] sm:$0xf]
        %v4650 = vld [vmem:[#allocation9 + $0x4] sm:$0xf]
        %v4651 = vld [vmem:[#allocation9 + $0x8] sm:$0xf]
        %v4652 = vld [vmem:[#allocation9 + $0xc] sm:$0xf]
        %v4653 = vld [vmem:[#allocation9 + $0x10] sm:$0xf]
        %v4654 = vld [vmem:[#allocation9 + $0x14] sm:$0xf]
        %v4655 = vld [vmem:[#allocation9 + $0x18] sm:$0xf]
        %v4656 = vld [vmem:[#allocation9 + $0x1c] sm:$0xf]
        %v4657 = vld [vmem:[#allocation9 + $0x20] sm:$0xf]
        %v4658 = vld [vmem:[#allocation9 + $0x24] sm:$0xf]
        %v4659 = vld [vmem:[#allocation9 + $0x28] sm:$0xf]
        %v4660 = vld [vmem:[#allocation9 + $0x2c] sm:$0xf]
        %v4661 = vld [vmem:[#allocation9 + $0x30] sm:$0xf]
        %v4662 = vld [vmem:[#allocation9 + $0x34] sm:$0xf]
        %v4663 = vld [vmem:[#allocation9 + $0x38] sm:$0xf]
        %v4664 = vld [vmem:[#allocation9 + $0x3c] sm:$0xf]
        %v4665 = vld [vmem:[#allocation9 + $0x40] sm:$0xf]
        %v4666 = vld [vmem:[#allocation9 + $0x44] sm:$0xf]
        %v4667 = vld [vmem:[#allocation9 + $0x48] sm:$0xf]
        %v4668 = vld [vmem:[#allocation9 + $0x4c] sm:$0xf]
        %v4669 = vld [vmem:[#allocation9 + $0x50] sm:$0xf]
        %v4670 = vld [vmem:[#allocation9 + $0x54] sm:$0xf]
        %v4671 = vld [vmem:[#allocation9 + $0x58] sm:$0xf]
        %v4672 = vld [vmem:[#allocation9 + $0x5c] sm:$0xf]
        %v4673 = vld [vmem:[#allocation9 + $0x60] sm:$0xf]
        %v4674 = vld [vmem:[#allocation9 + $0x64] sm:$0xf]
        %v4675 = vld [vmem:[#allocation9 + $0x68] sm:$0xf]
        %v4676 = vld [vmem:[#allocation9 + $0x6c] sm:$0xf]
        %v4677 = vld [vmem:[#allocation9 + $0x70] sm:$0xf]
        %v4678 = vld [vmem:[#allocation9 + $0x74] sm:$0xf]
        %v4679 = vld [vmem:[#allocation9 + $0x78] sm:$0xf]
        %v4680 = vld [vmem:[#allocation9 + $0x7c] sm:$0xf]
        %v4681 = vld [vmem:[#allocation9 + $0x80] sm:$0xf]
        %v4682 = vld [vmem:[#allocation9 + $0x84] sm:$0xf]
        %v4683 = vld [vmem:[#allocation9 + $0x88] sm:$0xf]
        %v4684 = vld [vmem:[#allocation9 + $0x8c] sm:$0xf]
        %v4685 = vld [vmem:[#allocation9 + $0x90] sm:$0xf]
        %v4686 = vld [vmem:[#allocation9 + $0x94] sm:$0xf]
        %v4687 = vld [vmem:[#allocation9 + $0x98] sm:$0xf]
        %v4688 = vld [vmem:[#allocation9 + $0x9c] sm:$0xf]
        %v4689 = vld [vmem:[#allocation9 + $0xa0] sm:$0xf]
        %v4690 = vld [vmem:[#allocation9 + $0xa4] sm:$0xf]
        %v4691 = vld [vmem:[#allocation9 + $0xa8] sm:$0xf]
        %v4692 = vld [vmem:[#allocation9 + $0xac] sm:$0xf]
        %v4693 = vld [vmem:[#allocation9 + $0xb0] sm:$0xf]
        %v4694 = vld [vmem:[#allocation9 + $0xb4] sm:$0xf]
        %v4695 = vld [vmem:[#allocation9 + $0xb8] sm:$0xf]
        %v4696 = vld [vmem:[#allocation9 + $0xbc] sm:$0xf]
        %v4697 = vld [vmem:[%s3752] sm:$0xff]
        %v4698 = vld [vmem:[%s3752 + $0x8] sm:$0xf]
        %v4699 = vld [vmem:[%s3752 + $0xc] sm:$0xff]
        %v4700 = vld [vmem:[%s3752 + $0x14] sm:$0xf]
        %v4701 = vld [vmem:[%s3752 + $0x18] sm:$0xff]
        %v4702 = vld [vmem:[%s3752 + $0x20] sm:$0xf]
        %v4703 = vld [vmem:[%s3752 + $0x24] sm:$0xff]
        %v4704 = vld [vmem:[%s3752 + $0x2c] sm:$0xf]
        %v4705 = vld [vmem:[%s3752 + $0x30] sm:$0xff]
        %v4706 = vld [vmem:[%s3752 + $0x38] sm:$0xf]
        %v4707 = vld [vmem:[%s3752 + $0x3c] sm:$0xff]
        %v4708 = vld [vmem:[%s3752 + $0x44] sm:$0xf]
        %v4709 = vld [vmem:[%s3752 + $0x48] sm:$0xff]
        %v4710 = vld [vmem:[%s3752 + $0x50] sm:$0xf]
        %v4711 = vld [vmem:[%s3752 + $0x54] sm:$0xff]
        %v4712 = vld [vmem:[%s3752 + $0x5c] sm:$0xf]
        %v4713 = vld [vmem:[%s3752 + $0x60] sm:$0xff]
        %v4714 = vld [vmem:[%s3752 + $0x68] sm:$0xf]
        %v4715 = vld [vmem:[%s3752 + $0x6c] sm:$0xff]
        %v4716 = vld [vmem:[%s3752 + $0x74] sm:$0xf]
        %v4717 = vld [vmem:[%s3752 + $0x78] sm:$0xff]
        %v4718 = vld [vmem:[%s3752 + $0x80] sm:$0xf]
        %v4719 = vld [vmem:[%s3752 + $0x84] sm:$0xff]
        %v4720 = vld [vmem:[%s3752 + $0x8c] sm:$0xf]
        %v4721 = vld [vmem:[%s3752 + $0x90] sm:$0xff]
        %v4722 = vld [vmem:[%s3752 + $0x98] sm:$0xf]
        %v4723 = vld [vmem:[%s3752 + $0x9c] sm:$0xff]
        %v4724 = vld [vmem:[%s3752 + $0xa4] sm:$0xf]
        %v4725 = vld [vmem:[%s3752 + $0xa8] sm:$0xff]
        %v4726 = vld [vmem:[%s3752 + $0xb0] sm:$0xf]
        %v4727 = vld [vmem:[%s3752 + $0xb4] sm:$0xff]
        %v4728 = vld [vmem:[%s3752 + $0xbc] sm:$0xf]
        %v4729 = vld [vmem:[%s3752 + $0xc0] sm:$0xff]
        %v4730 = vld [vmem:[%s3752 + $0xc8] sm:$0xf]
        %v4731 = vld [vmem:[%s3752 + $0xcc] sm:$0xff]
        %v4732 = vld [vmem:[%s3752 + $0xd4] sm:$0xf]
        %v4733 = vld [vmem:[%s3752 + $0xd8] sm:$0xff]
        %v4734 = vld [vmem:[%s3752 + $0xe0] sm:$0xf]
        %v4735 = vld [vmem:[%s3752 + $0xe4] sm:$0xff]
        %v4736 = vld [vmem:[%s3752 + $0xec] sm:$0xf]
        %v4737 = vld [vmem:[%s3752 + $0xf0] sm:$0xff]
        %v4738 = vld [vmem:[%s3752 + $0xf8] sm:$0xf]
        %v4739 = vld [vmem:[%s3752 + $0xfc] sm:$0xff]
        %v4740 = vld [vmem:[%s3752 + $0x104] sm:$0xf]
        %v4741 = vld [vmem:[%s3752 + $0x108] sm:$0xff]
        %v4742 = vld [vmem:[%s3752 + $0x110] sm:$0xf]
        %v4743 = vld [vmem:[%s3752 + $0x114] sm:$0xff]
        %v4744 = vld [vmem:[%s3752 + $0x11c] sm:$0xf]
        %v4745 = vld [vmem:[%s3752 + $0x120] sm:$0xff]
        %v4746 = vld [vmem:[%s3752 + $0x128] sm:$0xf]
        %v4747 = vld [vmem:[%s3752 + $0x12c] sm:$0xff]
        %v4748 = vld [vmem:[%s3752 + $0x134] sm:$0xf]
        %v4749 = vld [vmem:[%s3752 + $0x138] sm:$0xff]
        %v4750 = vld [vmem:[%s3752 + $0x140] sm:$0xf]
        %v4751 = vld [vmem:[%s3752 + $0x144] sm:$0xff]
        %v4752 = vld [vmem:[%s3752 + $0x14c] sm:$0xf]
        %v4753 = vld [vmem:[%s3752 + $0x150] sm:$0xff]
        %v4754 = vld [vmem:[%s3752 + $0x158] sm:$0xf]
        %v4755 = vld [vmem:[%s3752 + $0x15c] sm:$0xff]
        %v4756 = vld [vmem:[%s3752 + $0x164] sm:$0xf]
        %v4757 = vld [vmem:[%s3752 + $0x168] sm:$0xff]
        %v4758 = vld [vmem:[%s3752 + $0x170] sm:$0xf]
        %v4759 = vld [vmem:[%s3752 + $0x174] sm:$0xff]
        %v4760 = vld [vmem:[%s3752 + $0x17c] sm:$0xf]
        %s4761 = scalar_lea.vmem [#allocation9], 192
        %v4762 = vld [vmem:[%s4761] sm:$0xf]
        %v4763 = vld [vmem:[%s4761 + $0x4] sm:$0xf]
        %v4764 = vld [vmem:[%s4761 + $0x8] sm:$0xf]
        %v4765 = vld [vmem:[%s4761 + $0xc] sm:$0xf]
        %v4766 = vld [vmem:[%s4761 + $0x10] sm:$0xf]
        %v4767 = vld [vmem:[%s4761 + $0x14] sm:$0xf]
        %v4768 = vld [vmem:[%s4761 + $0x18] sm:$0xf]
        %v4769 = vld [vmem:[%s4761 + $0x1c] sm:$0xf]
        %v4770 = vld [vmem:[%s4761 + $0x20] sm:$0xf]
        %v4771 = vld [vmem:[%s4761 + $0x24] sm:$0xf]
        %v4772 = vld [vmem:[%s4761 + $0x28] sm:$0xf]
        %v4773 = vld [vmem:[%s4761 + $0x2c] sm:$0xf]
        %v4774 = vld [vmem:[%s4761 + $0x30] sm:$0xf]
        %v4775 = vld [vmem:[%s4761 + $0x34] sm:$0xf]
        %v4776 = vld [vmem:[%s4761 + $0x38] sm:$0xf]
        %v4777 = vld [vmem:[%s4761 + $0x3c] sm:$0xf]
        %v4778 = vld [vmem:[%s4761 + $0x40] sm:$0xf]
        %v4779 = vld [vmem:[%s4761 + $0x44] sm:$0xf]
        %v4780 = vld [vmem:[%s4761 + $0x48] sm:$0xf]
        %v4781 = vld [vmem:[%s4761 + $0x4c] sm:$0xf]
        %v4782 = vld [vmem:[%s4761 + $0x50] sm:$0xf]
        %v4783 = vld [vmem:[%s4761 + $0x54] sm:$0xf]
        %v4784 = vld [vmem:[%s4761 + $0x58] sm:$0xf]
        %v4785 = vld [vmem:[%s4761 + $0x5c] sm:$0xf]
        %v4786 = vld [vmem:[%s4761 + $0x60] sm:$0xf]
        %v4787 = vld [vmem:[%s4761 + $0x64] sm:$0xf]
        %v4788 = vld [vmem:[%s4761 + $0x68] sm:$0xf]
        %v4789 = vld [vmem:[%s4761 + $0x6c] sm:$0xf]
        %v4790 = vld [vmem:[%s4761 + $0x70] sm:$0xf]
        %v4791 = vld [vmem:[%s4761 + $0x74] sm:$0xf]
        %v4792 = vld [vmem:[%s4761 + $0x78] sm:$0xf]
        %v4793 = vld [vmem:[%s4761 + $0x7c] sm:$0xf]
        %v4794 = vld [vmem:[%s4761 + $0x80] sm:$0xf]
        %v4795 = vld [vmem:[%s4761 + $0x84] sm:$0xf]
        %v4796 = vld [vmem:[%s4761 + $0x88] sm:$0xf]
        %v4797 = vld [vmem:[%s4761 + $0x8c] sm:$0xf]
        %v4798 = vld [vmem:[%s4761 + $0x90] sm:$0xf]
        %v4799 = vld [vmem:[%s4761 + $0x94] sm:$0xf]
        %v4800 = vld [vmem:[%s4761 + $0x98] sm:$0xf]
        %v4801 = vld [vmem:[%s4761 + $0x9c] sm:$0xf]
        %v4802 = vld [vmem:[%s4761 + $0xa0] sm:$0xf]
        %v4803 = vld [vmem:[%s4761 + $0xa4] sm:$0xf]
        %v4804 = vld [vmem:[%s4761 + $0xa8] sm:$0xf]
        %v4805 = vld [vmem:[%s4761 + $0xac] sm:$0xf]
        %v4806 = vld [vmem:[%s4761 + $0xb0] sm:$0xf]
        %v4807 = vld [vmem:[%s4761 + $0xb4] sm:$0xf]
        %v4808 = vld [vmem:[%s4761 + $0xb8] sm:$0xf]
        %v4809 = vld [vmem:[%s4761 + $0xbc] sm:$0xf]
        %v4874 = vunpack.c.l.b16 %v4697
        %v4875 = vunpack.c.h.b16 %v4697
        %v4876 = vunpack.c.l.b16 %v4698
        %v4877 = vunpack.c.l.b16 %v4699
        %v4878 = vunpack.c.h.b16 %v4699
        %v4879 = vunpack.c.l.b16 %v4700
        %v4880 = vunpack.c.l.b16 %v4701
        %v4881 = vunpack.c.h.b16 %v4701
        %v4882 = vunpack.c.l.b16 %v4702
        %v4883 = vunpack.c.l.b16 %v4703
        %v4884 = vunpack.c.h.b16 %v4703
        %v4885 = vunpack.c.l.b16 %v4704
        %v4886 = vunpack.c.l.b16 %v4705
        %v4887 = vunpack.c.h.b16 %v4705
        %v4888 = vunpack.c.l.b16 %v4706
        %v4889 = vunpack.c.l.b16 %v4707
        %v4890 = vunpack.c.h.b16 %v4707
        %v4891 = vunpack.c.l.b16 %v4708
        %v4892 = vunpack.c.l.b16 %v4709
        %v4893 = vunpack.c.h.b16 %v4709
        %v4894 = vunpack.c.l.b16 %v4710
        %v4895 = vunpack.c.l.b16 %v4711
        %v4896 = vunpack.c.h.b16 %v4711
        %v4897 = vunpack.c.l.b16 %v4712
        %v4898 = vunpack.c.l.b16 %v4713
        %v4899 = vunpack.c.h.b16 %v4713
        %v4900 = vunpack.c.l.b16 %v4714
        %v4901 = vunpack.c.l.b16 %v4715
        %v4902 = vunpack.c.h.b16 %v4715
        %v4903 = vunpack.c.l.b16 %v4716
        %v4904 = vunpack.c.l.b16 %v4717
        %v4905 = vunpack.c.h.b16 %v4717
        %v4906 = vunpack.c.l.b16 %v4718
        %v4907 = vunpack.c.l.b16 %v4719
        %v4908 = vunpack.c.h.b16 %v4719
        %v4909 = vunpack.c.l.b16 %v4720
        %v4910 = vunpack.c.l.b16 %v4721
        %v4911 = vunpack.c.h.b16 %v4721
        %v4912 = vunpack.c.l.b16 %v4722
        %v4913 = vunpack.c.l.b16 %v4723
        %v4914 = vunpack.c.h.b16 %v4723
        %v4915 = vunpack.c.l.b16 %v4724
        %v4916 = vunpack.c.l.b16 %v4725
        %v4917 = vunpack.c.h.b16 %v4725
        %v4918 = vunpack.c.l.b16 %v4726
        %v4919 = vunpack.c.l.b16 %v4727
        %v4920 = vunpack.c.h.b16 %v4727
        %v4921 = vunpack.c.l.b16 %v4728
        %v4922 = vunpack.c.l.b16 %v4729
        %v4923 = vunpack.c.h.b16 %v4729
        %v4924 = vunpack.c.l.b16 %v4730
        %v4925 = vunpack.c.l.b16 %v4731
        %v4926 = vunpack.c.h.b16 %v4731
        %v4927 = vunpack.c.l.b16 %v4732
        %v4928 = vunpack.c.l.b16 %v4733
        %v4929 = vunpack.c.h.b16 %v4733
        %v4930 = vunpack.c.l.b16 %v4734
        %v4931 = vunpack.c.l.b16 %v4735
        %v4932 = vunpack.c.h.b16 %v4735
        %v4933 = vunpack.c.l.b16 %v4736
        %v4934 = vunpack.c.l.b16 %v4737
        %v4935 = vunpack.c.h.b16 %v4737
        %v4936 = vunpack.c.l.b16 %v4738
        %v4937 = vunpack.c.l.b16 %v4739
        %v4938 = vunpack.c.h.b16 %v4739
        %v4939 = vunpack.c.l.b16 %v4740
        %v4940 = vunpack.c.l.b16 %v4741
        %v4941 = vunpack.c.h.b16 %v4741
        %v4942 = vunpack.c.l.b16 %v4742
        %v4943 = vunpack.c.l.b16 %v4743
        %v4944 = vunpack.c.h.b16 %v4743
        %v4945 = vunpack.c.l.b16 %v4744
        %v4946 = vunpack.c.l.b16 %v4745
        %v4947 = vunpack.c.h.b16 %v4745
        %v4948 = vunpack.c.l.b16 %v4746
        %v4949 = vunpack.c.l.b16 %v4747
        %v4950 = vunpack.c.h.b16 %v4747
        %v4951 = vunpack.c.l.b16 %v4748
        %v4952 = vunpack.c.l.b16 %v4749
        %v4953 = vunpack.c.h.b16 %v4749
        %v4954 = vunpack.c.l.b16 %v4750
        %v4955 = vunpack.c.l.b16 %v4751
        %v4956 = vunpack.c.h.b16 %v4751
        %v4957 = vunpack.c.l.b16 %v4752
        %v4958 = vunpack.c.l.b16 %v4753
        %v4959 = vunpack.c.h.b16 %v4753
        %v4960 = vunpack.c.l.b16 %v4754
        %v4961 = vunpack.c.l.b16 %v4755
        %v4962 = vunpack.c.h.b16 %v4755
        %v4963 = vunpack.c.l.b16 %v4756
        %v4964 = vunpack.c.l.b16 %v4757
        %v4965 = vunpack.c.h.b16 %v4757
        %v4966 = vunpack.c.l.b16 %v4758
        %v4967 = vunpack.c.l.b16 %v4759
        %v4968 = vunpack.c.h.b16 %v4759
        %v4969 = vunpack.c.l.b16 %v4760
        %v4970 = vpack.c.b16 %v4877, %v4874
        %v4971 = vpack.c.b16 %v4878, %v4875
        %v4972 = vpack.c.b16 %v4879, %v4876
        %v4973 = vpack.c.b16 %v4883, %v4880
        %v4974 = vpack.c.b16 %v4884, %v4881
        %v4975 = vpack.c.b16 %v4885, %v4882
        %v4976 = vpack.c.b16 %v4889, %v4886
        %v4977 = vpack.c.b16 %v4890, %v4887
        %v4978 = vpack.c.b16 %v4891, %v4888
        %v4979 = vpack.c.b16 %v4895, %v4892
        %v4980 = vpack.c.b16 %v4896, %v4893
        %v4981 = vpack.c.b16 %v4897, %v4894
        %v4982 = vpack.c.b16 %v4901, %v4898
        %v4983 = vpack.c.b16 %v4902, %v4899
        %v4984 = vpack.c.b16 %v4903, %v4900
        %v4985 = vpack.c.b16 %v4907, %v4904
        %v4986 = vpack.c.b16 %v4908, %v4905
        %v4987 = vpack.c.b16 %v4909, %v4906
        %v4988 = vpack.c.b16 %v4913, %v4910
        %v4989 = vpack.c.b16 %v4914, %v4911
        %v4990 = vpack.c.b16 %v4915, %v4912
        %v4991 = vpack.c.b16 %v4919, %v4916
        %v4992 = vpack.c.b16 %v4920, %v4917
        %v4993 = vpack.c.b16 %v4921, %v4918
        %v4994 = vpack.c.b16 %v4925, %v4922
        %v4995 = vpack.c.b16 %v4926, %v4923
        %v4996 = vpack.c.b16 %v4927, %v4924
        %v4997 = vpack.c.b16 %v4931, %v4928
        %v4998 = vpack.c.b16 %v4932, %v4929
        %v4999 = vpack.c.b16 %v4933, %v4930
        %v5000 = vpack.c.b16 %v4937, %v4934
        %v5001 = vpack.c.b16 %v4938, %v4935
        %v5002 = vpack.c.b16 %v4939, %v4936
        %v5003 = vpack.c.b16 %v4943, %v4940
        %v5004 = vpack.c.b16 %v4944, %v4941
        %v5005 = vpack.c.b16 %v4945, %v4942
        %v5006 = vpack.c.b16 %v4949, %v4946
        %v5007 = vpack.c.b16 %v4950, %v4947
        %v5008 = vpack.c.b16 %v4951, %v4948
        %v5009 = vpack.c.b16 %v4955, %v4952
        %v5010 = vpack.c.b16 %v4956, %v4953
        %v5011 = vpack.c.b16 %v4957, %v4954
        %v5012 = vpack.c.b16 %v4961, %v4958
        %v5013 = vpack.c.b16 %v4962, %v4959
        %v5014 = vpack.c.b16 %v4963, %v4960
        %v5015 = vpack.c.b16 %v4967, %v4964
        %v5016 = vpack.c.b16 %v4968, %v4965
        %v5017 = vpack.c.b16 %v4969, %v4966
        %v5114 = vunpack.c.l.b16 %v4762
        %v5115 = vunpack.c.l.b16 %v4763
        %v5116 = vunpack.c.l.b16 %v4764
        %v5117 = vunpack.c.l.b16 %v4765
        %v5118 = vunpack.c.l.b16 %v4766
        %v5119 = vunpack.c.l.b16 %v4767
        %v5120 = vunpack.c.l.b16 %v4768
        %v5121 = vunpack.c.l.b16 %v4769
        %v5122 = vunpack.c.l.b16 %v4770
        %v5123 = vunpack.c.l.b16 %v4771
        %v5124 = vunpack.c.l.b16 %v4772
        %v5125 = vunpack.c.l.b16 %v4773
        %v5126 = vunpack.c.l.b16 %v4774
        %v5127 = vunpack.c.l.b16 %v4775
        %v5128 = vunpack.c.l.b16 %v4776
        %v5129 = vunpack.c.l.b16 %v4777
        %v5130 = vunpack.c.l.b16 %v4778
        %v5131 = vunpack.c.l.b16 %v4779
        %v5132 = vunpack.c.l.b16 %v4780
        %v5133 = vunpack.c.l.b16 %v4781
        %v5134 = vunpack.c.l.b16 %v4782
        %v5135 = vunpack.c.l.b16 %v4783
        %v5136 = vunpack.c.l.b16 %v4784
        %v5137 = vunpack.c.l.b16 %v4785
        %v5138 = vunpack.c.l.b16 %v4786
        %v5139 = vunpack.c.l.b16 %v4787
        %v5140 = vunpack.c.l.b16 %v4788
        %v5141 = vunpack.c.l.b16 %v4789
        %v5142 = vunpack.c.l.b16 %v4790
        %v5143 = vunpack.c.l.b16 %v4791
        %v5144 = vunpack.c.l.b16 %v4792
        %v5145 = vunpack.c.l.b16 %v4793
        %v5146 = vunpack.c.l.b16 %v4794
        %v5147 = vunpack.c.l.b16 %v4795
        %v5148 = vunpack.c.l.b16 %v4796
        %v5149 = vunpack.c.l.b16 %v4797
        %v5150 = vunpack.c.l.b16 %v4798
        %v5151 = vunpack.c.l.b16 %v4799
        %v5152 = vunpack.c.l.b16 %v4800
        %v5153 = vunpack.c.l.b16 %v4801
        %v5154 = vunpack.c.l.b16 %v4802
        %v5155 = vunpack.c.l.b16 %v4803
        %v5156 = vunpack.c.l.b16 %v4804
        %v5157 = vunpack.c.l.b16 %v4805
        %v5158 = vunpack.c.l.b16 %v4806
        %v5159 = vunpack.c.l.b16 %v4807
        %v5160 = vunpack.c.l.b16 %v4808
        %v5161 = vunpack.c.l.b16 %v4809
        %v5162 = vpack.c.b16 %v5115, %v5114
        %v5163 = vpack.c.b16 %v5117, %v5116
        %v5164 = vpack.c.b16 %v5119, %v5118
        %v5165 = vpack.c.b16 %v5121, %v5120
        %v5166 = vpack.c.b16 %v5123, %v5122
        %v5167 = vpack.c.b16 %v5125, %v5124
        %v5168 = vpack.c.b16 %v5127, %v5126
        %v5169 = vpack.c.b16 %v5129, %v5128
        %v5170 = vpack.c.b16 %v5131, %v5130
        %v5171 = vpack.c.b16 %v5133, %v5132
        %v5172 = vpack.c.b16 %v5135, %v5134
        %v5173 = vpack.c.b16 %v5137, %v5136
        %v5174 = vpack.c.b16 %v5139, %v5138
        %v5175 = vpack.c.b16 %v5141, %v5140
        %v5176 = vpack.c.b16 %v5143, %v5142
        %v5177 = vpack.c.b16 %v5145, %v5144
        %v5178 = vpack.c.b16 %v5147, %v5146
        %v5179 = vpack.c.b16 %v5149, %v5148
        %v5180 = vpack.c.b16 %v5151, %v5150
        %v5181 = vpack.c.b16 %v5153, %v5152
        %v5182 = vpack.c.b16 %v5155, %v5154
        %v5183 = vpack.c.b16 %v5157, %v5156
        %v5184 = vpack.c.b16 %v5159, %v5158
        %v5185 = vpack.c.b16 %v5161, %v5160
        %5210 = vmatprep.subr.bf16.mxu0 0
        %5211 = vmatpush1.bf16.msra.mxu0 %v5169
        %5212 = vmatprep.subr.bf16.mxu0 0
        %5213 = vmatpush1.bf16.msra.mxu0 %v5168
        %5214 = vmatprep.subr.bf16.mxu0 0
        %5215 = vmatpush1.bf16.msra.mxu0 %v5167
        %5216 = vmatprep.subr.bf16.mxu0 0
        %5217 = vmatpush1.bf16.msra.mxu0 %v5166
        %5218 = vmatprep.subr.bf16.mxu0 0
        %5219 = vmatpush1.bf16.msra.mxu0 %v5165
        %5220 = vmatprep.subr.bf16.mxu0 0
        %5221 = vmatpush1.bf16.msra.mxu0 %v5164
        %5222 = vmatprep.subr.bf16.mxu0 0
        %5223 = vmatpush1.bf16.msra.mxu0 %v5163
        %5224 = vmatprep.subr.bf16.mxu0 0
        %5225 = vmatpush1.bf16.msra.mxu0 %v5162
        %5226 = vmatprep.subr.bf16.mxu0 0
        %5227 = vmatpush2.bf16.msra.mxu0 %v5177
        %5228 = vmatprep.subr.bf16.mxu0 0
        %5229 = vmatpush2.bf16.msra.mxu0 %v5176
        %5230 = vmatprep.subr.bf16.mxu0 0
        %5231 = vmatpush2.bf16.msra.mxu0 %v5175
        %5232 = vmatprep.subr.bf16.mxu0 0
        %5233 = vmatpush2.bf16.msra.mxu0 %v5174
        %5234 = vmatprep.subr.bf16.mxu0 0
        %5235 = vmatpush2.bf16.msra.mxu0 %v5173
        %5236 = vmatprep.subr.bf16.mxu0 0
        %5237 = vmatpush2.bf16.msra.mxu0 %v5172
        %5238 = vmatprep.subr.bf16.mxu0 0
        %5239 = vmatpush2.bf16.msra.mxu0 %v5171
        %5240 = vmatprep.subr.bf16.mxu0 0
        %5241 = vmatpush2.bf16.msra.mxu0 %v5170
        %5242 = vmatprep.mubr.bf16.mxu0 %v4971
        %5243 = vmatmul.mubr.bf16.gmra.mxu0 %v4970
        %v5244 = vpop.f32.mrf.mxu0
        %v5245 = vadd.f32 0.0, %v5244
        %v5246 = vpop.f32.mrf.mxu0
        %v5247 = vpop.f32.mrf.mxu0
        %v5248 = vadd.f32 0.0, %v5247
        %v5249 = vpop.f32.mrf.mxu0
        %5250 = vmatprep.mubr.bf16.mxu0 %v4974
        %5251 = vmatmul.mubr.bf16.gmra.mxu0 %v4973
        %v5252 = vpop.f32.mrf.mxu0
        %v5253 = vadd.f32 0.0, %v5252
        %v5254 = vpop.f32.mrf.mxu0
        %v5255 = vpop.f32.mrf.mxu0
        %v5256 = vadd.f32 0.0, %v5255
        %v5257 = vpop.f32.mrf.mxu0
        %5258 = vmatprep.mubr.bf16.mxu0 %v4977
        %5259 = vmatmul.mubr.bf16.gmra.mxu0 %v4976
        %v5260 = vpop.f32.mrf.mxu0
        %v5261 = vadd.f32 0.0, %v5260
        %v5262 = vpop.f32.mrf.mxu0
        %v5263 = vpop.f32.mrf.mxu0
        %v5264 = vadd.f32 0.0, %v5263
        %v5265 = vpop.f32.mrf.mxu0
        %5266 = vmatprep.mubr.bf16.mxu0 %v4980
        %5267 = vmatmul.mubr.bf16.gmra.mxu0 %v4979
        %v5268 = vpop.f32.mrf.mxu0
        %v5269 = vadd.f32 0.0, %v5268
        %v5270 = vpop.f32.mrf.mxu0
        %v5271 = vpop.f32.mrf.mxu0
        %v5272 = vadd.f32 0.0, %v5271
        %v5273 = vpop.f32.mrf.mxu0
        %5274 = vmatprep.mubr.bf16.mxu0 %v4983
        %5275 = vmatmul.mubr.bf16.gmra.mxu0 %v4982
        %v5276 = vpop.f32.mrf.mxu0
        %v5277 = vadd.f32 0.0, %v5276
        %v5278 = vpop.f32.mrf.mxu0
        %v5279 = vpop.f32.mrf.mxu0
        %v5280 = vadd.f32 0.0, %v5279
        %v5281 = vpop.f32.mrf.mxu0
        %5282 = vmatprep.mubr.bf16.mxu0 %v4986
        %5283 = vmatmul.mubr.bf16.gmra.mxu0 %v4985
        %v5284 = vpop.f32.mrf.mxu0
        %v5285 = vadd.f32 0.0, %v5284
        %v5286 = vpop.f32.mrf.mxu0
        %v5287 = vpop.f32.mrf.mxu0
        %v5288 = vadd.f32 0.0, %v5287
        %v5289 = vpop.f32.mrf.mxu0
        %5290 = vmatprep.mubr.bf16.mxu0 %v4989
        %5291 = vmatmul.mubr.bf16.gmra.mxu0 %v4988
        %v5292 = vpop.f32.mrf.mxu0
        %v5293 = vadd.f32 0.0, %v5292
        %v5294 = vpop.f32.mrf.mxu0
        %v5295 = vpop.f32.mrf.mxu0
        %v5296 = vadd.f32 0.0, %v5295
        %v5297 = vpop.f32.mrf.mxu0
        %5298 = vmatprep.mubr.bf16.mxu0 %v4992
        %5299 = vmatmul.mubr.bf16.gmra.mxu0 %v4991
        %v5300 = vpop.f32.mrf.mxu0
        %v5301 = vadd.f32 0.0, %v5300
        %v5302 = vpop.f32.mrf.mxu0
        %v5303 = vpop.f32.mrf.mxu0
        %v5304 = vadd.f32 0.0, %v5303
        %v5305 = vpop.f32.mrf.mxu0
        %5306 = vmatprep.mubr.bf16.mxu0 %v4995
        %5307 = vmatmul.mubr.bf16.gmra.mxu0 %v4994
        %v5308 = vpop.f32.mrf.mxu0
        %v5309 = vadd.f32 0.0, %v5308
        %v5310 = vpop.f32.mrf.mxu0
        %v5311 = vpop.f32.mrf.mxu0
        %v5312 = vadd.f32 0.0, %v5311
        %v5313 = vpop.f32.mrf.mxu0
        %5314 = vmatprep.mubr.bf16.mxu0 %v4998
        %5315 = vmatmul.mubr.bf16.gmra.mxu0 %v4997
        %v5316 = vpop.f32.mrf.mxu0
        %v5317 = vadd.f32 0.0, %v5316
        %v5318 = vpop.f32.mrf.mxu0
        %v5319 = vpop.f32.mrf.mxu0
        %v5320 = vadd.f32 0.0, %v5319
        %v5321 = vpop.f32.mrf.mxu0
        %5322 = vmatprep.mubr.bf16.mxu0 %v5001
        %5323 = vmatmul.mubr.bf16.gmra.mxu0 %v5000
        %v5324 = vpop.f32.mrf.mxu0
        %v5325 = vadd.f32 0.0, %v5324
        %v5326 = vpop.f32.mrf.mxu0
        %v5327 = vpop.f32.mrf.mxu0
        %v5328 = vadd.f32 0.0, %v5327
        %v5329 = vpop.f32.mrf.mxu0
        %5330 = vmatprep.mubr.bf16.mxu0 %v5004
        %5331 = vmatmul.mubr.bf16.gmra.mxu0 %v5003
        %v5332 = vpop.f32.mrf.mxu0
        %v5333 = vadd.f32 0.0, %v5332
        %v5334 = vpop.f32.mrf.mxu0
        %v5335 = vpop.f32.mrf.mxu0
        %v5336 = vadd.f32 0.0, %v5335
        %v5337 = vpop.f32.mrf.mxu0
        %5338 = vmatprep.mubr.bf16.mxu0 %v5007
        %5339 = vmatmul.mubr.bf16.gmra.mxu0 %v5006
        %v5340 = vpop.f32.mrf.mxu0
        %v5341 = vadd.f32 0.0, %v5340
        %v5342 = vpop.f32.mrf.mxu0
        %v5343 = vpop.f32.mrf.mxu0
        %v5344 = vadd.f32 0.0, %v5343
        %v5345 = vpop.f32.mrf.mxu0
        %5346 = vmatprep.mubr.bf16.mxu0 %v5010
        %5347 = vmatmul.mubr.bf16.gmra.mxu0 %v5009
        %v5348 = vpop.f32.mrf.mxu0
        %v5349 = vadd.f32 0.0, %v5348
        %v5350 = vpop.f32.mrf.mxu0
        %v5351 = vpop.f32.mrf.mxu0
        %v5352 = vadd.f32 0.0, %v5351
        %v5353 = vpop.f32.mrf.mxu0
        %5354 = vmatprep.mubr.bf16.mxu0 %v5013
        %5355 = vmatmul.mubr.bf16.gmra.mxu0 %v5012
        %v5356 = vpop.f32.mrf.mxu0
        %v5357 = vadd.f32 0.0, %v5356
        %v5358 = vpop.f32.mrf.mxu0
        %v5359 = vpop.f32.mrf.mxu0
        %v5360 = vadd.f32 0.0, %v5359
        %v5361 = vpop.f32.mrf.mxu0
        %5362 = vmatprep.mubr.bf16.mxu0 %v5016
        %5363 = vmatmul.mubr.bf16.gmra.mxu0 %v5015
        %v5364 = vpop.f32.mrf.mxu0
        %v5365 = vadd.f32 0.0, %v5364
        %v5366 = vpop.f32.mrf.mxu0
        %v5367 = vpop.f32.mrf.mxu0
        %v5368 = vadd.f32 0.0, %v5367
        %v5369 = vpop.f32.mrf.mxu0
        %5370 = vdwg.mxu0
        %5371 = vmatprep.subr.bf16.mxu0 0
        %5372 = vmatpush1.bf16.msra.mxu0 %v5185
        %5373 = vmatprep.subr.bf16.mxu0 0
        %5374 = vmatpush1.bf16.msra.mxu0 %v5184
        %5375 = vmatprep.subr.bf16.mxu0 0
        %5376 = vmatpush1.bf16.msra.mxu0 %v5183
        %5377 = vmatprep.subr.bf16.mxu0 0
        %5378 = vmatpush1.bf16.msra.mxu0 %v5182
        %5379 = vmatprep.subr.bf16.mxu0 0
        %5380 = vmatpush1.bf16.msra.mxu0 %v5181
        %5381 = vmatprep.subr.bf16.mxu0 0
        %5382 = vmatpush1.bf16.msra.mxu0 %v5180
        %5383 = vmatprep.subr.bf16.mxu0 0
        %5384 = vmatpush1.bf16.msra.mxu0 %v5179
        %5385 = vmatprep.subr.bf16.mxu0 0
        %5386 = vmatpush1.bf16.msra.mxu0 %v5178
        %5387 = vmatprep.subr.bf16.mxu0 0
        %5388 = vmatpush2.bf16.msra.mxu0 0
        %5389 = vmatprep.subr.bf16.mxu0 0
        %5390 = vmatpush2.bf16.msra.mxu0 0
        %5391 = vmatprep.subr.bf16.mxu0 0
        %5392 = vmatpush2.bf16.msra.mxu0 0
        %5393 = vmatprep.subr.bf16.mxu0 0
        %5394 = vmatpush2.bf16.msra.mxu0 0
        %5395 = vmatprep.subr.bf16.mxu0 0
        %5396 = vmatpush2.bf16.msra.mxu0 0
        %5397 = vmatprep.subr.bf16.mxu0 0
        %5398 = vmatpush2.bf16.msra.mxu0 0
        %5399 = vmatprep.subr.bf16.mxu0 0
        %5400 = vmatpush2.bf16.msra.mxu0 0
        %5401 = vmatprep.subr.bf16.mxu0 0
        %5402 = vmatpush2.bf16.msra.mxu0 0
        %5403 = vmatprep.mubr.bf16.mxu0 0
        %5404 = vmatmul.mubr.bf16.gmra.mxu0 %v4972
        %v5405 = vpop.f32.mrf.mxu0
        %v5406 = vadd.f32 %v5245, %v5405
        %v5407 = vpop.f32.mrf.mxu0
        %v5408 = vpop.f32.mrf.mxu0
        %v5409 = vadd.f32 %v5248, %v5408
        %v5410 = vpop.f32.mrf.mxu0
        %5411 = vmatprep.mubr.bf16.mxu0 0
        %5412 = vmatmul.mubr.bf16.gmra.mxu0 %v4975
        %v5413 = vpop.f32.mrf.mxu0
        %v5414 = vadd.f32 %v5253, %v5413
        %v5415 = vpop.f32.mrf.mxu0
        %v5416 = vpop.f32.mrf.mxu0
        %v5417 = vadd.f32 %v5256, %v5416
        %v5418 = vpop.f32.mrf.mxu0
        %5419 = vmatprep.mubr.bf16.mxu0 0
        %5420 = vmatmul.mubr.bf16.gmra.mxu0 %v4978
        %v5421 = vpop.f32.mrf.mxu0
        %v5422 = vadd.f32 %v5261, %v5421
        %v5423 = vpop.f32.mrf.mxu0
        %v5424 = vpop.f32.mrf.mxu0
        %v5425 = vadd.f32 %v5264, %v5424
        %v5426 = vpop.f32.mrf.mxu0
        %5427 = vmatprep.mubr.bf16.mxu0 0
        %5428 = vmatmul.mubr.bf16.gmra.mxu0 %v4981
        %v5429 = vpop.f32.mrf.mxu0
        %v5430 = vadd.f32 %v5269, %v5429
        %v5431 = vpop.f32.mrf.mxu0
        %v5432 = vpop.f32.mrf.mxu0
        %v5433 = vadd.f32 %v5272, %v5432
        %v5434 = vpop.f32.mrf.mxu0
        %5435 = vmatprep.mubr.bf16.mxu0 0
        %5436 = vmatmul.mubr.bf16.gmra.mxu0 %v4984
        %v5437 = vpop.f32.mrf.mxu0
        %v5438 = vadd.f32 %v5277, %v5437
        %v5439 = vpop.f32.mrf.mxu0
        %v5440 = vpop.f32.mrf.mxu0
        %v5441 = vadd.f32 %v5280, %v5440
        %v5442 = vpop.f32.mrf.mxu0
        %5443 = vmatprep.mubr.bf16.mxu0 0
        %5444 = vmatmul.mubr.bf16.gmra.mxu0 %v4987
        %v5445 = vpop.f32.mrf.mxu0
        %v5446 = vadd.f32 %v5285, %v5445
        %v5447 = vpop.f32.mrf.mxu0
        %v5448 = vpop.f32.mrf.mxu0
        %v5449 = vadd.f32 %v5288, %v5448
        %v5450 = vpop.f32.mrf.mxu0
        %5451 = vmatprep.mubr.bf16.mxu0 0
        %5452 = vmatmul.mubr.bf16.gmra.mxu0 %v4990
        %v5453 = vpop.f32.mrf.mxu0
        %v5454 = vadd.f32 %v5293, %v5453
        %v5455 = vpop.f32.mrf.mxu0
        %v5456 = vpop.f32.mrf.mxu0
        %v5457 = vadd.f32 %v5296, %v5456
        %v5458 = vpop.f32.mrf.mxu0
        %5459 = vmatprep.mubr.bf16.mxu0 0
        %5460 = vmatmul.mubr.bf16.gmra.mxu0 %v4993
        %v5461 = vpop.f32.mrf.mxu0
        %v5462 = vadd.f32 %v5301, %v5461
        %v5463 = vpop.f32.mrf.mxu0
        %v5464 = vpop.f32.mrf.mxu0
        %v5465 = vadd.f32 %v5304, %v5464
        %v5466 = vpop.f32.mrf.mxu0
        %5467 = vmatprep.mubr.bf16.mxu0 0
        %5468 = vmatmul.mubr.bf16.gmra.mxu0 %v4996
        %v5469 = vpop.f32.mrf.mxu0
        %v5470 = vadd.f32 %v5309, %v5469
        %v5471 = vpop.f32.mrf.mxu0
        %v5472 = vpop.f32.mrf.mxu0
        %v5473 = vadd.f32 %v5312, %v5472
        %v5474 = vpop.f32.mrf.mxu0
        %5475 = vmatprep.mubr.bf16.mxu0 0
        %5476 = vmatmul.mubr.bf16.gmra.mxu0 %v4999
        %v5477 = vpop.f32.mrf.mxu0
        %v5478 = vadd.f32 %v5317, %v5477
        %v5479 = vpop.f32.mrf.mxu0
        %v5480 = vpop.f32.mrf.mxu0
        %v5481 = vadd.f32 %v5320, %v5480
        %v5482 = vpop.f32.mrf.mxu0
        %5483 = vmatprep.mubr.bf16.mxu0 0
        %5484 = vmatmul.mubr.bf16.gmra.mxu0 %v5002
        %v5485 = vpop.f32.mrf.mxu0
        %v5486 = vadd.f32 %v5325, %v5485
        %v5487 = vpop.f32.mrf.mxu0
        %v5488 = vpop.f32.mrf.mxu0
        %v5489 = vadd.f32 %v5328, %v5488
        %v5490 = vpop.f32.mrf.mxu0
        %5491 = vmatprep.mubr.bf16.mxu0 0
        %5492 = vmatmul.mubr.bf16.gmra.mxu0 %v5005
        %v5493 = vpop.f32.mrf.mxu0
        %v5494 = vadd.f32 %v5333, %v5493
        %v5495 = vpop.f32.mrf.mxu0
        %v5496 = vpop.f32.mrf.mxu0
        %v5497 = vadd.f32 %v5336, %v5496
        %v5498 = vpop.f32.mrf.mxu0
        %5499 = vmatprep.mubr.bf16.mxu0 0
        %5500 = vmatmul.mubr.bf16.gmra.mxu0 %v5008
        %v5501 = vpop.f32.mrf.mxu0
        %v5502 = vadd.f32 %v5341, %v5501
        %v5503 = vpop.f32.mrf.mxu0
        %v5504 = vpop.f32.mrf.mxu0
        %v5505 = vadd.f32 %v5344, %v5504
        %v5506 = vpop.f32.mrf.mxu0
        %5507 = vmatprep.mubr.bf16.mxu0 0
        %5508 = vmatmul.mubr.bf16.gmra.mxu0 %v5011
        %v5509 = vpop.f32.mrf.mxu0
        %v5510 = vadd.f32 %v5349, %v5509
        %v5511 = vpop.f32.mrf.mxu0
        %v5512 = vpop.f32.mrf.mxu0
        %v5513 = vadd.f32 %v5352, %v5512
        %v5514 = vpop.f32.mrf.mxu0
        %5515 = vmatprep.mubr.bf16.mxu0 0
        %5516 = vmatmul.mubr.bf16.gmra.mxu0 %v5014
        %v5517 = vpop.f32.mrf.mxu0
        %v5518 = vadd.f32 %v5357, %v5517
        %v5519 = vpop.f32.mrf.mxu0
        %v5520 = vpop.f32.mrf.mxu0
        %v5521 = vadd.f32 %v5360, %v5520
        %v5522 = vpop.f32.mrf.mxu0
        %5523 = vmatprep.mubr.bf16.mxu0 0
        %5524 = vmatmul.mubr.bf16.gmra.mxu0 %v5017
        %v5525 = vpop.f32.mrf.mxu0
        %v5526 = vadd.f32 %v5365, %v5525
        %v5527 = vpop.f32.mrf.mxu0
        %v5528 = vpop.f32.mrf.mxu0
        %v5529 = vadd.f32 %v5368, %v5528
        %v5530 = vpop.f32.mrf.mxu0
        %5531 = vdwg.mxu0
        %v5596 = vunpack.c.l.b16 %v4585
        %v5597 = vunpack.c.h.b16 %v4585
        %v5598 = vunpack.c.l.b16 %v4586
        %v5599 = vunpack.c.l.b16 %v4587
        %v5600 = vunpack.c.h.b16 %v4587
        %v5601 = vunpack.c.l.b16 %v4588
        %v5602 = vunpack.c.l.b16 %v4589
        %v5603 = vunpack.c.h.b16 %v4589
        %v5604 = vunpack.c.l.b16 %v4590
        %v5605 = vunpack.c.l.b16 %v4591
        %v5606 = vunpack.c.h.b16 %v4591
        %v5607 = vunpack.c.l.b16 %v4592
        %v5608 = vunpack.c.l.b16 %v4593
        %v5609 = vunpack.c.h.b16 %v4593
        %v5610 = vunpack.c.l.b16 %v4594
        %v5611 = vunpack.c.l.b16 %v4595
        %v5612 = vunpack.c.h.b16 %v4595
        %v5613 = vunpack.c.l.b16 %v4596
        %v5614 = vunpack.c.l.b16 %v4597
        %v5615 = vunpack.c.h.b16 %v4597
        %v5616 = vunpack.c.l.b16 %v4598
        %v5617 = vunpack.c.l.b16 %v4599
        %v5618 = vunpack.c.h.b16 %v4599
        %v5619 = vunpack.c.l.b16 %v4600
        %v5620 = vunpack.c.l.b16 %v4601
        %v5621 = vunpack.c.h.b16 %v4601
        %v5622 = vunpack.c.l.b16 %v4602
        %v5623 = vunpack.c.l.b16 %v4603
        %v5624 = vunpack.c.h.b16 %v4603
        %v5625 = vunpack.c.l.b16 %v4604
        %v5626 = vunpack.c.l.b16 %v4605
        %v5627 = vunpack.c.h.b16 %v4605
        %v5628 = vunpack.c.l.b16 %v4606
        %v5629 = vunpack.c.l.b16 %v4607
        %v5630 = vunpack.c.h.b16 %v4607
        %v5631 = vunpack.c.l.b16 %v4608
        %v5632 = vunpack.c.l.b16 %v4609
        %v5633 = vunpack.c.h.b16 %v4609
        %v5634 = vunpack.c.l.b16 %v4610
        %v5635 = vunpack.c.l.b16 %v4611
        %v5636 = vunpack.c.h.b16 %v4611
        %v5637 = vunpack.c.l.b16 %v4612
        %v5638 = vunpack.c.l.b16 %v4613
        %v5639 = vunpack.c.h.b16 %v4613
        %v5640 = vunpack.c.l.b16 %v4614
        %v5641 = vunpack.c.l.b16 %v4615
        %v5642 = vunpack.c.h.b16 %v4615
        %v5643 = vunpack.c.l.b16 %v4616
        %v5644 = vunpack.c.l.b16 %v4617
        %v5645 = vunpack.c.h.b16 %v4617
        %v5646 = vunpack.c.l.b16 %v4618
        %v5647 = vunpack.c.l.b16 %v4619
        %v5648 = vunpack.c.h.b16 %v4619
        %v5649 = vunpack.c.l.b16 %v4620
        %v5650 = vunpack.c.l.b16 %v4621
        %v5651 = vunpack.c.h.b16 %v4621
        %v5652 = vunpack.c.l.b16 %v4622
        %v5653 = vunpack.c.l.b16 %v4623
        %v5654 = vunpack.c.h.b16 %v4623
        %v5655 = vunpack.c.l.b16 %v4624
        %v5656 = vunpack.c.l.b16 %v4625
        %v5657 = vunpack.c.h.b16 %v4625
        %v5658 = vunpack.c.l.b16 %v4626
        %v5659 = vunpack.c.l.b16 %v4627
        %v5660 = vunpack.c.h.b16 %v4627
        %v5661 = vunpack.c.l.b16 %v4628
        %v5662 = vunpack.c.l.b16 %v4629
        %v5663 = vunpack.c.h.b16 %v4629
        %v5664 = vunpack.c.l.b16 %v4630
        %v5665 = vunpack.c.l.b16 %v4631
        %v5666 = vunpack.c.h.b16 %v4631
        %v5667 = vunpack.c.l.b16 %v4632
        %v5668 = vunpack.c.l.b16 %v4633
        %v5669 = vunpack.c.h.b16 %v4633
        %v5670 = vunpack.c.l.b16 %v4634
        %v5671 = vunpack.c.l.b16 %v4635
        %v5672 = vunpack.c.h.b16 %v4635
        %v5673 = vunpack.c.l.b16 %v4636
        %v5674 = vunpack.c.l.b16 %v4637
        %v5675 = vunpack.c.h.b16 %v4637
        %v5676 = vunpack.c.l.b16 %v4638
        %v5677 = vunpack.c.l.b16 %v4639
        %v5678 = vunpack.c.h.b16 %v4639
        %v5679 = vunpack.c.l.b16 %v4640
        %v5680 = vunpack.c.l.b16 %v4641
        %v5681 = vunpack.c.h.b16 %v4641
        %v5682 = vunpack.c.l.b16 %v4642
        %v5683 = vunpack.c.l.b16 %v4643
        %v5684 = vunpack.c.h.b16 %v4643
        %v5685 = vunpack.c.l.b16 %v4644
        %v5686 = vunpack.c.l.b16 %v4645
        %v5687 = vunpack.c.h.b16 %v4645
        %v5688 = vunpack.c.l.b16 %v4646
        %v5689 = vunpack.c.l.b16 %v4647
        %v5690 = vunpack.c.h.b16 %v4647
        %v5691 = vunpack.c.l.b16 %v4648
        %v5692 = vpack.c.b16 %v5599, %v5596
        %v5693 = vpack.c.b16 %v5600, %v5597
        %v5694 = vpack.c.b16 %v5601, %v5598
        %v5695 = vpack.c.b16 %v5605, %v5602
        %v5696 = vpack.c.b16 %v5606, %v5603
        %v5697 = vpack.c.b16 %v5607, %v5604
        %v5698 = vpack.c.b16 %v5611, %v5608
        %v5699 = vpack.c.b16 %v5612, %v5609
        %v5700 = vpack.c.b16 %v5613, %v5610
        %v5701 = vpack.c.b16 %v5617, %v5614
        %v5702 = vpack.c.b16 %v5618, %v5615
        %v5703 = vpack.c.b16 %v5619, %v5616
        %v5704 = vpack.c.b16 %v5623, %v5620
        %v5705 = vpack.c.b16 %v5624, %v5621
        %v5706 = vpack.c.b16 %v5625, %v5622
        %v5707 = vpack.c.b16 %v5629, %v5626
        %v5708 = vpack.c.b16 %v5630, %v5627
        %v5709 = vpack.c.b16 %v5631, %v5628
        %v5710 = vpack.c.b16 %v5635, %v5632
        %v5711 = vpack.c.b16 %v5636, %v5633
        %v5712 = vpack.c.b16 %v5637, %v5634
        %v5713 = vpack.c.b16 %v5641, %v5638
        %v5714 = vpack.c.b16 %v5642, %v5639
        %v5715 = vpack.c.b16 %v5643, %v5640
        %v5716 = vpack.c.b16 %v5647, %v5644
        %v5717 = vpack.c.b16 %v5648, %v5645
        %v5718 = vpack.c.b16 %v5649, %v5646
        %v5719 = vpack.c.b16 %v5653, %v5650
        %v5720 = vpack.c.b16 %v5654, %v5651
        %v5721 = vpack.c.b16 %v5655, %v5652
        %v5722 = vpack.c.b16 %v5659, %v5656
        %v5723 = vpack.c.b16 %v5660, %v5657
        %v5724 = vpack.c.b16 %v5661, %v5658
        %v5725 = vpack.c.b16 %v5665, %v5662
        %v5726 = vpack.c.b16 %v5666, %v5663
        %v5727 = vpack.c.b16 %v5667, %v5664
        %v5728 = vpack.c.b16 %v5671, %v5668
        %v5729 = vpack.c.b16 %v5672, %v5669
        %v5730 = vpack.c.b16 %v5673, %v5670
        %v5731 = vpack.c.b16 %v5677, %v5674
        %v5732 = vpack.c.b16 %v5678, %v5675
        %v5733 = vpack.c.b16 %v5679, %v5676
        %v5734 = vpack.c.b16 %v5683, %v5680
        %v5735 = vpack.c.b16 %v5684, %v5681
        %v5736 = vpack.c.b16 %v5685, %v5682
        %v5737 = vpack.c.b16 %v5689, %v5686
        %v5738 = vpack.c.b16 %v5690, %v5687
        %v5739 = vpack.c.b16 %v5691, %v5688
        %v5836 = vunpack.c.l.b16 %v4649
        %v5837 = vunpack.c.l.b16 %v4650
        %v5838 = vunpack.c.l.b16 %v4651
        %v5839 = vunpack.c.l.b16 %v4652
        %v5840 = vunpack.c.l.b16 %v4653
        %v5841 = vunpack.c.l.b16 %v4654
        %v5842 = vunpack.c.l.b16 %v4655
        %v5843 = vunpack.c.l.b16 %v4656
        %v5844 = vunpack.c.l.b16 %v4657
        %v5845 = vunpack.c.l.b16 %v4658
        %v5846 = vunpack.c.l.b16 %v4659
        %v5847 = vunpack.c.l.b16 %v4660
        %v5848 = vunpack.c.l.b16 %v4661
        %v5849 = vunpack.c.l.b16 %v4662
        %v5850 = vunpack.c.l.b16 %v4663
        %v5851 = vunpack.c.l.b16 %v4664
        %v5852 = vunpack.c.l.b16 %v4665
        %v5853 = vunpack.c.l.b16 %v4666
        %v5854 = vunpack.c.l.b16 %v4667
        %v5855 = vunpack.c.l.b16 %v4668
        %v5856 = vunpack.c.l.b16 %v4669
        %v5857 = vunpack.c.l.b16 %v4670
        %v5858 = vunpack.c.l.b16 %v4671
        %v5859 = vunpack.c.l.b16 %v4672
        %v5860 = vunpack.c.l.b16 %v4673
        %v5861 = vunpack.c.l.b16 %v4674
        %v5862 = vunpack.c.l.b16 %v4675
        %v5863 = vunpack.c.l.b16 %v4676
        %v5864 = vunpack.c.l.b16 %v4677
        %v5865 = vunpack.c.l.b16 %v4678
        %v5866 = vunpack.c.l.b16 %v4679
        %v5867 = vunpack.c.l.b16 %v4680
        %v5868 = vunpack.c.l.b16 %v4681
        %v5869 = vunpack.c.l.b16 %v4682
        %v5870 = vunpack.c.l.b16 %v4683
        %v5871 = vunpack.c.l.b16 %v4684
        %v5872 = vunpack.c.l.b16 %v4685
        %v5873 = vunpack.c.l.b16 %v4686
        %v5874 = vunpack.c.l.b16 %v4687
        %v5875 = vunpack.c.l.b16 %v4688
        %v5876 = vunpack.c.l.b16 %v4689
        %v5877 = vunpack.c.l.b16 %v4690
        %v5878 = vunpack.c.l.b16 %v4691
        %v5879 = vunpack.c.l.b16 %v4692
        %v5880 = vunpack.c.l.b16 %v4693
        %v5881 = vunpack.c.l.b16 %v4694
        %v5882 = vunpack.c.l.b16 %v4695
        %v5883 = vunpack.c.l.b16 %v4696
        %v5884 = vpack.c.b16 %v5837, %v5836
        %v5885 = vpack.c.b16 %v5839, %v5838
        %v5886 = vpack.c.b16 %v5841, %v5840
        %v5887 = vpack.c.b16 %v5843, %v5842
        %v5888 = vpack.c.b16 %v5845, %v5844
        %v5889 = vpack.c.b16 %v5847, %v5846
        %v5890 = vpack.c.b16 %v5849, %v5848
        %v5891 = vpack.c.b16 %v5851, %v5850
        %v5892 = vpack.c.b16 %v5853, %v5852
        %v5893 = vpack.c.b16 %v5855, %v5854
        %v5894 = vpack.c.b16 %v5857, %v5856
        %v5895 = vpack.c.b16 %v5859, %v5858
        %v5896 = vpack.c.b16 %v5861, %v5860
        %v5897 = vpack.c.b16 %v5863, %v5862
        %v5898 = vpack.c.b16 %v5865, %v5864
        %v5899 = vpack.c.b16 %v5867, %v5866
        %v5900 = vpack.c.b16 %v5869, %v5868
        %v5901 = vpack.c.b16 %v5871, %v5870
        %v5902 = vpack.c.b16 %v5873, %v5872
        %v5903 = vpack.c.b16 %v5875, %v5874
        %v5904 = vpack.c.b16 %v5877, %v5876
        %v5905 = vpack.c.b16 %v5879, %v5878
        %v5906 = vpack.c.b16 %v5881, %v5880
        %v5907 = vpack.c.b16 %v5883, %v5882
        %5932 = vmatprep.subr.bf16.mxu0 0
        %5933 = vmatpush1.bf16.msra.mxu0 %v5891
        %5934 = vmatprep.subr.bf16.mxu0 0
        %5935 = vmatpush1.bf16.msra.mxu0 %v5890
        %5936 = vmatprep.subr.bf16.mxu0 0
        %5937 = vmatpush1.bf16.msra.mxu0 %v5889
        %5938 = vmatprep.subr.bf16.mxu0 0
        %5939 = vmatpush1.bf16.msra.mxu0 %v5888
        %5940 = vmatprep.subr.bf16.mxu0 0
        %5941 = vmatpush1.bf16.msra.mxu0 %v5887
        %5942 = vmatprep.subr.bf16.mxu0 0
        %5943 = vmatpush1.bf16.msra.mxu0 %v5886
        %5944 = vmatprep.subr.bf16.mxu0 0
        %5945 = vmatpush1.bf16.msra.mxu0 %v5885
        %5946 = vmatprep.subr.bf16.mxu0 0
        %5947 = vmatpush1.bf16.msra.mxu0 %v5884
        %5948 = vmatprep.subr.bf16.mxu0 0
        %5949 = vmatpush2.bf16.msra.mxu0 %v5899
        %5950 = vmatprep.subr.bf16.mxu0 0
        %5951 = vmatpush2.bf16.msra.mxu0 %v5898
        %5952 = vmatprep.subr.bf16.mxu0 0
        %5953 = vmatpush2.bf16.msra.mxu0 %v5897
        %5954 = vmatprep.subr.bf16.mxu0 0
        %5955 = vmatpush2.bf16.msra.mxu0 %v5896
        %5956 = vmatprep.subr.bf16.mxu0 0
        %5957 = vmatpush2.bf16.msra.mxu0 %v5895
        %5958 = vmatprep.subr.bf16.mxu0 0
        %5959 = vmatpush2.bf16.msra.mxu0 %v5894
        %5960 = vmatprep.subr.bf16.mxu0 0
        %5961 = vmatpush2.bf16.msra.mxu0 %v5893
        %5962 = vmatprep.subr.bf16.mxu0 0
        %5963 = vmatpush2.bf16.msra.mxu0 %v5892
        %5964 = vmatprep.mubr.bf16.mxu0 %v5693
        %5965 = vmatmul.mubr.bf16.gmra.mxu0 %v5692
        %v5966 = vpop.f32.mrf.mxu0
        %v5967 = vadd.f32 %v5406, %v5966
        %v5968 = vpop.f32.mrf.mxu0
        %v5969 = vpop.f32.mrf.mxu0
        %v5970 = vadd.f32 %v5409, %v5969
        %v5971 = vpop.f32.mrf.mxu0
        %5972 = vmatprep.mubr.bf16.mxu0 %v5696
        %5973 = vmatmul.mubr.bf16.gmra.mxu0 %v5695
        %v5974 = vpop.f32.mrf.mxu0
        %v5975 = vadd.f32 %v5414, %v5974
        %v5976 = vpop.f32.mrf.mxu0
        %v5977 = vpop.f32.mrf.mxu0
        %v5978 = vadd.f32 %v5417, %v5977
        %v5979 = vpop.f32.mrf.mxu0
        %5980 = vmatprep.mubr.bf16.mxu0 %v5699
        %5981 = vmatmul.mubr.bf16.gmra.mxu0 %v5698
        %v5982 = vpop.f32.mrf.mxu0
        %v5983 = vadd.f32 %v5422, %v5982
        %v5984 = vpop.f32.mrf.mxu0
        %v5985 = vpop.f32.mrf.mxu0
        %v5986 = vadd.f32 %v5425, %v5985
        %v5987 = vpop.f32.mrf.mxu0
        %5988 = vmatprep.mubr.bf16.mxu0 %v5702
        %5989 = vmatmul.mubr.bf16.gmra.mxu0 %v5701
        %v5990 = vpop.f32.mrf.mxu0
        %v5991 = vadd.f32 %v5430, %v5990
        %v5992 = vpop.f32.mrf.mxu0
        %v5993 = vpop.f32.mrf.mxu0
        %v5994 = vadd.f32 %v5433, %v5993
        %v5995 = vpop.f32.mrf.mxu0
        %5996 = vmatprep.mubr.bf16.mxu0 %v5705
        %5997 = vmatmul.mubr.bf16.gmra.mxu0 %v5704
        %v5998 = vpop.f32.mrf.mxu0
        %v5999 = vadd.f32 %v5438, %v5998
        %v6000 = vpop.f32.mrf.mxu0
        %v6001 = vpop.f32.mrf.mxu0
        %v6002 = vadd.f32 %v5441, %v6001
        %v6003 = vpop.f32.mrf.mxu0
        %6004 = vmatprep.mubr.bf16.mxu0 %v5708
        %6005 = vmatmul.mubr.bf16.gmra.mxu0 %v5707
        %v6006 = vpop.f32.mrf.mxu0
        %v6007 = vadd.f32 %v5446, %v6006
        %v6008 = vpop.f32.mrf.mxu0
        %v6009 = vpop.f32.mrf.mxu0
        %v6010 = vadd.f32 %v5449, %v6009
        %v6011 = vpop.f32.mrf.mxu0
        %6012 = vmatprep.mubr.bf16.mxu0 %v5711
        %6013 = vmatmul.mubr.bf16.gmra.mxu0 %v5710
        %v6014 = vpop.f32.mrf.mxu0
        %v6015 = vadd.f32 %v5454, %v6014
        %v6016 = vpop.f32.mrf.mxu0
        %v6017 = vpop.f32.mrf.mxu0
        %v6018 = vadd.f32 %v5457, %v6017
        %v6019 = vpop.f32.mrf.mxu0
        %6020 = vmatprep.mubr.bf16.mxu0 %v5714
        %6021 = vmatmul.mubr.bf16.gmra.mxu0 %v5713
        %v6022 = vpop.f32.mrf.mxu0
        %v6023 = vadd.f32 %v5462, %v6022
        %v6024 = vpop.f32.mrf.mxu0
        %v6025 = vpop.f32.mrf.mxu0
        %v6026 = vadd.f32 %v5465, %v6025
        %v6027 = vpop.f32.mrf.mxu0
        %6028 = vmatprep.mubr.bf16.mxu0 %v5717
        %6029 = vmatmul.mubr.bf16.gmra.mxu0 %v5716
        %v6030 = vpop.f32.mrf.mxu0
        %v6031 = vadd.f32 %v5470, %v6030
        %v6032 = vpop.f32.mrf.mxu0
        %v6033 = vpop.f32.mrf.mxu0
        %v6034 = vadd.f32 %v5473, %v6033
        %v6035 = vpop.f32.mrf.mxu0
        %6036 = vmatprep.mubr.bf16.mxu0 %v5720
        %6037 = vmatmul.mubr.bf16.gmra.mxu0 %v5719
        %v6038 = vpop.f32.mrf.mxu0
        %v6039 = vadd.f32 %v5478, %v6038
        %v6040 = vpop.f32.mrf.mxu0
        %v6041 = vpop.f32.mrf.mxu0
        %v6042 = vadd.f32 %v5481, %v6041
        %v6043 = vpop.f32.mrf.mxu0
        %6044 = vmatprep.mubr.bf16.mxu0 %v5723
        %6045 = vmatmul.mubr.bf16.gmra.mxu0 %v5722
        %v6046 = vpop.f32.mrf.mxu0
        %v6047 = vadd.f32 %v5486, %v6046
        %v6048 = vpop.f32.mrf.mxu0
        %v6049 = vpop.f32.mrf.mxu0
        %v6050 = vadd.f32 %v5489, %v6049
        %v6051 = vpop.f32.mrf.mxu0
        %6052 = vmatprep.mubr.bf16.mxu0 %v5726
        %6053 = vmatmul.mubr.bf16.gmra.mxu0 %v5725
        %v6054 = vpop.f32.mrf.mxu0
        %v6055 = vadd.f32 %v5494, %v6054
        %v6056 = vpop.f32.mrf.mxu0
        %v6057 = vpop.f32.mrf.mxu0
        %v6058 = vadd.f32 %v5497, %v6057
        %v6059 = vpop.f32.mrf.mxu0
        %6060 = vmatprep.mubr.bf16.mxu0 %v5729
        %6061 = vmatmul.mubr.bf16.gmra.mxu0 %v5728
        %v6062 = vpop.f32.mrf.mxu0
        %v6063 = vadd.f32 %v5502, %v6062
        %v6064 = vpop.f32.mrf.mxu0
        %v6065 = vpop.f32.mrf.mxu0
        %v6066 = vadd.f32 %v5505, %v6065
        %v6067 = vpop.f32.mrf.mxu0
        %6068 = vmatprep.mubr.bf16.mxu0 %v5732
        %6069 = vmatmul.mubr.bf16.gmra.mxu0 %v5731
        %v6070 = vpop.f32.mrf.mxu0
        %v6071 = vadd.f32 %v5510, %v6070
        %v6072 = vpop.f32.mrf.mxu0
        %v6073 = vpop.f32.mrf.mxu0
        %v6074 = vadd.f32 %v5513, %v6073
        %v6075 = vpop.f32.mrf.mxu0
        %6076 = vmatprep.mubr.bf16.mxu0 %v5735
        %6077 = vmatmul.mubr.bf16.gmra.mxu0 %v5734
        %v6078 = vpop.f32.mrf.mxu0
        %v6079 = vadd.f32 %v5518, %v6078
        %v6080 = vpop.f32.mrf.mxu0
        %v6081 = vpop.f32.mrf.mxu0
        %v6082 = vadd.f32 %v5521, %v6081
        %v6083 = vpop.f32.mrf.mxu0
        %6084 = vmatprep.mubr.bf16.mxu0 %v5738
        %6085 = vmatmul.mubr.bf16.gmra.mxu0 %v5737
        %v6086 = vpop.f32.mrf.mxu0
        %v6087 = vadd.f32 %v5526, %v6086
        %v6088 = vpop.f32.mrf.mxu0
        %v6089 = vpop.f32.mrf.mxu0
        %v6090 = vadd.f32 %v5529, %v6089
        %v6091 = vpop.f32.mrf.mxu0
        %6092 = vdwg.mxu0
        %6093 = vmatprep.subr.bf16.mxu0 0
        %6094 = vmatpush1.bf16.msra.mxu0 %v5907
        %6095 = vmatprep.subr.bf16.mxu0 0
        %6096 = vmatpush1.bf16.msra.mxu0 %v5906
        %6097 = vmatprep.subr.bf16.mxu0 0
        %6098 = vmatpush1.bf16.msra.mxu0 %v5905
        %6099 = vmatprep.subr.bf16.mxu0 0
        %6100 = vmatpush1.bf16.msra.mxu0 %v5904
        %6101 = vmatprep.subr.bf16.mxu0 0
        %6102 = vmatpush1.bf16.msra.mxu0 %v5903
        %6103 = vmatprep.subr.bf16.mxu0 0
        %6104 = vmatpush1.bf16.msra.mxu0 %v5902
        %6105 = vmatprep.subr.bf16.mxu0 0
        %6106 = vmatpush1.bf16.msra.mxu0 %v5901
        %6107 = vmatprep.subr.bf16.mxu0 0
        %6108 = vmatpush1.bf16.msra.mxu0 %v5900
        %6109 = vmatprep.subr.bf16.mxu0 0
        %6110 = vmatpush2.bf16.msra.mxu0 0
        %6111 = vmatprep.subr.bf16.mxu0 0
        %6112 = vmatpush2.bf16.msra.mxu0 0
        %6113 = vmatprep.subr.bf16.mxu0 0
        %6114 = vmatpush2.bf16.msra.mxu0 0
        %6115 = vmatprep.subr.bf16.mxu0 0
        %6116 = vmatpush2.bf16.msra.mxu0 0
        %6117 = vmatprep.subr.bf16.mxu0 0
        %6118 = vmatpush2.bf16.msra.mxu0 0
        %6119 = vmatprep.subr.bf16.mxu0 0
        %6120 = vmatpush2.bf16.msra.mxu0 0
        %6121 = vmatprep.subr.bf16.mxu0 0
        %6122 = vmatpush2.bf16.msra.mxu0 0
        %6123 = vmatprep.subr.bf16.mxu0 0
        %6124 = vmatpush2.bf16.msra.mxu0 0
        %6125 = vmatprep.mubr.bf16.mxu0 0
        %6126 = vmatmul.mubr.bf16.gmra.mxu0 %v5694
        %v6127 = vpop.f32.mrf.mxu0
        %v6128 = vadd.f32 %v5967, %v6127
        %v6129 = vpop.f32.mrf.mxu0
        %v6130 = vpop.f32.mrf.mxu0
        %v6131 = vadd.f32 %v5970, %v6130
        %v6132 = vpop.f32.mrf.mxu0
        %6133 = vmatprep.mubr.bf16.mxu0 0
        %6134 = vmatmul.mubr.bf16.gmra.mxu0 %v5697
        %v6135 = vpop.f32.mrf.mxu0
        %v6136 = vadd.f32 %v5975, %v6135
        %v6137 = vpop.f32.mrf.mxu0
        %v6138 = vpop.f32.mrf.mxu0
        %v6139 = vadd.f32 %v5978, %v6138
        %v6140 = vpop.f32.mrf.mxu0
        %6141 = vmatprep.mubr.bf16.mxu0 0
        %6142 = vmatmul.mubr.bf16.gmra.mxu0 %v5700
        %v6143 = vpop.f32.mrf.mxu0
        %v6144 = vadd.f32 %v5983, %v6143
        %v6145 = vpop.f32.mrf.mxu0
        %v6146 = vpop.f32.mrf.mxu0
        %v6147 = vadd.f32 %v5986, %v6146
        %v6148 = vpop.f32.mrf.mxu0
        %6149 = vmatprep.mubr.bf16.mxu0 0
        %6150 = vmatmul.mubr.bf16.gmra.mxu0 %v5703
        %v6151 = vpop.f32.mrf.mxu0
        %v6152 = vadd.f32 %v5991, %v6151
        %v6153 = vpop.f32.mrf.mxu0
        %v6154 = vpop.f32.mrf.mxu0
        %v6155 = vadd.f32 %v5994, %v6154
        %v6156 = vpop.f32.mrf.mxu0
        %6157 = vmatprep.mubr.bf16.mxu0 0
        %6158 = vmatmul.mubr.bf16.gmra.mxu0 %v5706
        %v6159 = vpop.f32.mrf.mxu0
        %v6160 = vadd.f32 %v5999, %v6159
        %v6161 = vpop.f32.mrf.mxu0
        %v6162 = vpop.f32.mrf.mxu0
        %v6163 = vadd.f32 %v6002, %v6162
        %v6164 = vpop.f32.mrf.mxu0
        %6165 = vmatprep.mubr.bf16.mxu0 0
        %6166 = vmatmul.mubr.bf16.gmra.mxu0 %v5709
        %v6167 = vpop.f32.mrf.mxu0
        %v6168 = vadd.f32 %v6007, %v6167
        %v6169 = vpop.f32.mrf.mxu0
        %v6170 = vpop.f32.mrf.mxu0
        %v6171 = vadd.f32 %v6010, %v6170
        %v6172 = vpop.f32.mrf.mxu0
        %6173 = vmatprep.mubr.bf16.mxu0 0
        %6174 = vmatmul.mubr.bf16.gmra.mxu0 %v5712
        %v6175 = vpop.f32.mrf.mxu0
        %v6176 = vadd.f32 %v6015, %v6175
        %v6177 = vpop.f32.mrf.mxu0
        %v6178 = vpop.f32.mrf.mxu0
        %v6179 = vadd.f32 %v6018, %v6178
        %v6180 = vpop.f32.mrf.mxu0
        %6181 = vmatprep.mubr.bf16.mxu0 0
        %6182 = vmatmul.mubr.bf16.gmra.mxu0 %v5715
        %v6183 = vpop.f32.mrf.mxu0
        %v6184 = vadd.f32 %v6023, %v6183
        %v6185 = vpop.f32.mrf.mxu0
        %v6186 = vpop.f32.mrf.mxu0
        %v6187 = vadd.f32 %v6026, %v6186
        %v6188 = vpop.f32.mrf.mxu0
        %6189 = vmatprep.mubr.bf16.mxu0 0
        %6190 = vmatmul.mubr.bf16.gmra.mxu0 %v5718
        %v6191 = vpop.f32.mrf.mxu0
        %v6192 = vadd.f32 %v6031, %v6191
        %v6193 = vpop.f32.mrf.mxu0
        %v6194 = vpop.f32.mrf.mxu0
        %v6195 = vadd.f32 %v6034, %v6194
        %v6196 = vpop.f32.mrf.mxu0
        %6197 = vmatprep.mubr.bf16.mxu0 0
        %6198 = vmatmul.mubr.bf16.gmra.mxu0 %v5721
        %v6199 = vpop.f32.mrf.mxu0
        %v6200 = vadd.f32 %v6039, %v6199
        %v6201 = vpop.f32.mrf.mxu0
        %v6202 = vpop.f32.mrf.mxu0
        %v6203 = vadd.f32 %v6042, %v6202
        %v6204 = vpop.f32.mrf.mxu0
        %6205 = vmatprep.mubr.bf16.mxu0 0
        %6206 = vmatmul.mubr.bf16.gmra.mxu0 %v5724
        %v6207 = vpop.f32.mrf.mxu0
        %v6208 = vadd.f32 %v6047, %v6207
        %v6209 = vpop.f32.mrf.mxu0
        %v6210 = vpop.f32.mrf.mxu0
        %v6211 = vadd.f32 %v6050, %v6210
        %v6212 = vpop.f32.mrf.mxu0
        %6213 = vmatprep.mubr.bf16.mxu0 0
        %6214 = vmatmul.mubr.bf16.gmra.mxu0 %v5727
        %v6215 = vpop.f32.mrf.mxu0
        %v6216 = vadd.f32 %v6055, %v6215
        %v6217 = vpop.f32.mrf.mxu0
        %v6218 = vpop.f32.mrf.mxu0
        %v6219 = vadd.f32 %v6058, %v6218
        %v6220 = vpop.f32.mrf.mxu0
        %6221 = vmatprep.mubr.bf16.mxu0 0
        %6222 = vmatmul.mubr.bf16.gmra.mxu0 %v5730
        %v6223 = vpop.f32.mrf.mxu0
        %v6224 = vadd.f32 %v6063, %v6223
        %v6225 = vpop.f32.mrf.mxu0
        %v6226 = vpop.f32.mrf.mxu0
        %v6227 = vadd.f32 %v6066, %v6226
        %v6228 = vpop.f32.mrf.mxu0
        %6229 = vmatprep.mubr.bf16.mxu0 0
        %6230 = vmatmul.mubr.bf16.gmra.mxu0 %v5733
        %v6231 = vpop.f32.mrf.mxu0
        %v6232 = vadd.f32 %v6071, %v6231
        %v6233 = vpop.f32.mrf.mxu0
        %v6234 = vpop.f32.mrf.mxu0
        %v6235 = vadd.f32 %v6074, %v6234
        %v6236 = vpop.f32.mrf.mxu0
        %6237 = vmatprep.mubr.bf16.mxu0 0
        %6238 = vmatmul.mubr.bf16.gmra.mxu0 %v5736
        %v6239 = vpop.f32.mrf.mxu0
        %v6240 = vadd.f32 %v6079, %v6239
        %v6241 = vpop.f32.mrf.mxu0
        %v6242 = vpop.f32.mrf.mxu0
        %v6243 = vadd.f32 %v6082, %v6242
        %v6244 = vpop.f32.mrf.mxu0
        %6245 = vmatprep.mubr.bf16.mxu0 0
        %6246 = vmatmul.mubr.bf16.gmra.mxu0 %v5739
        %v6247 = vpop.f32.mrf.mxu0
        %v6248 = vadd.f32 %v6087, %v6247
        %v6249 = vpop.f32.mrf.mxu0
        %v6250 = vpop.f32.mrf.mxu0
        %v6251 = vadd.f32 %v6090, %v6250
        %v6252 = vpop.f32.mrf.mxu0
        %6253 = vdwg.mxu0
        %s6254 = scalar_lea.vmem [#allocation3], 48
        %v6255 = vld [vmem:[%s6254] sm:$0xff]
        %v6256 = vld [vmem:[%s6254 + $0x8] sm:$0xf]
        %v6257 = vld [vmem:[%s6254 + $0xc] sm:$0xff]
        %v6258 = vld [vmem:[%s6254 + $0x14] sm:$0xf]
        %v6259 = vld [vmem:[%s6254 + $0x18] sm:$0xff]
        %v6260 = vld [vmem:[%s6254 + $0x20] sm:$0xf]
        %v6261 = vld [vmem:[%s6254 + $0x24] sm:$0xff]
        %v6262 = vld [vmem:[%s6254 + $0x2c] sm:$0xf]
        %v6263 = vld [vmem:[%s6254 + $0x30] sm:$0xff]
        %v6264 = vld [vmem:[%s6254 + $0x38] sm:$0xf]
        %v6265 = vld [vmem:[%s6254 + $0x3c] sm:$0xff]
        %v6266 = vld [vmem:[%s6254 + $0x44] sm:$0xf]
        %v6267 = vld [vmem:[%s6254 + $0x48] sm:$0xff]
        %v6268 = vld [vmem:[%s6254 + $0x50] sm:$0xf]
        %v6269 = vld [vmem:[%s6254 + $0x54] sm:$0xff]
        %v6270 = vld [vmem:[%s6254 + $0x5c] sm:$0xf]
        %v6271 = vld [vmem:[%s6254 + $0x60] sm:$0xff]
        %v6272 = vld [vmem:[%s6254 + $0x68] sm:$0xf]
        %v6273 = vld [vmem:[%s6254 + $0x6c] sm:$0xff]
        %v6274 = vld [vmem:[%s6254 + $0x74] sm:$0xf]
        %v6275 = vld [vmem:[%s6254 + $0x78] sm:$0xff]
        %v6276 = vld [vmem:[%s6254 + $0x80] sm:$0xf]
        %v6277 = vld [vmem:[%s6254 + $0x84] sm:$0xff]
        %v6278 = vld [vmem:[%s6254 + $0x8c] sm:$0xf]
        %v6279 = vld [vmem:[%s6254 + $0x90] sm:$0xff]
        %v6280 = vld [vmem:[%s6254 + $0x98] sm:$0xf]
        %v6281 = vld [vmem:[%s6254 + $0x9c] sm:$0xff]
        %v6282 = vld [vmem:[%s6254 + $0xa4] sm:$0xf]
        %v6283 = vld [vmem:[%s6254 + $0xa8] sm:$0xff]
        %v6284 = vld [vmem:[%s6254 + $0xb0] sm:$0xf]
        %v6285 = vld [vmem:[%s6254 + $0xb4] sm:$0xff]
        %v6286 = vld [vmem:[%s6254 + $0xbc] sm:$0xf]
        %v6287 = vld [vmem:[%s6254 + $0xc0] sm:$0xff]
        %v6288 = vld [vmem:[%s6254 + $0xc8] sm:$0xf]
        %v6289 = vld [vmem:[%s6254 + $0xcc] sm:$0xff]
        %v6290 = vld [vmem:[%s6254 + $0xd4] sm:$0xf]
        %v6291 = vld [vmem:[%s6254 + $0xd8] sm:$0xff]
        %v6292 = vld [vmem:[%s6254 + $0xe0] sm:$0xf]
        %v6293 = vld [vmem:[%s6254 + $0xe4] sm:$0xff]
        %v6294 = vld [vmem:[%s6254 + $0xec] sm:$0xf]
        %v6295 = vld [vmem:[%s6254 + $0xf0] sm:$0xff]
        %v6296 = vld [vmem:[%s6254 + $0xf8] sm:$0xf]
        %v6297 = vld [vmem:[%s6254 + $0xfc] sm:$0xff]
        %v6298 = vld [vmem:[%s6254 + $0x104] sm:$0xf]
        %v6299 = vld [vmem:[%s6254 + $0x108] sm:$0xff]
        %v6300 = vld [vmem:[%s6254 + $0x110] sm:$0xf]
        %v6301 = vld [vmem:[%s6254 + $0x114] sm:$0xff]
        %v6302 = vld [vmem:[%s6254 + $0x11c] sm:$0xf]
        %v6303 = vld [vmem:[%s6254 + $0x120] sm:$0xff]
        %v6304 = vld [vmem:[%s6254 + $0x128] sm:$0xf]
        %v6305 = vld [vmem:[%s6254 + $0x12c] sm:$0xff]
        %v6306 = vld [vmem:[%s6254 + $0x134] sm:$0xf]
        %v6307 = vld [vmem:[%s6254 + $0x138] sm:$0xff]
        %v6308 = vld [vmem:[%s6254 + $0x140] sm:$0xf]
        %v6309 = vld [vmem:[%s6254 + $0x144] sm:$0xff]
        %v6310 = vld [vmem:[%s6254 + $0x14c] sm:$0xf]
        %v6311 = vld [vmem:[%s6254 + $0x150] sm:$0xff]
        %v6312 = vld [vmem:[%s6254 + $0x158] sm:$0xf]
        %v6313 = vld [vmem:[%s6254 + $0x15c] sm:$0xff]
        %v6314 = vld [vmem:[%s6254 + $0x164] sm:$0xf]
        %v6315 = vld [vmem:[%s6254 + $0x168] sm:$0xff]
        %v6316 = vld [vmem:[%s6254 + $0x170] sm:$0xf]
        %v6317 = vld [vmem:[%s6254 + $0x174] sm:$0xff]
        %v6318 = vld [vmem:[%s6254 + $0x17c] sm:$0xf]
        %s6319 = scalar_lea.vmem [#allocation9], 384
        %v6320 = vld [vmem:[%s6319] sm:$0xf]
        %v6321 = vld [vmem:[%s6319 + $0x4] sm:$0xf]
        %v6322 = vld [vmem:[%s6319 + $0x8] sm:$0xf]
        %v6323 = vld [vmem:[%s6319 + $0xc] sm:$0xf]
        %v6324 = vld [vmem:[%s6319 + $0x10] sm:$0xf]
        %v6325 = vld [vmem:[%s6319 + $0x14] sm:$0xf]
        %v6326 = vld [vmem:[%s6319 + $0x18] sm:$0xf]
        %v6327 = vld [vmem:[%s6319 + $0x1c] sm:$0xf]
        %v6328 = vld [vmem:[%s6319 + $0x20] sm:$0xf]
        %v6329 = vld [vmem:[%s6319 + $0x24] sm:$0xf]
        %v6330 = vld [vmem:[%s6319 + $0x28] sm:$0xf]
        %v6331 = vld [vmem:[%s6319 + $0x2c] sm:$0xf]
        %v6332 = vld [vmem:[%s6319 + $0x30] sm:$0xf]
        %v6333 = vld [vmem:[%s6319 + $0x34] sm:$0xf]
        %v6334 = vld [vmem:[%s6319 + $0x38] sm:$0xf]
        %v6335 = vld [vmem:[%s6319 + $0x3c] sm:$0xf]
        %v6336 = vld [vmem:[%s6319 + $0x40] sm:$0xf]
        %v6337 = vld [vmem:[%s6319 + $0x44] sm:$0xf]
        %v6338 = vld [vmem:[%s6319 + $0x48] sm:$0xf]
        %v6339 = vld [vmem:[%s6319 + $0x4c] sm:$0xf]
        %v6340 = vld [vmem:[%s6319 + $0x50] sm:$0xf]
        %v6341 = vld [vmem:[%s6319 + $0x54] sm:$0xf]
        %v6342 = vld [vmem:[%s6319 + $0x58] sm:$0xf]
        %v6343 = vld [vmem:[%s6319 + $0x5c] sm:$0xf]
        %v6344 = vld [vmem:[%s6319 + $0x60] sm:$0xf]
        %v6345 = vld [vmem:[%s6319 + $0x64] sm:$0xf]
        %v6346 = vld [vmem:[%s6319 + $0x68] sm:$0xf]
        %v6347 = vld [vmem:[%s6319 + $0x6c] sm:$0xf]
        %v6348 = vld [vmem:[%s6319 + $0x70] sm:$0xf]
        %v6349 = vld [vmem:[%s6319 + $0x74] sm:$0xf]
        %v6350 = vld [vmem:[%s6319 + $0x78] sm:$0xf]
        %v6351 = vld [vmem:[%s6319 + $0x7c] sm:$0xf]
        %v6352 = vld [vmem:[%s6319 + $0x80] sm:$0xf]
        %v6353 = vld [vmem:[%s6319 + $0x84] sm:$0xf]
        %v6354 = vld [vmem:[%s6319 + $0x88] sm:$0xf]
        %v6355 = vld [vmem:[%s6319 + $0x8c] sm:$0xf]
        %v6356 = vld [vmem:[%s6319 + $0x90] sm:$0xf]
        %v6357 = vld [vmem:[%s6319 + $0x94] sm:$0xf]
        %v6358 = vld [vmem:[%s6319 + $0x98] sm:$0xf]
        %v6359 = vld [vmem:[%s6319 + $0x9c] sm:$0xf]
        %v6360 = vld [vmem:[%s6319 + $0xa0] sm:$0xf]
        %v6361 = vld [vmem:[%s6319 + $0xa4] sm:$0xf]
        %v6362 = vld [vmem:[%s6319 + $0xa8] sm:$0xf]
        %v6363 = vld [vmem:[%s6319 + $0xac] sm:$0xf]
        %v6364 = vld [vmem:[%s6319 + $0xb0] sm:$0xf]
        %v6365 = vld [vmem:[%s6319 + $0xb4] sm:$0xf]
        %v6366 = vld [vmem:[%s6319 + $0xb8] sm:$0xf]
        %v6367 = vld [vmem:[%s6319 + $0xbc] sm:$0xf]
        %v6432 = vunpack.c.l.b16 %v6255
        %v6433 = vunpack.c.h.b16 %v6255
        %v6434 = vunpack.c.l.b16 %v6256
        %v6435 = vunpack.c.l.b16 %v6257
        %v6436 = vunpack.c.h.b16 %v6257
        %v6437 = vunpack.c.l.b16 %v6258
        %v6438 = vunpack.c.l.b16 %v6259
        %v6439 = vunpack.c.h.b16 %v6259
        %v6440 = vunpack.c.l.b16 %v6260
        %v6441 = vunpack.c.l.b16 %v6261
        %v6442 = vunpack.c.h.b16 %v6261
        %v6443 = vunpack.c.l.b16 %v6262
        %v6444 = vunpack.c.l.b16 %v6263
        %v6445 = vunpack.c.h.b16 %v6263
        %v6446 = vunpack.c.l.b16 %v6264
        %v6447 = vunpack.c.l.b16 %v6265
        %v6448 = vunpack.c.h.b16 %v6265
        %v6449 = vunpack.c.l.b16 %v6266
        %v6450 = vunpack.c.l.b16 %v6267
        %v6451 = vunpack.c.h.b16 %v6267
        %v6452 = vunpack.c.l.b16 %v6268
        %v6453 = vunpack.c.l.b16 %v6269
        %v6454 = vunpack.c.h.b16 %v6269
        %v6455 = vunpack.c.l.b16 %v6270
        %v6456 = vunpack.c.l.b16 %v6271
        %v6457 = vunpack.c.h.b16 %v6271
        %v6458 = vunpack.c.l.b16 %v6272
        %v6459 = vunpack.c.l.b16 %v6273
        %v6460 = vunpack.c.h.b16 %v6273
        %v6461 = vunpack.c.l.b16 %v6274
        %v6462 = vunpack.c.l.b16 %v6275
        %v6463 = vunpack.c.h.b16 %v6275
        %v6464 = vunpack.c.l.b16 %v6276
        %v6465 = vunpack.c.l.b16 %v6277
        %v6466 = vunpack.c.h.b16 %v6277
        %v6467 = vunpack.c.l.b16 %v6278
        %v6468 = vunpack.c.l.b16 %v6279
        %v6469 = vunpack.c.h.b16 %v6279
        %v6470 = vunpack.c.l.b16 %v6280
        %v6471 = vunpack.c.l.b16 %v6281
        %v6472 = vunpack.c.h.b16 %v6281
        %v6473 = vunpack.c.l.b16 %v6282
        %v6474 = vunpack.c.l.b16 %v6283
        %v6475 = vunpack.c.h.b16 %v6283
        %v6476 = vunpack.c.l.b16 %v6284
        %v6477 = vunpack.c.l.b16 %v6285
        %v6478 = vunpack.c.h.b16 %v6285
        %v6479 = vunpack.c.l.b16 %v6286
        %v6480 = vunpack.c.l.b16 %v6287
        %v6481 = vunpack.c.h.b16 %v6287
        %v6482 = vunpack.c.l.b16 %v6288
        %v6483 = vunpack.c.l.b16 %v6289
        %v6484 = vunpack.c.h.b16 %v6289
        %v6485 = vunpack.c.l.b16 %v6290
        %v6486 = vunpack.c.l.b16 %v6291
        %v6487 = vunpack.c.h.b16 %v6291
        %v6488 = vunpack.c.l.b16 %v6292
        %v6489 = vunpack.c.l.b16 %v6293
        %v6490 = vunpack.c.h.b16 %v6293
        %v6491 = vunpack.c.l.b16 %v6294
        %v6492 = vunpack.c.l.b16 %v6295
        %v6493 = vunpack.c.h.b16 %v6295
        %v6494 = vunpack.c.l.b16 %v6296
        %v6495 = vunpack.c.l.b16 %v6297
        %v6496 = vunpack.c.h.b16 %v6297
        %v6497 = vunpack.c.l.b16 %v6298
        %v6498 = vunpack.c.l.b16 %v6299
        %v6499 = vunpack.c.h.b16 %v6299
        %v6500 = vunpack.c.l.b16 %v6300
        %v6501 = vunpack.c.l.b16 %v6301
        %v6502 = vunpack.c.h.b16 %v6301
        %v6503 = vunpack.c.l.b16 %v6302
        %v6504 = vunpack.c.l.b16 %v6303
        %v6505 = vunpack.c.h.b16 %v6303
        %v6506 = vunpack.c.l.b16 %v6304
        %v6507 = vunpack.c.l.b16 %v6305
        %v6508 = vunpack.c.h.b16 %v6305
        %v6509 = vunpack.c.l.b16 %v6306
        %v6510 = vunpack.c.l.b16 %v6307
        %v6511 = vunpack.c.h.b16 %v6307
        %v6512 = vunpack.c.l.b16 %v6308
        %v6513 = vunpack.c.l.b16 %v6309
        %v6514 = vunpack.c.h.b16 %v6309
        %v6515 = vunpack.c.l.b16 %v6310
        %v6516 = vunpack.c.l.b16 %v6311
        %v6517 = vunpack.c.h.b16 %v6311
        %v6518 = vunpack.c.l.b16 %v6312
        %v6519 = vunpack.c.l.b16 %v6313
        %v6520 = vunpack.c.h.b16 %v6313
        %v6521 = vunpack.c.l.b16 %v6314
        %v6522 = vunpack.c.l.b16 %v6315
        %v6523 = vunpack.c.h.b16 %v6315
        %v6524 = vunpack.c.l.b16 %v6316
        %v6525 = vunpack.c.l.b16 %v6317
        %v6526 = vunpack.c.h.b16 %v6317
        %v6527 = vunpack.c.l.b16 %v6318
        %v6528 = vpack.c.b16 %v6435, %v6432
        %v6529 = vpack.c.b16 %v6436, %v6433
        %v6530 = vpack.c.b16 %v6437, %v6434
        %v6531 = vpack.c.b16 %v6441, %v6438
        %v6532 = vpack.c.b16 %v6442, %v6439
        %v6533 = vpack.c.b16 %v6443, %v6440
        %v6534 = vpack.c.b16 %v6447, %v6444
        %v6535 = vpack.c.b16 %v6448, %v6445
        %v6536 = vpack.c.b16 %v6449, %v6446
        %v6537 = vpack.c.b16 %v6453, %v6450
        %v6538 = vpack.c.b16 %v6454, %v6451
        %v6539 = vpack.c.b16 %v6455, %v6452
        %v6540 = vpack.c.b16 %v6459, %v6456
        %v6541 = vpack.c.b16 %v6460, %v6457
        %v6542 = vpack.c.b16 %v6461, %v6458
        %v6543 = vpack.c.b16 %v6465, %v6462
        %v6544 = vpack.c.b16 %v6466, %v6463
        %v6545 = vpack.c.b16 %v6467, %v6464
        %v6546 = vpack.c.b16 %v6471, %v6468
        %v6547 = vpack.c.b16 %v6472, %v6469
        %v6548 = vpack.c.b16 %v6473, %v6470
        %v6549 = vpack.c.b16 %v6477, %v6474
        %v6550 = vpack.c.b16 %v6478, %v6475
        %v6551 = vpack.c.b16 %v6479, %v6476
        %v6552 = vpack.c.b16 %v6483, %v6480
        %v6553 = vpack.c.b16 %v6484, %v6481
        %v6554 = vpack.c.b16 %v6485, %v6482
        %v6555 = vpack.c.b16 %v6489, %v6486
        %v6556 = vpack.c.b16 %v6490, %v6487
        %v6557 = vpack.c.b16 %v6491, %v6488
        %v6558 = vpack.c.b16 %v6495, %v6492
        %v6559 = vpack.c.b16 %v6496, %v6493
        %v6560 = vpack.c.b16 %v6497, %v6494
        %v6561 = vpack.c.b16 %v6501, %v6498
        %v6562 = vpack.c.b16 %v6502, %v6499
        %v6563 = vpack.c.b16 %v6503, %v6500
        %v6564 = vpack.c.b16 %v6507, %v6504
        %v6565 = vpack.c.b16 %v6508, %v6505
        %v6566 = vpack.c.b16 %v6509, %v6506
        %v6567 = vpack.c.b16 %v6513, %v6510
        %v6568 = vpack.c.b16 %v6514, %v6511
        %v6569 = vpack.c.b16 %v6515, %v6512
        %v6570 = vpack.c.b16 %v6519, %v6516
        %v6571 = vpack.c.b16 %v6520, %v6517
        %v6572 = vpack.c.b16 %v6521, %v6518
        %v6573 = vpack.c.b16 %v6525, %v6522
        %v6574 = vpack.c.b16 %v6526, %v6523
        %v6575 = vpack.c.b16 %v6527, %v6524
        %v6672 = vunpack.c.l.b16 %v6320
        %v6673 = vunpack.c.l.b16 %v6321
        %v6674 = vunpack.c.l.b16 %v6322
        %v6675 = vunpack.c.l.b16 %v6323
        %v6676 = vunpack.c.l.b16 %v6324
        %v6677 = vunpack.c.l.b16 %v6325
        %v6678 = vunpack.c.l.b16 %v6326
        %v6679 = vunpack.c.l.b16 %v6327
        %v6680 = vunpack.c.l.b16 %v6328
        %v6681 = vunpack.c.l.b16 %v6329
        %v6682 = vunpack.c.l.b16 %v6330
        %v6683 = vunpack.c.l.b16 %v6331
        %v6684 = vunpack.c.l.b16 %v6332
        %v6685 = vunpack.c.l.b16 %v6333
        %v6686 = vunpack.c.l.b16 %v6334
        %v6687 = vunpack.c.l.b16 %v6335
        %v6688 = vunpack.c.l.b16 %v6336
        %v6689 = vunpack.c.l.b16 %v6337
        %v6690 = vunpack.c.l.b16 %v6338
        %v6691 = vunpack.c.l.b16 %v6339
        %v6692 = vunpack.c.l.b16 %v6340
        %v6693 = vunpack.c.l.b16 %v6341
        %v6694 = vunpack.c.l.b16 %v6342
        %v6695 = vunpack.c.l.b16 %v6343
        %v6696 = vunpack.c.l.b16 %v6344
        %v6697 = vunpack.c.l.b16 %v6345
        %v6698 = vunpack.c.l.b16 %v6346
        %v6699 = vunpack.c.l.b16 %v6347
        %v6700 = vunpack.c.l.b16 %v6348
        %v6701 = vunpack.c.l.b16 %v6349
        %v6702 = vunpack.c.l.b16 %v6350
        %v6703 = vunpack.c.l.b16 %v6351
        %v6704 = vunpack.c.l.b16 %v6352
        %v6705 = vunpack.c.l.b16 %v6353
        %v6706 = vunpack.c.l.b16 %v6354
        %v6707 = vunpack.c.l.b16 %v6355
        %v6708 = vunpack.c.l.b16 %v6356
        %v6709 = vunpack.c.l.b16 %v6357
        %v6710 = vunpack.c.l.b16 %v6358
        %v6711 = vunpack.c.l.b16 %v6359
        %v6712 = vunpack.c.l.b16 %v6360
        %v6713 = vunpack.c.l.b16 %v6361
        %v6714 = vunpack.c.l.b16 %v6362
        %v6715 = vunpack.c.l.b16 %v6363
        %v6716 = vunpack.c.l.b16 %v6364
        %v6717 = vunpack.c.l.b16 %v6365
        %v6718 = vunpack.c.l.b16 %v6366
        %v6719 = vunpack.c.l.b16 %v6367
        %v6720 = vpack.c.b16 %v6673, %v6672
        %v6721 = vpack.c.b16 %v6675, %v6674
        %v6722 = vpack.c.b16 %v6677, %v6676
        %v6723 = vpack.c.b16 %v6679, %v6678
        %v6724 = vpack.c.b16 %v6681, %v6680
        %v6725 = vpack.c.b16 %v6683, %v6682
        %v6726 = vpack.c.b16 %v6685, %v6684
        %v6727 = vpack.c.b16 %v6687, %v6686
        %v6728 = vpack.c.b16 %v6689, %v6688
        %v6729 = vpack.c.b16 %v6691, %v6690
        %v6730 = vpack.c.b16 %v6693, %v6692
        %v6731 = vpack.c.b16 %v6695, %v6694
        %v6732 = vpack.c.b16 %v6697, %v6696
        %v6733 = vpack.c.b16 %v6699, %v6698
        %v6734 = vpack.c.b16 %v6701, %v6700
        %v6735 = vpack.c.b16 %v6703, %v6702
        %v6736 = vpack.c.b16 %v6705, %v6704
        %v6737 = vpack.c.b16 %v6707, %v6706
        %v6738 = vpack.c.b16 %v6709, %v6708
        %v6739 = vpack.c.b16 %v6711, %v6710
        %v6740 = vpack.c.b16 %v6713, %v6712
        %v6741 = vpack.c.b16 %v6715, %v6714
        %v6742 = vpack.c.b16 %v6717, %v6716
        %v6743 = vpack.c.b16 %v6719, %v6718
        %6768 = vmatprep.subr.bf16.mxu0 0
        %6769 = vmatpush1.bf16.msra.mxu0 %v6727
        %6770 = vmatprep.subr.bf16.mxu0 0
        %6771 = vmatpush1.bf16.msra.mxu0 %v6726
        %6772 = vmatprep.subr.bf16.mxu0 0
        %6773 = vmatpush1.bf16.msra.mxu0 %v6725
        %6774 = vmatprep.subr.bf16.mxu0 0
        %6775 = vmatpush1.bf16.msra.mxu0 %v6724
        %6776 = vmatprep.subr.bf16.mxu0 0
        %6777 = vmatpush1.bf16.msra.mxu0 %v6723
        %6778 = vmatprep.subr.bf16.mxu0 0
        %6779 = vmatpush1.bf16.msra.mxu0 %v6722
        %6780 = vmatprep.subr.bf16.mxu0 0
        %6781 = vmatpush1.bf16.msra.mxu0 %v6721
        %6782 = vmatprep.subr.bf16.mxu0 0
        %6783 = vmatpush1.bf16.msra.mxu0 %v6720
        %6784 = vmatprep.subr.bf16.mxu0 0
        %6785 = vmatpush2.bf16.msra.mxu0 %v6735
        %6786 = vmatprep.subr.bf16.mxu0 0
        %6787 = vmatpush2.bf16.msra.mxu0 %v6734
        %6788 = vmatprep.subr.bf16.mxu0 0
        %6789 = vmatpush2.bf16.msra.mxu0 %v6733
        %6790 = vmatprep.subr.bf16.mxu0 0
        %6791 = vmatpush2.bf16.msra.mxu0 %v6732
        %6792 = vmatprep.subr.bf16.mxu0 0
        %6793 = vmatpush2.bf16.msra.mxu0 %v6731
        %6794 = vmatprep.subr.bf16.mxu0 0
        %6795 = vmatpush2.bf16.msra.mxu0 %v6730
        %6796 = vmatprep.subr.bf16.mxu0 0
        %6797 = vmatpush2.bf16.msra.mxu0 %v6729
        %6798 = vmatprep.subr.bf16.mxu0 0
        %6799 = vmatpush2.bf16.msra.mxu0 %v6728
        %6800 = vmatprep.mubr.bf16.mxu0 %v6529
        %6801 = vmatmul.mubr.bf16.gmra.mxu0 %v6528
        %v6802 = vpop.f32.mrf.mxu0
        %v6803 = vadd.f32 0.0, %v6802
        %v6804 = vpop.f32.mrf.mxu0
        %v6805 = vpop.f32.mrf.mxu0
        %v6806 = vadd.f32 0.0, %v6805
        %v6807 = vpop.f32.mrf.mxu0
        %6808 = vmatprep.mubr.bf16.mxu0 %v6532
        %6809 = vmatmul.mubr.bf16.gmra.mxu0 %v6531
        %v6810 = vpop.f32.mrf.mxu0
        %v6811 = vadd.f32 0.0, %v6810
        %v6812 = vpop.f32.mrf.mxu0
        %v6813 = vpop.f32.mrf.mxu0
        %v6814 = vadd.f32 0.0, %v6813
        %v6815 = vpop.f32.mrf.mxu0
        %6816 = vmatprep.mubr.bf16.mxu0 %v6535
        %6817 = vmatmul.mubr.bf16.gmra.mxu0 %v6534
        %v6818 = vpop.f32.mrf.mxu0
        %v6819 = vadd.f32 0.0, %v6818
        %v6820 = vpop.f32.mrf.mxu0
        %v6821 = vpop.f32.mrf.mxu0
        %v6822 = vadd.f32 0.0, %v6821
        %v6823 = vpop.f32.mrf.mxu0
        %6824 = vmatprep.mubr.bf16.mxu0 %v6538
        %6825 = vmatmul.mubr.bf16.gmra.mxu0 %v6537
        %v6826 = vpop.f32.mrf.mxu0
        %v6827 = vadd.f32 0.0, %v6826
        %v6828 = vpop.f32.mrf.mxu0
        %v6829 = vpop.f32.mrf.mxu0
        %v6830 = vadd.f32 0.0, %v6829
        %v6831 = vpop.f32.mrf.mxu0
        %6832 = vmatprep.mubr.bf16.mxu0 %v6541
        %6833 = vmatmul.mubr.bf16.gmra.mxu0 %v6540
        %v6834 = vpop.f32.mrf.mxu0
        %v6835 = vadd.f32 0.0, %v6834
        %v6836 = vpop.f32.mrf.mxu0
        %v6837 = vpop.f32.mrf.mxu0
        %v6838 = vadd.f32 0.0, %v6837
        %v6839 = vpop.f32.mrf.mxu0
        %6840 = vmatprep.mubr.bf16.mxu0 %v6544
        %6841 = vmatmul.mubr.bf16.gmra.mxu0 %v6543
        %v6842 = vpop.f32.mrf.mxu0
        %v6843 = vadd.f32 0.0, %v6842
        %v6844 = vpop.f32.mrf.mxu0
        %v6845 = vpop.f32.mrf.mxu0
        %v6846 = vadd.f32 0.0, %v6845
        %v6847 = vpop.f32.mrf.mxu0
        %6848 = vmatprep.mubr.bf16.mxu0 %v6547
        %6849 = vmatmul.mubr.bf16.gmra.mxu0 %v6546
        %v6850 = vpop.f32.mrf.mxu0
        %v6851 = vadd.f32 0.0, %v6850
        %v6852 = vpop.f32.mrf.mxu0
        %v6853 = vpop.f32.mrf.mxu0
        %v6854 = vadd.f32 0.0, %v6853
        %v6855 = vpop.f32.mrf.mxu0
        %6856 = vmatprep.mubr.bf16.mxu0 %v6550
        %6857 = vmatmul.mubr.bf16.gmra.mxu0 %v6549
        %v6858 = vpop.f32.mrf.mxu0
        %v6859 = vadd.f32 0.0, %v6858
        %v6860 = vpop.f32.mrf.mxu0
        %v6861 = vpop.f32.mrf.mxu0
        %v6862 = vadd.f32 0.0, %v6861
        %v6863 = vpop.f32.mrf.mxu0
        %6864 = vmatprep.mubr.bf16.mxu0 %v6553
        %6865 = vmatmul.mubr.bf16.gmra.mxu0 %v6552
        %v6866 = vpop.f32.mrf.mxu0
        %v6867 = vadd.f32 0.0, %v6866
        %v6868 = vpop.f32.mrf.mxu0
        %v6869 = vpop.f32.mrf.mxu0
        %v6870 = vadd.f32 0.0, %v6869
        %v6871 = vpop.f32.mrf.mxu0
        %6872 = vmatprep.mubr.bf16.mxu0 %v6556
        %6873 = vmatmul.mubr.bf16.gmra.mxu0 %v6555
        %v6874 = vpop.f32.mrf.mxu0
        %v6875 = vadd.f32 0.0, %v6874
        %v6876 = vpop.f32.mrf.mxu0
        %v6877 = vpop.f32.mrf.mxu0
        %v6878 = vadd.f32 0.0, %v6877
        %v6879 = vpop.f32.mrf.mxu0
        %6880 = vmatprep.mubr.bf16.mxu0 %v6559
        %6881 = vmatmul.mubr.bf16.gmra.mxu0 %v6558
        %v6882 = vpop.f32.mrf.mxu0
        %v6883 = vadd.f32 0.0, %v6882
        %v6884 = vpop.f32.mrf.mxu0
        %v6885 = vpop.f32.mrf.mxu0
        %v6886 = vadd.f32 0.0, %v6885
        %v6887 = vpop.f32.mrf.mxu0
        %6888 = vmatprep.mubr.bf16.mxu0 %v6562
        %6889 = vmatmul.mubr.bf16.gmra.mxu0 %v6561
        %v6890 = vpop.f32.mrf.mxu0
        %v6891 = vadd.f32 0.0, %v6890
        %v6892 = vpop.f32.mrf.mxu0
        %v6893 = vpop.f32.mrf.mxu0
        %v6894 = vadd.f32 0.0, %v6893
        %v6895 = vpop.f32.mrf.mxu0
        %6896 = vmatprep.mubr.bf16.mxu0 %v6565
        %6897 = vmatmul.mubr.bf16.gmra.mxu0 %v6564
        %v6898 = vpop.f32.mrf.mxu0
        %v6899 = vadd.f32 0.0, %v6898
        %v6900 = vpop.f32.mrf.mxu0
        %v6901 = vpop.f32.mrf.mxu0
        %v6902 = vadd.f32 0.0, %v6901
        %v6903 = vpop.f32.mrf.mxu0
        %6904 = vmatprep.mubr.bf16.mxu0 %v6568
        %6905 = vmatmul.mubr.bf16.gmra.mxu0 %v6567
        %v6906 = vpop.f32.mrf.mxu0
        %v6907 = vadd.f32 0.0, %v6906
        %v6908 = vpop.f32.mrf.mxu0
        %v6909 = vpop.f32.mrf.mxu0
        %v6910 = vadd.f32 0.0, %v6909
        %v6911 = vpop.f32.mrf.mxu0
        %6912 = vmatprep.mubr.bf16.mxu0 %v6571
        %6913 = vmatmul.mubr.bf16.gmra.mxu0 %v6570
        %v6914 = vpop.f32.mrf.mxu0
        %v6915 = vadd.f32 0.0, %v6914
        %v6916 = vpop.f32.mrf.mxu0
        %v6917 = vpop.f32.mrf.mxu0
        %v6918 = vadd.f32 0.0, %v6917
        %v6919 = vpop.f32.mrf.mxu0
        %6920 = vmatprep.mubr.bf16.mxu0 %v6574
        %6921 = vmatmul.mubr.bf16.gmra.mxu0 %v6573
        %v6922 = vpop.f32.mrf.mxu0
        %v6923 = vadd.f32 0.0, %v6922
        %v6924 = vpop.f32.mrf.mxu0
        %v6925 = vpop.f32.mrf.mxu0
        %v6926 = vadd.f32 0.0, %v6925
        %v6927 = vpop.f32.mrf.mxu0
        %6928 = vdwg.mxu0
        %6929 = vmatprep.subr.bf16.mxu0 0
        %6930 = vmatpush1.bf16.msra.mxu0 %v6743
        %6931 = vmatprep.subr.bf16.mxu0 0
        %6932 = vmatpush1.bf16.msra.mxu0 %v6742
        %6933 = vmatprep.subr.bf16.mxu0 0
        %6934 = vmatpush1.bf16.msra.mxu0 %v6741
        %6935 = vmatprep.subr.bf16.mxu0 0
        %6936 = vmatpush1.bf16.msra.mxu0 %v6740
        %6937 = vmatprep.subr.bf16.mxu0 0
        %6938 = vmatpush1.bf16.msra.mxu0 %v6739
        %6939 = vmatprep.subr.bf16.mxu0 0
        %6940 = vmatpush1.bf16.msra.mxu0 %v6738
        %6941 = vmatprep.subr.bf16.mxu0 0
        %6942 = vmatpush1.bf16.msra.mxu0 %v6737
        %6943 = vmatprep.subr.bf16.mxu0 0
        %6944 = vmatpush1.bf16.msra.mxu0 %v6736
        %6945 = vmatprep.subr.bf16.mxu0 0
        %6946 = vmatpush2.bf16.msra.mxu0 0
        %6947 = vmatprep.subr.bf16.mxu0 0
        %6948 = vmatpush2.bf16.msra.mxu0 0
        %6949 = vmatprep.subr.bf16.mxu0 0
        %6950 = vmatpush2.bf16.msra.mxu0 0
        %6951 = vmatprep.subr.bf16.mxu0 0
        %6952 = vmatpush2.bf16.msra.mxu0 0
        %6953 = vmatprep.subr.bf16.mxu0 0
        %6954 = vmatpush2.bf16.msra.mxu0 0
        %6955 = vmatprep.subr.bf16.mxu0 0
        %6956 = vmatpush2.bf16.msra.mxu0 0
        %6957 = vmatprep.subr.bf16.mxu0 0
        %6958 = vmatpush2.bf16.msra.mxu0 0
        %6959 = vmatprep.subr.bf16.mxu0 0
        %6960 = vmatpush2.bf16.msra.mxu0 0
        %6961 = vmatprep.mubr.bf16.mxu0 0
        %6962 = vmatmul.mubr.bf16.gmra.mxu0 %v6530
        %v6963 = vpop.f32.mrf.mxu0
        %v6964 = vadd.f32 %v6803, %v6963
        %v6965 = vpop.f32.mrf.mxu0
        %v6966 = vpop.f32.mrf.mxu0
        %v6967 = vadd.f32 %v6806, %v6966
        %v6968 = vpop.f32.mrf.mxu0
        %6969 = vmatprep.mubr.bf16.mxu0 0
        %6970 = vmatmul.mubr.bf16.gmra.mxu0 %v6533
        %v6971 = vpop.f32.mrf.mxu0
        %v6972 = vadd.f32 %v6811, %v6971
        %v6973 = vpop.f32.mrf.mxu0
        %v6974 = vpop.f32.mrf.mxu0
        %v6975 = vadd.f32 %v6814, %v6974
        %v6976 = vpop.f32.mrf.mxu0
        %6977 = vmatprep.mubr.bf16.mxu0 0
        %6978 = vmatmul.mubr.bf16.gmra.mxu0 %v6536
        %v6979 = vpop.f32.mrf.mxu0
        %v6980 = vadd.f32 %v6819, %v6979
        %v6981 = vpop.f32.mrf.mxu0
        %v6982 = vpop.f32.mrf.mxu0
        %v6983 = vadd.f32 %v6822, %v6982
        %v6984 = vpop.f32.mrf.mxu0
        %6985 = vmatprep.mubr.bf16.mxu0 0
        %6986 = vmatmul.mubr.bf16.gmra.mxu0 %v6539
        %v6987 = vpop.f32.mrf.mxu0
        %v6988 = vadd.f32 %v6827, %v6987
        %v6989 = vpop.f32.mrf.mxu0
        %v6990 = vpop.f32.mrf.mxu0
        %v6991 = vadd.f32 %v6830, %v6990
        %v6992 = vpop.f32.mrf.mxu0
        %6993 = vmatprep.mubr.bf16.mxu0 0
        %6994 = vmatmul.mubr.bf16.gmra.mxu0 %v6542
        %v6995 = vpop.f32.mrf.mxu0
        %v6996 = vadd.f32 %v6835, %v6995
        %v6997 = vpop.f32.mrf.mxu0
        %v6998 = vpop.f32.mrf.mxu0
        %v6999 = vadd.f32 %v6838, %v6998
        %v7000 = vpop.f32.mrf.mxu0
        %7001 = vmatprep.mubr.bf16.mxu0 0
        %7002 = vmatmul.mubr.bf16.gmra.mxu0 %v6545
        %v7003 = vpop.f32.mrf.mxu0
        %v7004 = vadd.f32 %v6843, %v7003
        %v7005 = vpop.f32.mrf.mxu0
        %v7006 = vpop.f32.mrf.mxu0
        %v7007 = vadd.f32 %v6846, %v7006
        %v7008 = vpop.f32.mrf.mxu0
        %7009 = vmatprep.mubr.bf16.mxu0 0
        %7010 = vmatmul.mubr.bf16.gmra.mxu0 %v6548
        %v7011 = vpop.f32.mrf.mxu0
        %v7012 = vadd.f32 %v6851, %v7011
        %v7013 = vpop.f32.mrf.mxu0
        %v7014 = vpop.f32.mrf.mxu0
        %v7015 = vadd.f32 %v6854, %v7014
        %v7016 = vpop.f32.mrf.mxu0
        %7017 = vmatprep.mubr.bf16.mxu0 0
        %7018 = vmatmul.mubr.bf16.gmra.mxu0 %v6551
        %v7019 = vpop.f32.mrf.mxu0
        %v7020 = vadd.f32 %v6859, %v7019
        %v7021 = vpop.f32.mrf.mxu0
        %v7022 = vpop.f32.mrf.mxu0
        %v7023 = vadd.f32 %v6862, %v7022
        %v7024 = vpop.f32.mrf.mxu0
        %7025 = vmatprep.mubr.bf16.mxu0 0
        %7026 = vmatmul.mubr.bf16.gmra.mxu0 %v6554
        %v7027 = vpop.f32.mrf.mxu0
        %v7028 = vadd.f32 %v6867, %v7027
        %v7029 = vpop.f32.mrf.mxu0
        %v7030 = vpop.f32.mrf.mxu0
        %v7031 = vadd.f32 %v6870, %v7030
        %v7032 = vpop.f32.mrf.mxu0
        %7033 = vmatprep.mubr.bf16.mxu0 0
        %7034 = vmatmul.mubr.bf16.gmra.mxu0 %v6557
        %v7035 = vpop.f32.mrf.mxu0
        %v7036 = vadd.f32 %v6875, %v7035
        %v7037 = vpop.f32.mrf.mxu0
        %v7038 = vpop.f32.mrf.mxu0
        %v7039 = vadd.f32 %v6878, %v7038
        %v7040 = vpop.f32.mrf.mxu0
        %7041 = vmatprep.mubr.bf16.mxu0 0
        %7042 = vmatmul.mubr.bf16.gmra.mxu0 %v6560
        %v7043 = vpop.f32.mrf.mxu0
        %v7044 = vadd.f32 %v6883, %v7043
        %v7045 = vpop.f32.mrf.mxu0
        %v7046 = vpop.f32.mrf.mxu0
        %v7047 = vadd.f32 %v6886, %v7046
        %v7048 = vpop.f32.mrf.mxu0
        %7049 = vmatprep.mubr.bf16.mxu0 0
        %7050 = vmatmul.mubr.bf16.gmra.mxu0 %v6563
        %v7051 = vpop.f32.mrf.mxu0
        %v7052 = vadd.f32 %v6891, %v7051
        %v7053 = vpop.f32.mrf.mxu0
        %v7054 = vpop.f32.mrf.mxu0
        %v7055 = vadd.f32 %v6894, %v7054
        %v7056 = vpop.f32.mrf.mxu0
        %7057 = vmatprep.mubr.bf16.mxu0 0
        %7058 = vmatmul.mubr.bf16.gmra.mxu0 %v6566
        %v7059 = vpop.f32.mrf.mxu0
        %v7060 = vadd.f32 %v6899, %v7059
        %v7061 = vpop.f32.mrf.mxu0
        %v7062 = vpop.f32.mrf.mxu0
        %v7063 = vadd.f32 %v6902, %v7062
        %v7064 = vpop.f32.mrf.mxu0
        %7065 = vmatprep.mubr.bf16.mxu0 0
        %7066 = vmatmul.mubr.bf16.gmra.mxu0 %v6569
        %v7067 = vpop.f32.mrf.mxu0
        %v7068 = vadd.f32 %v6907, %v7067
        %v7069 = vpop.f32.mrf.mxu0
        %v7070 = vpop.f32.mrf.mxu0
        %v7071 = vadd.f32 %v6910, %v7070
        %v7072 = vpop.f32.mrf.mxu0
        %7073 = vmatprep.mubr.bf16.mxu0 0
        %7074 = vmatmul.mubr.bf16.gmra.mxu0 %v6572
        %v7075 = vpop.f32.mrf.mxu0
        %v7076 = vadd.f32 %v6915, %v7075
        %v7077 = vpop.f32.mrf.mxu0
        %v7078 = vpop.f32.mrf.mxu0
        %v7079 = vadd.f32 %v6918, %v7078
        %v7080 = vpop.f32.mrf.mxu0
        %7081 = vmatprep.mubr.bf16.mxu0 0
        %7082 = vmatmul.mubr.bf16.gmra.mxu0 %v6575
        %v7083 = vpop.f32.mrf.mxu0
        %v7084 = vadd.f32 %v6923, %v7083
        %v7085 = vpop.f32.mrf.mxu0
        %v7086 = vpop.f32.mrf.mxu0
        %v7087 = vadd.f32 %v6926, %v7086
        %v7088 = vpop.f32.mrf.mxu0
        %7089 = vdwg.mxu0
        %v7090 = vadd.f32 %v6128, %v6964
        %v7091 = vadd.f32 %v6131, %v6967
        %v7092 = vadd.f32 %v6136, %v6972
        %v7093 = vadd.f32 %v6139, %v6975
        %v7094 = vadd.f32 %v6144, %v6980
        %v7095 = vadd.f32 %v6147, %v6983
        %v7096 = vadd.f32 %v6152, %v6988
        %v7097 = vadd.f32 %v6155, %v6991
        %v7098 = vadd.f32 %v6160, %v6996
        %v7099 = vadd.f32 %v6163, %v6999
        %v7100 = vadd.f32 %v6168, %v7004
        %v7101 = vadd.f32 %v6171, %v7007
        %v7102 = vadd.f32 %v6176, %v7012
        %v7103 = vadd.f32 %v6179, %v7015
        %v7104 = vadd.f32 %v6184, %v7020
        %v7105 = vadd.f32 %v6187, %v7023
        %v7106 = vadd.f32 %v6192, %v7028
        %v7107 = vadd.f32 %v6195, %v7031
        %v7108 = vadd.f32 %v6200, %v7036
        %v7109 = vadd.f32 %v6203, %v7039
        %v7110 = vadd.f32 %v6208, %v7044
        %v7111 = vadd.f32 %v6211, %v7047
        %v7112 = vadd.f32 %v6216, %v7052
        %v7113 = vadd.f32 %v6219, %v7055
        %v7114 = vadd.f32 %v6224, %v7060
        %v7115 = vadd.f32 %v6227, %v7063
        %v7116 = vadd.f32 %v6232, %v7068
        %v7117 = vadd.f32 %v6235, %v7071
        %v7118 = vadd.f32 %v6240, %v7076
        %v7119 = vadd.f32 %v6243, %v7079
        %v7120 = vadd.f32 %v6248, %v7084
        %v7121 = vadd.f32 %v6251, %v7087
        %v7122 = vld [vmem:[%s4] sm:$0x1]
        %v7124 = vlaneseq
        %v7125 = vshrl.u32 %v7124, 7
        %v7126 = vsub.s32 0, %v7125
        %v7127 = vrot.slane %v7122, %v7126
        %v7129 = vadd.f32 %v7090, %v7127
        %v7130 = vadd.f32 %v7091, %v7127
        %v7131 = vadd.f32 %v7092, %v7127
        %v7132 = vadd.f32 %v7093, %v7127
        %v7133 = vadd.f32 %v7094, %v7127
        %v7134 = vadd.f32 %v7095, %v7127
        %v7135 = vadd.f32 %v7096, %v7127
        %v7136 = vadd.f32 %v7097, %v7127
        %v7137 = vadd.f32 %v7098, %v7127
        %v7138 = vadd.f32 %v7099, %v7127
        %v7139 = vadd.f32 %v7100, %v7127
        %v7140 = vadd.f32 %v7101, %v7127
        %v7141 = vadd.f32 %v7102, %v7127
        %v7142 = vadd.f32 %v7103, %v7127
        %v7143 = vadd.f32 %v7104, %v7127
        %v7144 = vadd.f32 %v7105, %v7127
        %v7145 = vadd.f32 %v7106, %v7127
        %v7146 = vadd.f32 %v7107, %v7127
        %v7147 = vadd.f32 %v7108, %v7127
        %v7148 = vadd.f32 %v7109, %v7127
        %v7149 = vadd.f32 %v7110, %v7127
        %v7150 = vadd.f32 %v7111, %v7127
        %v7151 = vadd.f32 %v7112, %v7127
        %v7152 = vadd.f32 %v7113, %v7127
        %v7153 = vadd.f32 %v7114, %v7127
        %v7154 = vadd.f32 %v7115, %v7127
        %v7155 = vadd.f32 %v7116, %v7127
        %v7156 = vadd.f32 %v7117, %v7127
        %v7157 = vadd.f32 %v7118, %v7127
        %v7158 = vadd.f32 %v7119, %v7127
        %v7159 = vadd.f32 %v7120, %v7127
        %v7160 = vadd.f32 %v7121, %v7127
        %v7161 = vld [vmem:[#allocation10] sm:$0xf]
        %v7162 = vld [vmem:[#allocation10 + $0x4] sm:$0xf]
        %v7163 = vld [vmem:[#allocation10 + $0x8] sm:$0xf]
        %v7164 = vld [vmem:[#allocation10 + $0xc] sm:$0xf]
        %v7165 = vld [vmem:[#allocation10 + $0x10] sm:$0xf]
        %v7166 = vld [vmem:[#allocation10 + $0x14] sm:$0xf]
        %v7167 = vld [vmem:[#allocation10 + $0x18] sm:$0xf]
        %v7168 = vld [vmem:[#allocation10 + $0x1c] sm:$0xf]
        %v7169 = vld [vmem:[#allocation10 + $0x20] sm:$0xf]
        %v7170 = vld [vmem:[#allocation10 + $0x24] sm:$0xf]
        %v7171 = vld [vmem:[#allocation10 + $0x28] sm:$0xf]
        %v7172 = vld [vmem:[#allocation10 + $0x2c] sm:$0xf]
        %v7173 = vld [vmem:[#allocation10 + $0x30] sm:$0xf]
        %v7174 = vld [vmem:[#allocation10 + $0x34] sm:$0xf]
        %v7175 = vld [vmem:[#allocation10 + $0x38] sm:$0xf]
        %v7176 = vld [vmem:[#allocation10 + $0x3c] sm:$0xf]
        %v7177 = vld [vmem:[#allocation10 + $0x40] sm:$0xf]
        %v7178 = vld [vmem:[#allocation10 + $0x44] sm:$0xf]
        %v7179 = vld [vmem:[#allocation10 + $0x48] sm:$0xf]
        %v7180 = vld [vmem:[#allocation10 + $0x4c] sm:$0xf]
        %v7181 = vld [vmem:[#allocation10 + $0x50] sm:$0xf]
        %v7182 = vld [vmem:[#allocation10 + $0x54] sm:$0xf]
        %v7183 = vld [vmem:[#allocation10 + $0x58] sm:$0xf]
        %v7184 = vld [vmem:[#allocation10 + $0x5c] sm:$0xf]
        %v7185 = vld [vmem:[#allocation10 + $0x60] sm:$0xf]
        %v7186 = vld [vmem:[#allocation10 + $0x64] sm:$0xf]
        %v7187 = vld [vmem:[#allocation10 + $0x68] sm:$0xf]
        %v7188 = vld [vmem:[#allocation10 + $0x6c] sm:$0xf]
        %v7189 = vld [vmem:[#allocation10 + $0x70] sm:$0xf]
        %v7190 = vld [vmem:[#allocation10 + $0x74] sm:$0xf]
        %v7191 = vld [vmem:[#allocation10 + $0x78] sm:$0xf]
        %v7192 = vld [vmem:[#allocation10 + $0x7c] sm:$0xf]
        %v7193 = vld [vmem:[#allocation10 + $0x80] sm:$0xf]
        %v7194 = vld [vmem:[#allocation10 + $0x84] sm:$0xf]
        %v7195 = vld [vmem:[#allocation10 + $0x88] sm:$0xf]
        %v7196 = vld [vmem:[#allocation10 + $0x8c] sm:$0xf]
        %v7197 = vld [vmem:[#allocation10 + $0x90] sm:$0xf]
        %v7198 = vld [vmem:[#allocation10 + $0x94] sm:$0xf]
        %v7199 = vld [vmem:[#allocation10 + $0x98] sm:$0xf]
        %v7200 = vld [vmem:[#allocation10 + $0x9c] sm:$0xf]
        %v7201 = vld [vmem:[#allocation10 + $0xa0] sm:$0xf]
        %v7202 = vld [vmem:[#allocation10 + $0xa4] sm:$0xf]
        %v7203 = vld [vmem:[#allocation10 + $0xa8] sm:$0xf]
        %v7204 = vld [vmem:[#allocation10 + $0xac] sm:$0xf]
        %v7205 = vld [vmem:[#allocation10 + $0xb0] sm:$0xf]
        %v7206 = vld [vmem:[#allocation10 + $0xb4] sm:$0xf]
        %v7207 = vld [vmem:[#allocation10 + $0xb8] sm:$0xf]
        %v7208 = vld [vmem:[#allocation10 + $0xbc] sm:$0xf]
        %v7209 = vld [vmem:[%s6] sm:$0x1]
        %v7211 = vlaneseq
        %v7212 = vshrl.u32 %v7211, 7
        %v7213 = vsub.s32 0, %v7212
        %v7214 = vrot.slane %v7209, %v7213
        %v7264 = vunpack.c.l.b16 %v7161
        %v7265 = vunpack.c.l.b16 %v7162
        %v7266 = vunpack.c.l.b16 %v7163
        %v7267 = vunpack.c.l.b16 %v7164
        %v7268 = vunpack.c.l.b16 %v7165
        %v7269 = vunpack.c.l.b16 %v7166
        %v7270 = vunpack.c.l.b16 %v7167
        %v7271 = vunpack.c.l.b16 %v7168
        %v7272 = vunpack.c.l.b16 %v7169
        %v7273 = vunpack.c.l.b16 %v7170
        %v7274 = vunpack.c.l.b16 %v7171
        %v7275 = vunpack.c.l.b16 %v7172
        %v7276 = vunpack.c.l.b16 %v7173
        %v7277 = vunpack.c.l.b16 %v7174
        %v7278 = vunpack.c.l.b16 %v7175
        %v7279 = vunpack.c.l.b16 %v7176
        %v7280 = vunpack.c.l.b16 %v7177
        %v7281 = vunpack.c.l.b16 %v7178
        %v7282 = vunpack.c.l.b16 %v7179
        %v7283 = vunpack.c.l.b16 %v7180
        %v7284 = vunpack.c.l.b16 %v7181
        %v7285 = vunpack.c.l.b16 %v7182
        %v7286 = vunpack.c.l.b16 %v7183
        %v7287 = vunpack.c.l.b16 %v7184
        %v7288 = vunpack.c.l.b16 %v7185
        %v7289 = vunpack.c.l.b16 %v7186
        %v7290 = vunpack.c.l.b16 %v7187
        %v7291 = vunpack.c.l.b16 %v7188
        %v7292 = vunpack.c.l.b16 %v7189
        %v7293 = vunpack.c.l.b16 %v7190
        %v7294 = vunpack.c.l.b16 %v7191
        %v7295 = vunpack.c.l.b16 %v7192
        %v7296 = vunpack.c.l.b16 %v7193
        %v7297 = vunpack.c.l.b16 %v7194
        %v7298 = vunpack.c.l.b16 %v7195
        %v7299 = vunpack.c.l.b16 %v7196
        %v7300 = vunpack.c.l.b16 %v7197
        %v7301 = vunpack.c.l.b16 %v7198
        %v7302 = vunpack.c.l.b16 %v7199
        %v7303 = vunpack.c.l.b16 %v7200
        %v7304 = vunpack.c.l.b16 %v7201
        %v7305 = vunpack.c.l.b16 %v7202
        %v7306 = vunpack.c.l.b16 %v7203
        %v7307 = vunpack.c.l.b16 %v7204
        %v7308 = vunpack.c.l.b16 %v7205
        %v7309 = vunpack.c.l.b16 %v7206
        %v7310 = vunpack.c.l.b16 %v7207
        %v7311 = vunpack.c.l.b16 %v7208
        %v7312 = vpack.c.b16 %v7265, %v7264
        %v7313 = vpack.c.b16 %v7267, %v7266
        %v7314 = vpack.c.b16 %v7269, %v7268
        %v7315 = vpack.c.b16 %v7271, %v7270
        %v7316 = vpack.c.b16 %v7273, %v7272
        %v7317 = vpack.c.b16 %v7275, %v7274
        %v7318 = vpack.c.b16 %v7277, %v7276
        %v7319 = vpack.c.b16 %v7279, %v7278
        %v7320 = vpack.c.b16 %v7281, %v7280
        %v7321 = vpack.c.b16 %v7283, %v7282
        %v7322 = vpack.c.b16 %v7285, %v7284
        %v7323 = vpack.c.b16 %v7287, %v7286
        %v7324 = vpack.c.b16 %v7289, %v7288
        %v7325 = vpack.c.b16 %v7291, %v7290
        %v7326 = vpack.c.b16 %v7293, %v7292
        %v7327 = vpack.c.b16 %v7295, %v7294
        %v7328 = vpack.c.b16 %v7297, %v7296
        %v7329 = vpack.c.b16 %v7299, %v7298
        %v7330 = vpack.c.b16 %v7301, %v7300
        %v7331 = vpack.c.b16 %v7303, %v7302
        %v7332 = vpack.c.b16 %v7305, %v7304
        %v7333 = vpack.c.b16 %v7307, %v7306
        %v7334 = vpack.c.b16 %v7309, %v7308
        %v7335 = vpack.c.b16 %v7311, %v7310
        %7360 = vmatprep.subr.bf16.mxu0 0
        %7361 = vmatpush1.bf16.msra.mxu0 %v7319
        %7362 = vmatprep.subr.bf16.mxu0 0
        %7363 = vmatpush1.bf16.msra.mxu0 %v7318
        %7364 = vmatprep.subr.bf16.mxu0 0
        %7365 = vmatpush1.bf16.msra.mxu0 %v7317
        %7366 = vmatprep.subr.bf16.mxu0 0
        %7367 = vmatpush1.bf16.msra.mxu0 %v7316
        %7368 = vmatprep.subr.bf16.mxu0 0
        %7369 = vmatpush1.bf16.msra.mxu0 %v7315
        %7370 = vmatprep.subr.bf16.mxu0 0
        %7371 = vmatpush1.bf16.msra.mxu0 %v7314
        %7372 = vmatprep.subr.bf16.mxu0 0
        %7373 = vmatpush1.bf16.msra.mxu0 %v7313
        %7374 = vmatprep.subr.bf16.mxu0 0
        %7375 = vmatpush1.bf16.msra.mxu0 %v7312
        %7376 = vmatprep.subr.bf16.mxu0 0
        %7377 = vmatpush2.bf16.msra.mxu0 %v7327
        %7378 = vmatprep.subr.bf16.mxu0 0
        %7379 = vmatpush2.bf16.msra.mxu0 %v7326
        %7380 = vmatprep.subr.bf16.mxu0 0
        %7381 = vmatpush2.bf16.msra.mxu0 %v7325
        %7382 = vmatprep.subr.bf16.mxu0 0
        %7383 = vmatpush2.bf16.msra.mxu0 %v7324
        %7384 = vmatprep.subr.bf16.mxu0 0
        %7385 = vmatpush2.bf16.msra.mxu0 %v7323
        %7386 = vmatprep.subr.bf16.mxu0 0
        %7387 = vmatpush2.bf16.msra.mxu0 %v7322
        %7388 = vmatprep.subr.bf16.mxu0 0
        %7389 = vmatpush2.bf16.msra.mxu0 %v7321
        %7390 = vmatprep.subr.bf16.mxu0 0
        %7391 = vmatpush2.bf16.msra.mxu0 %v7320
        %7392 = vmatprep.mubr.bf16.mxu0 %v1505
        %7393 = vmatmul.mubr.bf16.gmra.mxu0 %v1504
        %v7394 = vpop.f32.mrf.mxu0
        %v7395 = vadd.f32 %v7214, %v7394
        %v7396 = vpop.f32.mrf.mxu0
        %v7397 = vpop.f32.mrf.mxu0
        %v7398 = vadd.f32 %v7214, %v7397
        %v7399 = vpop.f32.mrf.mxu0
        %7400 = vmatprep.mubr.bf16.mxu0 %v1508
        %7401 = vmatmul.mubr.bf16.gmra.mxu0 %v1507
        %v7402 = vpop.f32.mrf.mxu0
        %v7403 = vadd.f32 %v7214, %v7402
        %v7404 = vpop.f32.mrf.mxu0
        %v7405 = vpop.f32.mrf.mxu0
        %v7406 = vadd.f32 %v7214, %v7405
        %v7407 = vpop.f32.mrf.mxu0
        %7408 = vmatprep.mubr.bf16.mxu0 %v1511
        %7409 = vmatmul.mubr.bf16.gmra.mxu0 %v1510
        %v7410 = vpop.f32.mrf.mxu0
        %v7411 = vadd.f32 %v7214, %v7410
        %v7412 = vpop.f32.mrf.mxu0
        %v7413 = vpop.f32.mrf.mxu0
        %v7414 = vadd.f32 %v7214, %v7413
        %v7415 = vpop.f32.mrf.mxu0
        %7416 = vmatprep.mubr.bf16.mxu0 %v1514
        %7417 = vmatmul.mubr.bf16.gmra.mxu0 %v1513
        %v7418 = vpop.f32.mrf.mxu0
        %v7419 = vadd.f32 %v7214, %v7418
        %v7420 = vpop.f32.mrf.mxu0
        %v7421 = vpop.f32.mrf.mxu0
        %v7422 = vadd.f32 %v7214, %v7421
        %v7423 = vpop.f32.mrf.mxu0
        %7424 = vmatprep.mubr.bf16.mxu0 %v1517
        %7425 = vmatmul.mubr.bf16.gmra.mxu0 %v1516
        %v7426 = vpop.f32.mrf.mxu0
        %v7427 = vadd.f32 %v7214, %v7426
        %v7428 = vpop.f32.mrf.mxu0
        %v7429 = vpop.f32.mrf.mxu0
        %v7430 = vadd.f32 %v7214, %v7429
        %v7431 = vpop.f32.mrf.mxu0
        %7432 = vmatprep.mubr.bf16.mxu0 %v1520
        %7433 = vmatmul.mubr.bf16.gmra.mxu0 %v1519
        %v7434 = vpop.f32.mrf.mxu0
        %v7435 = vadd.f32 %v7214, %v7434
        %v7436 = vpop.f32.mrf.mxu0
        %v7437 = vpop.f32.mrf.mxu0
        %v7438 = vadd.f32 %v7214, %v7437
        %v7439 = vpop.f32.mrf.mxu0
        %7440 = vmatprep.mubr.bf16.mxu0 %v1523
        %7441 = vmatmul.mubr.bf16.gmra.mxu0 %v1522
        %v7442 = vpop.f32.mrf.mxu0
        %v7443 = vadd.f32 %v7214, %v7442
        %v7444 = vpop.f32.mrf.mxu0
        %v7445 = vpop.f32.mrf.mxu0
        %v7446 = vadd.f32 %v7214, %v7445
        %v7447 = vpop.f32.mrf.mxu0
        %7448 = vmatprep.mubr.bf16.mxu0 %v1526
        %7449 = vmatmul.mubr.bf16.gmra.mxu0 %v1525
        %v7450 = vpop.f32.mrf.mxu0
        %v7451 = vadd.f32 %v7214, %v7450
        %v7452 = vpop.f32.mrf.mxu0
        %v7453 = vpop.f32.mrf.mxu0
        %v7454 = vadd.f32 %v7214, %v7453
        %v7455 = vpop.f32.mrf.mxu0
        %7456 = vmatprep.mubr.bf16.mxu0 %v1529
        %7457 = vmatmul.mubr.bf16.gmra.mxu0 %v1528
        %v7458 = vpop.f32.mrf.mxu0
        %v7459 = vadd.f32 %v7214, %v7458
        %v7460 = vpop.f32.mrf.mxu0
        %v7461 = vpop.f32.mrf.mxu0
        %v7462 = vadd.f32 %v7214, %v7461
        %v7463 = vpop.f32.mrf.mxu0
        %7464 = vmatprep.mubr.bf16.mxu0 %v1532
        %7465 = vmatmul.mubr.bf16.gmra.mxu0 %v1531
        %v7466 = vpop.f32.mrf.mxu0
        %v7467 = vadd.f32 %v7214, %v7466
        %v7468 = vpop.f32.mrf.mxu0
        %v7469 = vpop.f32.mrf.mxu0
        %v7470 = vadd.f32 %v7214, %v7469
        %v7471 = vpop.f32.mrf.mxu0
        %7472 = vmatprep.mubr.bf16.mxu0 %v1535
        %7473 = vmatmul.mubr.bf16.gmra.mxu0 %v1534
        %v7474 = vpop.f32.mrf.mxu0
        %v7475 = vadd.f32 %v7214, %v7474
        %v7476 = vpop.f32.mrf.mxu0
        %v7477 = vpop.f32.mrf.mxu0
        %v7478 = vadd.f32 %v7214, %v7477
        %v7479 = vpop.f32.mrf.mxu0
        %7480 = vmatprep.mubr.bf16.mxu0 %v1538
        %7481 = vmatmul.mubr.bf16.gmra.mxu0 %v1537
        %v7482 = vpop.f32.mrf.mxu0
        %v7483 = vadd.f32 %v7214, %v7482
        %v7484 = vpop.f32.mrf.mxu0
        %v7485 = vpop.f32.mrf.mxu0
        %v7486 = vadd.f32 %v7214, %v7485
        %v7487 = vpop.f32.mrf.mxu0
        %7488 = vmatprep.mubr.bf16.mxu0 %v1541
        %7489 = vmatmul.mubr.bf16.gmra.mxu0 %v1540
        %v7490 = vpop.f32.mrf.mxu0
        %v7491 = vadd.f32 %v7214, %v7490
        %v7492 = vpop.f32.mrf.mxu0
        %v7493 = vpop.f32.mrf.mxu0
        %v7494 = vadd.f32 %v7214, %v7493
        %v7495 = vpop.f32.mrf.mxu0
        %7496 = vmatprep.mubr.bf16.mxu0 %v1544
        %7497 = vmatmul.mubr.bf16.gmra.mxu0 %v1543
        %v7498 = vpop.f32.mrf.mxu0
        %v7499 = vadd.f32 %v7214, %v7498
        %v7500 = vpop.f32.mrf.mxu0
        %v7501 = vpop.f32.mrf.mxu0
        %v7502 = vadd.f32 %v7214, %v7501
        %v7503 = vpop.f32.mrf.mxu0
        %7504 = vmatprep.mubr.bf16.mxu0 %v1547
        %7505 = vmatmul.mubr.bf16.gmra.mxu0 %v1546
        %v7506 = vpop.f32.mrf.mxu0
        %v7507 = vadd.f32 %v7214, %v7506
        %v7508 = vpop.f32.mrf.mxu0
        %v7509 = vpop.f32.mrf.mxu0
        %v7510 = vadd.f32 %v7214, %v7509
        %v7511 = vpop.f32.mrf.mxu0
        %7512 = vmatprep.mubr.bf16.mxu0 %v1550
        %7513 = vmatmul.mubr.bf16.gmra.mxu0 %v1549
        %v7514 = vpop.f32.mrf.mxu0
        %v7515 = vadd.f32 %v7214, %v7514
        %v7516 = vpop.f32.mrf.mxu0
        %v7517 = vpop.f32.mrf.mxu0
        %v7518 = vadd.f32 %v7214, %v7517
        %v7519 = vpop.f32.mrf.mxu0
        %7520 = vdwg.mxu0
        %7521 = vmatprep.subr.bf16.mxu0 0
        %7522 = vmatpush1.bf16.msra.mxu0 %v7335
        %7523 = vmatprep.subr.bf16.mxu0 0
        %7524 = vmatpush1.bf16.msra.mxu0 %v7334
        %7525 = vmatprep.subr.bf16.mxu0 0
        %7526 = vmatpush1.bf16.msra.mxu0 %v7333
        %7527 = vmatprep.subr.bf16.mxu0 0
        %7528 = vmatpush1.bf16.msra.mxu0 %v7332
        %7529 = vmatprep.subr.bf16.mxu0 0
        %7530 = vmatpush1.bf16.msra.mxu0 %v7331
        %7531 = vmatprep.subr.bf16.mxu0 0
        %7532 = vmatpush1.bf16.msra.mxu0 %v7330
        %7533 = vmatprep.subr.bf16.mxu0 0
        %7534 = vmatpush1.bf16.msra.mxu0 %v7329
        %7535 = vmatprep.subr.bf16.mxu0 0
        %7536 = vmatpush1.bf16.msra.mxu0 %v7328
        %7537 = vmatprep.subr.bf16.mxu0 0
        %7538 = vmatpush2.bf16.msra.mxu0 0
        %7539 = vmatprep.subr.bf16.mxu0 0
        %7540 = vmatpush2.bf16.msra.mxu0 0
        %7541 = vmatprep.subr.bf16.mxu0 0
        %7542 = vmatpush2.bf16.msra.mxu0 0
        %7543 = vmatprep.subr.bf16.mxu0 0
        %7544 = vmatpush2.bf16.msra.mxu0 0
        %7545 = vmatprep.subr.bf16.mxu0 0
        %7546 = vmatpush2.bf16.msra.mxu0 0
        %7547 = vmatprep.subr.bf16.mxu0 0
        %7548 = vmatpush2.bf16.msra.mxu0 0
        %7549 = vmatprep.subr.bf16.mxu0 0
        %7550 = vmatpush2.bf16.msra.mxu0 0
        %7551 = vmatprep.subr.bf16.mxu0 0
        %7552 = vmatpush2.bf16.msra.mxu0 0
        %7553 = vmatprep.mubr.bf16.mxu0 0
        %7554 = vmatmul.mubr.bf16.gmra.mxu0 %v1506
        %v7555 = vpop.f32.mrf.mxu0
        %v7556 = vadd.f32 %v7395, %v7555
        %v7557 = vpop.f32.mrf.mxu0
        %v7558 = vpop.f32.mrf.mxu0
        %v7559 = vadd.f32 %v7398, %v7558
        %v7560 = vpop.f32.mrf.mxu0
        %7561 = vmatprep.mubr.bf16.mxu0 0
        %7562 = vmatmul.mubr.bf16.gmra.mxu0 %v1509
        %v7563 = vpop.f32.mrf.mxu0
        %v7564 = vadd.f32 %v7403, %v7563
        %v7565 = vpop.f32.mrf.mxu0
        %v7566 = vpop.f32.mrf.mxu0
        %v7567 = vadd.f32 %v7406, %v7566
        %v7568 = vpop.f32.mrf.mxu0
        %7569 = vmatprep.mubr.bf16.mxu0 0
        %7570 = vmatmul.mubr.bf16.gmra.mxu0 %v1512
        %v7571 = vpop.f32.mrf.mxu0
        %v7572 = vadd.f32 %v7411, %v7571
        %v7573 = vpop.f32.mrf.mxu0
        %v7574 = vpop.f32.mrf.mxu0
        %v7575 = vadd.f32 %v7414, %v7574
        %v7576 = vpop.f32.mrf.mxu0
        %7577 = vmatprep.mubr.bf16.mxu0 0
        %7578 = vmatmul.mubr.bf16.gmra.mxu0 %v1515
        %v7579 = vpop.f32.mrf.mxu0
        %v7580 = vadd.f32 %v7419, %v7579
        %v7581 = vpop.f32.mrf.mxu0
        %v7582 = vpop.f32.mrf.mxu0
        %v7583 = vadd.f32 %v7422, %v7582
        %v7584 = vpop.f32.mrf.mxu0
        %7585 = vmatprep.mubr.bf16.mxu0 0
        %7586 = vmatmul.mubr.bf16.gmra.mxu0 %v1518
        %v7587 = vpop.f32.mrf.mxu0
        %v7588 = vadd.f32 %v7427, %v7587
        %v7589 = vpop.f32.mrf.mxu0
        %v7590 = vpop.f32.mrf.mxu0
        %v7591 = vadd.f32 %v7430, %v7590
        %v7592 = vpop.f32.mrf.mxu0
        %7593 = vmatprep.mubr.bf16.mxu0 0
        %7594 = vmatmul.mubr.bf16.gmra.mxu0 %v1521
        %v7595 = vpop.f32.mrf.mxu0
        %v7596 = vadd.f32 %v7435, %v7595
        %v7597 = vpop.f32.mrf.mxu0
        %v7598 = vpop.f32.mrf.mxu0
        %v7599 = vadd.f32 %v7438, %v7598
        %v7600 = vpop.f32.mrf.mxu0
        %7601 = vmatprep.mubr.bf16.mxu0 0
        %7602 = vmatmul.mubr.bf16.gmra.mxu0 %v1524
        %v7603 = vpop.f32.mrf.mxu0
        %v7604 = vadd.f32 %v7443, %v7603
        %v7605 = vpop.f32.mrf.mxu0
        %v7606 = vpop.f32.mrf.mxu0
        %v7607 = vadd.f32 %v7446, %v7606
        %v7608 = vpop.f32.mrf.mxu0
        %7609 = vmatprep.mubr.bf16.mxu0 0
        %7610 = vmatmul.mubr.bf16.gmra.mxu0 %v1527
        %v7611 = vpop.f32.mrf.mxu0
        %v7612 = vadd.f32 %v7451, %v7611
        %v7613 = vpop.f32.mrf.mxu0
        %v7614 = vpop.f32.mrf.mxu0
        %v7615 = vadd.f32 %v7454, %v7614
        %v7616 = vpop.f32.mrf.mxu0
        %7617 = vmatprep.mubr.bf16.mxu0 0
        %7618 = vmatmul.mubr.bf16.gmra.mxu0 %v1530
        %v7619 = vpop.f32.mrf.mxu0
        %v7620 = vadd.f32 %v7459, %v7619
        %v7621 = vpop.f32.mrf.mxu0
        %v7622 = vpop.f32.mrf.mxu0
        %v7623 = vadd.f32 %v7462, %v7622
        %v7624 = vpop.f32.mrf.mxu0
        %7625 = vmatprep.mubr.bf16.mxu0 0
        %7626 = vmatmul.mubr.bf16.gmra.mxu0 %v1533
        %v7627 = vpop.f32.mrf.mxu0
        %v7628 = vadd.f32 %v7467, %v7627
        %v7629 = vpop.f32.mrf.mxu0
        %v7630 = vpop.f32.mrf.mxu0
        %v7631 = vadd.f32 %v7470, %v7630
        %v7632 = vpop.f32.mrf.mxu0
        %7633 = vmatprep.mubr.bf16.mxu0 0
        %7634 = vmatmul.mubr.bf16.gmra.mxu0 %v1536
        %v7635 = vpop.f32.mrf.mxu0
        %v7636 = vadd.f32 %v7475, %v7635
        %v7637 = vpop.f32.mrf.mxu0
        %v7638 = vpop.f32.mrf.mxu0
        %v7639 = vadd.f32 %v7478, %v7638
        %v7640 = vpop.f32.mrf.mxu0
        %7641 = vmatprep.mubr.bf16.mxu0 0
        %7642 = vmatmul.mubr.bf16.gmra.mxu0 %v1539
        %v7643 = vpop.f32.mrf.mxu0
        %v7644 = vadd.f32 %v7483, %v7643
        %v7645 = vpop.f32.mrf.mxu0
        %v7646 = vpop.f32.mrf.mxu0
        %v7647 = vadd.f32 %v7486, %v7646
        %v7648 = vpop.f32.mrf.mxu0
        %7649 = vmatprep.mubr.bf16.mxu0 0
        %7650 = vmatmul.mubr.bf16.gmra.mxu0 %v1542
        %v7651 = vpop.f32.mrf.mxu0
        %v7652 = vadd.f32 %v7491, %v7651
        %v7653 = vpop.f32.mrf.mxu0
        %v7654 = vpop.f32.mrf.mxu0
        %v7655 = vadd.f32 %v7494, %v7654
        %v7656 = vpop.f32.mrf.mxu0
        %7657 = vmatprep.mubr.bf16.mxu0 0
        %7658 = vmatmul.mubr.bf16.gmra.mxu0 %v1545
        %v7659 = vpop.f32.mrf.mxu0
        %v7660 = vadd.f32 %v7499, %v7659
        %v7661 = vpop.f32.mrf.mxu0
        %v7662 = vpop.f32.mrf.mxu0
        %v7663 = vadd.f32 %v7502, %v7662
        %v7664 = vpop.f32.mrf.mxu0
        %7665 = vmatprep.mubr.bf16.mxu0 0
        %7666 = vmatmul.mubr.bf16.gmra.mxu0 %v1548
        %v7667 = vpop.f32.mrf.mxu0
        %v7668 = vadd.f32 %v7507, %v7667
        %v7669 = vpop.f32.mrf.mxu0
        %v7670 = vpop.f32.mrf.mxu0
        %v7671 = vadd.f32 %v7510, %v7670
        %v7672 = vpop.f32.mrf.mxu0
        %7673 = vmatprep.mubr.bf16.mxu0 0
        %7674 = vmatmul.mubr.bf16.gmra.mxu0 %v1551
        %v7675 = vpop.f32.mrf.mxu0
        %v7676 = vadd.f32 %v7515, %v7675
        %v7677 = vpop.f32.mrf.mxu0
        %v7678 = vpop.f32.mrf.mxu0
        %v7679 = vadd.f32 %v7518, %v7678
        %v7680 = vpop.f32.mrf.mxu0
        %7681 = vdwg.mxu0
        %v7682 = vadd.f32 %v7129, %v7556
        %v7683 = vadd.f32 %v7130, %v7559
        %v7684 = vadd.f32 %v7131, %v7564
        %v7685 = vadd.f32 %v7132, %v7567
        %v7686 = vadd.f32 %v7133, %v7572
        %v7687 = vadd.f32 %v7134, %v7575
        %v7688 = vadd.f32 %v7135, %v7580
        %v7689 = vadd.f32 %v7136, %v7583
        %v7690 = vadd.f32 %v7137, %v7588
        %v7691 = vadd.f32 %v7138, %v7591
        %v7692 = vadd.f32 %v7139, %v7596
        %v7693 = vadd.f32 %v7140, %v7599
        %v7694 = vadd.f32 %v7141, %v7604
        %v7695 = vadd.f32 %v7142, %v7607
        %v7696 = vadd.f32 %v7143, %v7612
        %v7697 = vadd.f32 %v7144, %v7615
        %v7698 = vadd.f32 %v7145, %v7620
        %v7699 = vadd.f32 %v7146, %v7623
        %v7700 = vadd.f32 %v7147, %v7628
        %v7701 = vadd.f32 %v7148, %v7631
        %v7702 = vadd.f32 %v7149, %v7636
        %v7703 = vadd.f32 %v7150, %v7639
        %v7704 = vadd.f32 %v7151, %v7644
        %v7705 = vadd.f32 %v7152, %v7647
        %v7706 = vadd.f32 %v7153, %v7652
        %v7707 = vadd.f32 %v7154, %v7655
        %v7708 = vadd.f32 %v7155, %v7660
        %v7709 = vadd.f32 %v7156, %v7663
        %v7710 = vadd.f32 %v7157, %v7668
        %v7711 = vadd.f32 %v7158, %v7671
        %v7712 = vadd.f32 %v7159, %v7676
        %v7713 = vadd.f32 %v7160, %v7679
        %v7714 = vmax.f32 %v7682, 0.0
        %v7715 = vmax.f32 %v7683, 0.0
        %v7716 = vmax.f32 %v7684, 0.0
        %v7717 = vmax.f32 %v7685, 0.0
        %v7718 = vmax.f32 %v7686, 0.0
        %v7719 = vmax.f32 %v7687, 0.0
        %v7720 = vmax.f32 %v7688, 0.0
        %v7721 = vmax.f32 %v7689, 0.0
        %v7722 = vmax.f32 %v7690, 0.0
        %v7723 = vmax.f32 %v7691, 0.0
        %v7724 = vmax.f32 %v7692, 0.0
        %v7725 = vmax.f32 %v7693, 0.0
        %v7726 = vmax.f32 %v7694, 0.0
        %v7727 = vmax.f32 %v7695, 0.0
        %v7728 = vmax.f32 %v7696, 0.0
        %v7729 = vmax.f32 %v7697, 0.0
        %v7730 = vmax.f32 %v7698, 0.0
        %v7731 = vmax.f32 %v7699, 0.0
        %v7732 = vmax.f32 %v7700, 0.0
        %v7733 = vmax.f32 %v7701, 0.0
        %v7734 = vmax.f32 %v7702, 0.0
        %v7735 = vmax.f32 %v7703, 0.0
        %v7736 = vmax.f32 %v7704, 0.0
        %v7737 = vmax.f32 %v7705, 0.0
        %v7738 = vmax.f32 %v7706, 0.0
        %v7739 = vmax.f32 %v7707, 0.0
        %v7740 = vmax.f32 %v7708, 0.0
        %v7741 = vmax.f32 %v7709, 0.0
        %v7742 = vmax.f32 %v7710, 0.0
        %v7743 = vmax.f32 %v7711, 0.0
        %v7744 = vmax.f32 %v7712, 0.0
        %v7745 = vmax.f32 %v7713, 0.0
        %7746 = vst [vmem:[%s340] sm:$0xff] %v7714
        %7747 = vst [vmem:[%s340 + $0x8] sm:$0xff] %v7715
        %7748 = vst [vmem:[%s340 + $0x10] sm:$0xff] %v7716
        %7749 = vst [vmem:[%s340 + $0x18] sm:$0xff] %v7717
        %7750 = vst [vmem:[%s340 + $0x20] sm:$0xff] %v7718
        %7751 = vst [vmem:[%s340 + $0x28] sm:$0xff] %v7719
        %7752 = vst [vmem:[%s340 + $0x30] sm:$0xff] %v7720
        %7753 = vst [vmem:[%s340 + $0x38] sm:$0xff] %v7721
        %7754 = vst [vmem:[%s340 + $0x40] sm:$0xff] %v7722
        %7755 = vst [vmem:[%s340 + $0x48] sm:$0xff] %v7723
        %7756 = vst [vmem:[%s340 + $0x50] sm:$0xff] %v7724
        %7757 = vst [vmem:[%s340 + $0x58] sm:$0xff] %v7725
        %7758 = vst [vmem:[%s340 + $0x60] sm:$0xff] %v7726
        %7759 = vst [vmem:[%s340 + $0x68] sm:$0xff] %v7727
        %7760 = vst [vmem:[%s340 + $0x70] sm:$0xff] %v7728
        %7761 = vst [vmem:[%s340 + $0x78] sm:$0xff] %v7729
        %7762 = vst [vmem:[%s340 + $0x80] sm:$0xff] %v7730
        %7763 = vst [vmem:[%s340 + $0x88] sm:$0xff] %v7731
        %7764 = vst [vmem:[%s340 + $0x90] sm:$0xff] %v7732
        %7765 = vst [vmem:[%s340 + $0x98] sm:$0xff] %v7733
        %7766 = vst [vmem:[%s340 + $0xa0] sm:$0xff] %v7734
        %7767 = vst [vmem:[%s340 + $0xa8] sm:$0xff] %v7735
        %7768 = vst [vmem:[%s340 + $0xb0] sm:$0xff] %v7736
        %7769 = vst [vmem:[%s340 + $0xb8] sm:$0xff] %v7737
        %7770 = vst [vmem:[%s340 + $0xc0] sm:$0xff] %v7738
        %7771 = vst [vmem:[%s340 + $0xc8] sm:$0xff] %v7739
        %7772 = vst [vmem:[%s340 + $0xd0] sm:$0xff] %v7740
        %7773 = vst [vmem:[%s340 + $0xd8] sm:$0xff] %v7741
        %7774 = vst [vmem:[%s340 + $0xe0] sm:$0xff] %v7742
        %7775 = vst [vmem:[%s340 + $0xe8] sm:$0xff] %v7743
        %7776 = vst [vmem:[%s340 + $0xf0] sm:$0xff] %v7744
        %7777 = vst [vmem:[%s340 + $0xf8] sm:$0xff] %v7745
        %s7778 = sand.u32 %s186, 1
        %s7779 = scalar_lea.sflag [#allocation6], %s7778
        %s7780 = sand.u32 %s186, 1
        %s7781 = smul.addr %s7780, 256
        %s7782 = scalar_lea.vmem [#allocation12], %s7781
        // Predicated region
        $region65: #{tpu_custom_call.1} parent=47 // pred_check
          %p7783 = pneg %p196
        $region66: #{tpu_custom_call.1} parent=47 // pred_check_branch
          %7785 = sbr.rel (%p7783) target = $region68
        $region67: #{tpu_custom_call.1} parent=47 // pred_region
          %s7787 = ssub.s32 4096, 4096
          %7788 = vsyncadd %s7779, %s7787
          %s7789 = smul.addr %s26, 32
          %s7790 = smul.addr %s7789, 128
          %s7791 = scalar_lea.hbm %s7, %s7790
          %s7792 = sshll.u32 %s7782, 4
          %s7793 = int_to_ptr.vmem [resolvable:$true] %s7792
          %7798 = dma.vmem_to_hbm [thread:$0]  %s7793, 4096, %s7791, %s7779, 128, 128, 8
        $region68: #{tpu_custom_call.1} parent=47 // pred_fallthru
          _
      $region48: #{tpu_custom_call.1} parent=5 // pred_fallthru
        _
      %p7799 = scmp.le.s32.totalorder 2, %s21
      // Predicated region
      $region69: #{tpu_custom_call.1} parent=5 // pred_check
        %p7800 = pneg %p7799
      $region70: #{tpu_custom_call.1} parent=5 // pred_check_branch
        %7802 = sbr.rel (%p7800) target = $region72
      $region71: #{tpu_custom_call.1} parent=5 // pred_region
        %s7803 = ssub.s32 %s21, 2
        // Predicated region
        $region73: #{tpu_custom_call.1} parent=71 // pred_check
          %p7804 = pneg %p202
        $region74: #{tpu_custom_call.1} parent=71 // pred_check_branch
          %7806 = sbr.rel (%p7804) target = $region76
        $region75: #{tpu_custom_call.1} parent=71 // pred_region
          %s7807 = sand.u32 %s187, 1
          %s7808 = scalar_lea.sflag [#allocation6], %s7807
          %s7809 = sand.u32 %s187, 1
          %s7810 = smul.addr %s7809, 256
          %s7811 = scalar_lea.vmem [#allocation12], %s7810
          %7812 = dma.done %s7808, 4096
        $region76: #{tpu_custom_call.1} parent=71 // pred_fallthru
          _
      $region72: #{tpu_custom_call.1} parent=5 // pred_fallthru
        _
    $region6: #{tpu_custom_call.1} parent=1 // loop_footer
      %s25 = sadd.s32 1, %s21
    $region7: #{tpu_custom_call.1} parent=1 // loop_footer_branch
      %20 = sbr.rel target = $region3
    $region8: #{tpu_custom_call.1} parent=1 // loop_exit
      _
    %7813 = vsyncpa [#allocation5], 1
    %s7814 = scalar_lea.sflag [#allocation5], 1
    %7815 = vsyncpa %s7814, 1
    %7816 = vsyncpa [#allocation8], 1
    %7817 = vsyncpa [#allocation11], 1
    %7818 = vsyncpa [#allocation6], 1
    %s7819 = scalar_lea.sflag [#allocation6], 1
    %7820 = vsyncpa %s7819, 1

</llo_original>
